<compile_context>
chip_gen: v7x
topology: tpu7x:2x2x1
jax: 0.10.0
libtpu: 0.0.40
codegen_flags: <defaults>
</compile_context>

<pallas_src>
import functools
import math

import jax
import jax.numpy as jnp
from jax import lax
from jax.experimental import pallas as pl
from jax.experimental.pallas import tpu as pltpu


def _layer_norm(x, eps):
    # torch.nn.LayerNorm with fresh-init affine (gamma=1, beta=0).
    mu = jnp.mean(x, axis=-1, keepdims=True)
    var = jnp.mean(jnp.square(x - mu), axis=-1, keepdims=True)
    return (x - mu) * lax.rsqrt(var + eps)


def encoder_block_kernel(x_ref, k_ref, v_ref, wq_ref, w0_ref, w1_ref, b1_ref,
                         w2_ref, b2_ref, o_ref, concat_ref,
                         *, heads, hidden, tile_n, eps):
    cd = k_ref.dtype                                    # compute dtype (bf16)

    # Query-row tile sliced from the resident full-sequence x (no 2nd x input).
    row0 = pl.multiple_of(pl.program_id(0) * tile_n, tile_n)
    xt_f32 = x_ref[pl.ds(row0, tile_n), :]              # (T, D) float32
    xt_c = xt_f32.astype(cd)

    # Q projection for this tile only (1/sqrt(d_k) is pre-folded into Wq).
    q_all = jnp.dot(xt_c, wq_ref[...],
                    preferred_element_type=jnp.float32).astype(cd)   # (T, H*hid)

    # K/V over the full sequence were computed once in the wrapper.
    k_all = k_ref[...]                                   # (N, H*hid) bf16
    v_all = v_ref[...]                                   # (N, H*hid) bf16

    # ---- per-head attention; outputs written into lane-slices of VMEM scratch ----
    for h in range(heads):
        sl = slice(h * hidden, (h + 1) * hidden)
        # scores via dot_general contracting last axes (no explicit k.T)
        a = lax.dot_general(q_all[:, sl], k_all[:, sl],
                            (((1,), (1,)), ((), ())),
                            preferred_element_type=jnp.float32)       # (T, N)
        a = a - jnp.max(a, axis=-1, keepdims=True)
        p = jnp.exp(a)
        p = p * pl.reciprocal(jnp.sum(p, axis=-1, keepdims=True), approx=True)
        ho = jnp.dot(p.astype(cd), v_all[:, sl],
                     preferred_element_type=jnp.float32)              # (T, hid)
        concat_ref[:, sl] = ho.astype(cd)

    # one fused output-projection matmul with W0 over the concatenated heads
    sa = jnp.dot(concat_ref[...], w0_ref[...],
                 preferred_element_type=jnp.float32)                  # (T, D)

    # residual (+ dropout = identity in eval) then LayerNorm 1 (f32 stats)
    x1 = _layer_norm(xt_f32 + sa, eps)

    # ---- feed-forward: Linear -> ReLU -> Linear (weights pre-transposed, bf16) ----
    h1 = jnp.dot(x1.astype(cd), w1_ref[...],
                 preferred_element_type=jnp.float32) + b1_ref[...]
    h1 = jnp.maximum(h1, 0.0)
    ff = jnp.dot(h1.astype(cd), w2_ref[...],
                 preferred_element_type=jnp.float32) + b2_ref[...]

    # residual (+ dropout = identity) then LayerNorm 2
    o_ref[...] = _layer_norm(x1 + ff, eps).astype(o_ref.dtype)


def _pick_tile(n):
    # Largest seq tile (multiple of 8) dividing n, preferring to keep >= 2 grid
    # steps so the "parallel" axis can still split across TensorCores (v7x).
    cands = (512, 256, 128, 64, 32, 16, 8)
    for t in cands:
        if n % t == 0 and n // t >= 2:
            return t
    for t in cands:
        if n % t == 0:
            return t
    return n  # full sequence as one block (always legal)


def encoder_block(x, params, heads, hidden, *, tile_n=None,
                  compute_dtype=jnp.bfloat16, eps=1e-5):
    """Pallas implementation of EncoderBlock.forward (eval mode)."""
    n, d = x.shape
    hh = heads * hidden
    if tile_n is None:
        tile_n = _pick_tile(n)
    assert n % tile_n == 0
    grid = (n // tile_n,)
    cd = compute_dtype
    scale = 1.0 / math.sqrt(hidden)

    # --- hoisted, grid-invariant pre-processing (review items 1 & 2) ---
    # K/V depend only on the full sequence: compute them ONCE here, pass as
    # resident bf16 blocks. Pre-cast all weights to bf16; fold 1/sqrt(d_k)
    # into Wq so the kernel never scales activations.
    x_c = x.astype(cd)
    wq = (params["wq"] * scale).astype(cd)
    k_all = jnp.dot(x_c, params["wk"].astype(cd),
                    preferred_element_type=jnp.float32).astype(cd)
    v_all = jnp.dot(x_c, params["wv"].astype(cd),
                    preferred_element_type=jnp.float32).astype(cd)
    w0 = params["w0"].astype(cd)
    w1 = params["w1"].astype(cd)
    w2 = params["w2"].astype(cd)
    b1 = params["b1"].astype(jnp.float32)
    b2 = params["b2"].astype(jnp.float32)

    args = (x, k_all, v_all, wq, w0, w1, b1, w2, b2)

    kernel = functools.partial(encoder_block_kernel, heads=heads, hidden=hidden,
                               tile_n=tile_n, eps=eps)

    flops = int(2 * n * d * hh                 # Q projection
                + 2 * 2 * n * n * hh           # QK^T + PV (all heads)
                + 2 * n * hh * d               # W0
                + 2 * 2 * n * d * (4 * d))     # FFN
    cost = pl.CostEstimate(
        flops=flops,
        transcendentals=int(heads * n * n),
        bytes_accessed=int(sum(int(a.size) * a.dtype.itemsize for a in args)
                           + n * d * 4))

    out_spec = pl.BlockSpec((tile_n, d), lambda i: (i, 0))

    def build_in_specs(single_buffer_resident):
        kwargs = {}
        if single_buffer_resident:
            # Resident blocks never change across the grid -> single-buffer them
            # (saves a second VMEM copy of x/K/V/weights; matters on v7x 64 MiB).
            kwargs["pipeline_mode"] = pl.Buffered(1)
        return [pl.BlockSpec(a.shape, lambda i: (0, 0), **kwargs) for a in args]

    def run(single_buffer_resident):
        return pl.pallas_call(
            kernel,
            out_shape=jax.ShapeDtypeStruct((n, d), x.dtype),
            grid=grid,
            in_specs=build_in_specs(single_buffer_resident),
            out_specs=out_spec,
            scratch_shapes=[pltpu.VMEM((tile_n, hh), cd)],   # head-concat scratch
            compiler_params=pltpu.CompilerParams(
                dimension_semantics=("parallel",),           # megacore on v7x
                vmem_limit_bytes=48 * 1024 * 1024),
            cost_estimate=cost,
        )(*args)

    try:
        return run(single_buffer_resident=True)
    except Exception:
        # pipeline_mode=pl.Buffered(1) not supported in this jax build.
        return run(single_buffer_resident=False)


def make_params(key, d_model, hidden, heads):
    """Deterministic Kaiming-normal init matching the module's shapes
    (per-head projections fused along lanes / Linear weights pre-transposed)."""
    ks = jax.random.split(key, 6)

    def kaiming(k, shape, fan_in):
        return jnp.sqrt(2.0 / fan_in) * jax.random.normal(k, shape, jnp.float32)

    return dict(
        # per-head (d_model, hidden) projections fused along lanes -> (D, H*hid)
        wq=kaiming(ks[0], (d_model, heads * hidden), hidden),
        wk=kaiming(ks[1], (d_model, heads * hidden), hidden),
        wv=kaiming(ks[2], (d_model, heads * hidden), hidden),
        # W0: (heads*hidden, d_model)
        w0=kaiming(ks[3], (heads * hidden, d_model), d_model),
        # Linear1 weight (4D, D) -> stored transposed as (D, 4D) for x @ W
        w1=kaiming(ks[4], (4 * d_model, d_model), d_model).T,
        b1=jnp.zeros((1, 4 * d_model), jnp.float32),
        # Linear2 weight (D, 4D) -> stored transposed as (4D, D)
        w2=kaiming(ks[5], (d_model, 4 * d_model), 4 * d_model).T,
        b2=jnp.zeros((1, d_model), jnp.float32),
    )


def _reference_forward(x, params, heads, hidden, eps=1e-5):
    """Pure-JAX f32 reference of EncoderBlock.forward (eval mode)."""
    scale = 1.0 / math.sqrt(hidden)
    q = x @ params["wq"]
    k = x @ params["wk"]
    v = x @ params["wv"]
    outs = []
    for h in range(heads):
        sl = slice(h * hidden, (h + 1) * hidden)
        a = (q[:, sl] @ k[:, sl].T) * scale
        outs.append(jax.nn.softmax(a, axis=-1) @ v[:, sl])
    sa = jnp.concatenate(outs, axis=-1) @ params["w0"]
    x1 = _layer_norm(x + sa, eps)
    h1 = jnp.maximum(x1 @ params["w1"] + params["b1"], 0.0)
    ff = h1 @ params["w2"] + params["b2"]
    return _layer_norm(x1 + ff, eps)


if __name__ == "__main__":
    # small shapes consistent with the module; seq=256 -> 2-step "parallel" grid
    seq_length, d_model, hidden, heads = 256, 128, 32, 4

    key = jax.random.PRNGKey(0)
    pkey, xkey = jax.random.split(key)
    params = make_params(pkey, d_model, hidden, heads)
    x = jax.random.normal(xkey, (seq_length, d_model), jnp.float32)

    out = encoder_block(x, params, heads, hidden)
    jax.block_until_ready(out)

    assert out.shape == (seq_length, d_model)
    assert jnp.all(jnp.isfinite(out))

    # loose-tolerance check vs. f32 reference (bf16 MXU operands inside kernel)
    ref = _reference_forward(x, params, heads, hidden)
    mean_err = float(jnp.mean(jnp.abs(out - ref)))
    assert mean_err < 0.05, f"mean abs error vs f32 reference too large: {mean_err}"

    print("KERNEL_OK")
</pallas_src>

<mosaic_0001>
module attributes {stable_mosaic.version = 11 : i64} {
  func.func @encoder_block_kernel(%arg0: i32, %arg1: memref<256x128xf32, #tpu.memory_space<vmem>>, %arg2: memref<256x128xbf16, #tpu.memory_space<vmem>>, %arg3: memref<256x128xbf16, #tpu.memory_space<vmem>>, %arg4: memref<128x128xbf16, #tpu.memory_space<vmem>>, %arg5: memref<128x128xbf16, #tpu.memory_space<vmem>>, %arg6: memref<128x512xbf16, #tpu.memory_space<vmem>>, %arg7: memref<1x512xf32, #tpu.memory_space<vmem>>, %arg8: memref<512x128xbf16, #tpu.memory_space<vmem>>, %arg9: memref<1x128xf32, #tpu.memory_space<vmem>>, %arg10: memref<128x128xf32, #tpu.memory_space<vmem>>, %arg11: memref<128x128xbf16, #tpu.memory_space<vmem>>) attributes {dimension_semantics = [#tpu.dimension_semantics<parallel>], iteration_bounds = array<i64: 2>, scalar_prefetch = 0 : i64, scratch_operands = 1 : i64, tpu.core_type = #tpu.core_type<tc>, window_params = [{pipeline_mode = #tpu.pipeline_mode<synchronous>, transform_indices = @transform_0, window_bounds = array<i64: 256, 128>}, {pipeline_mode = #tpu.pipeline_mode<synchronous>, transform_indices = @transform_1, window_bounds = array<i64: 256, 128>}, {pipeline_mode = #tpu.pipeline_mode<synchronous>, transform_indices = @transform_2, window_bounds = array<i64: 256, 128>}, {pipeline_mode = #tpu.pipeline_mode<synchronous>, transform_indices = @transform_3, window_bounds = array<i64: 128, 128>}, {pipeline_mode = #tpu.pipeline_mode<synchronous>, transform_indices = @transform_4, window_bounds = array<i64: 128, 128>}, {pipeline_mode = #tpu.pipeline_mode<synchronous>, transform_indices = @transform_5, window_bounds = array<i64: 128, 512>}, {pipeline_mode = #tpu.pipeline_mode<synchronous>, transform_indices = @transform_6, window_bounds = array<i64: 1, 512>}, {pipeline_mode = #tpu.pipeline_mode<synchronous>, transform_indices = @transform_7, window_bounds = array<i64: 512, 128>}, {pipeline_mode = #tpu.pipeline_mode<synchronous>, transform_indices = @transform_8, window_bounds = array<i64: 1, 128>}, {transform_indices = @transform_9, window_bounds = array<i64: 128, 128>}]} {
    %c128_i32 = arith.constant 128 : i32
    %0 = arith.muli %arg0, %c128_i32 : i32
    %1 = tpu.assume_multiple %0, 128 : i32
    %2 = arith.index_cast %1 : i32 to index
    %c0 = arith.constant 0 : index
    %3 = vector.load %arg1[%2, %c0] : memref<256x128xf32, #tpu.memory_space<vmem>>, vector<128x128xf32>
    %4 = arith.truncf %3 : vector<128x128xf32> to vector<128x128xbf16>
    %c0_0 = arith.constant 0 : index
    %c0_1 = arith.constant 0 : index
    %5 = vector.load %arg4[%c0_0, %c0_1] : memref<128x128xbf16, #tpu.memory_space<vmem>>, vector<128x128xbf16>
    %cst = arith.constant dense<0.000000e+00> : vector<128x128xf32>
    %6 = tpu.matmul %4, %5, %cst {dimension_numbers = #tpu.dot_dimension_numbers<[1], [0], [0], [1], [0, 0, 1, 1], [], []>} : vector<128x128xbf16>, vector<128x128xbf16>, vector<128x128xf32> -> vector<128x128xf32>
    %7 = arith.truncf %6 : vector<128x128xf32> to vector<128x128xbf16>
    %c0_2 = arith.constant 0 : index
    %c0_3 = arith.constant 0 : index
    %8 = vector.load %arg2[%c0_2, %c0_3] : memref<256x128xbf16, #tpu.memory_space<vmem>>, vector<256x128xbf16>
    %c0_4 = arith.constant 0 : index
    %c0_5 = arith.constant 0 : index
    %9 = vector.load %arg3[%c0_4, %c0_5] : memref<256x128xbf16, #tpu.memory_space<vmem>>, vector<256x128xbf16>
    %10 = vector.extract_strided_slice %7 {offsets = [0, 0], sizes = [128, 32], strides = [1, 1]} : vector<128x128xbf16> to vector<128x32xbf16>
    %11 = vector.extract_strided_slice %8 {offsets = [0, 0], sizes = [256, 32], strides = [1, 1]} : vector<256x128xbf16> to vector<256x32xbf16>
    %cst_6 = arith.constant dense<0.000000e+00> : vector<128x256xf32>
    %12 = tpu.matmul %10, %11, %cst_6 {dimension_numbers = #tpu.dot_dimension_numbers<[1], [1], [0], [0], [0, 0, 1, 0], [], []>} : vector<128x32xbf16>, vector<256x32xbf16>, vector<128x256xf32> -> vector<128x256xf32>
    %cst_7 = arith.constant dense<0xFF800000> : vector<128xf32>
    %13 = vector.multi_reduction <maximumf>, %12, %cst_7 [1] : vector<128x256xf32> to vector<128xf32>
    %14 = vector.shape_cast %13 : vector<128xf32> to vector<128x1xf32>
    %15 = vector.broadcast %14 : vector<128x1xf32> to vector<128x256xf32>
    %16 = arith.subf %12, %15 : vector<128x256xf32>
    %17 = math.exp %16 : vector<128x256xf32>
    %cst_8 = arith.constant dense<0.000000e+00> : vector<128xf32>
    %18 = vector.multi_reduction <add>, %17, %cst_8 [1] : vector<128x256xf32> to vector<128xf32>
    %19 = vector.shape_cast %18 : vector<128xf32> to vector<128x1xf32>
    %20 = tpu.reciprocal %19 {approx = true} : vector<128x1xf32> -> vector<128x1xf32>
    %21 = vector.broadcast %20 : vector<128x1xf32> to vector<128x256xf32>
    %22 = arith.mulf %17, %21 : vector<128x256xf32>
    %23 = arith.truncf %22 : vector<128x256xf32> to vector<128x256xbf16>
    %24 = vector.extract_strided_slice %9 {offsets = [0, 0], sizes = [256, 32], strides = [1, 1]} : vector<256x128xbf16> to vector<256x32xbf16>
    %cst_9 = arith.constant dense<0.000000e+00> : vector<128x32xf32>
    %25 = tpu.matmul %23, %24, %cst_9 {dimension_numbers = #tpu.dot_dimension_numbers<[1], [0], [0], [1], [0, 0, 1, 1], [], []>} : vector<128x256xbf16>, vector<256x32xbf16>, vector<128x32xf32> -> vector<128x32xf32>
    %26 = arith.truncf %25 : vector<128x32xf32> to vector<128x32xbf16>
    %c0_10 = arith.constant 0 : index
    %c0_11 = arith.constant 0 : index
    %27 = vector.load %arg11[%c0_10, %c0_11] : memref<128x128xbf16, #tpu.memory_space<vmem>>, vector<128x32xbf16>
    tpu.vector_store %arg11[%c0_10, %c0_11], %26 {strides = array<i32>} : memref<128x128xbf16, #tpu.memory_space<vmem>>, vector<128x32xbf16>,
    %28 = vector.extract_strided_slice %7 {offsets = [0, 32], sizes = [128, 32], strides = [1, 1]} : vector<128x128xbf16> to vector<128x32xbf16>
    %29 = vector.extract_strided_slice %8 {offsets = [0, 32], sizes = [256, 32], strides = [1, 1]} : vector<256x128xbf16> to vector<256x32xbf16>
    %cst_12 = arith.constant dense<0.000000e+00> : vector<128x256xf32>
    %30 = tpu.matmul %28, %29, %cst_12 {dimension_numbers = #tpu.dot_dimension_numbers<[1], [1], [0], [0], [0, 0, 1, 0], [], []>} : vector<128x32xbf16>, vector<256x32xbf16>, vector<128x256xf32> -> vector<128x256xf32>
    %cst_13 = arith.constant dense<0xFF800000> : vector<128xf32>
    %31 = vector.multi_reduction <maximumf>, %30, %cst_13 [1] : vector<128x256xf32> to vector<128xf32>
    %32 = vector.shape_cast %31 : vector<128xf32> to vector<128x1xf32>
    %33 = vector.broadcast %32 : vector<128x1xf32> to vector<128x256xf32>
    %34 = arith.subf %30, %33 : vector<128x256xf32>
    %35 = math.exp %34 : vector<128x256xf32>
    %cst_14 = arith.constant dense<0.000000e+00> : vector<128xf32>
    %36 = vector.multi_reduction <add>, %35, %cst_14 [1] : vector<128x256xf32> to vector<128xf32>
    %37 = vector.shape_cast %36 : vector<128xf32> to vector<128x1xf32>
    %38 = tpu.reciprocal %37 {approx = true} : vector<128x1xf32> -> vector<128x1xf32>
    %39 = vector.broadcast %38 : vector<128x1xf32> to vector<128x256xf32>
    %40 = arith.mulf %35, %39 : vector<128x256xf32>
    %41 = arith.truncf %40 : vector<128x256xf32> to vector<128x256xbf16>
    %42 = vector.extract_strided_slice %9 {offsets = [0, 32], sizes = [256, 32], strides = [1, 1]} : vector<256x128xbf16> to vector<256x32xbf16>
    %cst_15 = arith.constant dense<0.000000e+00> : vector<128x32xf32>
    %43 = tpu.matmul %41, %42, %cst_15 {dimension_numbers = #tpu.dot_dimension_numbers<[1], [0], [0], [1], [0, 0, 1, 1], [], []>} : vector<128x256xbf16>, vector<256x32xbf16>, vector<128x32xf32> -> vector<128x32xf32>
    %44 = arith.truncf %43 : vector<128x32xf32> to vector<128x32xbf16>
    %c0_16 = arith.constant 0 : index
    %c32 = arith.constant 32 : index
    %45 = vector.load %arg11[%c0_16, %c32] : memref<128x128xbf16, #tpu.memory_space<vmem>>, vector<128x32xbf16>
    tpu.vector_store %arg11[%c0_16, %c32], %44 {strides = array<i32>} : memref<128x128xbf16, #tpu.memory_space<vmem>>, vector<128x32xbf16>,
    %46 = vector.extract_strided_slice %7 {offsets = [0, 64], sizes = [128, 32], strides = [1, 1]} : vector<128x128xbf16> to vector<128x32xbf16>
    %47 = vector.extract_strided_slice %8 {offsets = [0, 64], sizes = [256, 32], strides = [1, 1]} : vector<256x128xbf16> to vector<256x32xbf16>
    %cst_17 = arith.constant dense<0.000000e+00> : vector<128x256xf32>
    %48 = tpu.matmul %46, %47, %cst_17 {dimension_numbers = #tpu.dot_dimension_numbers<[1], [1], [0], [0], [0, 0, 1, 0], [], []>} : vector<128x32xbf16>, vector<256x32xbf16>, vector<128x256xf32> -> vector<128x256xf32>
    %cst_18 = arith.constant dense<0xFF800000> : vector<128xf32>
    %49 = vector.multi_reduction <maximumf>, %48, %cst_18 [1] : vector<128x256xf32> to vector<128xf32>
    %50 = vector.shape_cast %49 : vector<128xf32> to vector<128x1xf32>
    %51 = vector.broadcast %50 : vector<128x1xf32> to vector<128x256xf32>
    %52 = arith.subf %48, %51 : vector<128x256xf32>
    %53 = math.exp %52 : vector<128x256xf32>
    %cst_19 = arith.constant dense<0.000000e+00> : vector<128xf32>
    %54 = vector.multi_reduction <add>, %53, %cst_19 [1] : vector<128x256xf32> to vector<128xf32>
    %55 = vector.shape_cast %54 : vector<128xf32> to vector<128x1xf32>
    %56 = tpu.reciprocal %55 {approx = true} : vector<128x1xf32> -> vector<128x1xf32>
    %57 = vector.broadcast %56 : vector<128x1xf32> to vector<128x256xf32>
    %58 = arith.mulf %53, %57 : vector<128x256xf32>
    %59 = arith.truncf %58 : vector<128x256xf32> to vector<128x256xbf16>
    %60 = vector.extract_strided_slice %9 {offsets = [0, 64], sizes = [256, 32], strides = [1, 1]} : vector<256x128xbf16> to vector<256x32xbf16>
    %cst_20 = arith.constant dense<0.000000e+00> : vector<128x32xf32>
    %61 = tpu.matmul %59, %60, %cst_20 {dimension_numbers = #tpu.dot_dimension_numbers<[1], [0], [0], [1], [0, 0, 1, 1], [], []>} : vector<128x256xbf16>, vector<256x32xbf16>, vector<128x32xf32> -> vector<128x32xf32>
    %62 = arith.truncf %61 : vector<128x32xf32> to vector<128x32xbf16>
    %c0_21 = arith.constant 0 : index
    %c64 = arith.constant 64 : index
    %63 = vector.load %arg11[%c0_21, %c64] : memref<128x128xbf16, #tpu.memory_space<vmem>>, vector<128x32xbf16>
    tpu.vector_store %arg11[%c0_21, %c64], %62 {strides = array<i32>} : memref<128x128xbf16, #tpu.memory_space<vmem>>, vector<128x32xbf16>,
    %64 = vector.extract_strided_slice %7 {offsets = [0, 96], sizes = [128, 32], strides = [1, 1]} : vector<128x128xbf16> to vector<128x32xbf16>
    %65 = vector.extract_strided_slice %8 {offsets = [0, 96], sizes = [256, 32], strides = [1, 1]} : vector<256x128xbf16> to vector<256x32xbf16>
    %cst_22 = arith.constant dense<0.000000e+00> : vector<128x256xf32>
    %66 = tpu.matmul %64, %65, %cst_22 {dimension_numbers = #tpu.dot_dimension_numbers<[1], [1], [0], [0], [0, 0, 1, 0], [], []>} : vector<128x32xbf16>, vector<256x32xbf16>, vector<128x256xf32> -> vector<128x256xf32>
    %cst_23 = arith.constant dense<0xFF800000> : vector<128xf32>
    %67 = vector.multi_reduction <maximumf>, %66, %cst_23 [1] : vector<128x256xf32> to vector<128xf32>
    %68 = vector.shape_cast %67 : vector<128xf32> to vector<128x1xf32>
    %69 = vector.broadcast %68 : vector<128x1xf32> to vector<128x256xf32>
    %70 = arith.subf %66, %69 : vector<128x256xf32>
    %71 = math.exp %70 : vector<128x256xf32>
    %cst_24 = arith.constant dense<0.000000e+00> : vector<128xf32>
    %72 = vector.multi_reduction <add>, %71, %cst_24 [1] : vector<128x256xf32> to vector<128xf32>
    %73 = vector.shape_cast %72 : vector<128xf32> to vector<128x1xf32>
    %74 = tpu.reciprocal %73 {approx = true} : vector<128x1xf32> -> vector<128x1xf32>
    %75 = vector.broadcast %74 : vector<128x1xf32> to vector<128x256xf32>
    %76 = arith.mulf %71, %75 : vector<128x256xf32>
    %77 = arith.truncf %76 : vector<128x256xf32> to vector<128x256xbf16>
    %78 = vector.extract_strided_slice %9 {offsets = [0, 96], sizes = [256, 32], strides = [1, 1]} : vector<256x128xbf16> to vector<256x32xbf16>
    %cst_25 = arith.constant dense<0.000000e+00> : vector<128x32xf32>
    %79 = tpu.matmul %77, %78, %cst_25 {dimension_numbers = #tpu.dot_dimension_numbers<[1], [0], [0], [1], [0, 0, 1, 1], [], []>} : vector<128x256xbf16>, vector<256x32xbf16>, vector<128x32xf32> -> vector<128x32xf32>
    %80 = arith.truncf %79 : vector<128x32xf32> to vector<128x32xbf16>
    %c0_26 = arith.constant 0 : index
    %c96 = arith.constant 96 : index
    %81 = vector.load %arg11[%c0_26, %c96] : memref<128x128xbf16, #tpu.memory_space<vmem>>, vector<128x32xbf16>
    tpu.vector_store %arg11[%c0_26, %c96], %80 {strides = array<i32>} : memref<128x128xbf16, #tpu.memory_space<vmem>>, vector<128x32xbf16>,
    %c0_27 = arith.constant 0 : index
    %c0_28 = arith.constant 0 : index
    %82 = vector.load %arg11[%c0_27, %c0_28] : memref<128x128xbf16, #tpu.memory_space<vmem>>, vector<128x128xbf16>
    %c0_29 = arith.constant 0 : index
    %c0_30 = arith.constant 0 : index
    %83 = vector.load %arg5[%c0_29, %c0_30] : memref<128x128xbf16, #tpu.memory_space<vmem>>, vector<128x128xbf16>
    %cst_31 = arith.constant dense<0.000000e+00> : vector<128x128xf32>
    %84 = tpu.matmul %82, %83, %cst_31 {dimension_numbers = #tpu.dot_dimension_numbers<[1], [0], [0], [1], [0, 0, 1, 1], [], []>} : vector<128x128xbf16>, vector<128x128xbf16>, vector<128x128xf32> -> vector<128x128xf32>
    %85 = arith.addf %3, %84 : vector<128x128xf32>
    %cst_32 = arith.constant dense<0.000000e+00> : vector<128xf32>
    %86 = vector.multi_reduction <add>, %85, %cst_32 [1] : vector<128x128xf32> to vector<128xf32>
    %87 = vector.shape_cast %86 : vector<128xf32> to vector<128x1xf32>
    %cst_33 = arith.constant 1.280000e+02 : f32
    %88 = vector.broadcast %cst_33 : f32 to vector<128x1xf32>
    %89 = arith.divf %87, %88 : vector<128x1xf32>
    %90 = vector.broadcast %89 : vector<128x1xf32> to vector<128x128xf32>
    %91 = arith.subf %85, %90 : vector<128x128xf32>
    %92 = arith.mulf %91, %91 : vector<128x128xf32>
    %cst_34 = arith.constant dense<0.000000e+00> : vector<128xf32>
    %93 = vector.multi_reduction <add>, %92, %cst_34 [1] : vector<128x128xf32> to vector<128xf32>
    %94 = vector.shape_cast %93 : vector<128xf32> to vector<128x1xf32>
    %cst_35 = arith.constant 1.280000e+02 : f32
    %95 = vector.broadcast %cst_35 : f32 to vector<128x1xf32>
    %96 = arith.divf %94, %95 : vector<128x1xf32>
    %97 = vector.broadcast %89 : vector<128x1xf32> to vector<128x128xf32>
    %98 = arith.subf %85, %97 : vector<128x128xf32>
    %cst_36 = arith.constant 9.99999974E-6 : f32
    %99 = vector.broadcast %cst_36 : f32 to vector<128x1xf32>
    %100 = arith.addf %96, %99 : vector<128x1xf32>
    %101 = math.rsqrt %100 : vector<128x1xf32>
    %102 = vector.broadcast %101 : vector<128x1xf32> to vector<128x128xf32>
    %103 = arith.mulf %98, %102 : vector<128x128xf32>
    %104 = arith.truncf %103 : vector<128x128xf32> to vector<128x128xbf16>
    %c0_37 = arith.constant 0 : index
    %c0_38 = arith.constant 0 : index
    %105 = vector.load %arg6[%c0_37, %c0_38] : memref<128x512xbf16, #tpu.memory_space<vmem>>, vector<128x512xbf16>
    %cst_39 = arith.constant dense<0.000000e+00> : vector<128x512xf32>
    %106 = tpu.matmul %104, %105, %cst_39 {dimension_numbers = #tpu.dot_dimension_numbers<[1], [0], [0], [1], [0, 0, 1, 1], [], []>} : vector<128x128xbf16>, vector<128x512xbf16>, vector<128x512xf32> -> vector<128x512xf32>
    %c0_40 = arith.constant 0 : index
    %c0_41 = arith.constant 0 : index
    %107 = vector.load %arg7[%c0_40, %c0_41] : memref<1x512xf32, #tpu.memory_space<vmem>>, vector<1x512xf32>
    %108 = vector.broadcast %107 : vector<1x512xf32> to vector<128x512xf32>
    %109 = arith.addf %106, %108 : vector<128x512xf32>
    %cst_42 = arith.constant 0.000000e+00 : f32
    %110 = vector.broadcast %cst_42 : f32 to vector<128x512xf32>
    %111 = arith.maximumf %109, %110 : vector<128x512xf32>
    %112 = arith.truncf %111 : vector<128x512xf32> to vector<128x512xbf16>
    %c0_43 = arith.constant 0 : index
    %c0_44 = arith.constant 0 : index
    %113 = vector.load %arg8[%c0_43, %c0_44] : memref<512x128xbf16, #tpu.memory_space<vmem>>, vector<512x128xbf16>
    %cst_45 = arith.constant dense<0.000000e+00> : vector<128x128xf32>
    %114 = tpu.matmul %112, %113, %cst_45 {dimension_numbers = #tpu.dot_dimension_numbers<[1], [0], [0], [1], [0, 0, 1, 1], [], []>} : vector<128x512xbf16>, vector<512x128xbf16>, vector<128x128xf32> -> vector<128x128xf32>
    %c0_46 = arith.constant 0 : index
    %c0_47 = arith.constant 0 : index
    %115 = vector.load %arg9[%c0_46, %c0_47] : memref<1x128xf32, #tpu.memory_space<vmem>>, vector<1x128xf32>
    %116 = vector.broadcast %115 : vector<1x128xf32> to vector<128x128xf32>
    %117 = arith.addf %114, %116 : vector<128x128xf32>
    %118 = arith.addf %103, %117 : vector<128x128xf32>
    %cst_48 = arith.constant dense<0.000000e+00> : vector<128xf32>
    %119 = vector.multi_reduction <add>, %118, %cst_48 [1] : vector<128x128xf32> to vector<128xf32>
    %120 = vector.shape_cast %119 : vector<128xf32> to vector<128x1xf32>
    %cst_49 = arith.constant 1.280000e+02 : f32
    %121 = vector.broadcast %cst_49 : f32 to vector<128x1xf32>
    %122 = arith.divf %120, %121 : vector<128x1xf32>
    %123 = vector.broadcast %122 : vector<128x1xf32> to vector<128x128xf32>
    %124 = arith.subf %118, %123 : vector<128x128xf32>
    %125 = arith.mulf %124, %124 : vector<128x128xf32>
    %cst_50 = arith.constant dense<0.000000e+00> : vector<128xf32>
    %126 = vector.multi_reduction <add>, %125, %cst_50 [1] : vector<128x128xf32> to vector<128xf32>
    %127 = vector.shape_cast %126 : vector<128xf32> to vector<128x1xf32>
    %cst_51 = arith.constant 1.280000e+02 : f32
    %128 = vector.broadcast %cst_51 : f32 to vector<128x1xf32>
    %129 = arith.divf %127, %128 : vector<128x1xf32>
    %130 = vector.broadcast %122 : vector<128x1xf32> to vector<128x128xf32>
    %131 = arith.subf %118, %130 : vector<128x128xf32>
    %cst_52 = arith.constant 9.99999974E-6 : f32
    %132 = vector.broadcast %cst_52 : f32 to vector<128x1xf32>
    %133 = arith.addf %129, %132 : vector<128x1xf32>
    %134 = math.rsqrt %133 : vector<128x1xf32>
    %135 = vector.broadcast %134 : vector<128x1xf32> to vector<128x128xf32>
    %136 = arith.mulf %131, %135 : vector<128x128xf32>
    %c0_53 = arith.constant 0 : index
    %c0_54 = arith.constant 0 : index
    %137 = vector.load %arg10[%c0_53, %c0_54] : memref<128x128xf32, #tpu.memory_space<vmem>>, vector<128x128xf32>
    tpu.vector_store %arg10[%c0_53, %c0_54], %136 {strides = array<i32>} : memref<128x128xf32, #tpu.memory_space<vmem>>, vector<128x128xf32>,
    return
  }
  func.func @transform_0(%arg0: i32) -> (i32, i32) {
    %c0_i32 = arith.constant 0 : i32
    %c0_i32_0 = arith.constant 0 : i32
    %c0_i32_1 = arith.constant 0 : i32
    return %c0_i32, %c0_i32_0 : i32, i32
  }
  func.func @transform_1(%arg0: i32) -> (i32, i32) {
    %c0_i32 = arith.constant 0 : i32
    %c0_i32_0 = arith.constant 0 : i32
    %c0_i32_1 = arith.constant 0 : i32
    return %c0_i32, %c0_i32_0 : i32, i32
  }
  func.func @transform_2(%arg0: i32) -> (i32, i32) {
    %c0_i32 = arith.constant 0 : i32
    %c0_i32_0 = arith.constant 0 : i32
    %c0_i32_1 = arith.constant 0 : i32
    return %c0_i32, %c0_i32_0 : i32, i32
  }
  func.func @transform_3(%arg0: i32) -> (i32, i32) {
    %c0_i32 = arith.constant 0 : i32
    %c0_i32_0 = arith.constant 0 : i32
    %c0_i32_1 = arith.constant 0 : i32
    return %c0_i32, %c0_i32_0 : i32, i32
  }
  func.func @transform_4(%arg0: i32) -> (i32, i32) {
    %c0_i32 = arith.constant 0 : i32
    %c0_i32_0 = arith.constant 0 : i32
    %c0_i32_1 = arith.constant 0 : i32
    return %c0_i32, %c0_i32_0 : i32, i32
  }
  func.func @transform_5(%arg0: i32) -> (i32, i32) {
    %c0_i32 = arith.constant 0 : i32
    %c0_i32_0 = arith.constant 0 : i32
    %c0_i32_1 = arith.constant 0 : i32
    return %c0_i32, %c0_i32_0 : i32, i32
  }
  func.func @transform_6(%arg0: i32) -> (i32, i32) {
    %c0_i32 = arith.constant 0 : i32
    %c0_i32_0 = arith.constant 0 : i32
    %c0_i32_1 = arith.constant 0 : i32
    return %c0_i32, %c0_i32_0 : i32, i32
  }
  func.func @transform_7(%arg0: i32) -> (i32, i32) {
    %c0_i32 = arith.constant 0 : i32
    %c0_i32_0 = arith.constant 0 : i32
    %c0_i32_1 = arith.constant 0 : i32
    return %c0_i32, %c0_i32_0 : i32, i32
  }
  func.func @transform_8(%arg0: i32) -> (i32, i32) {
    %c0_i32 = arith.constant 0 : i32
    %c0_i32_0 = arith.constant 0 : i32
    %c0_i32_1 = arith.constant 0 : i32
    return %c0_i32, %c0_i32_0 : i32, i32
  }
  func.func @transform_9(%arg0: i32) -> (i32, i32) {
    %c0_i32 = arith.constant 0 : i32
    %c0_i32_0 = arith.constant 0 : i32
    return %arg0, %c0_i32 : i32, i32
  }
}

module attributes {stable_mosaic.version = 11 : i64} {
  func.func @encoder_block_kernel(%arg0: i32, %arg1: memref<256x128xf32, #tpu.memory_space<vmem>>, %arg2: memref<256x128xbf16, #tpu.memory_space<vmem>>, %arg3: memref<256x128xbf16, #tpu.memory_space<vmem>>, %arg4: memref<128x128xbf16, #tpu.memory_space<vmem>>, %arg5: memref<128x128xbf16, #tpu.memory_space<vmem>>, %arg6: memref<128x512xbf16, #tpu.memory_space<vmem>>, %arg7: memref<1x512xf32, #tpu.memory_space<vmem>>, %arg8: memref<512x128xbf16, #tpu.memory_space<vmem>>, %arg9: memref<1x128xf32, #tpu.memory_space<vmem>>, %arg10: memref<128x128xf32, #tpu.memory_space<vmem>>, %arg11: memref<128x128xbf16, #tpu.memory_space<vmem>>) attributes {dimension_semantics = [#tpu.dimension_semantics<parallel>], iteration_bounds = array<i64: 2>, scalar_prefetch = 0 : i64, scratch_operands = 1 : i64, tpu.core_type = #tpu.core_type<tc>, window_params = [{pipeline_mode = #tpu.pipeline_mode<synchronous>, transform_indices = @transform_0, window_bounds = array<i64: 256, 128>}, {pipeline_mode = #tpu.pipeline_mode<synchronous>, transform_indices = @transform_1, window_bounds = array<i64: 256, 128>}, {pipeline_mode = #tpu.pipeline_mode<synchronous>, transform_indices = @transform_2, window_bounds = array<i64: 256, 128>}, {pipeline_mode = #tpu.pipeline_mode<synchronous>, transform_indices = @transform_3, window_bounds = array<i64: 128, 128>}, {pipeline_mode = #tpu.pipeline_mode<synchronous>, transform_indices = @transform_4, window_bounds = array<i64: 128, 128>}, {pipeline_mode = #tpu.pipeline_mode<synchronous>, transform_indices = @transform_5, window_bounds = array<i64: 128, 512>}, {pipeline_mode = #tpu.pipeline_mode<synchronous>, transform_indices = @transform_6, window_bounds = array<i64: 1, 512>}, {pipeline_mode = #tpu.pipeline_mode<synchronous>, transform_indices = @transform_7, window_bounds = array<i64: 512, 128>}, {pipeline_mode = #tpu.pipeline_mode<synchronous>, transform_indices = @transform_8, window_bounds = array<i64: 1, 128>}, {transform_indices = @transform_9, window_bounds = array<i64: 128, 128>}]} {
    %c128_i32 = arith.constant 128 : i32
    %0 = arith.muli %arg0, %c128_i32 : i32
    %1 = tpu.assume_multiple %0, 128 : i32
    %2 = arith.index_cast %1 : i32 to index
    %c0 = arith.constant 0 : index
    %3 = vector.load %arg1[%2, %c0] : memref<256x128xf32, #tpu.memory_space<vmem>>, vector<128x128xf32>
    %4 = arith.truncf %3 : vector<128x128xf32> to vector<128x128xbf16>
    %c0_0 = arith.constant 0 : index
    %c0_1 = arith.constant 0 : index
    %5 = vector.load %arg4[%c0_0, %c0_1] : memref<128x128xbf16, #tpu.memory_space<vmem>>, vector<128x128xbf16>
    %cst = arith.constant dense<0.000000e+00> : vector<128x128xf32>
    %6 = tpu.matmul %4, %5, %cst {dimension_numbers = #tpu.dot_dimension_numbers<[1], [0], [0], [1], [0, 0, 1, 1], [], []>} : vector<128x128xbf16>, vector<128x128xbf16>, vector<128x128xf32> -> vector<128x128xf32>
    %7 = arith.truncf %6 : vector<128x128xf32> to vector<128x128xbf16>
    %c0_2 = arith.constant 0 : index
    %c0_3 = arith.constant 0 : index
    %8 = vector.load %arg2[%c0_2, %c0_3] : memref<256x128xbf16, #tpu.memory_space<vmem>>, vector<256x128xbf16>
    %c0_4 = arith.constant 0 : index
    %c0_5 = arith.constant 0 : index
    %9 = vector.load %arg3[%c0_4, %c0_5] : memref<256x128xbf16, #tpu.memory_space<vmem>>, vector<256x128xbf16>
    %10 = vector.extract_strided_slice %7 {offsets = [0, 0], sizes = [128, 32], strides = [1, 1]} : vector<128x128xbf16> to vector<128x32xbf16>
    %11 = vector.extract_strided_slice %8 {offsets = [0, 0], sizes = [256, 32], strides = [1, 1]} : vector<256x128xbf16> to vector<256x32xbf16>
    %cst_6 = arith.constant dense<0.000000e+00> : vector<128x256xf32>
    %12 = tpu.matmul %10, %11, %cst_6 {dimension_numbers = #tpu.dot_dimension_numbers<[1], [1], [0], [0], [0, 0, 1, 0], [], []>} : vector<128x32xbf16>, vector<256x32xbf16>, vector<128x256xf32> -> vector<128x256xf32>
    %cst_7 = arith.constant dense<0xFF800000> : vector<128xf32>
    %13 = vector.multi_reduction <maximumf>, %12, %cst_7 [1] : vector<128x256xf32> to vector<128xf32>
    %14 = vector.shape_cast %13 : vector<128xf32> to vector<128x1xf32>
    %15 = vector.broadcast %14 : vector<128x1xf32> to vector<128x256xf32>
    %16 = arith.subf %12, %15 : vector<128x256xf32>
    %17 = math.exp %16 : vector<128x256xf32>
    %cst_8 = arith.constant dense<0.000000e+00> : vector<128xf32>
    %18 = vector.multi_reduction <add>, %17, %cst_8 [1] : vector<128x256xf32> to vector<128xf32>
    %19 = vector.shape_cast %18 : vector<128xf32> to vector<128x1xf32>
    %20 = tpu.reciprocal %19 {approx = true} : vector<128x1xf32> -> vector<128x1xf32>
    %21 = vector.broadcast %20 : vector<128x1xf32> to vector<128x256xf32>
    %22 = arith.mulf %17, %21 : vector<128x256xf32>
    %23 = arith.truncf %22 : vector<128x256xf32> to vector<128x256xbf16>
    %24 = vector.extract_strided_slice %9 {offsets = [0, 0], sizes = [256, 32], strides = [1, 1]} : vector<256x128xbf16> to vector<256x32xbf16>
    %cst_9 = arith.constant dense<0.000000e+00> : vector<128x32xf32>
    %25 = tpu.matmul %23, %24, %cst_9 {dimension_numbers = #tpu.dot_dimension_numbers<[1], [0], [0], [1], [0, 0, 1, 1], [], []>} : vector<128x256xbf16>, vector<256x32xbf16>, vector<128x32xf32> -> vector<128x32xf32>
    %26 = arith.truncf %25 : vector<128x32xf32> to vector<128x32xbf16>
    %c0_10 = arith.constant 0 : index
    %c0_11 = arith.constant 0 : index
    %27 = vector.load %arg11[%c0_10, %c0_11] : memref<128x128xbf16, #tpu.memory_space<vmem>>, vector<128x32xbf16>
    tpu.vector_store %arg11[%c0_10, %c0_11], %26 {strides = array<i32>} : memref<128x128xbf16, #tpu.memory_space<vmem>>, vector<128x32xbf16>,
    %28 = vector.extract_strided_slice %7 {offsets = [0, 32], sizes = [128, 32], strides = [1, 1]} : vector<128x128xbf16> to vector<128x32xbf16>
    %29 = vector.extract_strided_slice %8 {offsets = [0, 32], sizes = [256, 32], strides = [1, 1]} : vector<256x128xbf16> to vector<256x32xbf16>
    %cst_12 = arith.constant dense<0.000000e+00> : vector<128x256xf32>
    %30 = tpu.matmul %28, %29, %cst_12 {dimension_numbers = #tpu.dot_dimension_numbers<[1], [1], [0], [0], [0, 0, 1, 0], [], []>} : vector<128x32xbf16>, vector<256x32xbf16>, vector<128x256xf32> -> vector<128x256xf32>
    %cst_13 = arith.constant dense<0xFF800000> : vector<128xf32>
    %31 = vector.multi_reduction <maximumf>, %30, %cst_13 [1] : vector<128x256xf32> to vector<128xf32>
    %32 = vector.shape_cast %31 : vector<128xf32> to vector<128x1xf32>
    %33 = vector.broadcast %32 : vector<128x1xf32> to vector<128x256xf32>
    %34 = arith.subf %30, %33 : vector<128x256xf32>
    %35 = math.exp %34 : vector<128x256xf32>
    %cst_14 = arith.constant dense<0.000000e+00> : vector<128xf32>
    %36 = vector.multi_reduction <add>, %35, %cst_14 [1] : vector<128x256xf32> to vector<128xf32>
    %37 = vector.shape_cast %36 : vector<128xf32> to vector<128x1xf32>
    %38 = tpu.reciprocal %37 {approx = true} : vector<128x1xf32> -> vector<128x1xf32>
    %39 = vector.broadcast %38 : vector<128x1xf32> to vector<128x256xf32>
    %40 = arith.mulf %35, %39 : vector<128x256xf32>
    %41 = arith.truncf %40 : vector<128x256xf32> to vector<128x256xbf16>
    %42 = vector.extract_strided_slice %9 {offsets = [0, 32], sizes = [256, 32], strides = [1, 1]} : vector<256x128xbf16> to vector<256x32xbf16>
    %cst_15 = arith.constant dense<0.000000e+00> : vector<128x32xf32>
    %43 = tpu.matmul %41, %42, %cst_15 {dimension_numbers = #tpu.dot_dimension_numbers<[1], [0], [0], [1], [0, 0, 1, 1], [], []>} : vector<128x256xbf16>, vector<256x32xbf16>, vector<128x32xf32> -> vector<128x32xf32>
    %44 = arith.truncf %43 : vector<128x32xf32> to vector<128x32xbf16>
    %c0_16 = arith.constant 0 : index
    %c32 = arith.constant 32 : index
    %45 = vector.load %arg11[%c0_16, %c32] : memref<128x128xbf16, #tpu.memory_space<vmem>>, vector<128x32xbf16>
    tpu.vector_store %arg11[%c0_16, %c32], %44 {strides = array<i32>} : memref<128x128xbf16, #tpu.memory_space<vmem>>, vector<128x32xbf16>,
    %46 = vector.extract_strided_slice %7 {offsets = [0, 64], sizes = [128, 32], strides = [1, 1]} : vector<128x128xbf16> to vector<128x32xbf16>
    %47 = vector.extract_strided_slice %8 {offsets = [0, 64], sizes = [256, 32], strides = [1, 1]} : vector<256x128xbf16> to vector<256x32xbf16>
    %cst_17 = arith.constant dense<0.000000e+00> : vector<128x256xf32>
    %48 = tpu.matmul %46, %47, %cst_17 {dimension_numbers = #tpu.dot_dimension_numbers<[1], [1], [0], [0], [0, 0, 1, 0], [], []>} : vector<128x32xbf16>, vector<256x32xbf16>, vector<128x256xf32> -> vector<128x256xf32>
    %cst_18 = arith.constant dense<0xFF800000> : vector<128xf32>
    %49 = vector.multi_reduction <maximumf>, %48, %cst_18 [1] : vector<128x256xf32> to vector<128xf32>
    %50 = vector.shape_cast %49 : vector<128xf32> to vector<128x1xf32>
    %51 = vector.broadcast %50 : vector<128x1xf32> to vector<128x256xf32>
    %52 = arith.subf %48, %51 : vector<128x256xf32>
    %53 = math.exp %52 : vector<128x256xf32>
    %cst_19 = arith.constant dense<0.000000e+00> : vector<128xf32>
    %54 = vector.multi_reduction <add>, %53, %cst_19 [1] : vector<128x256xf32> to vector<128xf32>
    %55 = vector.shape_cast %54 : vector<128xf32> to vector<128x1xf32>
    %56 = tpu.reciprocal %55 {approx = true} : vector<128x1xf32> -> vector<128x1xf32>
    %57 = vector.broadcast %56 : vector<128x1xf32> to vector<128x256xf32>
    %58 = arith.mulf %53, %57 : vector<128x256xf32>
    %59 = arith.truncf %58 : vector<128x256xf32> to vector<128x256xbf16>
    %60 = vector.extract_strided_slice %9 {offsets = [0, 64], sizes = [256, 32], strides = [1, 1]} : vector<256x128xbf16> to vector<256x32xbf16>
    %cst_20 = arith.constant dense<0.000000e+00> : vector<128x32xf32>
    %61 = tpu.matmul %59, %60, %cst_20 {dimension_numbers = #tpu.dot_dimension_numbers<[1], [0], [0], [1], [0, 0, 1, 1], [], []>} : vector<128x256xbf16>, vector<256x32xbf16>, vector<128x32xf32> -> vector<128x32xf32>
    %62 = arith.truncf %61 : vector<128x32xf32> to vector<128x32xbf16>
    %c0_21 = arith.constant 0 : index
    %c64 = arith.constant 64 : index
    %63 = vector.load %arg11[%c0_21, %c64] : memref<128x128xbf16, #tpu.memory_space<vmem>>, vector<128x32xbf16>
    tpu.vector_store %arg11[%c0_21, %c64], %62 {strides = array<i32>} : memref<128x128xbf16, #tpu.memory_space<vmem>>, vector<128x32xbf16>,
    %64 = vector.extract_strided_slice %7 {offsets = [0, 96], sizes = [128, 32], strides = [1, 1]} : vector<128x128xbf16> to vector<128x32xbf16>
    %65 = vector.extract_strided_slice %8 {offsets = [0, 96], sizes = [256, 32], strides = [1, 1]} : vector<256x128xbf16> to vector<256x32xbf16>
    %cst_22 = arith.constant dense<0.000000e+00> : vector<128x256xf32>
    %66 = tpu.matmul %64, %65, %cst_22 {dimension_numbers = #tpu.dot_dimension_numbers<[1], [1], [0], [0], [0, 0, 1, 0], [], []>} : vector<128x32xbf16>, vector<256x32xbf16>, vector<128x256xf32> -> vector<128x256xf32>
    %cst_23 = arith.constant dense<0xFF800000> : vector<128xf32>
    %67 = vector.multi_reduction <maximumf>, %66, %cst_23 [1] : vector<128x256xf32> to vector<128xf32>
    %68 = vector.shape_cast %67 : vector<128xf32> to vector<128x1xf32>
    %69 = vector.broadcast %68 : vector<128x1xf32> to vector<128x256xf32>
    %70 = arith.subf %66, %69 : vector<128x256xf32>
    %71 = math.exp %70 : vector<128x256xf32>
    %cst_24 = arith.constant dense<0.000000e+00> : vector<128xf32>
    %72 = vector.multi_reduction <add>, %71, %cst_24 [1] : vector<128x256xf32> to vector<128xf32>
    %73 = vector.shape_cast %72 : vector<128xf32> to vector<128x1xf32>
    %74 = tpu.reciprocal %73 {approx = true} : vector<128x1xf32> -> vector<128x1xf32>
    %75 = vector.broadcast %74 : vector<128x1xf32> to vector<128x256xf32>
    %76 = arith.mulf %71, %75 : vector<128x256xf32>
    %77 = arith.truncf %76 : vector<128x256xf32> to vector<128x256xbf16>
    %78 = vector.extract_strided_slice %9 {offsets = [0, 96], sizes = [256, 32], strides = [1, 1]} : vector<256x128xbf16> to vector<256x32xbf16>
    %cst_25 = arith.constant dense<0.000000e+00> : vector<128x32xf32>
    %79 = tpu.matmul %77, %78, %cst_25 {dimension_numbers = #tpu.dot_dimension_numbers<[1], [0], [0], [1], [0, 0, 1, 1], [], []>} : vector<128x256xbf16>, vector<256x32xbf16>, vector<128x32xf32> -> vector<128x32xf32>
    %80 = arith.truncf %79 : vector<128x32xf32> to vector<128x32xbf16>
    %c0_26 = arith.constant 0 : index
    %c96 = arith.constant 96 : index
    %81 = vector.load %arg11[%c0_26, %c96] : memref<128x128xbf16, #tpu.memory_space<vmem>>, vector<128x32xbf16>
    tpu.vector_store %arg11[%c0_26, %c96], %80 {strides = array<i32>} : memref<128x128xbf16, #tpu.memory_space<vmem>>, vector<128x32xbf16>,
    %c0_27 = arith.constant 0 : index
    %c0_28 = arith.constant 0 : index
    %82 = vector.load %arg11[%c0_27, %c0_28] : memref<128x128xbf16, #tpu.memory_space<vmem>>, vector<128x128xbf16>
    %c0_29 = arith.constant 0 : index
    %c0_30 = arith.constant 0 : index
    %83 = vector.load %arg5[%c0_29, %c0_30] : memref<128x128xbf16, #tpu.memory_space<vmem>>, vector<128x128xbf16>
    %cst_31 = arith.constant dense<0.000000e+00> : vector<128x128xf32>
    %84 = tpu.matmul %82, %83, %cst_31 {dimension_numbers = #tpu.dot_dimension_numbers<[1], [0], [0], [1], [0, 0, 1, 1], [], []>} : vector<128x128xbf16>, vector<128x128xbf16>, vector<128x128xf32> -> vector<128x128xf32>
    %85 = arith.addf %3, %84 : vector<128x128xf32>
    %cst_32 = arith.constant dense<0.000000e+00> : vector<128xf32>
    %86 = vector.multi_reduction <add>, %85, %cst_32 [1] : vector<128x128xf32> to vector<128xf32>
    %87 = vector.shape_cast %86 : vector<128xf32> to vector<128x1xf32>
    %cst_33 = arith.constant 1.280000e+02 : f32
    %88 = vector.broadcast %cst_33 : f32 to vector<128x1xf32>
    %89 = arith.divf %87, %88 : vector<128x1xf32>
    %90 = vector.broadcast %89 : vector<128x1xf32> to vector<128x128xf32>
    %91 = arith.subf %85, %90 : vector<128x128xf32>
    %92 = arith.mulf %91, %91 : vector<128x128xf32>
    %cst_34 = arith.constant dense<0.000000e+00> : vector<128xf32>
    %93 = vector.multi_reduction <add>, %92, %cst_34 [1] : vector<128x128xf32> to vector<128xf32>
    %94 = vector.shape_cast %93 : vector<128xf32> to vector<128x1xf32>
    %cst_35 = arith.constant 1.280000e+02 : f32
    %95 = vector.broadcast %cst_35 : f32 to vector<128x1xf32>
    %96 = arith.divf %94, %95 : vector<128x1xf32>
    %97 = vector.broadcast %89 : vector<128x1xf32> to vector<128x128xf32>
    %98 = arith.subf %85, %97 : vector<128x128xf32>
    %cst_36 = arith.constant 9.99999974E-6 : f32
    %99 = vector.broadcast %cst_36 : f32 to vector<128x1xf32>
    %100 = arith.addf %96, %99 : vector<128x1xf32>
    %101 = math.rsqrt %100 : vector<128x1xf32>
    %102 = vector.broadcast %101 : vector<128x1xf32> to vector<128x128xf32>
    %103 = arith.mulf %98, %102 : vector<128x128xf32>
    %104 = arith.truncf %103 : vector<128x128xf32> to vector<128x128xbf16>
    %c0_37 = arith.constant 0 : index
    %c0_38 = arith.constant 0 : index
    %105 = vector.load %arg6[%c0_37, %c0_38] : memref<128x512xbf16, #tpu.memory_space<vmem>>, vector<128x512xbf16>
    %cst_39 = arith.constant dense<0.000000e+00> : vector<128x512xf32>
    %106 = tpu.matmul %104, %105, %cst_39 {dimension_numbers = #tpu.dot_dimension_numbers<[1], [0], [0], [1], [0, 0, 1, 1], [], []>} : vector<128x128xbf16>, vector<128x512xbf16>, vector<128x512xf32> -> vector<128x512xf32>
    %c0_40 = arith.constant 0 : index
    %c0_41 = arith.constant 0 : index
    %107 = vector.load %arg7[%c0_40, %c0_41] : memref<1x512xf32, #tpu.memory_space<vmem>>, vector<1x512xf32>
    %108 = vector.broadcast %107 : vector<1x512xf32> to vector<128x512xf32>
    %109 = arith.addf %106, %108 : vector<128x512xf32>
    %cst_42 = arith.constant 0.000000e+00 : f32
    %110 = vector.broadcast %cst_42 : f32 to vector<128x512xf32>
    %111 = arith.maximumf %109, %110 : vector<128x512xf32>
    %112 = arith.truncf %111 : vector<128x512xf32> to vector<128x512xbf16>
    %c0_43 = arith.constant 0 : index
    %c0_44 = arith.constant 0 : index
    %113 = vector.load %arg8[%c0_43, %c0_44] : memref<512x128xbf16, #tpu.memory_space<vmem>>, vector<512x128xbf16>
    %cst_45 = arith.constant dense<0.000000e+00> : vector<128x128xf32>
    %114 = tpu.matmul %112, %113, %cst_45 {dimension_numbers = #tpu.dot_dimension_numbers<[1], [0], [0], [1], [0, 0, 1, 1], [], []>} : vector<128x512xbf16>, vector<512x128xbf16>, vector<128x128xf32> -> vector<128x128xf32>
    %c0_46 = arith.constant 0 : index
    %c0_47 = arith.constant 0 : index
    %115 = vector.load %arg9[%c0_46, %c0_47] : memref<1x128xf32, #tpu.memory_space<vmem>>, vector<1x128xf32>
    %116 = vector.broadcast %115 : vector<1x128xf32> to vector<128x128xf32>
    %117 = arith.addf %114, %116 : vector<128x128xf32>
    %118 = arith.addf %103, %117 : vector<128x128xf32>
    %cst_48 = arith.constant dense<0.000000e+00> : vector<128xf32>
    %119 = vector.multi_reduction <add>, %118, %cst_48 [1] : vector<128x128xf32> to vector<128xf32>
    %120 = vector.shape_cast %119 : vector<128xf32> to vector<128x1xf32>
    %cst_49 = arith.constant 1.280000e+02 : f32
    %121 = vector.broadcast %cst_49 : f32 to vector<128x1xf32>
    %122 = arith.divf %120, %121 : vector<128x1xf32>
    %123 = vector.broadcast %122 : vector<128x1xf32> to vector<128x128xf32>
    %124 = arith.subf %118, %123 : vector<128x128xf32>
    %125 = arith.mulf %124, %124 : vector<128x128xf32>
    %cst_50 = arith.constant dense<0.000000e+00> : vector<128xf32>
    %126 = vector.multi_reduction <add>, %125, %cst_50 [1] : vector<128x128xf32> to vector<128xf32>
    %127 = vector.shape_cast %126 : vector<128xf32> to vector<128x1xf32>
    %cst_51 = arith.constant 1.280000e+02 : f32
    %128 = vector.broadcast %cst_51 : f32 to vector<128x1xf32>
    %129 = arith.divf %127, %128 : vector<128x1xf32>
    %130 = vector.broadcast %122 : vector<128x1xf32> to vector<128x128xf32>
    %131 = arith.subf %118, %130 : vector<128x128xf32>
    %cst_52 = arith.constant 9.99999974E-6 : f32
    %132 = vector.broadcast %cst_52 : f32 to vector<128x1xf32>
    %133 = arith.addf %129, %132 : vector<128x1xf32>
    %134 = math.rsqrt %133 : vector<128x1xf32>
    %135 = vector.broadcast %134 : vector<128x1xf32> to vector<128x128xf32>
    %136 = arith.mulf %131, %135 : vector<128x128xf32>
    %c0_53 = arith.constant 0 : index
    %c0_54 = arith.constant 0 : index
    %137 = vector.load %arg10[%c0_53, %c0_54] : memref<128x128xf32, #tpu.memory_space<vmem>>, vector<128x128xf32>
    tpu.vector_store %arg10[%c0_53, %c0_54], %136 {strides = array<i32>} : memref<128x128xf32, #tpu.memory_space<vmem>>, vector<128x128xf32>,
    return
  }
  func.func @transform_0(%arg0: i32) -> (i32, i32) {
    %c0_i32 = arith.constant 0 : i32
    %c0_i32_0 = arith.constant 0 : i32
    %c0_i32_1 = arith.constant 0 : i32
    return %c0_i32, %c0_i32_0 : i32, i32
  }
  func.func @transform_1(%arg0: i32) -> (i32, i32) {
    %c0_i32 = arith.constant 0 : i32
    %c0_i32_0 = arith.constant 0 : i32
    %c0_i32_1 = arith.constant 0 : i32
    return %c0_i32, %c0_i32_0 : i32, i32
  }
  func.func @transform_2(%arg0: i32) -> (i32, i32) {
    %c0_i32 = arith.constant 0 : i32
    %c0_i32_0 = arith.constant 0 : i32
    %c0_i32_1 = arith.constant 0 : i32
    return %c0_i32, %c0_i32_0 : i32, i32
  }
  func.func @transform_3(%arg0: i32) -> (i32, i32) {
    %c0_i32 = arith.constant 0 : i32
    %c0_i32_0 = arith.constant 0 : i32
    %c0_i32_1 = arith.constant 0 : i32
    return %c0_i32, %c0_i32_0 : i32, i32
  }
  func.func @transform_4(%arg0: i32) -> (i32, i32) {
    %c0_i32 = arith.constant 0 : i32
    %c0_i32_0 = arith.constant 0 : i32
    %c0_i32_1 = arith.constant 0 : i32
    return %c0_i32, %c0_i32_0 : i32, i32
  }
  func.func @transform_5(%arg0: i32) -> (i32, i32) {
    %c0_i32 = arith.constant 0 : i32
    %c0_i32_0 = arith.constant 0 : i32
    %c0_i32_1 = arith.constant 0 : i32
    return %c0_i32, %c0_i32_0 : i32, i32
  }
  func.func @transform_6(%arg0: i32) -> (i32, i32) {
    %c0_i32 = arith.constant 0 : i32
    %c0_i32_0 = arith.constant 0 : i32
    %c0_i32_1 = arith.constant 0 : i32
    return %c0_i32, %c0_i32_0 : i32, i32
  }
  func.func @transform_7(%arg0: i32) -> (i32, i32) {
    %c0_i32 = arith.constant 0 : i32
    %c0_i32_0 = arith.constant 0 : i32
    %c0_i32_1 = arith.constant 0 : i32
    return %c0_i32, %c0_i32_0 : i32, i32
  }
  func.func @transform_8(%arg0: i32) -> (i32, i32) {
    %c0_i32 = arith.constant 0 : i32
    %c0_i32_0 = arith.constant 0 : i32
    %c0_i32_1 = arith.constant 0 : i32
    return %c0_i32, %c0_i32_0 : i32, i32
  }
  func.func @transform_9(%arg0: i32) -> (i32, i32) {
    %c0_i32 = arith.constant 0 : i32
    %c0_i32_0 = arith.constant 0 : i32
    return %arg0, %c0_i32 : i32, i32
  }
}

</mosaic_0001>

<llo_original>
// kernel: tpu_custom_call.1
$region0: #{tpu_custom_call.1}
  #allocation0 [shape = 'u32[]', space=smem, size = 0x4, offset = 0x4, fixed_abs, tag = 'smem constant byte address 0x4 - core index']
  #allocation1 [shape = 'u32[144,128]{1,0:T(1,128)}', space=vmem, size = 0x12000, scoped, tag = 'internal scratch']
  #allocation2 [shape = 'bf16[128,128]{1,0:T(16,128)(2,1)}', space=vmem, size = 0x8000, scoped, tag = 'scratch operand']
  %s0 = inlined_call_operand.hbm [shape: f32[256,128], index: 0, kind: input, shape index: {}]
  %s1 = inlined_call_operand.hbm [shape: bf16[256,128], index: 1, kind: input, shape index: {}]
  %s2 = inlined_call_operand.hbm [shape: bf16[256,128], index: 2, kind: input, shape index: {}]
  %s3 = inlined_call_operand.hbm [shape: bf16[128,128], index: 3, kind: input, shape index: {}]
  %s4 = inlined_call_operand.hbm [shape: bf16[128,128], index: 4, kind: input, shape index: {}]
  %s5 = inlined_call_operand.hbm [shape: bf16[128,512], index: 5, kind: input, shape index: {}]
  %s6 = inlined_call_operand.vmem [shape: f32[1,512], index: 6, kind: input, shape index: {}]
  %s7 = inlined_call_operand.hbm [shape: bf16[512,128], index: 7, kind: input, shape index: {}]
  %s8 = inlined_call_operand.vmem [shape: f32[1,128], index: 8, kind: input, shape index: {}]
  %s9 = inlined_call_operand.hbm [shape: f32[256,128], index: 9, kind: output, shape index: {}]
  %s10 = sld [smem:[#allocation0]]
  $region97: #{tpu_custom_call.1} parent=0
    _
  %s12 = ssub.s32 1, %s10
  %s13 = scalar_select 0, %s12, %s10
  $region1: #{tpu_custom_call.1} parent=0
    #allocation3 [shape = 'u8[131072]{0}', space=vmem, size = 0x20000, scoped, tag = 'input window, operand 0, single buffered']
    #allocation4 [shape = 's32[2]{0}', space=sflag, size = 0x8, scoped, tag = 'scoped memory for tpu_custom_call.1']
    #allocation5 [shape = 's32[2]{0}', space=sflag, size = 0x8, scoped, tag = 'scoped memory for tpu_custom_call.1']
    #allocation6 [shape = 'u8[65536]{0}', space=vmem, size = 0x10000, scoped, tag = 'input window, operand 1, single buffered']
    #allocation7 [shape = 's32[1]{0}', space=sflag, size = 0x4, scoped, tag = 'scoped memory for tpu_custom_call.1']
    #allocation8 [shape = 'u8[65536]{0}', space=vmem, size = 0x10000, scoped, tag = 'input window, operand 2, single buffered']
    #allocation9 [shape = 'u8[32768]{0}', space=vmem, size = 0x8000, scoped, tag = 'input window, operand 3, single buffered']
    #allocation10 [shape = 's32[1]{0}', space=sflag, size = 0x4, scoped, tag = 'scoped memory for tpu_custom_call.1']
    #allocation11 [shape = 'u8[32768]{0}', space=vmem, size = 0x8000, scoped, tag = 'input window, operand 4, single buffered']
    #allocation12 [shape = 'u8[131072]{0}', space=vmem, size = 0x20000, scoped, tag = 'input window, operand 5, single buffered']
    #allocation13 [shape = 's32[1]{0}', space=sflag, size = 0x4, scoped, tag = 'scoped memory for tpu_custom_call.1']
    #allocation14 [shape = 'u8[131072]{0}', space=vmem, size = 0x20000, scoped, tag = 'input window, operand 7, single buffered']
    #allocation15 [shape = 'u8[131072]{0}', space=vmem, size = 0x20000, scoped, tag = 'output window, operand 0']
    %14 = vsyncpa [#allocation4], 0
    %15 = vsyncpa [#allocation7], 0
    %16 = vsyncpa [#allocation10], 0
    %17 = vsyncpa [#allocation13], 0
    %18 = vsyncpa [#allocation5], 0
    %s19 = scalar_lea.sflag [#allocation5], 1
    %20 = vsyncpa %s19, 0
    loop: start=0, step=1, limit=4
    $region2: #{tpu_custom_call.1} parent=1 // loop_pre_header
      _
    $region3: #{tpu_custom_call.1} parent=1 // loop_header
      %s22 = sphi 0, %s26
      %p23 = scmp.ge.s32.totalorder %s22, 4
      %s30 = sphi 0, %s30
      %s32 = sphi 0, %s30
      %s33 = sphi 0, %s32
      %s47 = sphi 0, %s33
      %s51 = sphi 0, %s51
      %s53 = sphi 0, %s51
      %s54 = sphi 0, %s53
      %s68 = sphi 0, %s54
      %s72 = sphi 0, %s72
      %s74 = sphi 0, %s72
      %s75 = sphi 0, %s74
      %s89 = sphi 0, %s75
      %s93 = sphi 0, %s93
      %s95 = sphi 0, %s93
      %s96 = sphi 0, %s95
      %s110 = sphi 0, %s96
      %s114 = sphi 0, %s114
      %s116 = sphi 0, %s114
      %s117 = sphi 0, %s116
      %s131 = sphi 0, %s117
      %s135 = sphi 0, %s135
      %s137 = sphi 0, %s135
      %s138 = sphi 0, %s137
      %s152 = sphi 0, %s138
      %s156 = sphi 0, %s156
      %s158 = sphi 0, %s156
      %s159 = sphi 0, %s158
      %s173 = sphi 0, %s159
      %s177 = sphi 0, %s177
      %s179 = sphi 0, %s177
      %s180 = sphi 0, %s179
      %s194 = sphi 0, %s180
      %s198 = sphi 0, %s198
      %s200 = sphi 0, %s198
      %s201 = sphi 0, %s200
      %s215 = sphi 0, %s201
      %s221 = sphi 0, %s223
      %s224 = sphi 0, %s221
      %s225 = sphi 0, %s224
      %s241 = sphi 0, %s225
    $region4: #{tpu_custom_call.1} parent=1 // loop_header_branch
      %25 = sbr.rel (%p23) target = $region8
    $region5: #{tpu_custom_call.1} parent=1 // loop_body
      %s27 = ssub.s32 %s22, 1
      %s28 = ssub.s32 %s22, 2
      %s29 = sadd.s32 %s22, 1
      %s31 = sadd.s32 %s30, 1
      %p34 = scmp.eq.s32.totalorder %s22, 1
      %p35 = scmp.ne.s32.totalorder %s30, %s32
      %p36 = scmp.eq.s32.totalorder %s22, 0
      %p37 = por %p35, %p36
      %p38 = scmp.ne.s32.totalorder %s30, %s32
      %p39 = scmp.eq.s32.totalorder %s27, 1
      %p40 = por %p38, %p39
      %p41 = scmp.ne.s32.totalorder %s32, %s33
      %p42 = scmp.eq.s32.totalorder %s27, 0
      %p43 = por %p41, %p42
      %p44 = scmp.ne.s32.totalorder %s32, %s33
      %p45 = scmp.eq.s32.totalorder %s28, 1
      %p46 = por %p44, %p45
      %p48 = scmp.ne.s32.totalorder %s33, %s47
      %p49 = scmp.eq.s32.totalorder %s28, 0
      %p50 = por %p48, %p49
      %s52 = sadd.s32 %s51, 1
      %p55 = scmp.eq.s32.totalorder %s22, 1
      %p56 = scmp.ne.s32.totalorder %s51, %s53
      %p57 = scmp.eq.s32.totalorder %s22, 0
      %p58 = por %p56, %p57
      %p59 = scmp.ne.s32.totalorder %s51, %s53
      %p60 = scmp.eq.s32.totalorder %s27, 1
      %p61 = por %p59, %p60
      %p62 = scmp.ne.s32.totalorder %s53, %s54
      %p63 = scmp.eq.s32.totalorder %s27, 0
      %p64 = por %p62, %p63
      %p65 = scmp.ne.s32.totalorder %s53, %s54
      %p66 = scmp.eq.s32.totalorder %s28, 1
      %p67 = por %p65, %p66
      %p69 = scmp.ne.s32.totalorder %s54, %s68
      %p70 = scmp.eq.s32.totalorder %s28, 0
      %p71 = por %p69, %p70
      %s73 = sadd.s32 %s72, 1
      %p76 = scmp.eq.s32.totalorder %s22, 1
      %p77 = scmp.ne.s32.totalorder %s72, %s74
      %p78 = scmp.eq.s32.totalorder %s22, 0
      %p79 = por %p77, %p78
      %p80 = scmp.ne.s32.totalorder %s72, %s74
      %p81 = scmp.eq.s32.totalorder %s27, 1
      %p82 = por %p80, %p81
      %p83 = scmp.ne.s32.totalorder %s74, %s75
      %p84 = scmp.eq.s32.totalorder %s27, 0
      %p85 = por %p83, %p84
      %p86 = scmp.ne.s32.totalorder %s74, %s75
      %p87 = scmp.eq.s32.totalorder %s28, 1
      %p88 = por %p86, %p87
      %p90 = scmp.ne.s32.totalorder %s75, %s89
      %p91 = scmp.eq.s32.totalorder %s28, 0
      %p92 = por %p90, %p91
      %s94 = sadd.s32 %s93, 1
      %p97 = scmp.eq.s32.totalorder %s22, 1
      %p98 = scmp.ne.s32.totalorder %s93, %s95
      %p99 = scmp.eq.s32.totalorder %s22, 0
      %p100 = por %p98, %p99
      %p101 = scmp.ne.s32.totalorder %s93, %s95
      %p102 = scmp.eq.s32.totalorder %s27, 1
      %p103 = por %p101, %p102
      %p104 = scmp.ne.s32.totalorder %s95, %s96
      %p105 = scmp.eq.s32.totalorder %s27, 0
      %p106 = por %p104, %p105
      %p107 = scmp.ne.s32.totalorder %s95, %s96
      %p108 = scmp.eq.s32.totalorder %s28, 1
      %p109 = por %p107, %p108
      %p111 = scmp.ne.s32.totalorder %s96, %s110
      %p112 = scmp.eq.s32.totalorder %s28, 0
      %p113 = por %p111, %p112
      %s115 = sadd.s32 %s114, 1
      %p118 = scmp.eq.s32.totalorder %s22, 1
      %p119 = scmp.ne.s32.totalorder %s114, %s116
      %p120 = scmp.eq.s32.totalorder %s22, 0
      %p121 = por %p119, %p120
      %p122 = scmp.ne.s32.totalorder %s114, %s116
      %p123 = scmp.eq.s32.totalorder %s27, 1
      %p124 = por %p122, %p123
      %p125 = scmp.ne.s32.totalorder %s116, %s117
      %p126 = scmp.eq.s32.totalorder %s27, 0
      %p127 = por %p125, %p126
      %p128 = scmp.ne.s32.totalorder %s116, %s117
      %p129 = scmp.eq.s32.totalorder %s28, 1
      %p130 = por %p128, %p129
      %p132 = scmp.ne.s32.totalorder %s117, %s131
      %p133 = scmp.eq.s32.totalorder %s28, 0
      %p134 = por %p132, %p133
      %s136 = sadd.s32 %s135, 1
      %p139 = scmp.eq.s32.totalorder %s22, 1
      %p140 = scmp.ne.s32.totalorder %s135, %s137
      %p141 = scmp.eq.s32.totalorder %s22, 0
      %p142 = por %p140, %p141
      %p143 = scmp.ne.s32.totalorder %s135, %s137
      %p144 = scmp.eq.s32.totalorder %s27, 1
      %p145 = por %p143, %p144
      %p146 = scmp.ne.s32.totalorder %s137, %s138
      %p147 = scmp.eq.s32.totalorder %s27, 0
      %p148 = por %p146, %p147
      %p149 = scmp.ne.s32.totalorder %s137, %s138
      %p150 = scmp.eq.s32.totalorder %s28, 1
      %p151 = por %p149, %p150
      %p153 = scmp.ne.s32.totalorder %s138, %s152
      %p154 = scmp.eq.s32.totalorder %s28, 0
      %p155 = por %p153, %p154
      %s157 = sadd.s32 %s156, 1
      %p160 = scmp.eq.s32.totalorder %s22, 1
      %p161 = scmp.ne.s32.totalorder %s156, %s158
      %p162 = scmp.eq.s32.totalorder %s22, 0
      %p163 = por %p161, %p162
      %p164 = scmp.ne.s32.totalorder %s156, %s158
      %p165 = scmp.eq.s32.totalorder %s27, 1
      %p166 = por %p164, %p165
      %p167 = scmp.ne.s32.totalorder %s158, %s159
      %p168 = scmp.eq.s32.totalorder %s27, 0
      %p169 = por %p167, %p168
      %p170 = scmp.ne.s32.totalorder %s158, %s159
      %p171 = scmp.eq.s32.totalorder %s28, 1
      %p172 = por %p170, %p171
      %p174 = scmp.ne.s32.totalorder %s159, %s173
      %p175 = scmp.eq.s32.totalorder %s28, 0
      %p176 = por %p174, %p175
      %s178 = sadd.s32 %s177, 1
      %p181 = scmp.eq.s32.totalorder %s22, 1
      %p182 = scmp.ne.s32.totalorder %s177, %s179
      %p183 = scmp.eq.s32.totalorder %s22, 0
      %p184 = por %p182, %p183
      %p185 = scmp.ne.s32.totalorder %s177, %s179
      %p186 = scmp.eq.s32.totalorder %s27, 1
      %p187 = por %p185, %p186
      %p188 = scmp.ne.s32.totalorder %s179, %s180
      %p189 = scmp.eq.s32.totalorder %s27, 0
      %p190 = por %p188, %p189
      %p191 = scmp.ne.s32.totalorder %s179, %s180
      %p192 = scmp.eq.s32.totalorder %s28, 1
      %p193 = por %p191, %p192
      %p195 = scmp.ne.s32.totalorder %s180, %s194
      %p196 = scmp.eq.s32.totalorder %s28, 0
      %p197 = por %p195, %p196
      %s199 = sadd.s32 %s198, 1
      %p202 = scmp.eq.s32.totalorder %s22, 1
      %p203 = scmp.ne.s32.totalorder %s198, %s200
      %p204 = scmp.eq.s32.totalorder %s22, 0
      %p205 = por %p203, %p204
      %p206 = scmp.ne.s32.totalorder %s198, %s200
      %p207 = scmp.eq.s32.totalorder %s27, 1
      %p208 = por %p206, %p207
      %p209 = scmp.ne.s32.totalorder %s200, %s201
      %p210 = scmp.eq.s32.totalorder %s27, 0
      %p211 = por %p209, %p210
      %p212 = scmp.ne.s32.totalorder %s200, %s201
      %p213 = scmp.eq.s32.totalorder %s28, 1
      %p214 = por %p212, %p213
      %p216 = scmp.ne.s32.totalorder %s201, %s215
      %p217 = scmp.eq.s32.totalorder %s28, 0
      %p218 = por %p216, %p217
      %s219 = ssub.s32 %s22, %s29
      %p220 = scmp.eq.s32.totalorder %s219, 0
      %s222 = sadd.s32 %s221, 1
      %s223 = scalar_select %p220, %s221, %s222
      %p226 = pneg %p220
      %p227 = scmp.eq.s32.totalorder %s22, 1
      %p228 = por %p226, %p227
      %p229 = scmp.ne.s32.totalorder %s221, %s224
      %p230 = scmp.eq.s32.totalorder %s22, 0
      %p231 = por %p229, %p230
      %p232 = scmp.ne.s32.totalorder %s221, %s224
      %p233 = scmp.eq.s32.totalorder %s27, 1
      %p234 = por %p232, %p233
      %p235 = scmp.ne.s32.totalorder %s224, %s225
      %p236 = scmp.eq.s32.totalorder %s27, 0
      %p237 = por %p235, %p236
      %p238 = scmp.ne.s32.totalorder %s224, %s225
      %p239 = scmp.eq.s32.totalorder %s28, 1
      %p240 = por %p238, %p239
      %p242 = scmp.ne.s32.totalorder %s225, %s241
      %p243 = scmp.eq.s32.totalorder %s28, 0
      %p244 = por %p242, %p243
      %p245 = scmp.le.s32.totalorder 1, %s22
      %p246 = scmp.lt.s32.totalorder %s22, 3
      %p247 = pnand %p245, %p246
      %p248 = pneg %p247
      // Predicated region
      $region9: #{tpu_custom_call.1} parent=5 // pred_check
        _
      $region10: #{tpu_custom_call.1} parent=5 // pred_check_branch
        %250 = sbr.rel (%p247) target = $region12
      $region11: #{tpu_custom_call.1} parent=5 // pred_region
        %s251 = ssub.s32 %s22, 1
        // Predicated region
        $region13: #{tpu_custom_call.1} parent=11 // pred_check
          %p252 = pneg %p43
        $region14: #{tpu_custom_call.1} parent=11 // pred_check_branch
          %254 = sbr.rel (%p252) target = $region16
        $region15: #{tpu_custom_call.1} parent=11 // pred_region
          %s256 = ssub.s32 4096, 4096
          %257 = vsyncadd [#allocation4], %s256
          %s258 = sshll.u32 [#allocation3], 4
          %s259 = int_to_ptr.vmem [resolvable:$true] %s258
          %264 = dma.hbm_to_vmem [thread:$0]  %s0, 4096, %s259, [#allocation4], 128, 128, 8
        $region16: #{tpu_custom_call.1} parent=11 // pred_fallthru
          _
        // Predicated region
        $region17: #{tpu_custom_call.1} parent=11 // pred_check
          %p265 = pneg %p64
        $region18: #{tpu_custom_call.1} parent=11 // pred_check_branch
          %267 = sbr.rel (%p265) target = $region20
        $region19: #{tpu_custom_call.1} parent=11 // pred_region
          %s269 = ssub.s32 2048, 2048
          %270 = vsyncadd [#allocation7], %s269
          %s271 = sshll.u32 [#allocation6], 4
          %s272 = int_to_ptr.vmem [resolvable:$true] %s271
          %277 = dma.hbm_to_vmem [thread:$0]  %s1, 2048, %s272, [#allocation7], 64, 64, 4
        $region20: #{tpu_custom_call.1} parent=11 // pred_fallthru
          _
        // Predicated region
        $region21: #{tpu_custom_call.1} parent=11 // pred_check
          %p278 = pneg %p85
        $region22: #{tpu_custom_call.1} parent=11 // pred_check_branch
          %280 = sbr.rel (%p278) target = $region24
        $region23: #{tpu_custom_call.1} parent=11 // pred_region
          %s282 = ssub.s32 2048, 2048
          %283 = vsyncadd [#allocation7], %s282
          %s284 = sshll.u32 [#allocation8], 4
          %s285 = int_to_ptr.vmem [resolvable:$true] %s284
          %290 = dma.hbm_to_vmem [thread:$0]  %s2, 2048, %s285, [#allocation7], 64, 64, 4
        $region24: #{tpu_custom_call.1} parent=11 // pred_fallthru
          _
        // Predicated region
        $region25: #{tpu_custom_call.1} parent=11 // pred_check
          %p291 = pneg %p106
        $region26: #{tpu_custom_call.1} parent=11 // pred_check_branch
          %293 = sbr.rel (%p291) target = $region28
        $region27: #{tpu_custom_call.1} parent=11 // pred_region
          %s295 = ssub.s32 1024, 1024
          %296 = vsyncadd [#allocation10], %s295
          %s297 = sshll.u32 [#allocation9], 4
          %s298 = int_to_ptr.vmem [resolvable:$true] %s297
          %303 = dma.hbm_to_vmem [thread:$0]  %s3, 1024, %s298, [#allocation10], 64, 64, 4
        $region28: #{tpu_custom_call.1} parent=11 // pred_fallthru
          _
        // Predicated region
        $region29: #{tpu_custom_call.1} parent=11 // pred_check
          %p304 = pneg %p127
        $region30: #{tpu_custom_call.1} parent=11 // pred_check_branch
          %306 = sbr.rel (%p304) target = $region32
        $region31: #{tpu_custom_call.1} parent=11 // pred_region
          %s308 = ssub.s32 1024, 1024
          %309 = vsyncadd [#allocation10], %s308
          %s310 = sshll.u32 [#allocation11], 4
          %s311 = int_to_ptr.vmem [resolvable:$true] %s310
          %316 = dma.hbm_to_vmem [thread:$0]  %s4, 1024, %s311, [#allocation10], 64, 64, 4
        $region32: #{tpu_custom_call.1} parent=11 // pred_fallthru
          _
        // Predicated region
        $region33: #{tpu_custom_call.1} parent=11 // pred_check
          %p317 = pneg %p148
        $region34: #{tpu_custom_call.1} parent=11 // pred_check_branch
          %319 = sbr.rel (%p317) target = $region36
        $region35: #{tpu_custom_call.1} parent=11 // pred_region
          %s321 = ssub.s32 4096, 4096
          %322 = vsyncadd [#allocation13], %s321
          %s323 = sshll.u32 [#allocation12], 4
          %s324 = int_to_ptr.vmem [resolvable:$true] %s323
          %329 = dma.hbm_to_vmem [thread:$0]  %s5, 4096, %s324, [#allocation13], 256, 256, 16
        $region36: #{tpu_custom_call.1} parent=11 // pred_fallthru
          _
        // Predicated region
        $region37: #{tpu_custom_call.1} parent=11 // pred_check
          %p330 = pneg %p169
        $region38: #{tpu_custom_call.1} parent=11 // pred_check_branch
          %332 = sbr.rel (%p330) target = $region40
        $region39: #{tpu_custom_call.1} parent=11 // pred_region
          _
        $region40: #{tpu_custom_call.1} parent=11 // pred_fallthru
          _
        // Predicated region
        $region41: #{tpu_custom_call.1} parent=11 // pred_check
          %p333 = pneg %p190
        $region42: #{tpu_custom_call.1} parent=11 // pred_check_branch
          %335 = sbr.rel (%p333) target = $region44
        $region43: #{tpu_custom_call.1} parent=11 // pred_region
          %s337 = ssub.s32 4096, 4096
          %338 = vsyncadd [#allocation13], %s337
          %s339 = sshll.u32 [#allocation14], 4
          %s340 = int_to_ptr.vmem [resolvable:$true] %s339
          %345 = dma.hbm_to_vmem [thread:$0]  %s7, 4096, %s340, [#allocation13], 64, 64, 4
        $region44: #{tpu_custom_call.1} parent=11 // pred_fallthru
          _
        // Predicated region
        $region45: #{tpu_custom_call.1} parent=11 // pred_check
          %p346 = pneg %p211
        $region46: #{tpu_custom_call.1} parent=11 // pred_check_branch
          %348 = sbr.rel (%p346) target = $region48
        $region47: #{tpu_custom_call.1} parent=11 // pred_region
          _
        $region48: #{tpu_custom_call.1} parent=11 // pred_fallthru
          _
      $region12: #{tpu_custom_call.1} parent=5 // pred_fallthru
        _
      %p349 = scmp.lt.s32.totalorder %s22, 2
      // Predicated region
      $region49: #{tpu_custom_call.1} parent=5 // pred_check
        %p350 = pneg %p349
      $region50: #{tpu_custom_call.1} parent=5 // pred_check_branch
        %352 = sbr.rel (%p350) target = $region52
      $region51: #{tpu_custom_call.1} parent=5 // pred_region
        _
      $region52: #{tpu_custom_call.1} parent=5 // pred_fallthru
        _
      %p353 = scmp.le.s32.totalorder 1, %s22
      %p354 = scmp.lt.s32.totalorder %s22, 3
      %p355 = pnand %p353, %p354
      %p356 = pneg %p355
      // Predicated region
      $region53: #{tpu_custom_call.1} parent=5 // pred_check
        _
      $region54: #{tpu_custom_call.1} parent=5 // pred_check_branch
        %358 = sbr.rel (%p355) target = $region56
      $region55: #{tpu_custom_call.1} parent=5 // pred_region
        %s359 = ssub.s32 %s22, 1
        // Predicated region
        $region57: #{tpu_custom_call.1} parent=55 // pred_check
          %p360 = pneg %p43
        $region58: #{tpu_custom_call.1} parent=55 // pred_check_branch
          %362 = sbr.rel (%p360) target = $region60
        $region59: #{tpu_custom_call.1} parent=55 // pred_region
          %363 = dma.done [#allocation4], 4096
        $region60: #{tpu_custom_call.1} parent=55 // pred_fallthru
          _
        // Predicated region
        $region61: #{tpu_custom_call.1} parent=55 // pred_check
          %p364 = pneg %p64
        $region62: #{tpu_custom_call.1} parent=55 // pred_check_branch
          %366 = sbr.rel (%p364) target = $region64
        $region63: #{tpu_custom_call.1} parent=55 // pred_region
          %367 = dma.done [#allocation7], 2048
        $region64: #{tpu_custom_call.1} parent=55 // pred_fallthru
          _
        // Predicated region
        $region65: #{tpu_custom_call.1} parent=55 // pred_check
          %p368 = pneg %p85
        $region66: #{tpu_custom_call.1} parent=55 // pred_check_branch
          %370 = sbr.rel (%p368) target = $region68
        $region67: #{tpu_custom_call.1} parent=55 // pred_region
          %371 = dma.done [#allocation7], 2048
        $region68: #{tpu_custom_call.1} parent=55 // pred_fallthru
          _
        // Predicated region
        $region69: #{tpu_custom_call.1} parent=55 // pred_check
          %p372 = pneg %p106
        $region70: #{tpu_custom_call.1} parent=55 // pred_check_branch
          %374 = sbr.rel (%p372) target = $region72
        $region71: #{tpu_custom_call.1} parent=55 // pred_region
          %375 = dma.done [#allocation10], 1024
        $region72: #{tpu_custom_call.1} parent=55 // pred_fallthru
          _
        // Predicated region
        $region73: #{tpu_custom_call.1} parent=55 // pred_check
          %p376 = pneg %p127
        $region74: #{tpu_custom_call.1} parent=55 // pred_check_branch
          %378 = sbr.rel (%p376) target = $region76
        $region75: #{tpu_custom_call.1} parent=55 // pred_region
          %379 = dma.done [#allocation10], 1024
        $region76: #{tpu_custom_call.1} parent=55 // pred_fallthru
          _
        // Predicated region
        $region77: #{tpu_custom_call.1} parent=55 // pred_check
          %p380 = pneg %p148
        $region78: #{tpu_custom_call.1} parent=55 // pred_check_branch
          %382 = sbr.rel (%p380) target = $region80
        $region79: #{tpu_custom_call.1} parent=55 // pred_region
          %383 = dma.done [#allocation13], 4096
        $region80: #{tpu_custom_call.1} parent=55 // pred_fallthru
          _
        // Predicated region
        $region81: #{tpu_custom_call.1} parent=55 // pred_check
          %p384 = pneg %p190
        $region82: #{tpu_custom_call.1} parent=55 // pred_check_branch
          %386 = sbr.rel (%p384) target = $region84
        $region83: #{tpu_custom_call.1} parent=55 // pred_region
          %387 = dma.done [#allocation13], 4096
        $region84: #{tpu_custom_call.1} parent=55 // pred_fallthru
          _
        %p388 = pneg %p43
        %p389 = pneg %p40
        %p390 = pneg %p64
        %p391 = pneg %p61
        %p392 = pneg %p85
        %p393 = pneg %p82
        %p394 = pneg %p106
        %p395 = pneg %p103
        %p396 = pneg %p127
        %p397 = pneg %p124
        %p398 = pneg %p148
        %p399 = pneg %p145
        %p400 = pneg %p169
        %p401 = pneg %p166
        %p402 = pneg %p190
        %p403 = pneg %p187
        %p404 = pneg %p211
        %p405 = pneg %p208
        %p406 = pneg %p237
        %p407 = pneg %p234
        %s408 = sand.u32 %s224, 1
        %s409 = scalar_lea.sflag [#allocation5], %s408
        %s410 = sand.u32 %s224, 1
        %s411 = smul.addr %s410, 128
        %s412 = scalar_lea.vmem [#allocation15], %s411
        %s413 = smul.u32 16, %s27
        %s415 = smul.u32 %s27, 128
        %s416 = scalar_lea.vmem [#allocation3], %s415
        %v417 = vld [vmem:[%s416] sm:$0xff]
        %v418 = vld [vmem:[%s416 + $0x8] sm:$0xff]
        %v419 = vld [vmem:[%s416 + $0x10] sm:$0xff]
        %v420 = vld [vmem:[%s416 + $0x18] sm:$0xff]
        %v421 = vld [vmem:[%s416 + $0x20] sm:$0xff]
        %v422 = vld [vmem:[%s416 + $0x28] sm:$0xff]
        %v423 = vld [vmem:[%s416 + $0x30] sm:$0xff]
        %v424 = vld [vmem:[%s416 + $0x38] sm:$0xff]
        %v425 = vld [vmem:[%s416 + $0x40] sm:$0xff]
        %v426 = vld [vmem:[%s416 + $0x48] sm:$0xff]
        %v427 = vld [vmem:[%s416 + $0x50] sm:$0xff]
        %v428 = vld [vmem:[%s416 + $0x58] sm:$0xff]
        %v429 = vld [vmem:[%s416 + $0x60] sm:$0xff]
        %v430 = vld [vmem:[%s416 + $0x68] sm:$0xff]
        %v431 = vld [vmem:[%s416 + $0x70] sm:$0xff]
        %v432 = vld [vmem:[%s416 + $0x78] sm:$0xff]
        %v433 = vpack.c.bf16 %v418, %v417
        %v434 = vpack.c.bf16 %v420, %v419
        %v435 = vpack.c.bf16 %v422, %v421
        %v436 = vpack.c.bf16 %v424, %v423
        %v437 = vpack.c.bf16 %v426, %v425
        %v438 = vpack.c.bf16 %v428, %v427
        %v439 = vpack.c.bf16 %v430, %v429
        %v440 = vpack.c.bf16 %v432, %v431
        %v441 = vld [vmem:[#allocation9] sm:$0xf]
        %v442 = vld [vmem:[#allocation9 + $0x4] sm:$0xf]
        %v443 = vld [vmem:[#allocation9 + $0x8] sm:$0xf]
        %v444 = vld [vmem:[#allocation9 + $0xc] sm:$0xf]
        %v445 = vld [vmem:[#allocation9 + $0x10] sm:$0xf]
        %v446 = vld [vmem:[#allocation9 + $0x14] sm:$0xf]
        %v447 = vld [vmem:[#allocation9 + $0x18] sm:$0xf]
        %v448 = vld [vmem:[#allocation9 + $0x1c] sm:$0xf]
        %v449 = vld [vmem:[#allocation9 + $0x20] sm:$0xf]
        %v450 = vld [vmem:[#allocation9 + $0x24] sm:$0xf]
        %v451 = vld [vmem:[#allocation9 + $0x28] sm:$0xf]
        %v452 = vld [vmem:[#allocation9 + $0x2c] sm:$0xf]
        %v453 = vld [vmem:[#allocation9 + $0x30] sm:$0xf]
        %v454 = vld [vmem:[#allocation9 + $0x34] sm:$0xf]
        %v455 = vld [vmem:[#allocation9 + $0x38] sm:$0xf]
        %v456 = vld [vmem:[#allocation9 + $0x3c] sm:$0xf]
        %v473 = vunpack.c.l.b16 %v441
        %v474 = vunpack.c.l.b16 %v442
        %v475 = vunpack.c.l.b16 %v443
        %v476 = vunpack.c.l.b16 %v444
        %v477 = vunpack.c.l.b16 %v445
        %v478 = vunpack.c.l.b16 %v446
        %v479 = vunpack.c.l.b16 %v447
        %v480 = vunpack.c.l.b16 %v448
        %v481 = vunpack.c.l.b16 %v449
        %v482 = vunpack.c.l.b16 %v450
        %v483 = vunpack.c.l.b16 %v451
        %v484 = vunpack.c.l.b16 %v452
        %v485 = vunpack.c.l.b16 %v453
        %v486 = vunpack.c.l.b16 %v454
        %v487 = vunpack.c.l.b16 %v455
        %v488 = vunpack.c.l.b16 %v456
        %v489 = vpack.c.b16 %v474, %v473
        %v490 = vpack.c.b16 %v476, %v475
        %v491 = vpack.c.b16 %v478, %v477
        %v492 = vpack.c.b16 %v480, %v479
        %v493 = vpack.c.b16 %v482, %v481
        %v494 = vpack.c.b16 %v484, %v483
        %v495 = vpack.c.b16 %v486, %v485
        %v496 = vpack.c.b16 %v488, %v487
        %505 = vmatprep.subr.bf16.mxu0 0
        %506 = vmatpush1.bf16.msra.mxu0 %v489
        %507 = vmatprep.subr.bf16.mxu0 0
        %508 = vmatpush1.bf16.msra.mxu0 %v490
        %509 = vmatprep.subr.bf16.mxu0 0
        %510 = vmatpush1.bf16.msra.mxu0 %v491
        %511 = vmatprep.subr.bf16.mxu0 0
        %512 = vmatpush1.bf16.msra.mxu0 %v492
        %513 = vmatprep.subr.bf16.mxu0 0
        %514 = vmatpush1.bf16.msra.mxu0 %v493
        %515 = vmatprep.subr.bf16.mxu0 0
        %516 = vmatpush1.bf16.msra.mxu0 %v494
        %517 = vmatprep.subr.bf16.mxu0 0
        %518 = vmatpush1.bf16.msra.mxu0 %v495
        %519 = vmatprep.subr.bf16.mxu0 0
        %520 = vmatpush1.bf16.msra.mxu0 %v496
        %521 = vmatprep.subr.bf16.mxu0 0
        %522 = vmatpush1.bf16.msra.mxu0 0
        %523 = vmatprep.subr.bf16.mxu0 0
        %524 = vmatpush1.bf16.msra.mxu0 0
        %525 = vmatprep.subr.bf16.mxu0 0
        %526 = vmatpush1.bf16.msra.mxu0 0
        %527 = vmatprep.subr.bf16.mxu0 0
        %528 = vmatpush1.bf16.msra.mxu0 0
        %529 = vmatprep.subr.bf16.mxu0 0
        %530 = vmatpush1.bf16.msra.mxu0 0
        %531 = vmatprep.subr.bf16.mxu0 0
        %532 = vmatpush1.bf16.msra.mxu0 0
        %533 = vmatprep.subr.bf16.mxu0 0
        %534 = vmatpush1.bf16.msra.mxu0 0
        %535 = vmatprep.subr.bf16.mxu0 0
        %536 = vmatpush1.bf16.msra.mxu0 0
        %537 = vmatprep.mubr.bf16.mxu0 0
        %538 = vmatmul.mubr.bf16.gmra.mrb[0].mxu0 %v433
        %v539 = vpop.f32.mrb[0].mxu0
        %v540 = vadd.f32 0.0, %v539
        %v541 = vpop.f32.mrb[0].mxu0
        %v542 = vpop.f32.mrb[0].mxu0
        %v543 = vadd.f32 0.0, %v542
        %v544 = vpop.f32.mrb[0].mxu0
        %545 = vmatprep.mubr.bf16.mxu0 0
        %546 = vmatmul.mubr.bf16.gmra.mrb[0].mxu0 %v434
        %v547 = vpop.f32.mrb[0].mxu0
        %v548 = vadd.f32 0.0, %v547
        %v549 = vpop.f32.mrb[0].mxu0
        %v550 = vpop.f32.mrb[0].mxu0
        %v551 = vadd.f32 0.0, %v550
        %v552 = vpop.f32.mrb[0].mxu0
        %553 = vmatprep.mubr.bf16.mxu0 0
        %554 = vmatmul.mubr.bf16.gmra.mrb[0].mxu0 %v435
        %v555 = vpop.f32.mrb[0].mxu0
        %v556 = vadd.f32 0.0, %v555
        %v557 = vpop.f32.mrb[0].mxu0
        %v558 = vpop.f32.mrb[0].mxu0
        %v559 = vadd.f32 0.0, %v558
        %v560 = vpop.f32.mrb[0].mxu0
        %561 = vmatprep.mubr.bf16.mxu0 0
        %562 = vmatmul.mubr.bf16.gmra.mrb[0].mxu0 %v436
        %v563 = vpop.f32.mrb[0].mxu0
        %v564 = vadd.f32 0.0, %v563
        %v565 = vpop.f32.mrb[0].mxu0
        %v566 = vpop.f32.mrb[0].mxu0
        %v567 = vadd.f32 0.0, %v566
        %v568 = vpop.f32.mrb[0].mxu0
        %569 = vmatprep.mubr.bf16.mxu0 0
        %570 = vmatmul.mubr.bf16.gmra.mrb[0].mxu0 %v437
        %v571 = vpop.f32.mrb[0].mxu0
        %v572 = vadd.f32 0.0, %v571
        %v573 = vpop.f32.mrb[0].mxu0
        %v574 = vpop.f32.mrb[0].mxu0
        %v575 = vadd.f32 0.0, %v574
        %v576 = vpop.f32.mrb[0].mxu0
        %577 = vmatprep.mubr.bf16.mxu0 0
        %578 = vmatmul.mubr.bf16.gmra.mrb[0].mxu0 %v438
        %v579 = vpop.f32.mrb[0].mxu0
        %v580 = vadd.f32 0.0, %v579
        %v581 = vpop.f32.mrb[0].mxu0
        %v582 = vpop.f32.mrb[0].mxu0
        %v583 = vadd.f32 0.0, %v582
        %v584 = vpop.f32.mrb[0].mxu0
        %585 = vmatprep.mubr.bf16.mxu0 0
        %586 = vmatmul.mubr.bf16.gmra.mrb[0].mxu0 %v439
        %v587 = vpop.f32.mrb[0].mxu0
        %v588 = vadd.f32 0.0, %v587
        %v589 = vpop.f32.mrb[0].mxu0
        %v590 = vpop.f32.mrb[0].mxu0
        %v591 = vadd.f32 0.0, %v590
        %v592 = vpop.f32.mrb[0].mxu0
        %593 = vmatprep.mubr.bf16.mxu0 0
        %594 = vmatmul.mubr.bf16.gmra.mrb[0].mxu0 %v440
        %v595 = vpop.f32.mrb[0].mxu0
        %v596 = vadd.f32 0.0, %v595
        %v597 = vpop.f32.mrb[0].mxu0
        %v598 = vpop.f32.mrb[0].mxu0
        %v599 = vadd.f32 0.0, %v598
        %v600 = vpop.f32.mrb[0].mxu0
        %601 = vdwg.mxu0
        %v602 = vpack.c.bf16 %v543, %v540
        %v603 = vpack.c.bf16 %v551, %v548
        %v604 = vpack.c.bf16 %v559, %v556
        %v605 = vpack.c.bf16 %v567, %v564
        %v606 = vpack.c.bf16 %v575, %v572
        %v607 = vpack.c.bf16 %v583, %v580
        %v608 = vpack.c.bf16 %v591, %v588
        %v609 = vpack.c.bf16 %v599, %v596
        %v610 = vld [vmem:[#allocation6] sm:$0xf]
        %v611 = vld [vmem:[#allocation6 + $0x4] sm:$0xf]
        %v612 = vld [vmem:[#allocation6 + $0x8] sm:$0xf]
        %v613 = vld [vmem:[#allocation6 + $0xc] sm:$0xf]
        %v614 = vld [vmem:[#allocation6 + $0x10] sm:$0xf]
        %v615 = vld [vmem:[#allocation6 + $0x14] sm:$0xf]
        %v616 = vld [vmem:[#allocation6 + $0x18] sm:$0xf]
        %v617 = vld [vmem:[#allocation6 + $0x1c] sm:$0xf]
        %v618 = vld [vmem:[#allocation6 + $0x20] sm:$0xf]
        %v619 = vld [vmem:[#allocation6 + $0x24] sm:$0xf]
        %v620 = vld [vmem:[#allocation6 + $0x28] sm:$0xf]
        %v621 = vld [vmem:[#allocation6 + $0x2c] sm:$0xf]
        %v622 = vld [vmem:[#allocation6 + $0x30] sm:$0xf]
        %v623 = vld [vmem:[#allocation6 + $0x34] sm:$0xf]
        %v624 = vld [vmem:[#allocation6 + $0x38] sm:$0xf]
        %v625 = vld [vmem:[#allocation6 + $0x3c] sm:$0xf]
        %v626 = vld [vmem:[#allocation6 + $0x40] sm:$0xf]
        %v627 = vld [vmem:[#allocation6 + $0x44] sm:$0xf]
        %v628 = vld [vmem:[#allocation6 + $0x48] sm:$0xf]
        %v629 = vld [vmem:[#allocation6 + $0x4c] sm:$0xf]
        %v630 = vld [vmem:[#allocation6 + $0x50] sm:$0xf]
        %v631 = vld [vmem:[#allocation6 + $0x54] sm:$0xf]
        %v632 = vld [vmem:[#allocation6 + $0x58] sm:$0xf]
        %v633 = vld [vmem:[#allocation6 + $0x5c] sm:$0xf]
        %v634 = vld [vmem:[#allocation6 + $0x60] sm:$0xf]
        %v635 = vld [vmem:[#allocation6 + $0x64] sm:$0xf]
        %v636 = vld [vmem:[#allocation6 + $0x68] sm:$0xf]
        %v637 = vld [vmem:[#allocation6 + $0x6c] sm:$0xf]
        %v638 = vld [vmem:[#allocation6 + $0x70] sm:$0xf]
        %v639 = vld [vmem:[#allocation6 + $0x74] sm:$0xf]
        %v640 = vld [vmem:[#allocation6 + $0x78] sm:$0xf]
        %v641 = vld [vmem:[#allocation6 + $0x7c] sm:$0xf]
        %v642 = vld [vmem:[#allocation8] sm:$0xf]
        %v643 = vld [vmem:[#allocation8 + $0x4] sm:$0xf]
        %v644 = vld [vmem:[#allocation8 + $0x8] sm:$0xf]
        %v645 = vld [vmem:[#allocation8 + $0xc] sm:$0xf]
        %v646 = vld [vmem:[#allocation8 + $0x10] sm:$0xf]
        %v647 = vld [vmem:[#allocation8 + $0x14] sm:$0xf]
        %v648 = vld [vmem:[#allocation8 + $0x18] sm:$0xf]
        %v649 = vld [vmem:[#allocation8 + $0x1c] sm:$0xf]
        %v650 = vld [vmem:[#allocation8 + $0x20] sm:$0xf]
        %v651 = vld [vmem:[#allocation8 + $0x24] sm:$0xf]
        %v652 = vld [vmem:[#allocation8 + $0x28] sm:$0xf]
        %v653 = vld [vmem:[#allocation8 + $0x2c] sm:$0xf]
        %v654 = vld [vmem:[#allocation8 + $0x30] sm:$0xf]
        %v655 = vld [vmem:[#allocation8 + $0x34] sm:$0xf]
        %v656 = vld [vmem:[#allocation8 + $0x38] sm:$0xf]
        %v657 = vld [vmem:[#allocation8 + $0x3c] sm:$0xf]
        %v658 = vld [vmem:[#allocation8 + $0x40] sm:$0xf]
        %v659 = vld [vmem:[#allocation8 + $0x44] sm:$0xf]
        %v660 = vld [vmem:[#allocation8 + $0x48] sm:$0xf]
        %v661 = vld [vmem:[#allocation8 + $0x4c] sm:$0xf]
        %v662 = vld [vmem:[#allocation8 + $0x50] sm:$0xf]
        %v663 = vld [vmem:[#allocation8 + $0x54] sm:$0xf]
        %v664 = vld [vmem:[#allocation8 + $0x58] sm:$0xf]
        %v665 = vld [vmem:[#allocation8 + $0x5c] sm:$0xf]
        %v666 = vld [vmem:[#allocation8 + $0x60] sm:$0xf]
        %v667 = vld [vmem:[#allocation8 + $0x64] sm:$0xf]
        %v668 = vld [vmem:[#allocation8 + $0x68] sm:$0xf]
        %v669 = vld [vmem:[#allocation8 + $0x6c] sm:$0xf]
        %v670 = vld [vmem:[#allocation8 + $0x70] sm:$0xf]
        %v671 = vld [vmem:[#allocation8 + $0x74] sm:$0xf]
        %v672 = vld [vmem:[#allocation8 + $0x78] sm:$0xf]
        %v673 = vld [vmem:[#allocation8 + $0x7c] sm:$0xf]
        %v706 = vunpack.c.l.b16 %v610
        %v707 = vunpack.c.l.b16 %v611
        %v708 = vunpack.c.l.b16 %v612
        %v709 = vunpack.c.l.b16 %v613
        %v710 = vunpack.c.l.b16 %v614
        %v711 = vunpack.c.l.b16 %v615
        %v712 = vunpack.c.l.b16 %v616
        %v713 = vunpack.c.l.b16 %v617
        %v714 = vunpack.c.l.b16 %v618
        %v715 = vunpack.c.l.b16 %v619
        %v716 = vunpack.c.l.b16 %v620
        %v717 = vunpack.c.l.b16 %v621
        %v718 = vunpack.c.l.b16 %v622
        %v719 = vunpack.c.l.b16 %v623
        %v720 = vunpack.c.l.b16 %v624
        %v721 = vunpack.c.l.b16 %v625
        %v722 = vunpack.c.l.b16 %v626
        %v723 = vunpack.c.l.b16 %v627
        %v724 = vunpack.c.l.b16 %v628
        %v725 = vunpack.c.l.b16 %v629
        %v726 = vunpack.c.l.b16 %v630
        %v727 = vunpack.c.l.b16 %v631
        %v728 = vunpack.c.l.b16 %v632
        %v729 = vunpack.c.l.b16 %v633
        %v730 = vunpack.c.l.b16 %v634
        %v731 = vunpack.c.l.b16 %v635
        %v732 = vunpack.c.l.b16 %v636
        %v733 = vunpack.c.l.b16 %v637
        %v734 = vunpack.c.l.b16 %v638
        %v735 = vunpack.c.l.b16 %v639
        %v736 = vunpack.c.l.b16 %v640
        %v737 = vunpack.c.l.b16 %v641
        %v738 = vpack.c.b16 %v707, %v706
        %v739 = vpack.c.b16 %v709, %v708
        %v740 = vpack.c.b16 %v711, %v710
        %v741 = vpack.c.b16 %v713, %v712
        %v742 = vpack.c.b16 %v715, %v714
        %v743 = vpack.c.b16 %v717, %v716
        %v744 = vpack.c.b16 %v719, %v718
        %v745 = vpack.c.b16 %v721, %v720
        %v746 = vpack.c.b16 %v723, %v722
        %v747 = vpack.c.b16 %v725, %v724
        %v748 = vpack.c.b16 %v727, %v726
        %v749 = vpack.c.b16 %v729, %v728
        %v750 = vpack.c.b16 %v731, %v730
        %v751 = vpack.c.b16 %v733, %v732
        %v752 = vpack.c.b16 %v735, %v734
        %v753 = vpack.c.b16 %v737, %v736
        %vm754 = vcmask 261120
        %v756 = vsel %vm754, %v602, 0
        %v759 = vsel %vm754, %v603, 0
        %v762 = vsel %vm754, %v604, 0
        %v765 = vsel %vm754, %v605, 0
        %v768 = vsel %vm754, %v606, 0
        %v771 = vsel %vm754, %v607, 0
        %v774 = vsel %vm754, %v608, 0
        %v777 = vsel %vm754, %v609, 0
        %v780 = vsel %vm754, %v738, 0
        %v783 = vsel %vm754, %v739, 0
        %v786 = vsel %vm754, %v740, 0
        %v789 = vsel %vm754, %v741, 0
        %v792 = vsel %vm754, %v742, 0
        %v795 = vsel %vm754, %v743, 0
        %v798 = vsel %vm754, %v744, 0
        %v801 = vsel %vm754, %v745, 0
        %v804 = vsel %vm754, %v746, 0
        %v807 = vsel %vm754, %v747, 0
        %v810 = vsel %vm754, %v748, 0
        %v813 = vsel %vm754, %v749, 0
        %v816 = vsel %vm754, %v750, 0
        %v819 = vsel %vm754, %v751, 0
        %v822 = vsel %vm754, %v752, 0
        %v825 = vsel %vm754, %v753, 0
        %827 = vmatprep.subr.bf16.mxu0 0
        %828 = vmatpush1.bf16.xpose.msra.mxu0 %v780
        %829 = vmatprep.subr.bf16.mxu0 0
        %830 = vmatpush1.bf16.xpose.msra.mxu0 %v783
        %831 = vmatprep.subr.bf16.mxu0 0
        %832 = vmatpush1.bf16.xpose.msra.mxu0 %v786
        %833 = vmatprep.subr.bf16.mxu0 0
        %834 = vmatpush1.bf16.xpose.msra.mxu0 %v789
        %835 = vmatprep.subr.bf16.mxu0 0
        %836 = vmatpush1.bf16.xpose.msra.mxu0 %v792
        %837 = vmatprep.subr.bf16.mxu0 0
        %838 = vmatpush1.bf16.xpose.msra.mxu0 %v795
        %839 = vmatprep.subr.bf16.mxu0 0
        %840 = vmatpush1.bf16.xpose.msra.mxu0 %v798
        %841 = vmatprep.subr.bf16.mxu0 0
        %842 = vmatpush1.bf16.xpose.msra.mxu0 %v801
        %843 = vmatprep.subr.bf16.mxu0 0
        %844 = vmatpush1.bf16.xpose.msra.mxu0 %v804
        %845 = vmatprep.subr.bf16.mxu0 0
        %846 = vmatpush1.bf16.xpose.msra.mxu0 %v807
        %847 = vmatprep.subr.bf16.mxu0 0
        %848 = vmatpush1.bf16.xpose.msra.mxu0 %v810
        %849 = vmatprep.subr.bf16.mxu0 0
        %850 = vmatpush1.bf16.xpose.msra.mxu0 %v813
        %851 = vmatprep.subr.bf16.mxu0 0
        %852 = vmatpush1.bf16.xpose.msra.mxu0 %v816
        %853 = vmatprep.subr.bf16.mxu0 0
        %854 = vmatpush1.bf16.xpose.msra.mxu0 %v819
        %855 = vmatprep.subr.bf16.mxu0 0
        %856 = vmatpush1.bf16.xpose.msra.mxu0 %v822
        %857 = vmatprep.subr.bf16.mxu0 0
        %858 = vmatpush1.bf16.xpose.msra.mxu0 %v825
        %859 = vmatprep.mubr.bf16.mxu0 0
        %860 = vmatmul.mubr.bf16.gmra.mrb[0].mxu0 %v756
        %v861 = vpop.f32.mrb[0].mxu0
        %v862 = vadd.f32 0.0, %v861
        %v863 = vpop.f32.mrb[0].mxu0
        %v864 = vadd.f32 0.0, %v863
        %v865 = vpop.f32.mrb[0].mxu0
        %v866 = vadd.f32 0.0, %v865
        %v867 = vpop.f32.mrb[0].mxu0
        %v868 = vadd.f32 0.0, %v867
        %869 = vmatprep.mubr.bf16.mxu0 0
        %870 = vmatmul.mubr.bf16.gmra.mrb[0].mxu0 %v759
        %v871 = vpop.f32.mrb[0].mxu0
        %v872 = vadd.f32 0.0, %v871
        %v873 = vpop.f32.mrb[0].mxu0
        %v874 = vadd.f32 0.0, %v873
        %v875 = vpop.f32.mrb[0].mxu0
        %v876 = vadd.f32 0.0, %v875
        %v877 = vpop.f32.mrb[0].mxu0
        %v878 = vadd.f32 0.0, %v877
        %879 = vmatprep.mubr.bf16.mxu0 0
        %880 = vmatmul.mubr.bf16.gmra.mrb[0].mxu0 %v762
        %v881 = vpop.f32.mrb[0].mxu0
        %v882 = vadd.f32 0.0, %v881
        %v883 = vpop.f32.mrb[0].mxu0
        %v884 = vadd.f32 0.0, %v883
        %v885 = vpop.f32.mrb[0].mxu0
        %v886 = vadd.f32 0.0, %v885
        %v887 = vpop.f32.mrb[0].mxu0
        %v888 = vadd.f32 0.0, %v887
        %889 = vmatprep.mubr.bf16.mxu0 0
        %890 = vmatmul.mubr.bf16.gmra.mrb[0].mxu0 %v765
        %v891 = vpop.f32.mrb[0].mxu0
        %v892 = vadd.f32 0.0, %v891
        %v893 = vpop.f32.mrb[0].mxu0
        %v894 = vadd.f32 0.0, %v893
        %v895 = vpop.f32.mrb[0].mxu0
        %v896 = vadd.f32 0.0, %v895
        %v897 = vpop.f32.mrb[0].mxu0
        %v898 = vadd.f32 0.0, %v897
        %899 = vmatprep.mubr.bf16.mxu0 0
        %900 = vmatmul.mubr.bf16.gmra.mrb[0].mxu0 %v768
        %v901 = vpop.f32.mrb[0].mxu0
        %v902 = vadd.f32 0.0, %v901
        %v903 = vpop.f32.mrb[0].mxu0
        %v904 = vadd.f32 0.0, %v903
        %v905 = vpop.f32.mrb[0].mxu0
        %v906 = vadd.f32 0.0, %v905
        %v907 = vpop.f32.mrb[0].mxu0
        %v908 = vadd.f32 0.0, %v907
        %909 = vmatprep.mubr.bf16.mxu0 0
        %910 = vmatmul.mubr.bf16.gmra.mrb[0].mxu0 %v771
        %v911 = vpop.f32.mrb[0].mxu0
        %v912 = vadd.f32 0.0, %v911
        %v913 = vpop.f32.mrb[0].mxu0
        %v914 = vadd.f32 0.0, %v913
        %v915 = vpop.f32.mrb[0].mxu0
        %v916 = vadd.f32 0.0, %v915
        %v917 = vpop.f32.mrb[0].mxu0
        %v918 = vadd.f32 0.0, %v917
        %919 = vmatprep.mubr.bf16.mxu0 0
        %920 = vmatmul.mubr.bf16.gmra.mrb[0].mxu0 %v774
        %v921 = vpop.f32.mrb[0].mxu0
        %v922 = vadd.f32 0.0, %v921
        %v923 = vpop.f32.mrb[0].mxu0
        %v924 = vadd.f32 0.0, %v923
        %v925 = vpop.f32.mrb[0].mxu0
        %v926 = vadd.f32 0.0, %v925
        %v927 = vpop.f32.mrb[0].mxu0
        %v928 = vadd.f32 0.0, %v927
        %929 = vmatprep.mubr.bf16.mxu0 0
        %930 = vmatmul.mubr.bf16.gmra.mrb[0].mxu0 %v777
        %v931 = vpop.f32.mrb[0].mxu0
        %v932 = vadd.f32 0.0, %v931
        %v933 = vpop.f32.mrb[0].mxu0
        %v934 = vadd.f32 0.0, %v933
        %v935 = vpop.f32.mrb[0].mxu0
        %v936 = vadd.f32 0.0, %v935
        %v937 = vpop.f32.mrb[0].mxu0
        %v938 = vadd.f32 0.0, %v937
        %939 = vdwg.mxu0
        %v940 = vmax.f32 %v862, %v864
        %941 = vmax.xlane.f32.xlu0 %v940
        %v942 = vpop.xlane.xlu0 %941
        %v943 = vmax.f32 %v866, %v868
        %944 = vmax.xlane.f32.xlu0 %v943
        %v945 = vpop.xlane.xlu0 %944
        %v946 = vmax.f32 %v872, %v874
        %947 = vmax.xlane.f32.xlu0 %v946
        %v948 = vpop.xlane.xlu0 %947
        %v949 = vmax.f32 %v876, %v878
        %950 = vmax.xlane.f32.xlu0 %v949
        %v951 = vpop.xlane.xlu0 %950
        %v952 = vmax.f32 %v882, %v884
        %953 = vmax.xlane.f32.xlu0 %v952
        %v954 = vpop.xlane.xlu0 %953
        %v955 = vmax.f32 %v886, %v888
        %956 = vmax.xlane.f32.xlu0 %v955
        %v957 = vpop.xlane.xlu0 %956
        %v958 = vmax.f32 %v892, %v894
        %959 = vmax.xlane.f32.xlu0 %v958
        %v960 = vpop.xlane.xlu0 %959
        %v961 = vmax.f32 %v896, %v898
        %962 = vmax.xlane.f32.xlu0 %v961
        %v963 = vpop.xlane.xlu0 %962
        %v964 = vmax.f32 %v902, %v904
        %965 = vmax.xlane.f32.xlu0 %v964
        %v966 = vpop.xlane.xlu0 %965
        %v967 = vmax.f32 %v906, %v908
        %968 = vmax.xlane.f32.xlu0 %v967
        %v969 = vpop.xlane.xlu0 %968
        %v970 = vmax.f32 %v912, %v914
        %971 = vmax.xlane.f32.xlu0 %v970
        %v972 = vpop.xlane.xlu0 %971
        %v973 = vmax.f32 %v916, %v918
        %974 = vmax.xlane.f32.xlu0 %v973
        %v975 = vpop.xlane.xlu0 %974
        %v976 = vmax.f32 %v922, %v924
        %977 = vmax.xlane.f32.xlu0 %v976
        %v978 = vpop.xlane.xlu0 %977
        %v979 = vmax.f32 %v926, %v928
        %980 = vmax.xlane.f32.xlu0 %v979
        %v981 = vpop.xlane.xlu0 %980
        %v982 = vmax.f32 %v932, %v934
        %983 = vmax.xlane.f32.xlu0 %v982
        %v984 = vpop.xlane.xlu0 %983
        %v985 = vmax.f32 %v936, %v938
        %986 = vmax.xlane.f32.xlu0 %v985
        %v987 = vpop.xlane.xlu0 %986
        %v988 = vsub.f32 %v862, %v942
        %v989 = vsub.f32 %v864, %v942
        %v990 = vsub.f32 %v866, %v945
        %v991 = vsub.f32 %v868, %v945
        %v992 = vsub.f32 %v872, %v948
        %v993 = vsub.f32 %v874, %v948
        %v994 = vsub.f32 %v876, %v951
        %v995 = vsub.f32 %v878, %v951
        %v996 = vsub.f32 %v882, %v954
        %v997 = vsub.f32 %v884, %v954
        %v998 = vsub.f32 %v886, %v957
        %v999 = vsub.f32 %v888, %v957
        %v1000 = vsub.f32 %v892, %v960
        %v1001 = vsub.f32 %v894, %v960
        %v1002 = vsub.f32 %v896, %v963
        %v1003 = vsub.f32 %v898, %v963
        %v1004 = vsub.f32 %v902, %v966
        %v1005 = vsub.f32 %v904, %v966
        %v1006 = vsub.f32 %v906, %v969
        %v1007 = vsub.f32 %v908, %v969
        %v1008 = vsub.f32 %v912, %v972
        %v1009 = vsub.f32 %v914, %v972
        %v1010 = vsub.f32 %v916, %v975
        %v1011 = vsub.f32 %v918, %v975
        %v1012 = vsub.f32 %v922, %v978
        %v1013 = vsub.f32 %v924, %v978
        %v1014 = vsub.f32 %v926, %v981
        %v1015 = vsub.f32 %v928, %v981
        %v1016 = vsub.f32 %v932, %v984
        %v1017 = vsub.f32 %v934, %v984
        %v1018 = vsub.f32 %v936, %v987
        %v1019 = vsub.f32 %v938, %v987
        %v1020 = vmul.f32 %v988, 1.442695
        %v1021 = vpow.pop %v1020
        %v1022 = vmul.f32 %v989, 1.442695
        %v1023 = vpow.pop %v1022
        %v1024 = vmul.f32 %v990, 1.442695
        %v1025 = vpow.pop %v1024
        %v1026 = vmul.f32 %v991, 1.442695
        %v1027 = vpow.pop %v1026
        %v1028 = vmul.f32 %v992, 1.442695
        %v1029 = vpow.pop %v1028
        %v1030 = vmul.f32 %v993, 1.442695
        %v1031 = vpow.pop %v1030
        %v1032 = vmul.f32 %v994, 1.442695
        %v1033 = vpow.pop %v1032
        %v1034 = vmul.f32 %v995, 1.442695
        %v1035 = vpow.pop %v1034
        %v1036 = vmul.f32 %v996, 1.442695
        %v1037 = vpow.pop %v1036
        %v1038 = vmul.f32 %v997, 1.442695
        %v1039 = vpow.pop %v1038
        %v1040 = vmul.f32 %v998, 1.442695
        %v1041 = vpow.pop %v1040
        %v1042 = vmul.f32 %v999, 1.442695
        %v1043 = vpow.pop %v1042
        %v1044 = vmul.f32 %v1000, 1.442695
        %v1045 = vpow.pop %v1044
        %v1046 = vmul.f32 %v1001, 1.442695
        %v1047 = vpow.pop %v1046
        %v1048 = vmul.f32 %v1002, 1.442695
        %v1049 = vpow.pop %v1048
        %v1050 = vmul.f32 %v1003, 1.442695
        %v1051 = vpow.pop %v1050
        %v1052 = vmul.f32 %v1004, 1.442695
        %v1053 = vpow.pop %v1052
        %v1054 = vmul.f32 %v1005, 1.442695
        %v1055 = vpow.pop %v1054
        %v1056 = vmul.f32 %v1006, 1.442695
        %v1057 = vpow.pop %v1056
        %v1058 = vmul.f32 %v1007, 1.442695
        %v1059 = vpow.pop %v1058
        %v1060 = vmul.f32 %v1008, 1.442695
        %v1061 = vpow.pop %v1060
        %v1062 = vmul.f32 %v1009, 1.442695
        %v1063 = vpow.pop %v1062
        %v1064 = vmul.f32 %v1010, 1.442695
        %v1065 = vpow.pop %v1064
        %v1066 = vmul.f32 %v1011, 1.442695
        %v1067 = vpow.pop %v1066
        %v1068 = vmul.f32 %v1012, 1.442695
        %v1069 = vpow.pop %v1068
        %v1070 = vmul.f32 %v1013, 1.442695
        %v1071 = vpow.pop %v1070
        %v1072 = vmul.f32 %v1014, 1.442695
        %v1073 = vpow.pop %v1072
        %v1074 = vmul.f32 %v1015, 1.442695
        %v1075 = vpow.pop %v1074
        %v1076 = vmul.f32 %v1016, 1.442695
        %v1077 = vpow.pop %v1076
        %v1078 = vmul.f32 %v1017, 1.442695
        %v1079 = vpow.pop %v1078
        %v1080 = vmul.f32 %v1018, 1.442695
        %v1081 = vpow.pop %v1080
        %v1082 = vmul.f32 %v1019, 1.442695
        %v1083 = vpow.pop %v1082
        %v1084 = vadd.f32 %v1021, %v1023
        %1085 = vadd.xlane.f32.xlu0 %v1084
        %v1086 = vpop.xlane.xlu0 %1085
        %v1087 = vadd.f32 %v1025, %v1027
        %1088 = vadd.xlane.f32.xlu0 %v1087
        %v1089 = vpop.xlane.xlu0 %1088
        %v1090 = vadd.f32 %v1029, %v1031
        %1091 = vadd.xlane.f32.xlu0 %v1090
        %v1092 = vpop.xlane.xlu0 %1091
        %v1093 = vadd.f32 %v1033, %v1035
        %1094 = vadd.xlane.f32.xlu0 %v1093
        %v1095 = vpop.xlane.xlu0 %1094
        %v1096 = vadd.f32 %v1037, %v1039
        %1097 = vadd.xlane.f32.xlu0 %v1096
        %v1098 = vpop.xlane.xlu0 %1097
        %v1099 = vadd.f32 %v1041, %v1043
        %1100 = vadd.xlane.f32.xlu0 %v1099
        %v1101 = vpop.xlane.xlu0 %1100
        %v1102 = vadd.f32 %v1045, %v1047
        %1103 = vadd.xlane.f32.xlu0 %v1102
        %v1104 = vpop.xlane.xlu0 %1103
        %v1105 = vadd.f32 %v1049, %v1051
        %1106 = vadd.xlane.f32.xlu0 %v1105
        %v1107 = vpop.xlane.xlu0 %1106
        %v1108 = vadd.f32 %v1053, %v1055
        %1109 = vadd.xlane.f32.xlu0 %v1108
        %v1110 = vpop.xlane.xlu0 %1109
        %v1111 = vadd.f32 %v1057, %v1059
        %1112 = vadd.xlane.f32.xlu0 %v1111
        %v1113 = vpop.xlane.xlu0 %1112
        %v1114 = vadd.f32 %v1061, %v1063
        %1115 = vadd.xlane.f32.xlu0 %v1114
        %v1116 = vpop.xlane.xlu0 %1115
        %v1117 = vadd.f32 %v1065, %v1067
        %1118 = vadd.xlane.f32.xlu0 %v1117
        %v1119 = vpop.xlane.xlu0 %1118
        %v1120 = vadd.f32 %v1069, %v1071
        %1121 = vadd.xlane.f32.xlu0 %v1120
        %v1122 = vpop.xlane.xlu0 %1121
        %v1123 = vadd.f32 %v1073, %v1075
        %1124 = vadd.xlane.f32.xlu0 %v1123
        %v1125 = vpop.xlane.xlu0 %1124
        %v1126 = vadd.f32 %v1077, %v1079
        %1127 = vadd.xlane.f32.xlu0 %v1126
        %v1128 = vpop.xlane.xlu0 %1127
        %v1129 = vadd.f32 %v1081, %v1083
        %1130 = vadd.xlane.f32.xlu0 %v1129
        %v1131 = vpop.xlane.xlu0 %1130
        %v1132 = vrcp.pop %v1086
        %v1133 = vrcp.pop %v1089
        %v1134 = vrcp.pop %v1092
        %v1135 = vrcp.pop %v1095
        %v1136 = vrcp.pop %v1098
        %v1137 = vrcp.pop %v1101
        %v1138 = vrcp.pop %v1104
        %v1139 = vrcp.pop %v1107
        %v1140 = vrcp.pop %v1110
        %v1141 = vrcp.pop %v1113
        %v1142 = vrcp.pop %v1116
        %v1143 = vrcp.pop %v1119
        %v1144 = vrcp.pop %v1122
        %v1145 = vrcp.pop %v1125
        %v1146 = vrcp.pop %v1128
        %v1147 = vrcp.pop %v1131
        %v1148 = vmul.f32 %v1021, %v1132
        %v1149 = vmul.f32 %v1023, %v1132
        %v1150 = vmul.f32 %v1025, %v1133
        %v1151 = vmul.f32 %v1027, %v1133
        %v1152 = vmul.f32 %v1029, %v1134
        %v1153 = vmul.f32 %v1031, %v1134
        %v1154 = vmul.f32 %v1033, %v1135
        %v1155 = vmul.f32 %v1035, %v1135
        %v1156 = vmul.f32 %v1037, %v1136
        %v1157 = vmul.f32 %v1039, %v1136
        %v1158 = vmul.f32 %v1041, %v1137
        %v1159 = vmul.f32 %v1043, %v1137
        %v1160 = vmul.f32 %v1045, %v1138
        %v1161 = vmul.f32 %v1047, %v1138
        %v1162 = vmul.f32 %v1049, %v1139
        %v1163 = vmul.f32 %v1051, %v1139
        %v1164 = vmul.f32 %v1053, %v1140
        %v1165 = vmul.f32 %v1055, %v1140
        %v1166 = vmul.f32 %v1057, %v1141
        %v1167 = vmul.f32 %v1059, %v1141
        %v1168 = vmul.f32 %v1061, %v1142
        %v1169 = vmul.f32 %v1063, %v1142
        %v1170 = vmul.f32 %v1065, %v1143
        %v1171 = vmul.f32 %v1067, %v1143
        %v1172 = vmul.f32 %v1069, %v1144
        %v1173 = vmul.f32 %v1071, %v1144
        %v1174 = vmul.f32 %v1073, %v1145
        %v1175 = vmul.f32 %v1075, %v1145
        %v1176 = vmul.f32 %v1077, %v1146
        %v1177 = vmul.f32 %v1079, %v1146
        %v1178 = vmul.f32 %v1081, %v1147
        %v1179 = vmul.f32 %v1083, %v1147
        %v1180 = vpack.c.bf16 %v1150, %v1148
        %v1181 = vpack.c.bf16 %v1151, %v1149
        %v1182 = vpack.c.bf16 %v1154, %v1152
        %v1183 = vpack.c.bf16 %v1155, %v1153
        %v1184 = vpack.c.bf16 %v1158, %v1156
        %v1185 = vpack.c.bf16 %v1159, %v1157
        %v1186 = vpack.c.bf16 %v1162, %v1160
        %v1187 = vpack.c.bf16 %v1163, %v1161
        %v1188 = vpack.c.bf16 %v1166, %v1164
        %v1189 = vpack.c.bf16 %v1167, %v1165
        %v1190 = vpack.c.bf16 %v1170, %v1168
        %v1191 = vpack.c.bf16 %v1171, %v1169
        %v1192 = vpack.c.bf16 %v1174, %v1172
        %v1193 = vpack.c.bf16 %v1175, %v1173
        %v1194 = vpack.c.bf16 %v1178, %v1176
        %v1195 = vpack.c.bf16 %v1179, %v1177
        %v1228 = vunpack.c.l.b16 %v642
        %v1229 = vunpack.c.l.b16 %v643
        %v1230 = vunpack.c.l.b16 %v644
        %v1231 = vunpack.c.l.b16 %v645
        %v1232 = vunpack.c.l.b16 %v646
        %v1233 = vunpack.c.l.b16 %v647
        %v1234 = vunpack.c.l.b16 %v648
        %v1235 = vunpack.c.l.b16 %v649
        %v1236 = vunpack.c.l.b16 %v650
        %v1237 = vunpack.c.l.b16 %v651
        %v1238 = vunpack.c.l.b16 %v652
        %v1239 = vunpack.c.l.b16 %v653
        %v1240 = vunpack.c.l.b16 %v654
        %v1241 = vunpack.c.l.b16 %v655
        %v1242 = vunpack.c.l.b16 %v656
        %v1243 = vunpack.c.l.b16 %v657
        %v1244 = vunpack.c.l.b16 %v658
        %v1245 = vunpack.c.l.b16 %v659
        %v1246 = vunpack.c.l.b16 %v660
        %v1247 = vunpack.c.l.b16 %v661
        %v1248 = vunpack.c.l.b16 %v662
        %v1249 = vunpack.c.l.b16 %v663
        %v1250 = vunpack.c.l.b16 %v664
        %v1251 = vunpack.c.l.b16 %v665
        %v1252 = vunpack.c.l.b16 %v666
        %v1253 = vunpack.c.l.b16 %v667
        %v1254 = vunpack.c.l.b16 %v668
        %v1255 = vunpack.c.l.b16 %v669
        %v1256 = vunpack.c.l.b16 %v670
        %v1257 = vunpack.c.l.b16 %v671
        %v1258 = vunpack.c.l.b16 %v672
        %v1259 = vunpack.c.l.b16 %v673
        %v1260 = vpack.c.b16 %v1229, %v1228
        %v1261 = vpack.c.b16 %v1231, %v1230
        %v1262 = vpack.c.b16 %v1233, %v1232
        %v1263 = vpack.c.b16 %v1235, %v1234
        %v1264 = vpack.c.b16 %v1237, %v1236
        %v1265 = vpack.c.b16 %v1239, %v1238
        %v1266 = vpack.c.b16 %v1241, %v1240
        %v1267 = vpack.c.b16 %v1243, %v1242
        %v1268 = vpack.c.b16 %v1245, %v1244
        %v1269 = vpack.c.b16 %v1247, %v1246
        %v1270 = vpack.c.b16 %v1249, %v1248
        %v1271 = vpack.c.b16 %v1251, %v1250
        %v1272 = vpack.c.b16 %v1253, %v1252
        %v1273 = vpack.c.b16 %v1255, %v1254
        %v1274 = vpack.c.b16 %v1257, %v1256
        %v1275 = vpack.c.b16 %v1259, %v1258
        %1292 = vmatprep.subr.bf16.mxu0 0
        %1293 = vmatpush1.bf16.msra.mxu0 %v1260
        %1294 = vmatprep.subr.bf16.mxu0 0
        %1295 = vmatpush1.bf16.msra.mxu0 %v1261
        %1296 = vmatprep.subr.bf16.mxu0 0
        %1297 = vmatpush1.bf16.msra.mxu0 %v1262
        %1298 = vmatprep.subr.bf16.mxu0 0
        %1299 = vmatpush1.bf16.msra.mxu0 %v1263
        %1300 = vmatprep.subr.bf16.mxu0 0
        %1301 = vmatpush1.bf16.msra.mxu0 %v1264
        %1302 = vmatprep.subr.bf16.mxu0 0
        %1303 = vmatpush1.bf16.msra.mxu0 %v1265
        %1304 = vmatprep.subr.bf16.mxu0 0
        %1305 = vmatpush1.bf16.msra.mxu0 %v1266
        %1306 = vmatprep.subr.bf16.mxu0 0
        %1307 = vmatpush1.bf16.msra.mxu0 %v1267
        %1308 = vmatprep.subr.bf16.mxu0 0
        %1309 = vmatpush1.bf16.msra.mxu0 %v1268
        %1310 = vmatprep.subr.bf16.mxu0 0
        %1311 = vmatpush1.bf16.msra.mxu0 %v1269
        %1312 = vmatprep.subr.bf16.mxu0 0
        %1313 = vmatpush1.bf16.msra.mxu0 %v1270
        %1314 = vmatprep.subr.bf16.mxu0 0
        %1315 = vmatpush1.bf16.msra.mxu0 %v1271
        %1316 = vmatprep.subr.bf16.mxu0 0
        %1317 = vmatpush1.bf16.msra.mxu0 %v1272
        %1318 = vmatprep.subr.bf16.mxu0 0
        %1319 = vmatpush1.bf16.msra.mxu0 %v1273
        %1320 = vmatprep.subr.bf16.mxu0 0
        %1321 = vmatpush1.bf16.msra.mxu0 %v1274
        %1322 = vmatprep.subr.bf16.mxu0 0
        %1323 = vmatpush1.bf16.msra.mxu0 %v1275
        %1324 = vmatprep.mubr.bf16.mxu0 %v1181
        %1325 = vmatmul.mubr.bf16.gmra.mrb[0].mxu0 %v1180
        %v1326 = vpop.f32.mrb[0].mxu0
        %v1327 = vadd.f32 0.0, %v1326
        %v1328 = vpop.f32.mrb[0].mxu0
        %v1329 = vpop.f32.mrb[0].mxu0
        %v1330 = vadd.f32 0.0, %v1329
        %v1331 = vpop.f32.mrb[0].mxu0
        %1332 = vmatprep.mubr.bf16.mxu0 %v1183
        %1333 = vmatmul.mubr.bf16.gmra.mrb[0].mxu0 %v1182
        %v1334 = vpop.f32.mrb[0].mxu0
        %v1335 = vadd.f32 0.0, %v1334
        %v1336 = vpop.f32.mrb[0].mxu0
        %v1337 = vpop.f32.mrb[0].mxu0
        %v1338 = vadd.f32 0.0, %v1337
        %v1339 = vpop.f32.mrb[0].mxu0
        %1340 = vmatprep.mubr.bf16.mxu0 %v1185
        %1341 = vmatmul.mubr.bf16.gmra.mrb[0].mxu0 %v1184
        %v1342 = vpop.f32.mrb[0].mxu0
        %v1343 = vadd.f32 0.0, %v1342
        %v1344 = vpop.f32.mrb[0].mxu0
        %v1345 = vpop.f32.mrb[0].mxu0
        %v1346 = vadd.f32 0.0, %v1345
        %v1347 = vpop.f32.mrb[0].mxu0
        %1348 = vmatprep.mubr.bf16.mxu0 %v1187
        %1349 = vmatmul.mubr.bf16.gmra.mrb[0].mxu0 %v1186
        %v1350 = vpop.f32.mrb[0].mxu0
        %v1351 = vadd.f32 0.0, %v1350
        %v1352 = vpop.f32.mrb[0].mxu0
        %v1353 = vpop.f32.mrb[0].mxu0
        %v1354 = vadd.f32 0.0, %v1353
        %v1355 = vpop.f32.mrb[0].mxu0
        %1356 = vmatprep.mubr.bf16.mxu0 %v1189
        %1357 = vmatmul.mubr.bf16.gmra.mrb[0].mxu0 %v1188
        %v1358 = vpop.f32.mrb[0].mxu0
        %v1359 = vadd.f32 0.0, %v1358
        %v1360 = vpop.f32.mrb[0].mxu0
        %v1361 = vpop.f32.mrb[0].mxu0
        %v1362 = vadd.f32 0.0, %v1361
        %v1363 = vpop.f32.mrb[0].mxu0
        %1364 = vmatprep.mubr.bf16.mxu0 %v1191
        %1365 = vmatmul.mubr.bf16.gmra.mrb[0].mxu0 %v1190
        %v1366 = vpop.f32.mrb[0].mxu0
        %v1367 = vadd.f32 0.0, %v1366
        %v1368 = vpop.f32.mrb[0].mxu0
        %v1369 = vpop.f32.mrb[0].mxu0
        %v1370 = vadd.f32 0.0, %v1369
        %v1371 = vpop.f32.mrb[0].mxu0
        %1372 = vmatprep.mubr.bf16.mxu0 %v1193
        %1373 = vmatmul.mubr.bf16.gmra.mrb[0].mxu0 %v1192
        %v1374 = vpop.f32.mrb[0].mxu0
        %v1375 = vadd.f32 0.0, %v1374
        %v1376 = vpop.f32.mrb[0].mxu0
        %v1377 = vpop.f32.mrb[0].mxu0
        %v1378 = vadd.f32 0.0, %v1377
        %v1379 = vpop.f32.mrb[0].mxu0
        %1380 = vmatprep.mubr.bf16.mxu0 %v1195
        %1381 = vmatmul.mubr.bf16.gmra.mrb[0].mxu0 %v1194
        %v1382 = vpop.f32.mrb[0].mxu0
        %v1383 = vadd.f32 0.0, %v1382
        %v1384 = vpop.f32.mrb[0].mxu0
        %v1385 = vpop.f32.mrb[0].mxu0
        %v1386 = vadd.f32 0.0, %v1385
        %v1387 = vpop.f32.mrb[0].mxu0
        %1388 = vdwg.mxu0
        %v1389 = vpack.c.bf16 %v1330, %v1327
        %v1390 = vpack.c.bf16 %v1338, %v1335
        %v1391 = vpack.c.bf16 %v1346, %v1343
        %v1392 = vpack.c.bf16 %v1354, %v1351
        %v1393 = vpack.c.bf16 %v1362, %v1359
        %v1394 = vpack.c.bf16 %v1370, %v1367
        %v1395 = vpack.c.bf16 %v1378, %v1375
        %v1396 = vpack.c.bf16 %v1386, %v1383
        %1397 = vst.msk [vmem:[#allocation2] sm:$0xff] %vm754, %v1389
        %1398 = vst.msk [vmem:[#allocation2 + $0x8] sm:$0xff] %vm754, %v1390
        %1399 = vst.msk [vmem:[#allocation2 + $0x10] sm:$0xff] %vm754, %v1391
        %1400 = vst.msk [vmem:[#allocation2 + $0x18] sm:$0xff] %vm754, %v1392
        %1401 = vst.msk [vmem:[#allocation2 + $0x20] sm:$0xff] %vm754, %v1393
        %1402 = vst.msk [vmem:[#allocation2 + $0x28] sm:$0xff] %vm754, %v1394
        %1403 = vst.msk [vmem:[#allocation2 + $0x30] sm:$0xff] %vm754, %v1395
        %1404 = vst.msk [vmem:[#allocation2 + $0x38] sm:$0xff] %vm754, %v1396
        %1413 = vrot.lane.b32.xlu0 %v602, 96
        %v1414 = vpop.permute.xlu0 %1413
        %1415 = vrot.lane.b32.xlu0 %v603, 96
        %v1416 = vpop.permute.xlu0 %1415
        %1417 = vrot.lane.b32.xlu0 %v604, 96
        %v1418 = vpop.permute.xlu0 %1417
        %1419 = vrot.lane.b32.xlu0 %v605, 96
        %v1420 = vpop.permute.xlu0 %1419
        %1421 = vrot.lane.b32.xlu0 %v606, 96
        %v1422 = vpop.permute.xlu0 %1421
        %1423 = vrot.lane.b32.xlu0 %v607, 96
        %v1424 = vpop.permute.xlu0 %1423
        %1425 = vrot.lane.b32.xlu0 %v608, 96
        %v1426 = vpop.permute.xlu0 %1425
        %1427 = vrot.lane.b32.xlu0 %v609, 96
        %v1428 = vpop.permute.xlu0 %1427
        %1429 = vrot.lane.b32.xlu0 %v738, 96
        %v1430 = vpop.permute.xlu0 %1429
        %1431 = vrot.lane.b32.xlu0 %v739, 96
        %v1432 = vpop.permute.xlu0 %1431
        %1433 = vrot.lane.b32.xlu0 %v740, 96
        %v1434 = vpop.permute.xlu0 %1433
        %1435 = vrot.lane.b32.xlu0 %v741, 96
        %v1436 = vpop.permute.xlu0 %1435
        %1437 = vrot.lane.b32.xlu0 %v742, 96
        %v1438 = vpop.permute.xlu0 %1437
        %1439 = vrot.lane.b32.xlu0 %v743, 96
        %v1440 = vpop.permute.xlu0 %1439
        %1441 = vrot.lane.b32.xlu0 %v744, 96
        %v1442 = vpop.permute.xlu0 %1441
        %1443 = vrot.lane.b32.xlu0 %v745, 96
        %v1444 = vpop.permute.xlu0 %1443
        %1445 = vrot.lane.b32.xlu0 %v746, 96
        %v1446 = vpop.permute.xlu0 %1445
        %1447 = vrot.lane.b32.xlu0 %v747, 96
        %v1448 = vpop.permute.xlu0 %1447
        %1449 = vrot.lane.b32.xlu0 %v748, 96
        %v1450 = vpop.permute.xlu0 %1449
        %1451 = vrot.lane.b32.xlu0 %v749, 96
        %v1452 = vpop.permute.xlu0 %1451
        %1453 = vrot.lane.b32.xlu0 %v750, 96
        %v1454 = vpop.permute.xlu0 %1453
        %1455 = vrot.lane.b32.xlu0 %v751, 96
        %v1456 = vpop.permute.xlu0 %1455
        %1457 = vrot.lane.b32.xlu0 %v752, 96
        %v1458 = vpop.permute.xlu0 %1457
        %1459 = vrot.lane.b32.xlu0 %v753, 96
        %v1460 = vpop.permute.xlu0 %1459
        %v1462 = vsel %vm754, %v1414, 0
        %v1465 = vsel %vm754, %v1416, 0
        %v1468 = vsel %vm754, %v1418, 0
        %v1471 = vsel %vm754, %v1420, 0
        %v1474 = vsel %vm754, %v1422, 0
        %v1477 = vsel %vm754, %v1424, 0
        %v1480 = vsel %vm754, %v1426, 0
        %v1483 = vsel %vm754, %v1428, 0
        %v1486 = vsel %vm754, %v1430, 0
        %v1489 = vsel %vm754, %v1432, 0
        %v1492 = vsel %vm754, %v1434, 0
        %v1495 = vsel %vm754, %v1436, 0
        %v1498 = vsel %vm754, %v1438, 0
        %v1501 = vsel %vm754, %v1440, 0
        %v1504 = vsel %vm754, %v1442, 0
        %v1507 = vsel %vm754, %v1444, 0
        %v1510 = vsel %vm754, %v1446, 0
        %v1513 = vsel %vm754, %v1448, 0
        %v1516 = vsel %vm754, %v1450, 0
        %v1519 = vsel %vm754, %v1452, 0
        %v1522 = vsel %vm754, %v1454, 0
        %v1525 = vsel %vm754, %v1456, 0
        %v1528 = vsel %vm754, %v1458, 0
        %v1531 = vsel %vm754, %v1460, 0
        %1533 = vmatprep.subr.bf16.mxu0 0
        %1534 = vmatpush1.bf16.xpose.msra.mxu0 %v1486
        %1535 = vmatprep.subr.bf16.mxu0 0
        %1536 = vmatpush1.bf16.xpose.msra.mxu0 %v1489
        %1537 = vmatprep.subr.bf16.mxu0 0
        %1538 = vmatpush1.bf16.xpose.msra.mxu0 %v1492
        %1539 = vmatprep.subr.bf16.mxu0 0
        %1540 = vmatpush1.bf16.xpose.msra.mxu0 %v1495
        %1541 = vmatprep.subr.bf16.mxu0 0
        %1542 = vmatpush1.bf16.xpose.msra.mxu0 %v1498
        %1543 = vmatprep.subr.bf16.mxu0 0
        %1544 = vmatpush1.bf16.xpose.msra.mxu0 %v1501
        %1545 = vmatprep.subr.bf16.mxu0 0
        %1546 = vmatpush1.bf16.xpose.msra.mxu0 %v1504
        %1547 = vmatprep.subr.bf16.mxu0 0
        %1548 = vmatpush1.bf16.xpose.msra.mxu0 %v1507
        %1549 = vmatprep.subr.bf16.mxu0 0
        %1550 = vmatpush1.bf16.xpose.msra.mxu0 %v1510
        %1551 = vmatprep.subr.bf16.mxu0 0
        %1552 = vmatpush1.bf16.xpose.msra.mxu0 %v1513
        %1553 = vmatprep.subr.bf16.mxu0 0
        %1554 = vmatpush1.bf16.xpose.msra.mxu0 %v1516
        %1555 = vmatprep.subr.bf16.mxu0 0
        %1556 = vmatpush1.bf16.xpose.msra.mxu0 %v1519
        %1557 = vmatprep.subr.bf16.mxu0 0
        %1558 = vmatpush1.bf16.xpose.msra.mxu0 %v1522
        %1559 = vmatprep.subr.bf16.mxu0 0
        %1560 = vmatpush1.bf16.xpose.msra.mxu0 %v1525
        %1561 = vmatprep.subr.bf16.mxu0 0
        %1562 = vmatpush1.bf16.xpose.msra.mxu0 %v1528
        %1563 = vmatprep.subr.bf16.mxu0 0
        %1564 = vmatpush1.bf16.xpose.msra.mxu0 %v1531
        %1565 = vmatprep.mubr.bf16.mxu0 0
        %1566 = vmatmul.mubr.bf16.gmra.mrb[0].mxu0 %v1462
        %v1567 = vpop.f32.mrb[0].mxu0
        %v1568 = vadd.f32 0.0, %v1567
        %v1569 = vpop.f32.mrb[0].mxu0
        %v1570 = vadd.f32 0.0, %v1569
        %v1571 = vpop.f32.mrb[0].mxu0
        %v1572 = vadd.f32 0.0, %v1571
        %v1573 = vpop.f32.mrb[0].mxu0
        %v1574 = vadd.f32 0.0, %v1573
        %1575 = vmatprep.mubr.bf16.mxu0 0
        %1576 = vmatmul.mubr.bf16.gmra.mrb[0].mxu0 %v1465
        %v1577 = vpop.f32.mrb[0].mxu0
        %v1578 = vadd.f32 0.0, %v1577
        %v1579 = vpop.f32.mrb[0].mxu0
        %v1580 = vadd.f32 0.0, %v1579
        %v1581 = vpop.f32.mrb[0].mxu0
        %v1582 = vadd.f32 0.0, %v1581
        %v1583 = vpop.f32.mrb[0].mxu0
        %v1584 = vadd.f32 0.0, %v1583
        %1585 = vmatprep.mubr.bf16.mxu0 0
        %1586 = vmatmul.mubr.bf16.gmra.mrb[0].mxu0 %v1468
        %v1587 = vpop.f32.mrb[0].mxu0
        %v1588 = vadd.f32 0.0, %v1587
        %v1589 = vpop.f32.mrb[0].mxu0
        %v1590 = vadd.f32 0.0, %v1589
        %v1591 = vpop.f32.mrb[0].mxu0
        %v1592 = vadd.f32 0.0, %v1591
        %v1593 = vpop.f32.mrb[0].mxu0
        %v1594 = vadd.f32 0.0, %v1593
        %1595 = vmatprep.mubr.bf16.mxu0 0
        %1596 = vmatmul.mubr.bf16.gmra.mrb[0].mxu0 %v1471
        %v1597 = vpop.f32.mrb[0].mxu0
        %v1598 = vadd.f32 0.0, %v1597
        %v1599 = vpop.f32.mrb[0].mxu0
        %v1600 = vadd.f32 0.0, %v1599
        %v1601 = vpop.f32.mrb[0].mxu0
        %v1602 = vadd.f32 0.0, %v1601
        %v1603 = vpop.f32.mrb[0].mxu0
        %v1604 = vadd.f32 0.0, %v1603
        %1605 = vmatprep.mubr.bf16.mxu0 0
        %1606 = vmatmul.mubr.bf16.gmra.mrb[0].mxu0 %v1474
        %v1607 = vpop.f32.mrb[0].mxu0
        %v1608 = vadd.f32 0.0, %v1607
        %v1609 = vpop.f32.mrb[0].mxu0
        %v1610 = vadd.f32 0.0, %v1609
        %v1611 = vpop.f32.mrb[0].mxu0
        %v1612 = vadd.f32 0.0, %v1611
        %v1613 = vpop.f32.mrb[0].mxu0
        %v1614 = vadd.f32 0.0, %v1613
        %1615 = vmatprep.mubr.bf16.mxu0 0
        %1616 = vmatmul.mubr.bf16.gmra.mrb[0].mxu0 %v1477
        %v1617 = vpop.f32.mrb[0].mxu0
        %v1618 = vadd.f32 0.0, %v1617
        %v1619 = vpop.f32.mrb[0].mxu0
        %v1620 = vadd.f32 0.0, %v1619
        %v1621 = vpop.f32.mrb[0].mxu0
        %v1622 = vadd.f32 0.0, %v1621
        %v1623 = vpop.f32.mrb[0].mxu0
        %v1624 = vadd.f32 0.0, %v1623
        %1625 = vmatprep.mubr.bf16.mxu0 0
        %1626 = vmatmul.mubr.bf16.gmra.mrb[0].mxu0 %v1480
        %v1627 = vpop.f32.mrb[0].mxu0
        %v1628 = vadd.f32 0.0, %v1627
        %v1629 = vpop.f32.mrb[0].mxu0
        %v1630 = vadd.f32 0.0, %v1629
        %v1631 = vpop.f32.mrb[0].mxu0
        %v1632 = vadd.f32 0.0, %v1631
        %v1633 = vpop.f32.mrb[0].mxu0
        %v1634 = vadd.f32 0.0, %v1633
        %1635 = vmatprep.mubr.bf16.mxu0 0
        %1636 = vmatmul.mubr.bf16.gmra.mrb[0].mxu0 %v1483
        %v1637 = vpop.f32.mrb[0].mxu0
        %v1638 = vadd.f32 0.0, %v1637
        %v1639 = vpop.f32.mrb[0].mxu0
        %v1640 = vadd.f32 0.0, %v1639
        %v1641 = vpop.f32.mrb[0].mxu0
        %v1642 = vadd.f32 0.0, %v1641
        %v1643 = vpop.f32.mrb[0].mxu0
        %v1644 = vadd.f32 0.0, %v1643
        %1645 = vdwg.mxu0
        %v1646 = vmax.f32 %v1568, %v1570
        %1647 = vmax.xlane.f32.xlu0 %v1646
        %v1648 = vpop.xlane.xlu0 %1647
        %v1649 = vmax.f32 %v1572, %v1574
        %1650 = vmax.xlane.f32.xlu0 %v1649
        %v1651 = vpop.xlane.xlu0 %1650
        %v1652 = vmax.f32 %v1578, %v1580
        %1653 = vmax.xlane.f32.xlu0 %v1652
        %v1654 = vpop.xlane.xlu0 %1653
        %v1655 = vmax.f32 %v1582, %v1584
        %1656 = vmax.xlane.f32.xlu0 %v1655
        %v1657 = vpop.xlane.xlu0 %1656
        %v1658 = vmax.f32 %v1588, %v1590
        %1659 = vmax.xlane.f32.xlu0 %v1658
        %v1660 = vpop.xlane.xlu0 %1659
        %v1661 = vmax.f32 %v1592, %v1594
        %1662 = vmax.xlane.f32.xlu0 %v1661
        %v1663 = vpop.xlane.xlu0 %1662
        %v1664 = vmax.f32 %v1598, %v1600
        %1665 = vmax.xlane.f32.xlu0 %v1664
        %v1666 = vpop.xlane.xlu0 %1665
        %v1667 = vmax.f32 %v1602, %v1604
        %1668 = vmax.xlane.f32.xlu0 %v1667
        %v1669 = vpop.xlane.xlu0 %1668
        %v1670 = vmax.f32 %v1608, %v1610
        %1671 = vmax.xlane.f32.xlu0 %v1670
        %v1672 = vpop.xlane.xlu0 %1671
        %v1673 = vmax.f32 %v1612, %v1614
        %1674 = vmax.xlane.f32.xlu0 %v1673
        %v1675 = vpop.xlane.xlu0 %1674
        %v1676 = vmax.f32 %v1618, %v1620
        %1677 = vmax.xlane.f32.xlu0 %v1676
        %v1678 = vpop.xlane.xlu0 %1677
        %v1679 = vmax.f32 %v1622, %v1624
        %1680 = vmax.xlane.f32.xlu0 %v1679
        %v1681 = vpop.xlane.xlu0 %1680
        %v1682 = vmax.f32 %v1628, %v1630
        %1683 = vmax.xlane.f32.xlu0 %v1682
        %v1684 = vpop.xlane.xlu0 %1683
        %v1685 = vmax.f32 %v1632, %v1634
        %1686 = vmax.xlane.f32.xlu0 %v1685
        %v1687 = vpop.xlane.xlu0 %1686
        %v1688 = vmax.f32 %v1638, %v1640
        %1689 = vmax.xlane.f32.xlu0 %v1688
        %v1690 = vpop.xlane.xlu0 %1689
        %v1691 = vmax.f32 %v1642, %v1644
        %1692 = vmax.xlane.f32.xlu0 %v1691
        %v1693 = vpop.xlane.xlu0 %1692
        %v1694 = vsub.f32 %v1568, %v1648
        %v1695 = vsub.f32 %v1570, %v1648
        %v1696 = vsub.f32 %v1572, %v1651
        %v1697 = vsub.f32 %v1574, %v1651
        %v1698 = vsub.f32 %v1578, %v1654
        %v1699 = vsub.f32 %v1580, %v1654
        %v1700 = vsub.f32 %v1582, %v1657
        %v1701 = vsub.f32 %v1584, %v1657
        %v1702 = vsub.f32 %v1588, %v1660
        %v1703 = vsub.f32 %v1590, %v1660
        %v1704 = vsub.f32 %v1592, %v1663
        %v1705 = vsub.f32 %v1594, %v1663
        %v1706 = vsub.f32 %v1598, %v1666
        %v1707 = vsub.f32 %v1600, %v1666
        %v1708 = vsub.f32 %v1602, %v1669
        %v1709 = vsub.f32 %v1604, %v1669
        %v1710 = vsub.f32 %v1608, %v1672
        %v1711 = vsub.f32 %v1610, %v1672
        %v1712 = vsub.f32 %v1612, %v1675
        %v1713 = vsub.f32 %v1614, %v1675
        %v1714 = vsub.f32 %v1618, %v1678
        %v1715 = vsub.f32 %v1620, %v1678
        %v1716 = vsub.f32 %v1622, %v1681
        %v1717 = vsub.f32 %v1624, %v1681
        %v1718 = vsub.f32 %v1628, %v1684
        %v1719 = vsub.f32 %v1630, %v1684
        %v1720 = vsub.f32 %v1632, %v1687
        %v1721 = vsub.f32 %v1634, %v1687
        %v1722 = vsub.f32 %v1638, %v1690
        %v1723 = vsub.f32 %v1640, %v1690
        %v1724 = vsub.f32 %v1642, %v1693
        %v1725 = vsub.f32 %v1644, %v1693
        %v1726 = vmul.f32 %v1694, 1.442695
        %v1727 = vpow.pop %v1726
        %v1728 = vmul.f32 %v1695, 1.442695
        %v1729 = vpow.pop %v1728
        %v1730 = vmul.f32 %v1696, 1.442695
        %v1731 = vpow.pop %v1730
        %v1732 = vmul.f32 %v1697, 1.442695
        %v1733 = vpow.pop %v1732
        %v1734 = vmul.f32 %v1698, 1.442695
        %v1735 = vpow.pop %v1734
        %v1736 = vmul.f32 %v1699, 1.442695
        %v1737 = vpow.pop %v1736
        %v1738 = vmul.f32 %v1700, 1.442695
        %v1739 = vpow.pop %v1738
        %v1740 = vmul.f32 %v1701, 1.442695
        %v1741 = vpow.pop %v1740
        %v1742 = vmul.f32 %v1702, 1.442695
        %v1743 = vpow.pop %v1742
        %v1744 = vmul.f32 %v1703, 1.442695
        %v1745 = vpow.pop %v1744
        %v1746 = vmul.f32 %v1704, 1.442695
        %v1747 = vpow.pop %v1746
        %v1748 = vmul.f32 %v1705, 1.442695
        %v1749 = vpow.pop %v1748
        %v1750 = vmul.f32 %v1706, 1.442695
        %v1751 = vpow.pop %v1750
        %v1752 = vmul.f32 %v1707, 1.442695
        %v1753 = vpow.pop %v1752
        %v1754 = vmul.f32 %v1708, 1.442695
        %v1755 = vpow.pop %v1754
        %v1756 = vmul.f32 %v1709, 1.442695
        %v1757 = vpow.pop %v1756
        %v1758 = vmul.f32 %v1710, 1.442695
        %v1759 = vpow.pop %v1758
        %v1760 = vmul.f32 %v1711, 1.442695
        %v1761 = vpow.pop %v1760
        %v1762 = vmul.f32 %v1712, 1.442695
        %v1763 = vpow.pop %v1762
        %v1764 = vmul.f32 %v1713, 1.442695
        %v1765 = vpow.pop %v1764
        %v1766 = vmul.f32 %v1714, 1.442695
        %v1767 = vpow.pop %v1766
        %v1768 = vmul.f32 %v1715, 1.442695
        %v1769 = vpow.pop %v1768
        %v1770 = vmul.f32 %v1716, 1.442695
        %v1771 = vpow.pop %v1770
        %v1772 = vmul.f32 %v1717, 1.442695
        %v1773 = vpow.pop %v1772
        %v1774 = vmul.f32 %v1718, 1.442695
        %v1775 = vpow.pop %v1774
        %v1776 = vmul.f32 %v1719, 1.442695
        %v1777 = vpow.pop %v1776
        %v1778 = vmul.f32 %v1720, 1.442695
        %v1779 = vpow.pop %v1778
        %v1780 = vmul.f32 %v1721, 1.442695
        %v1781 = vpow.pop %v1780
        %v1782 = vmul.f32 %v1722, 1.442695
        %v1783 = vpow.pop %v1782
        %v1784 = vmul.f32 %v1723, 1.442695
        %v1785 = vpow.pop %v1784
        %v1786 = vmul.f32 %v1724, 1.442695
        %v1787 = vpow.pop %v1786
        %v1788 = vmul.f32 %v1725, 1.442695
        %v1789 = vpow.pop %v1788
        %v1790 = vadd.f32 %v1727, %v1729
        %1791 = vadd.xlane.f32.xlu0 %v1790
        %v1792 = vpop.xlane.xlu0 %1791
        %v1793 = vadd.f32 %v1731, %v1733
        %1794 = vadd.xlane.f32.xlu0 %v1793
        %v1795 = vpop.xlane.xlu0 %1794
        %v1796 = vadd.f32 %v1735, %v1737
        %1797 = vadd.xlane.f32.xlu0 %v1796
        %v1798 = vpop.xlane.xlu0 %1797
        %v1799 = vadd.f32 %v1739, %v1741
        %1800 = vadd.xlane.f32.xlu0 %v1799
        %v1801 = vpop.xlane.xlu0 %1800
        %v1802 = vadd.f32 %v1743, %v1745
        %1803 = vadd.xlane.f32.xlu0 %v1802
        %v1804 = vpop.xlane.xlu0 %1803
        %v1805 = vadd.f32 %v1747, %v1749
        %1806 = vadd.xlane.f32.xlu0 %v1805
        %v1807 = vpop.xlane.xlu0 %1806
        %v1808 = vadd.f32 %v1751, %v1753
        %1809 = vadd.xlane.f32.xlu0 %v1808
        %v1810 = vpop.xlane.xlu0 %1809
        %v1811 = vadd.f32 %v1755, %v1757
        %1812 = vadd.xlane.f32.xlu0 %v1811
        %v1813 = vpop.xlane.xlu0 %1812
        %v1814 = vadd.f32 %v1759, %v1761
        %1815 = vadd.xlane.f32.xlu0 %v1814
        %v1816 = vpop.xlane.xlu0 %1815
        %v1817 = vadd.f32 %v1763, %v1765
        %1818 = vadd.xlane.f32.xlu0 %v1817
        %v1819 = vpop.xlane.xlu0 %1818
        %v1820 = vadd.f32 %v1767, %v1769
        %1821 = vadd.xlane.f32.xlu0 %v1820
        %v1822 = vpop.xlane.xlu0 %1821
        %v1823 = vadd.f32 %v1771, %v1773
        %1824 = vadd.xlane.f32.xlu0 %v1823
        %v1825 = vpop.xlane.xlu0 %1824
        %v1826 = vadd.f32 %v1775, %v1777
        %1827 = vadd.xlane.f32.xlu0 %v1826
        %v1828 = vpop.xlane.xlu0 %1827
        %v1829 = vadd.f32 %v1779, %v1781
        %1830 = vadd.xlane.f32.xlu0 %v1829
        %v1831 = vpop.xlane.xlu0 %1830
        %v1832 = vadd.f32 %v1783, %v1785
        %1833 = vadd.xlane.f32.xlu0 %v1832
        %v1834 = vpop.xlane.xlu0 %1833
        %v1835 = vadd.f32 %v1787, %v1789
        %1836 = vadd.xlane.f32.xlu0 %v1835
        %v1837 = vpop.xlane.xlu0 %1836
        %v1838 = vrcp.pop %v1792
        %v1839 = vrcp.pop %v1795
        %v1840 = vrcp.pop %v1798
        %v1841 = vrcp.pop %v1801
        %v1842 = vrcp.pop %v1804
        %v1843 = vrcp.pop %v1807
        %v1844 = vrcp.pop %v1810
        %v1845 = vrcp.pop %v1813
        %v1846 = vrcp.pop %v1816
        %v1847 = vrcp.pop %v1819
        %v1848 = vrcp.pop %v1822
        %v1849 = vrcp.pop %v1825
        %v1850 = vrcp.pop %v1828
        %v1851 = vrcp.pop %v1831
        %v1852 = vrcp.pop %v1834
        %v1853 = vrcp.pop %v1837
        %v1854 = vmul.f32 %v1727, %v1838
        %v1855 = vmul.f32 %v1729, %v1838
        %v1856 = vmul.f32 %v1731, %v1839
        %v1857 = vmul.f32 %v1733, %v1839
        %v1858 = vmul.f32 %v1735, %v1840
        %v1859 = vmul.f32 %v1737, %v1840
        %v1860 = vmul.f32 %v1739, %v1841
        %v1861 = vmul.f32 %v1741, %v1841
        %v1862 = vmul.f32 %v1743, %v1842
        %v1863 = vmul.f32 %v1745, %v1842
        %v1864 = vmul.f32 %v1747, %v1843
        %v1865 = vmul.f32 %v1749, %v1843
        %v1866 = vmul.f32 %v1751, %v1844
        %v1867 = vmul.f32 %v1753, %v1844
        %v1868 = vmul.f32 %v1755, %v1845
        %v1869 = vmul.f32 %v1757, %v1845
        %v1870 = vmul.f32 %v1759, %v1846
        %v1871 = vmul.f32 %v1761, %v1846
        %v1872 = vmul.f32 %v1763, %v1847
        %v1873 = vmul.f32 %v1765, %v1847
        %v1874 = vmul.f32 %v1767, %v1848
        %v1875 = vmul.f32 %v1769, %v1848
        %v1876 = vmul.f32 %v1771, %v1849
        %v1877 = vmul.f32 %v1773, %v1849
        %v1878 = vmul.f32 %v1775, %v1850
        %v1879 = vmul.f32 %v1777, %v1850
        %v1880 = vmul.f32 %v1779, %v1851
        %v1881 = vmul.f32 %v1781, %v1851
        %v1882 = vmul.f32 %v1783, %v1852
        %v1883 = vmul.f32 %v1785, %v1852
        %v1884 = vmul.f32 %v1787, %v1853
        %v1885 = vmul.f32 %v1789, %v1853
        %v1886 = vpack.c.bf16 %v1856, %v1854
        %v1887 = vpack.c.bf16 %v1857, %v1855
        %v1888 = vpack.c.bf16 %v1860, %v1858
        %v1889 = vpack.c.bf16 %v1861, %v1859
        %v1890 = vpack.c.bf16 %v1864, %v1862
        %v1891 = vpack.c.bf16 %v1865, %v1863
        %v1892 = vpack.c.bf16 %v1868, %v1866
        %v1893 = vpack.c.bf16 %v1869, %v1867
        %v1894 = vpack.c.bf16 %v1872, %v1870
        %v1895 = vpack.c.bf16 %v1873, %v1871
        %v1896 = vpack.c.bf16 %v1876, %v1874
        %v1897 = vpack.c.bf16 %v1877, %v1875
        %v1898 = vpack.c.bf16 %v1880, %v1878
        %v1899 = vpack.c.bf16 %v1881, %v1879
        %v1900 = vpack.c.bf16 %v1884, %v1882
        %v1901 = vpack.c.bf16 %v1885, %v1883
        %1902 = vrot.lane.b32.xlu0 %v1260, 96
        %v1903 = vpop.permute.xlu0 %1902
        %1904 = vrot.lane.b32.xlu0 %v1261, 96
        %v1905 = vpop.permute.xlu0 %1904
        %1906 = vrot.lane.b32.xlu0 %v1262, 96
        %v1907 = vpop.permute.xlu0 %1906
        %1908 = vrot.lane.b32.xlu0 %v1263, 96
        %v1909 = vpop.permute.xlu0 %1908
        %1910 = vrot.lane.b32.xlu0 %v1264, 96
        %v1911 = vpop.permute.xlu0 %1910
        %1912 = vrot.lane.b32.xlu0 %v1265, 96
        %v1913 = vpop.permute.xlu0 %1912
        %1914 = vrot.lane.b32.xlu0 %v1266, 96
        %v1915 = vpop.permute.xlu0 %1914
        %1916 = vrot.lane.b32.xlu0 %v1267, 96
        %v1917 = vpop.permute.xlu0 %1916
        %1918 = vrot.lane.b32.xlu0 %v1268, 96
        %v1919 = vpop.permute.xlu0 %1918
        %1920 = vrot.lane.b32.xlu0 %v1269, 96
        %v1921 = vpop.permute.xlu0 %1920
        %1922 = vrot.lane.b32.xlu0 %v1270, 96
        %v1923 = vpop.permute.xlu0 %1922
        %1924 = vrot.lane.b32.xlu0 %v1271, 96
        %v1925 = vpop.permute.xlu0 %1924
        %1926 = vrot.lane.b32.xlu0 %v1272, 96
        %v1927 = vpop.permute.xlu0 %1926
        %1928 = vrot.lane.b32.xlu0 %v1273, 96
        %v1929 = vpop.permute.xlu0 %1928
        %1930 = vrot.lane.b32.xlu0 %v1274, 96
        %v1931 = vpop.permute.xlu0 %1930
        %1932 = vrot.lane.b32.xlu0 %v1275, 96
        %v1933 = vpop.permute.xlu0 %1932
        %1950 = vmatprep.subr.bf16.mxu0 0
        %1951 = vmatpush1.bf16.msra.mxu0 %v1903
        %1952 = vmatprep.subr.bf16.mxu0 0
        %1953 = vmatpush1.bf16.msra.mxu0 %v1905
        %1954 = vmatprep.subr.bf16.mxu0 0
        %1955 = vmatpush1.bf16.msra.mxu0 %v1907
        %1956 = vmatprep.subr.bf16.mxu0 0
        %1957 = vmatpush1.bf16.msra.mxu0 %v1909
        %1958 = vmatprep.subr.bf16.mxu0 0
        %1959 = vmatpush1.bf16.msra.mxu0 %v1911
        %1960 = vmatprep.subr.bf16.mxu0 0
        %1961 = vmatpush1.bf16.msra.mxu0 %v1913
        %1962 = vmatprep.subr.bf16.mxu0 0
        %1963 = vmatpush1.bf16.msra.mxu0 %v1915
        %1964 = vmatprep.subr.bf16.mxu0 0
        %1965 = vmatpush1.bf16.msra.mxu0 %v1917
        %1966 = vmatprep.subr.bf16.mxu0 0
        %1967 = vmatpush1.bf16.msra.mxu0 %v1919
        %1968 = vmatprep.subr.bf16.mxu0 0
        %1969 = vmatpush1.bf16.msra.mxu0 %v1921
        %1970 = vmatprep.subr.bf16.mxu0 0
        %1971 = vmatpush1.bf16.msra.mxu0 %v1923
        %1972 = vmatprep.subr.bf16.mxu0 0
        %1973 = vmatpush1.bf16.msra.mxu0 %v1925
        %1974 = vmatprep.subr.bf16.mxu0 0
        %1975 = vmatpush1.bf16.msra.mxu0 %v1927
        %1976 = vmatprep.subr.bf16.mxu0 0
        %1977 = vmatpush1.bf16.msra.mxu0 %v1929
        %1978 = vmatprep.subr.bf16.mxu0 0
        %1979 = vmatpush1.bf16.msra.mxu0 %v1931
        %1980 = vmatprep.subr.bf16.mxu0 0
        %1981 = vmatpush1.bf16.msra.mxu0 %v1933
        %1982 = vmatprep.mubr.bf16.mxu0 %v1887
        %1983 = vmatmul.mubr.bf16.gmra.mrb[0].mxu0 %v1886
        %v1984 = vpop.f32.mrb[0].mxu0
        %v1985 = vadd.f32 0.0, %v1984
        %v1986 = vpop.f32.mrb[0].mxu0
        %v1987 = vpop.f32.mrb[0].mxu0
        %v1988 = vadd.f32 0.0, %v1987
        %v1989 = vpop.f32.mrb[0].mxu0
        %1990 = vmatprep.mubr.bf16.mxu0 %v1889
        %1991 = vmatmul.mubr.bf16.gmra.mrb[0].mxu0 %v1888
        %v1992 = vpop.f32.mrb[0].mxu0
        %v1993 = vadd.f32 0.0, %v1992
        %v1994 = vpop.f32.mrb[0].mxu0
        %v1995 = vpop.f32.mrb[0].mxu0
        %v1996 = vadd.f32 0.0, %v1995
        %v1997 = vpop.f32.mrb[0].mxu0
        %1998 = vmatprep.mubr.bf16.mxu0 %v1891
        %1999 = vmatmul.mubr.bf16.gmra.mrb[0].mxu0 %v1890
        %v2000 = vpop.f32.mrb[0].mxu0
        %v2001 = vadd.f32 0.0, %v2000
        %v2002 = vpop.f32.mrb[0].mxu0
        %v2003 = vpop.f32.mrb[0].mxu0
        %v2004 = vadd.f32 0.0, %v2003
        %v2005 = vpop.f32.mrb[0].mxu0
        %2006 = vmatprep.mubr.bf16.mxu0 %v1893
        %2007 = vmatmul.mubr.bf16.gmra.mrb[0].mxu0 %v1892
        %v2008 = vpop.f32.mrb[0].mxu0
        %v2009 = vadd.f32 0.0, %v2008
        %v2010 = vpop.f32.mrb[0].mxu0
        %v2011 = vpop.f32.mrb[0].mxu0
        %v2012 = vadd.f32 0.0, %v2011
        %v2013 = vpop.f32.mrb[0].mxu0
        %2014 = vmatprep.mubr.bf16.mxu0 %v1895
        %2015 = vmatmul.mubr.bf16.gmra.mrb[0].mxu0 %v1894
        %v2016 = vpop.f32.mrb[0].mxu0
        %v2017 = vadd.f32 0.0, %v2016
        %v2018 = vpop.f32.mrb[0].mxu0
        %v2019 = vpop.f32.mrb[0].mxu0
        %v2020 = vadd.f32 0.0, %v2019
        %v2021 = vpop.f32.mrb[0].mxu0
        %2022 = vmatprep.mubr.bf16.mxu0 %v1897
        %2023 = vmatmul.mubr.bf16.gmra.mrb[0].mxu0 %v1896
        %v2024 = vpop.f32.mrb[0].mxu0
        %v2025 = vadd.f32 0.0, %v2024
        %v2026 = vpop.f32.mrb[0].mxu0
        %v2027 = vpop.f32.mrb[0].mxu0
        %v2028 = vadd.f32 0.0, %v2027
        %v2029 = vpop.f32.mrb[0].mxu0
        %2030 = vmatprep.mubr.bf16.mxu0 %v1899
        %2031 = vmatmul.mubr.bf16.gmra.mrb[0].mxu0 %v1898
        %v2032 = vpop.f32.mrb[0].mxu0
        %v2033 = vadd.f32 0.0, %v2032
        %v2034 = vpop.f32.mrb[0].mxu0
        %v2035 = vpop.f32.mrb[0].mxu0
        %v2036 = vadd.f32 0.0, %v2035
        %v2037 = vpop.f32.mrb[0].mxu0
        %2038 = vmatprep.mubr.bf16.mxu0 %v1901
        %2039 = vmatmul.mubr.bf16.gmra.mrb[0].mxu0 %v1900
        %v2040 = vpop.f32.mrb[0].mxu0
        %v2041 = vadd.f32 0.0, %v2040
        %v2042 = vpop.f32.mrb[0].mxu0
        %v2043 = vpop.f32.mrb[0].mxu0
        %v2044 = vadd.f32 0.0, %v2043
        %v2045 = vpop.f32.mrb[0].mxu0
        %2046 = vdwg.mxu0
        %v2047 = vpack.c.bf16 %v1988, %v1985
        %v2048 = vpack.c.bf16 %v1996, %v1993
        %v2049 = vpack.c.bf16 %v2004, %v2001
        %v2050 = vpack.c.bf16 %v2012, %v2009
        %v2051 = vpack.c.bf16 %v2020, %v2017
        %v2052 = vpack.c.bf16 %v2028, %v2025
        %v2053 = vpack.c.bf16 %v2036, %v2033
        %v2054 = vpack.c.bf16 %v2044, %v2041
        %2063 = vrot.lane.b32.xlu0 %v2047, 32
        %v2064 = vpop.permute.xlu0 %2063
        %2065 = vrot.lane.b32.xlu0 %v2048, 32
        %v2066 = vpop.permute.xlu0 %2065
        %2067 = vrot.lane.b32.xlu0 %v2049, 32
        %v2068 = vpop.permute.xlu0 %2067
        %2069 = vrot.lane.b32.xlu0 %v2050, 32
        %v2070 = vpop.permute.xlu0 %2069
        %2071 = vrot.lane.b32.xlu0 %v2051, 32
        %v2072 = vpop.permute.xlu0 %2071
        %2073 = vrot.lane.b32.xlu0 %v2052, 32
        %v2074 = vpop.permute.xlu0 %2073
        %2075 = vrot.lane.b32.xlu0 %v2053, 32
        %v2076 = vpop.permute.xlu0 %2075
        %2077 = vrot.lane.b32.xlu0 %v2054, 32
        %v2078 = vpop.permute.xlu0 %2077
        %vm2087 = vcmask 523520
        %2088 = vst.msk [vmem:[#allocation2] sm:$0xff] %vm2087, %v2064
        %2089 = vst.msk [vmem:[#allocation2 + $0x8] sm:$0xff] %vm2087, %v2066
        %2090 = vst.msk [vmem:[#allocation2 + $0x10] sm:$0xff] %vm2087, %v2068
        %2091 = vst.msk [vmem:[#allocation2 + $0x18] sm:$0xff] %vm2087, %v2070
        %2092 = vst.msk [vmem:[#allocation2 + $0x20] sm:$0xff] %vm2087, %v2072
        %2093 = vst.msk [vmem:[#allocation2 + $0x28] sm:$0xff] %vm2087, %v2074
        %2094 = vst.msk [vmem:[#allocation2 + $0x30] sm:$0xff] %vm2087, %v2076
        %2095 = vst.msk [vmem:[#allocation2 + $0x38] sm:$0xff] %vm2087, %v2078
        %2096 = vrot.lane.b32.xlu0 %v602, 64
        %v2097 = vpop.permute.xlu0 %2096
        %2098 = vrot.lane.b32.xlu0 %v603, 64
        %v2099 = vpop.permute.xlu0 %2098
        %2100 = vrot.lane.b32.xlu0 %v604, 64
        %v2101 = vpop.permute.xlu0 %2100
        %2102 = vrot.lane.b32.xlu0 %v605, 64
        %v2103 = vpop.permute.xlu0 %2102
        %2104 = vrot.lane.b32.xlu0 %v606, 64
        %v2105 = vpop.permute.xlu0 %2104
        %2106 = vrot.lane.b32.xlu0 %v607, 64
        %v2107 = vpop.permute.xlu0 %2106
        %2108 = vrot.lane.b32.xlu0 %v608, 64
        %v2109 = vpop.permute.xlu0 %2108
        %2110 = vrot.lane.b32.xlu0 %v609, 64
        %v2111 = vpop.permute.xlu0 %2110
        %2112 = vrot.lane.b32.xlu0 %v738, 64
        %v2113 = vpop.permute.xlu0 %2112
        %2114 = vrot.lane.b32.xlu0 %v739, 64
        %v2115 = vpop.permute.xlu0 %2114
        %2116 = vrot.lane.b32.xlu0 %v740, 64
        %v2117 = vpop.permute.xlu0 %2116
        %2118 = vrot.lane.b32.xlu0 %v741, 64
        %v2119 = vpop.permute.xlu0 %2118
        %2120 = vrot.lane.b32.xlu0 %v742, 64
        %v2121 = vpop.permute.xlu0 %2120
        %2122 = vrot.lane.b32.xlu0 %v743, 64
        %v2123 = vpop.permute.xlu0 %2122
        %2124 = vrot.lane.b32.xlu0 %v744, 64
        %v2125 = vpop.permute.xlu0 %2124
        %2126 = vrot.lane.b32.xlu0 %v745, 64
        %v2127 = vpop.permute.xlu0 %2126
        %2128 = vrot.lane.b32.xlu0 %v746, 64
        %v2129 = vpop.permute.xlu0 %2128
        %2130 = vrot.lane.b32.xlu0 %v747, 64
        %v2131 = vpop.permute.xlu0 %2130
        %2132 = vrot.lane.b32.xlu0 %v748, 64
        %v2133 = vpop.permute.xlu0 %2132
        %2134 = vrot.lane.b32.xlu0 %v749, 64
        %v2135 = vpop.permute.xlu0 %2134
        %2136 = vrot.lane.b32.xlu0 %v750, 64
        %v2137 = vpop.permute.xlu0 %2136
        %2138 = vrot.lane.b32.xlu0 %v751, 64
        %v2139 = vpop.permute.xlu0 %2138
        %2140 = vrot.lane.b32.xlu0 %v752, 64
        %v2141 = vpop.permute.xlu0 %2140
        %2142 = vrot.lane.b32.xlu0 %v753, 64
        %v2143 = vpop.permute.xlu0 %2142
        %v2145 = vsel %vm754, %v2097, 0
        %v2148 = vsel %vm754, %v2099, 0
        %v2151 = vsel %vm754, %v2101, 0
        %v2154 = vsel %vm754, %v2103, 0
        %v2157 = vsel %vm754, %v2105, 0
        %v2160 = vsel %vm754, %v2107, 0
        %v2163 = vsel %vm754, %v2109, 0
        %v2166 = vsel %vm754, %v2111, 0
        %v2169 = vsel %vm754, %v2113, 0
        %v2172 = vsel %vm754, %v2115, 0
        %v2175 = vsel %vm754, %v2117, 0
        %v2178 = vsel %vm754, %v2119, 0
        %v2181 = vsel %vm754, %v2121, 0
        %v2184 = vsel %vm754, %v2123, 0
        %v2187 = vsel %vm754, %v2125, 0
        %v2190 = vsel %vm754, %v2127, 0
        %v2193 = vsel %vm754, %v2129, 0
        %v2196 = vsel %vm754, %v2131, 0
        %v2199 = vsel %vm754, %v2133, 0
        %v2202 = vsel %vm754, %v2135, 0
        %v2205 = vsel %vm754, %v2137, 0
        %v2208 = vsel %vm754, %v2139, 0
        %v2211 = vsel %vm754, %v2141, 0
        %v2214 = vsel %vm754, %v2143, 0
        %2216 = vmatprep.subr.bf16.mxu0 0
        %2217 = vmatpush1.bf16.xpose.msra.mxu0 %v2169
        %2218 = vmatprep.subr.bf16.mxu0 0
        %2219 = vmatpush1.bf16.xpose.msra.mxu0 %v2172
        %2220 = vmatprep.subr.bf16.mxu0 0
        %2221 = vmatpush1.bf16.xpose.msra.mxu0 %v2175
        %2222 = vmatprep.subr.bf16.mxu0 0
        %2223 = vmatpush1.bf16.xpose.msra.mxu0 %v2178
        %2224 = vmatprep.subr.bf16.mxu0 0
        %2225 = vmatpush1.bf16.xpose.msra.mxu0 %v2181
        %2226 = vmatprep.subr.bf16.mxu0 0
        %2227 = vmatpush1.bf16.xpose.msra.mxu0 %v2184
        %2228 = vmatprep.subr.bf16.mxu0 0
        %2229 = vmatpush1.bf16.xpose.msra.mxu0 %v2187
        %2230 = vmatprep.subr.bf16.mxu0 0
        %2231 = vmatpush1.bf16.xpose.msra.mxu0 %v2190
        %2232 = vmatprep.subr.bf16.mxu0 0
        %2233 = vmatpush1.bf16.xpose.msra.mxu0 %v2193
        %2234 = vmatprep.subr.bf16.mxu0 0
        %2235 = vmatpush1.bf16.xpose.msra.mxu0 %v2196
        %2236 = vmatprep.subr.bf16.mxu0 0
        %2237 = vmatpush1.bf16.xpose.msra.mxu0 %v2199
        %2238 = vmatprep.subr.bf16.mxu0 0
        %2239 = vmatpush1.bf16.xpose.msra.mxu0 %v2202
        %2240 = vmatprep.subr.bf16.mxu0 0
        %2241 = vmatpush1.bf16.xpose.msra.mxu0 %v2205
        %2242 = vmatprep.subr.bf16.mxu0 0
        %2243 = vmatpush1.bf16.xpose.msra.mxu0 %v2208
        %2244 = vmatprep.subr.bf16.mxu0 0
        %2245 = vmatpush1.bf16.xpose.msra.mxu0 %v2211
        %2246 = vmatprep.subr.bf16.mxu0 0
        %2247 = vmatpush1.bf16.xpose.msra.mxu0 %v2214
        %2248 = vmatprep.mubr.bf16.mxu0 0
        %2249 = vmatmul.mubr.bf16.gmra.mrb[0].mxu0 %v2145
        %v2250 = vpop.f32.mrb[0].mxu0
        %v2251 = vadd.f32 0.0, %v2250
        %v2252 = vpop.f32.mrb[0].mxu0
        %v2253 = vadd.f32 0.0, %v2252
        %v2254 = vpop.f32.mrb[0].mxu0
        %v2255 = vadd.f32 0.0, %v2254
        %v2256 = vpop.f32.mrb[0].mxu0
        %v2257 = vadd.f32 0.0, %v2256
        %2258 = vmatprep.mubr.bf16.mxu0 0
        %2259 = vmatmul.mubr.bf16.gmra.mrb[0].mxu0 %v2148
        %v2260 = vpop.f32.mrb[0].mxu0
        %v2261 = vadd.f32 0.0, %v2260
        %v2262 = vpop.f32.mrb[0].mxu0
        %v2263 = vadd.f32 0.0, %v2262
        %v2264 = vpop.f32.mrb[0].mxu0
        %v2265 = vadd.f32 0.0, %v2264
        %v2266 = vpop.f32.mrb[0].mxu0
        %v2267 = vadd.f32 0.0, %v2266
        %2268 = vmatprep.mubr.bf16.mxu0 0
        %2269 = vmatmul.mubr.bf16.gmra.mrb[0].mxu0 %v2151
        %v2270 = vpop.f32.mrb[0].mxu0
        %v2271 = vadd.f32 0.0, %v2270
        %v2272 = vpop.f32.mrb[0].mxu0
        %v2273 = vadd.f32 0.0, %v2272
        %v2274 = vpop.f32.mrb[0].mxu0
        %v2275 = vadd.f32 0.0, %v2274
        %v2276 = vpop.f32.mrb[0].mxu0
        %v2277 = vadd.f32 0.0, %v2276
        %2278 = vmatprep.mubr.bf16.mxu0 0
        %2279 = vmatmul.mubr.bf16.gmra.mrb[0].mxu0 %v2154
        %v2280 = vpop.f32.mrb[0].mxu0
        %v2281 = vadd.f32 0.0, %v2280
        %v2282 = vpop.f32.mrb[0].mxu0
        %v2283 = vadd.f32 0.0, %v2282
        %v2284 = vpop.f32.mrb[0].mxu0
        %v2285 = vadd.f32 0.0, %v2284
        %v2286 = vpop.f32.mrb[0].mxu0
        %v2287 = vadd.f32 0.0, %v2286
        %2288 = vmatprep.mubr.bf16.mxu0 0
        %2289 = vmatmul.mubr.bf16.gmra.mrb[0].mxu0 %v2157
        %v2290 = vpop.f32.mrb[0].mxu0
        %v2291 = vadd.f32 0.0, %v2290
        %v2292 = vpop.f32.mrb[0].mxu0
        %v2293 = vadd.f32 0.0, %v2292
        %v2294 = vpop.f32.mrb[0].mxu0
        %v2295 = vadd.f32 0.0, %v2294
        %v2296 = vpop.f32.mrb[0].mxu0
        %v2297 = vadd.f32 0.0, %v2296
        %2298 = vmatprep.mubr.bf16.mxu0 0
        %2299 = vmatmul.mubr.bf16.gmra.mrb[0].mxu0 %v2160
        %v2300 = vpop.f32.mrb[0].mxu0
        %v2301 = vadd.f32 0.0, %v2300
        %v2302 = vpop.f32.mrb[0].mxu0
        %v2303 = vadd.f32 0.0, %v2302
        %v2304 = vpop.f32.mrb[0].mxu0
        %v2305 = vadd.f32 0.0, %v2304
        %v2306 = vpop.f32.mrb[0].mxu0
        %v2307 = vadd.f32 0.0, %v2306
        %2308 = vmatprep.mubr.bf16.mxu0 0
        %2309 = vmatmul.mubr.bf16.gmra.mrb[0].mxu0 %v2163
        %v2310 = vpop.f32.mrb[0].mxu0
        %v2311 = vadd.f32 0.0, %v2310
        %v2312 = vpop.f32.mrb[0].mxu0
        %v2313 = vadd.f32 0.0, %v2312
        %v2314 = vpop.f32.mrb[0].mxu0
        %v2315 = vadd.f32 0.0, %v2314
        %v2316 = vpop.f32.mrb[0].mxu0
        %v2317 = vadd.f32 0.0, %v2316
        %2318 = vmatprep.mubr.bf16.mxu0 0
        %2319 = vmatmul.mubr.bf16.gmra.mrb[0].mxu0 %v2166
        %v2320 = vpop.f32.mrb[0].mxu0
        %v2321 = vadd.f32 0.0, %v2320
        %v2322 = vpop.f32.mrb[0].mxu0
        %v2323 = vadd.f32 0.0, %v2322
        %v2324 = vpop.f32.mrb[0].mxu0
        %v2325 = vadd.f32 0.0, %v2324
        %v2326 = vpop.f32.mrb[0].mxu0
        %v2327 = vadd.f32 0.0, %v2326
        %2328 = vdwg.mxu0
        %v2329 = vmax.f32 %v2251, %v2253
        %2330 = vmax.xlane.f32.xlu0 %v2329
        %v2331 = vpop.xlane.xlu0 %2330
        %v2332 = vmax.f32 %v2255, %v2257
        %2333 = vmax.xlane.f32.xlu0 %v2332
        %v2334 = vpop.xlane.xlu0 %2333
        %v2335 = vmax.f32 %v2261, %v2263
        %2336 = vmax.xlane.f32.xlu0 %v2335
        %v2337 = vpop.xlane.xlu0 %2336
        %v2338 = vmax.f32 %v2265, %v2267
        %2339 = vmax.xlane.f32.xlu0 %v2338
        %v2340 = vpop.xlane.xlu0 %2339
        %v2341 = vmax.f32 %v2271, %v2273
        %2342 = vmax.xlane.f32.xlu0 %v2341
        %v2343 = vpop.xlane.xlu0 %2342
        %v2344 = vmax.f32 %v2275, %v2277
        %2345 = vmax.xlane.f32.xlu0 %v2344
        %v2346 = vpop.xlane.xlu0 %2345
        %v2347 = vmax.f32 %v2281, %v2283
        %2348 = vmax.xlane.f32.xlu0 %v2347
        %v2349 = vpop.xlane.xlu0 %2348
        %v2350 = vmax.f32 %v2285, %v2287
        %2351 = vmax.xlane.f32.xlu0 %v2350
        %v2352 = vpop.xlane.xlu0 %2351
        %v2353 = vmax.f32 %v2291, %v2293
        %2354 = vmax.xlane.f32.xlu0 %v2353
        %v2355 = vpop.xlane.xlu0 %2354
        %v2356 = vmax.f32 %v2295, %v2297
        %2357 = vmax.xlane.f32.xlu0 %v2356
        %v2358 = vpop.xlane.xlu0 %2357
        %v2359 = vmax.f32 %v2301, %v2303
        %2360 = vmax.xlane.f32.xlu0 %v2359
        %v2361 = vpop.xlane.xlu0 %2360
        %v2362 = vmax.f32 %v2305, %v2307
        %2363 = vmax.xlane.f32.xlu0 %v2362
        %v2364 = vpop.xlane.xlu0 %2363
        %v2365 = vmax.f32 %v2311, %v2313
        %2366 = vmax.xlane.f32.xlu0 %v2365
        %v2367 = vpop.xlane.xlu0 %2366
        %v2368 = vmax.f32 %v2315, %v2317
        %2369 = vmax.xlane.f32.xlu0 %v2368
        %v2370 = vpop.xlane.xlu0 %2369
        %v2371 = vmax.f32 %v2321, %v2323
        %2372 = vmax.xlane.f32.xlu0 %v2371
        %v2373 = vpop.xlane.xlu0 %2372
        %v2374 = vmax.f32 %v2325, %v2327
        %2375 = vmax.xlane.f32.xlu0 %v2374
        %v2376 = vpop.xlane.xlu0 %2375
        %v2377 = vsub.f32 %v2251, %v2331
        %v2378 = vsub.f32 %v2253, %v2331
        %v2379 = vsub.f32 %v2255, %v2334
        %v2380 = vsub.f32 %v2257, %v2334
        %v2381 = vsub.f32 %v2261, %v2337
        %v2382 = vsub.f32 %v2263, %v2337
        %v2383 = vsub.f32 %v2265, %v2340
        %v2384 = vsub.f32 %v2267, %v2340
        %v2385 = vsub.f32 %v2271, %v2343
        %v2386 = vsub.f32 %v2273, %v2343
        %v2387 = vsub.f32 %v2275, %v2346
        %v2388 = vsub.f32 %v2277, %v2346
        %v2389 = vsub.f32 %v2281, %v2349
        %v2390 = vsub.f32 %v2283, %v2349
        %v2391 = vsub.f32 %v2285, %v2352
        %v2392 = vsub.f32 %v2287, %v2352
        %v2393 = vsub.f32 %v2291, %v2355
        %v2394 = vsub.f32 %v2293, %v2355
        %v2395 = vsub.f32 %v2295, %v2358
        %v2396 = vsub.f32 %v2297, %v2358
        %v2397 = vsub.f32 %v2301, %v2361
        %v2398 = vsub.f32 %v2303, %v2361
        %v2399 = vsub.f32 %v2305, %v2364
        %v2400 = vsub.f32 %v2307, %v2364
        %v2401 = vsub.f32 %v2311, %v2367
        %v2402 = vsub.f32 %v2313, %v2367
        %v2403 = vsub.f32 %v2315, %v2370
        %v2404 = vsub.f32 %v2317, %v2370
        %v2405 = vsub.f32 %v2321, %v2373
        %v2406 = vsub.f32 %v2323, %v2373
        %v2407 = vsub.f32 %v2325, %v2376
        %v2408 = vsub.f32 %v2327, %v2376
        %v2409 = vmul.f32 %v2377, 1.442695
        %v2410 = vpow.pop %v2409
        %v2411 = vmul.f32 %v2378, 1.442695
        %v2412 = vpow.pop %v2411
        %v2413 = vmul.f32 %v2379, 1.442695
        %v2414 = vpow.pop %v2413
        %v2415 = vmul.f32 %v2380, 1.442695
        %v2416 = vpow.pop %v2415
        %v2417 = vmul.f32 %v2381, 1.442695
        %v2418 = vpow.pop %v2417
        %v2419 = vmul.f32 %v2382, 1.442695
        %v2420 = vpow.pop %v2419
        %v2421 = vmul.f32 %v2383, 1.442695
        %v2422 = vpow.pop %v2421
        %v2423 = vmul.f32 %v2384, 1.442695
        %v2424 = vpow.pop %v2423
        %v2425 = vmul.f32 %v2385, 1.442695
        %v2426 = vpow.pop %v2425
        %v2427 = vmul.f32 %v2386, 1.442695
        %v2428 = vpow.pop %v2427
        %v2429 = vmul.f32 %v2387, 1.442695
        %v2430 = vpow.pop %v2429
        %v2431 = vmul.f32 %v2388, 1.442695
        %v2432 = vpow.pop %v2431
        %v2433 = vmul.f32 %v2389, 1.442695
        %v2434 = vpow.pop %v2433
        %v2435 = vmul.f32 %v2390, 1.442695
        %v2436 = vpow.pop %v2435
        %v2437 = vmul.f32 %v2391, 1.442695
        %v2438 = vpow.pop %v2437
        %v2439 = vmul.f32 %v2392, 1.442695
        %v2440 = vpow.pop %v2439
        %v2441 = vmul.f32 %v2393, 1.442695
        %v2442 = vpow.pop %v2441
        %v2443 = vmul.f32 %v2394, 1.442695
        %v2444 = vpow.pop %v2443
        %v2445 = vmul.f32 %v2395, 1.442695
        %v2446 = vpow.pop %v2445
        %v2447 = vmul.f32 %v2396, 1.442695
        %v2448 = vpow.pop %v2447
        %v2449 = vmul.f32 %v2397, 1.442695
        %v2450 = vpow.pop %v2449
        %v2451 = vmul.f32 %v2398, 1.442695
        %v2452 = vpow.pop %v2451
        %v2453 = vmul.f32 %v2399, 1.442695
        %v2454 = vpow.pop %v2453
        %v2455 = vmul.f32 %v2400, 1.442695
        %v2456 = vpow.pop %v2455
        %v2457 = vmul.f32 %v2401, 1.442695
        %v2458 = vpow.pop %v2457
        %v2459 = vmul.f32 %v2402, 1.442695
        %v2460 = vpow.pop %v2459
        %v2461 = vmul.f32 %v2403, 1.442695
        %v2462 = vpow.pop %v2461
        %v2463 = vmul.f32 %v2404, 1.442695
        %v2464 = vpow.pop %v2463
        %v2465 = vmul.f32 %v2405, 1.442695
        %v2466 = vpow.pop %v2465
        %v2467 = vmul.f32 %v2406, 1.442695
        %v2468 = vpow.pop %v2467
        %v2469 = vmul.f32 %v2407, 1.442695
        %v2470 = vpow.pop %v2469
        %v2471 = vmul.f32 %v2408, 1.442695
        %v2472 = vpow.pop %v2471
        %v2473 = vadd.f32 %v2410, %v2412
        %2474 = vadd.xlane.f32.xlu0 %v2473
        %v2475 = vpop.xlane.xlu0 %2474
        %v2476 = vadd.f32 %v2414, %v2416
        %2477 = vadd.xlane.f32.xlu0 %v2476
        %v2478 = vpop.xlane.xlu0 %2477
        %v2479 = vadd.f32 %v2418, %v2420
        %2480 = vadd.xlane.f32.xlu0 %v2479
        %v2481 = vpop.xlane.xlu0 %2480
        %v2482 = vadd.f32 %v2422, %v2424
        %2483 = vadd.xlane.f32.xlu0 %v2482
        %v2484 = vpop.xlane.xlu0 %2483
        %v2485 = vadd.f32 %v2426, %v2428
        %2486 = vadd.xlane.f32.xlu0 %v2485
        %v2487 = vpop.xlane.xlu0 %2486
        %v2488 = vadd.f32 %v2430, %v2432
        %2489 = vadd.xlane.f32.xlu0 %v2488
        %v2490 = vpop.xlane.xlu0 %2489
        %v2491 = vadd.f32 %v2434, %v2436
        %2492 = vadd.xlane.f32.xlu0 %v2491
        %v2493 = vpop.xlane.xlu0 %2492
        %v2494 = vadd.f32 %v2438, %v2440
        %2495 = vadd.xlane.f32.xlu0 %v2494
        %v2496 = vpop.xlane.xlu0 %2495
        %v2497 = vadd.f32 %v2442, %v2444
        %2498 = vadd.xlane.f32.xlu0 %v2497
        %v2499 = vpop.xlane.xlu0 %2498
        %v2500 = vadd.f32 %v2446, %v2448
        %2501 = vadd.xlane.f32.xlu0 %v2500
        %v2502 = vpop.xlane.xlu0 %2501
        %v2503 = vadd.f32 %v2450, %v2452
        %2504 = vadd.xlane.f32.xlu0 %v2503
        %v2505 = vpop.xlane.xlu0 %2504
        %v2506 = vadd.f32 %v2454, %v2456
        %2507 = vadd.xlane.f32.xlu0 %v2506
        %v2508 = vpop.xlane.xlu0 %2507
        %v2509 = vadd.f32 %v2458, %v2460
        %2510 = vadd.xlane.f32.xlu0 %v2509
        %v2511 = vpop.xlane.xlu0 %2510
        %v2512 = vadd.f32 %v2462, %v2464
        %2513 = vadd.xlane.f32.xlu0 %v2512
        %v2514 = vpop.xlane.xlu0 %2513
        %v2515 = vadd.f32 %v2466, %v2468
        %2516 = vadd.xlane.f32.xlu0 %v2515
        %v2517 = vpop.xlane.xlu0 %2516
        %v2518 = vadd.f32 %v2470, %v2472
        %2519 = vadd.xlane.f32.xlu0 %v2518
        %v2520 = vpop.xlane.xlu0 %2519
        %v2521 = vrcp.pop %v2475
        %v2522 = vrcp.pop %v2478
        %v2523 = vrcp.pop %v2481
        %v2524 = vrcp.pop %v2484
        %v2525 = vrcp.pop %v2487
        %v2526 = vrcp.pop %v2490
        %v2527 = vrcp.pop %v2493
        %v2528 = vrcp.pop %v2496
        %v2529 = vrcp.pop %v2499
        %v2530 = vrcp.pop %v2502
        %v2531 = vrcp.pop %v2505
        %v2532 = vrcp.pop %v2508
        %v2533 = vrcp.pop %v2511
        %v2534 = vrcp.pop %v2514
        %v2535 = vrcp.pop %v2517
        %v2536 = vrcp.pop %v2520
        %v2537 = vmul.f32 %v2410, %v2521
        %v2538 = vmul.f32 %v2412, %v2521
        %v2539 = vmul.f32 %v2414, %v2522
        %v2540 = vmul.f32 %v2416, %v2522
        %v2541 = vmul.f32 %v2418, %v2523
        %v2542 = vmul.f32 %v2420, %v2523
        %v2543 = vmul.f32 %v2422, %v2524
        %v2544 = vmul.f32 %v2424, %v2524
        %v2545 = vmul.f32 %v2426, %v2525
        %v2546 = vmul.f32 %v2428, %v2525
        %v2547 = vmul.f32 %v2430, %v2526
        %v2548 = vmul.f32 %v2432, %v2526
        %v2549 = vmul.f32 %v2434, %v2527
        %v2550 = vmul.f32 %v2436, %v2527
        %v2551 = vmul.f32 %v2438, %v2528
        %v2552 = vmul.f32 %v2440, %v2528
        %v2553 = vmul.f32 %v2442, %v2529
        %v2554 = vmul.f32 %v2444, %v2529
        %v2555 = vmul.f32 %v2446, %v2530
        %v2556 = vmul.f32 %v2448, %v2530
        %v2557 = vmul.f32 %v2450, %v2531
        %v2558 = vmul.f32 %v2452, %v2531
        %v2559 = vmul.f32 %v2454, %v2532
        %v2560 = vmul.f32 %v2456, %v2532
        %v2561 = vmul.f32 %v2458, %v2533
        %v2562 = vmul.f32 %v2460, %v2533
        %v2563 = vmul.f32 %v2462, %v2534
        %v2564 = vmul.f32 %v2464, %v2534
        %v2565 = vmul.f32 %v2466, %v2535
        %v2566 = vmul.f32 %v2468, %v2535
        %v2567 = vmul.f32 %v2470, %v2536
        %v2568 = vmul.f32 %v2472, %v2536
        %v2569 = vpack.c.bf16 %v2539, %v2537
        %v2570 = vpack.c.bf16 %v2540, %v2538
        %v2571 = vpack.c.bf16 %v2543, %v2541
        %v2572 = vpack.c.bf16 %v2544, %v2542
        %v2573 = vpack.c.bf16 %v2547, %v2545
        %v2574 = vpack.c.bf16 %v2548, %v2546
        %v2575 = vpack.c.bf16 %v2551, %v2549
        %v2576 = vpack.c.bf16 %v2552, %v2550
        %v2577 = vpack.c.bf16 %v2555, %v2553
        %v2578 = vpack.c.bf16 %v2556, %v2554
        %v2579 = vpack.c.bf16 %v2559, %v2557
        %v2580 = vpack.c.bf16 %v2560, %v2558
        %v2581 = vpack.c.bf16 %v2563, %v2561
        %v2582 = vpack.c.bf16 %v2564, %v2562
        %v2583 = vpack.c.bf16 %v2567, %v2565
        %v2584 = vpack.c.bf16 %v2568, %v2566
        %2585 = vrot.lane.b32.xlu0 %v1260, 64
        %v2586 = vpop.permute.xlu0 %2585
        %2587 = vrot.lane.b32.xlu0 %v1261, 64
        %v2588 = vpop.permute.xlu0 %2587
        %2589 = vrot.lane.b32.xlu0 %v1262, 64
        %v2590 = vpop.permute.xlu0 %2589
        %2591 = vrot.lane.b32.xlu0 %v1263, 64
        %v2592 = vpop.permute.xlu0 %2591
        %2593 = vrot.lane.b32.xlu0 %v1264, 64
        %v2594 = vpop.permute.xlu0 %2593
        %2595 = vrot.lane.b32.xlu0 %v1265, 64
        %v2596 = vpop.permute.xlu0 %2595
        %2597 = vrot.lane.b32.xlu0 %v1266, 64
        %v2598 = vpop.permute.xlu0 %2597
        %2599 = vrot.lane.b32.xlu0 %v1267, 64
        %v2600 = vpop.permute.xlu0 %2599
        %2601 = vrot.lane.b32.xlu0 %v1268, 64
        %v2602 = vpop.permute.xlu0 %2601
        %2603 = vrot.lane.b32.xlu0 %v1269, 64
        %v2604 = vpop.permute.xlu0 %2603
        %2605 = vrot.lane.b32.xlu0 %v1270, 64
        %v2606 = vpop.permute.xlu0 %2605
        %2607 = vrot.lane.b32.xlu0 %v1271, 64
        %v2608 = vpop.permute.xlu0 %2607
        %2609 = vrot.lane.b32.xlu0 %v1272, 64
        %v2610 = vpop.permute.xlu0 %2609
        %2611 = vrot.lane.b32.xlu0 %v1273, 64
        %v2612 = vpop.permute.xlu0 %2611
        %2613 = vrot.lane.b32.xlu0 %v1274, 64
        %v2614 = vpop.permute.xlu0 %2613
        %2615 = vrot.lane.b32.xlu0 %v1275, 64
        %v2616 = vpop.permute.xlu0 %2615
        %2633 = vmatprep.subr.bf16.mxu0 0
        %2634 = vmatpush1.bf16.msra.mxu0 %v2586
        %2635 = vmatprep.subr.bf16.mxu0 0
        %2636 = vmatpush1.bf16.msra.mxu0 %v2588
        %2637 = vmatprep.subr.bf16.mxu0 0
        %2638 = vmatpush1.bf16.msra.mxu0 %v2590
        %2639 = vmatprep.subr.bf16.mxu0 0
        %2640 = vmatpush1.bf16.msra.mxu0 %v2592
        %2641 = vmatprep.subr.bf16.mxu0 0
        %2642 = vmatpush1.bf16.msra.mxu0 %v2594
        %2643 = vmatprep.subr.bf16.mxu0 0
        %2644 = vmatpush1.bf16.msra.mxu0 %v2596
        %2645 = vmatprep.subr.bf16.mxu0 0
        %2646 = vmatpush1.bf16.msra.mxu0 %v2598
        %2647 = vmatprep.subr.bf16.mxu0 0
        %2648 = vmatpush1.bf16.msra.mxu0 %v2600
        %2649 = vmatprep.subr.bf16.mxu0 0
        %2650 = vmatpush1.bf16.msra.mxu0 %v2602
        %2651 = vmatprep.subr.bf16.mxu0 0
        %2652 = vmatpush1.bf16.msra.mxu0 %v2604
        %2653 = vmatprep.subr.bf16.mxu0 0
        %2654 = vmatpush1.bf16.msra.mxu0 %v2606
        %2655 = vmatprep.subr.bf16.mxu0 0
        %2656 = vmatpush1.bf16.msra.mxu0 %v2608
        %2657 = vmatprep.subr.bf16.mxu0 0
        %2658 = vmatpush1.bf16.msra.mxu0 %v2610
        %2659 = vmatprep.subr.bf16.mxu0 0
        %2660 = vmatpush1.bf16.msra.mxu0 %v2612
        %2661 = vmatprep.subr.bf16.mxu0 0
        %2662 = vmatpush1.bf16.msra.mxu0 %v2614
        %2663 = vmatprep.subr.bf16.mxu0 0
        %2664 = vmatpush1.bf16.msra.mxu0 %v2616
        %2665 = vmatprep.mubr.bf16.mxu0 %v2570
        %2666 = vmatmul.mubr.bf16.gmra.mrb[0].mxu0 %v2569
        %v2667 = vpop.f32.mrb[0].mxu0
        %v2668 = vadd.f32 0.0, %v2667
        %v2669 = vpop.f32.mrb[0].mxu0
        %v2670 = vpop.f32.mrb[0].mxu0
        %v2671 = vadd.f32 0.0, %v2670
        %v2672 = vpop.f32.mrb[0].mxu0
        %2673 = vmatprep.mubr.bf16.mxu0 %v2572
        %2674 = vmatmul.mubr.bf16.gmra.mrb[0].mxu0 %v2571
        %v2675 = vpop.f32.mrb[0].mxu0
        %v2676 = vadd.f32 0.0, %v2675
        %v2677 = vpop.f32.mrb[0].mxu0
        %v2678 = vpop.f32.mrb[0].mxu0
        %v2679 = vadd.f32 0.0, %v2678
        %v2680 = vpop.f32.mrb[0].mxu0
        %2681 = vmatprep.mubr.bf16.mxu0 %v2574
        %2682 = vmatmul.mubr.bf16.gmra.mrb[0].mxu0 %v2573
        %v2683 = vpop.f32.mrb[0].mxu0
        %v2684 = vadd.f32 0.0, %v2683
        %v2685 = vpop.f32.mrb[0].mxu0
        %v2686 = vpop.f32.mrb[0].mxu0
        %v2687 = vadd.f32 0.0, %v2686
        %v2688 = vpop.f32.mrb[0].mxu0
        %2689 = vmatprep.mubr.bf16.mxu0 %v2576
        %2690 = vmatmul.mubr.bf16.gmra.mrb[0].mxu0 %v2575
        %v2691 = vpop.f32.mrb[0].mxu0
        %v2692 = vadd.f32 0.0, %v2691
        %v2693 = vpop.f32.mrb[0].mxu0
        %v2694 = vpop.f32.mrb[0].mxu0
        %v2695 = vadd.f32 0.0, %v2694
        %v2696 = vpop.f32.mrb[0].mxu0
        %2697 = vmatprep.mubr.bf16.mxu0 %v2578
        %2698 = vmatmul.mubr.bf16.gmra.mrb[0].mxu0 %v2577
        %v2699 = vpop.f32.mrb[0].mxu0
        %v2700 = vadd.f32 0.0, %v2699
        %v2701 = vpop.f32.mrb[0].mxu0
        %v2702 = vpop.f32.mrb[0].mxu0
        %v2703 = vadd.f32 0.0, %v2702
        %v2704 = vpop.f32.mrb[0].mxu0
        %2705 = vmatprep.mubr.bf16.mxu0 %v2580
        %2706 = vmatmul.mubr.bf16.gmra.mrb[0].mxu0 %v2579
        %v2707 = vpop.f32.mrb[0].mxu0
        %v2708 = vadd.f32 0.0, %v2707
        %v2709 = vpop.f32.mrb[0].mxu0
        %v2710 = vpop.f32.mrb[0].mxu0
        %v2711 = vadd.f32 0.0, %v2710
        %v2712 = vpop.f32.mrb[0].mxu0
        %2713 = vmatprep.mubr.bf16.mxu0 %v2582
        %2714 = vmatmul.mubr.bf16.gmra.mrb[0].mxu0 %v2581
        %v2715 = vpop.f32.mrb[0].mxu0
        %v2716 = vadd.f32 0.0, %v2715
        %v2717 = vpop.f32.mrb[0].mxu0
        %v2718 = vpop.f32.mrb[0].mxu0
        %v2719 = vadd.f32 0.0, %v2718
        %v2720 = vpop.f32.mrb[0].mxu0
        %2721 = vmatprep.mubr.bf16.mxu0 %v2584
        %2722 = vmatmul.mubr.bf16.gmra.mrb[0].mxu0 %v2583
        %v2723 = vpop.f32.mrb[0].mxu0
        %v2724 = vadd.f32 0.0, %v2723
        %v2725 = vpop.f32.mrb[0].mxu0
        %v2726 = vpop.f32.mrb[0].mxu0
        %v2727 = vadd.f32 0.0, %v2726
        %v2728 = vpop.f32.mrb[0].mxu0
        %2729 = vdwg.mxu0
        %v2730 = vpack.c.bf16 %v2671, %v2668
        %v2731 = vpack.c.bf16 %v2679, %v2676
        %v2732 = vpack.c.bf16 %v2687, %v2684
        %v2733 = vpack.c.bf16 %v2695, %v2692
        %v2734 = vpack.c.bf16 %v2703, %v2700
        %v2735 = vpack.c.bf16 %v2711, %v2708
        %v2736 = vpack.c.bf16 %v2719, %v2716
        %v2737 = vpack.c.bf16 %v2727, %v2724
        %2746 = vrot.lane.b32.xlu0 %v2730, 64
        %v2747 = vpop.permute.xlu0 %2746
        %2748 = vrot.lane.b32.xlu0 %v2731, 64
        %v2749 = vpop.permute.xlu0 %2748
        %2750 = vrot.lane.b32.xlu0 %v2732, 64
        %v2751 = vpop.permute.xlu0 %2750
        %2752 = vrot.lane.b32.xlu0 %v2733, 64
        %v2753 = vpop.permute.xlu0 %2752
        %2754 = vrot.lane.b32.xlu0 %v2734, 64
        %v2755 = vpop.permute.xlu0 %2754
        %2756 = vrot.lane.b32.xlu0 %v2735, 64
        %v2757 = vpop.permute.xlu0 %2756
        %2758 = vrot.lane.b32.xlu0 %v2736, 64
        %v2759 = vpop.permute.xlu0 %2758
        %2760 = vrot.lane.b32.xlu0 %v2737, 64
        %v2761 = vpop.permute.xlu0 %2760
        %vm2770 = vcmask 785920
        %2771 = vst.msk [vmem:[#allocation2] sm:$0xff] %vm2770, %v2747
        %2772 = vst.msk [vmem:[#allocation2 + $0x8] sm:$0xff] %vm2770, %v2749
        %2773 = vst.msk [vmem:[#allocation2 + $0x10] sm:$0xff] %vm2770, %v2751
        %2774 = vst.msk [vmem:[#allocation2 + $0x18] sm:$0xff] %vm2770, %v2753
        %2775 = vst.msk [vmem:[#allocation2 + $0x20] sm:$0xff] %vm2770, %v2755
        %2776 = vst.msk [vmem:[#allocation2 + $0x28] sm:$0xff] %vm2770, %v2757
        %2777 = vst.msk [vmem:[#allocation2 + $0x30] sm:$0xff] %vm2770, %v2759
        %2778 = vst.msk [vmem:[#allocation2 + $0x38] sm:$0xff] %vm2770, %v2761
        %2779 = vrot.lane.b32.xlu0 %v602, 32
        %v2780 = vpop.permute.xlu0 %2779
        %2781 = vrot.lane.b32.xlu0 %v603, 32
        %v2782 = vpop.permute.xlu0 %2781
        %2783 = vrot.lane.b32.xlu0 %v604, 32
        %v2784 = vpop.permute.xlu0 %2783
        %2785 = vrot.lane.b32.xlu0 %v605, 32
        %v2786 = vpop.permute.xlu0 %2785
        %2787 = vrot.lane.b32.xlu0 %v606, 32
        %v2788 = vpop.permute.xlu0 %2787
        %2789 = vrot.lane.b32.xlu0 %v607, 32
        %v2790 = vpop.permute.xlu0 %2789
        %2791 = vrot.lane.b32.xlu0 %v608, 32
        %v2792 = vpop.permute.xlu0 %2791
        %2793 = vrot.lane.b32.xlu0 %v609, 32
        %v2794 = vpop.permute.xlu0 %2793
        %2795 = vrot.lane.b32.xlu0 %v738, 32
        %v2796 = vpop.permute.xlu0 %2795
        %2797 = vrot.lane.b32.xlu0 %v739, 32
        %v2798 = vpop.permute.xlu0 %2797
        %2799 = vrot.lane.b32.xlu0 %v740, 32
        %v2800 = vpop.permute.xlu0 %2799
        %2801 = vrot.lane.b32.xlu0 %v741, 32
        %v2802 = vpop.permute.xlu0 %2801
        %2803 = vrot.lane.b32.xlu0 %v742, 32
        %v2804 = vpop.permute.xlu0 %2803
        %2805 = vrot.lane.b32.xlu0 %v743, 32
        %v2806 = vpop.permute.xlu0 %2805
        %2807 = vrot.lane.b32.xlu0 %v744, 32
        %v2808 = vpop.permute.xlu0 %2807
        %2809 = vrot.lane.b32.xlu0 %v745, 32
        %v2810 = vpop.permute.xlu0 %2809
        %2811 = vrot.lane.b32.xlu0 %v746, 32
        %v2812 = vpop.permute.xlu0 %2811
        %2813 = vrot.lane.b32.xlu0 %v747, 32
        %v2814 = vpop.permute.xlu0 %2813
        %2815 = vrot.lane.b32.xlu0 %v748, 32
        %v2816 = vpop.permute.xlu0 %2815
        %2817 = vrot.lane.b32.xlu0 %v749, 32
        %v2818 = vpop.permute.xlu0 %2817
        %2819 = vrot.lane.b32.xlu0 %v750, 32
        %v2820 = vpop.permute.xlu0 %2819
        %2821 = vrot.lane.b32.xlu0 %v751, 32
        %v2822 = vpop.permute.xlu0 %2821
        %2823 = vrot.lane.b32.xlu0 %v752, 32
        %v2824 = vpop.permute.xlu0 %2823
        %2825 = vrot.lane.b32.xlu0 %v753, 32
        %v2826 = vpop.permute.xlu0 %2825
        %v2828 = vsel %vm754, %v2780, 0
        %v2831 = vsel %vm754, %v2782, 0
        %v2834 = vsel %vm754, %v2784, 0
        %v2837 = vsel %vm754, %v2786, 0
        %v2840 = vsel %vm754, %v2788, 0
        %v2843 = vsel %vm754, %v2790, 0
        %v2846 = vsel %vm754, %v2792, 0
        %v2849 = vsel %vm754, %v2794, 0
        %v2852 = vsel %vm754, %v2796, 0
        %v2855 = vsel %vm754, %v2798, 0
        %v2858 = vsel %vm754, %v2800, 0
        %v2861 = vsel %vm754, %v2802, 0
        %v2864 = vsel %vm754, %v2804, 0
        %v2867 = vsel %vm754, %v2806, 0
        %v2870 = vsel %vm754, %v2808, 0
        %v2873 = vsel %vm754, %v2810, 0
        %v2876 = vsel %vm754, %v2812, 0
        %v2879 = vsel %vm754, %v2814, 0
        %v2882 = vsel %vm754, %v2816, 0
        %v2885 = vsel %vm754, %v2818, 0
        %v2888 = vsel %vm754, %v2820, 0
        %v2891 = vsel %vm754, %v2822, 0
        %v2894 = vsel %vm754, %v2824, 0
        %v2897 = vsel %vm754, %v2826, 0
        %2899 = vmatprep.subr.bf16.mxu0 0
        %2900 = vmatpush1.bf16.xpose.msra.mxu0 %v2852
        %2901 = vmatprep.subr.bf16.mxu0 0
        %2902 = vmatpush1.bf16.xpose.msra.mxu0 %v2855
        %2903 = vmatprep.subr.bf16.mxu0 0
        %2904 = vmatpush1.bf16.xpose.msra.mxu0 %v2858
        %2905 = vmatprep.subr.bf16.mxu0 0
        %2906 = vmatpush1.bf16.xpose.msra.mxu0 %v2861
        %2907 = vmatprep.subr.bf16.mxu0 0
        %2908 = vmatpush1.bf16.xpose.msra.mxu0 %v2864
        %2909 = vmatprep.subr.bf16.mxu0 0
        %2910 = vmatpush1.bf16.xpose.msra.mxu0 %v2867
        %2911 = vmatprep.subr.bf16.mxu0 0
        %2912 = vmatpush1.bf16.xpose.msra.mxu0 %v2870
        %2913 = vmatprep.subr.bf16.mxu0 0
        %2914 = vmatpush1.bf16.xpose.msra.mxu0 %v2873
        %2915 = vmatprep.subr.bf16.mxu0 0
        %2916 = vmatpush1.bf16.xpose.msra.mxu0 %v2876
        %2917 = vmatprep.subr.bf16.mxu0 0
        %2918 = vmatpush1.bf16.xpose.msra.mxu0 %v2879
        %2919 = vmatprep.subr.bf16.mxu0 0
        %2920 = vmatpush1.bf16.xpose.msra.mxu0 %v2882
        %2921 = vmatprep.subr.bf16.mxu0 0
        %2922 = vmatpush1.bf16.xpose.msra.mxu0 %v2885
        %2923 = vmatprep.subr.bf16.mxu0 0
        %2924 = vmatpush1.bf16.xpose.msra.mxu0 %v2888
        %2925 = vmatprep.subr.bf16.mxu0 0
        %2926 = vmatpush1.bf16.xpose.msra.mxu0 %v2891
        %2927 = vmatprep.subr.bf16.mxu0 0
        %2928 = vmatpush1.bf16.xpose.msra.mxu0 %v2894
        %2929 = vmatprep.subr.bf16.mxu0 0
        %2930 = vmatpush1.bf16.xpose.msra.mxu0 %v2897
        %2931 = vmatprep.mubr.bf16.mxu0 0
        %2932 = vmatmul.mubr.bf16.gmra.mrb[0].mxu0 %v2828
        %v2933 = vpop.f32.mrb[0].mxu0
        %v2934 = vadd.f32 0.0, %v2933
        %v2935 = vpop.f32.mrb[0].mxu0
        %v2936 = vadd.f32 0.0, %v2935
        %v2937 = vpop.f32.mrb[0].mxu0
        %v2938 = vadd.f32 0.0, %v2937
        %v2939 = vpop.f32.mrb[0].mxu0
        %v2940 = vadd.f32 0.0, %v2939
        %2941 = vmatprep.mubr.bf16.mxu0 0
        %2942 = vmatmul.mubr.bf16.gmra.mrb[0].mxu0 %v2831
        %v2943 = vpop.f32.mrb[0].mxu0
        %v2944 = vadd.f32 0.0, %v2943
        %v2945 = vpop.f32.mrb[0].mxu0
        %v2946 = vadd.f32 0.0, %v2945
        %v2947 = vpop.f32.mrb[0].mxu0
        %v2948 = vadd.f32 0.0, %v2947
        %v2949 = vpop.f32.mrb[0].mxu0
        %v2950 = vadd.f32 0.0, %v2949
        %2951 = vmatprep.mubr.bf16.mxu0 0
        %2952 = vmatmul.mubr.bf16.gmra.mrb[0].mxu0 %v2834
        %v2953 = vpop.f32.mrb[0].mxu0
        %v2954 = vadd.f32 0.0, %v2953
        %v2955 = vpop.f32.mrb[0].mxu0
        %v2956 = vadd.f32 0.0, %v2955
        %v2957 = vpop.f32.mrb[0].mxu0
        %v2958 = vadd.f32 0.0, %v2957
        %v2959 = vpop.f32.mrb[0].mxu0
        %v2960 = vadd.f32 0.0, %v2959
        %2961 = vmatprep.mubr.bf16.mxu0 0
        %2962 = vmatmul.mubr.bf16.gmra.mrb[0].mxu0 %v2837
        %v2963 = vpop.f32.mrb[0].mxu0
        %v2964 = vadd.f32 0.0, %v2963
        %v2965 = vpop.f32.mrb[0].mxu0
        %v2966 = vadd.f32 0.0, %v2965
        %v2967 = vpop.f32.mrb[0].mxu0
        %v2968 = vadd.f32 0.0, %v2967
        %v2969 = vpop.f32.mrb[0].mxu0
        %v2970 = vadd.f32 0.0, %v2969
        %2971 = vmatprep.mubr.bf16.mxu0 0
        %2972 = vmatmul.mubr.bf16.gmra.mrb[0].mxu0 %v2840
        %v2973 = vpop.f32.mrb[0].mxu0
        %v2974 = vadd.f32 0.0, %v2973
        %v2975 = vpop.f32.mrb[0].mxu0
        %v2976 = vadd.f32 0.0, %v2975
        %v2977 = vpop.f32.mrb[0].mxu0
        %v2978 = vadd.f32 0.0, %v2977
        %v2979 = vpop.f32.mrb[0].mxu0
        %v2980 = vadd.f32 0.0, %v2979
        %2981 = vmatprep.mubr.bf16.mxu0 0
        %2982 = vmatmul.mubr.bf16.gmra.mrb[0].mxu0 %v2843
        %v2983 = vpop.f32.mrb[0].mxu0
        %v2984 = vadd.f32 0.0, %v2983
        %v2985 = vpop.f32.mrb[0].mxu0
        %v2986 = vadd.f32 0.0, %v2985
        %v2987 = vpop.f32.mrb[0].mxu0
        %v2988 = vadd.f32 0.0, %v2987
        %v2989 = vpop.f32.mrb[0].mxu0
        %v2990 = vadd.f32 0.0, %v2989
        %2991 = vmatprep.mubr.bf16.mxu0 0
        %2992 = vmatmul.mubr.bf16.gmra.mrb[0].mxu0 %v2846
        %v2993 = vpop.f32.mrb[0].mxu0
        %v2994 = vadd.f32 0.0, %v2993
        %v2995 = vpop.f32.mrb[0].mxu0
        %v2996 = vadd.f32 0.0, %v2995
        %v2997 = vpop.f32.mrb[0].mxu0
        %v2998 = vadd.f32 0.0, %v2997
        %v2999 = vpop.f32.mrb[0].mxu0
        %v3000 = vadd.f32 0.0, %v2999
        %3001 = vmatprep.mubr.bf16.mxu0 0
        %3002 = vmatmul.mubr.bf16.gmra.mrb[0].mxu0 %v2849
        %v3003 = vpop.f32.mrb[0].mxu0
        %v3004 = vadd.f32 0.0, %v3003
        %v3005 = vpop.f32.mrb[0].mxu0
        %v3006 = vadd.f32 0.0, %v3005
        %v3007 = vpop.f32.mrb[0].mxu0
        %v3008 = vadd.f32 0.0, %v3007
        %v3009 = vpop.f32.mrb[0].mxu0
        %v3010 = vadd.f32 0.0, %v3009
        %3011 = vdwg.mxu0
        %v3012 = vmax.f32 %v2934, %v2936
        %3013 = vmax.xlane.f32.xlu0 %v3012
        %v3014 = vpop.xlane.xlu0 %3013
        %v3015 = vmax.f32 %v2938, %v2940
        %3016 = vmax.xlane.f32.xlu0 %v3015
        %v3017 = vpop.xlane.xlu0 %3016
        %v3018 = vmax.f32 %v2944, %v2946
        %3019 = vmax.xlane.f32.xlu0 %v3018
        %v3020 = vpop.xlane.xlu0 %3019
        %v3021 = vmax.f32 %v2948, %v2950
        %3022 = vmax.xlane.f32.xlu0 %v3021
        %v3023 = vpop.xlane.xlu0 %3022
        %v3024 = vmax.f32 %v2954, %v2956
        %3025 = vmax.xlane.f32.xlu0 %v3024
        %v3026 = vpop.xlane.xlu0 %3025
        %v3027 = vmax.f32 %v2958, %v2960
        %3028 = vmax.xlane.f32.xlu0 %v3027
        %v3029 = vpop.xlane.xlu0 %3028
        %v3030 = vmax.f32 %v2964, %v2966
        %3031 = vmax.xlane.f32.xlu0 %v3030
        %v3032 = vpop.xlane.xlu0 %3031
        %v3033 = vmax.f32 %v2968, %v2970
        %3034 = vmax.xlane.f32.xlu0 %v3033
        %v3035 = vpop.xlane.xlu0 %3034
        %v3036 = vmax.f32 %v2974, %v2976
        %3037 = vmax.xlane.f32.xlu0 %v3036
        %v3038 = vpop.xlane.xlu0 %3037
        %v3039 = vmax.f32 %v2978, %v2980
        %3040 = vmax.xlane.f32.xlu0 %v3039
        %v3041 = vpop.xlane.xlu0 %3040
        %v3042 = vmax.f32 %v2984, %v2986
        %3043 = vmax.xlane.f32.xlu0 %v3042
        %v3044 = vpop.xlane.xlu0 %3043
        %v3045 = vmax.f32 %v2988, %v2990
        %3046 = vmax.xlane.f32.xlu0 %v3045
        %v3047 = vpop.xlane.xlu0 %3046
        %v3048 = vmax.f32 %v2994, %v2996
        %3049 = vmax.xlane.f32.xlu0 %v3048
        %v3050 = vpop.xlane.xlu0 %3049
        %v3051 = vmax.f32 %v2998, %v3000
        %3052 = vmax.xlane.f32.xlu0 %v3051
        %v3053 = vpop.xlane.xlu0 %3052
        %v3054 = vmax.f32 %v3004, %v3006
        %3055 = vmax.xlane.f32.xlu0 %v3054
        %v3056 = vpop.xlane.xlu0 %3055
        %v3057 = vmax.f32 %v3008, %v3010
        %3058 = vmax.xlane.f32.xlu0 %v3057
        %v3059 = vpop.xlane.xlu0 %3058
        %v3060 = vsub.f32 %v2934, %v3014
        %v3061 = vsub.f32 %v2936, %v3014
        %v3062 = vsub.f32 %v2938, %v3017
        %v3063 = vsub.f32 %v2940, %v3017
        %v3064 = vsub.f32 %v2944, %v3020
        %v3065 = vsub.f32 %v2946, %v3020
        %v3066 = vsub.f32 %v2948, %v3023
        %v3067 = vsub.f32 %v2950, %v3023
        %v3068 = vsub.f32 %v2954, %v3026
        %v3069 = vsub.f32 %v2956, %v3026
        %v3070 = vsub.f32 %v2958, %v3029
        %v3071 = vsub.f32 %v2960, %v3029
        %v3072 = vsub.f32 %v2964, %v3032
        %v3073 = vsub.f32 %v2966, %v3032
        %v3074 = vsub.f32 %v2968, %v3035
        %v3075 = vsub.f32 %v2970, %v3035
        %v3076 = vsub.f32 %v2974, %v3038
        %v3077 = vsub.f32 %v2976, %v3038
        %v3078 = vsub.f32 %v2978, %v3041
        %v3079 = vsub.f32 %v2980, %v3041
        %v3080 = vsub.f32 %v2984, %v3044
        %v3081 = vsub.f32 %v2986, %v3044
        %v3082 = vsub.f32 %v2988, %v3047
        %v3083 = vsub.f32 %v2990, %v3047
        %v3084 = vsub.f32 %v2994, %v3050
        %v3085 = vsub.f32 %v2996, %v3050
        %v3086 = vsub.f32 %v2998, %v3053
        %v3087 = vsub.f32 %v3000, %v3053
        %v3088 = vsub.f32 %v3004, %v3056
        %v3089 = vsub.f32 %v3006, %v3056
        %v3090 = vsub.f32 %v3008, %v3059
        %v3091 = vsub.f32 %v3010, %v3059
        %v3092 = vmul.f32 %v3060, 1.442695
        %v3093 = vpow.pop %v3092
        %v3094 = vmul.f32 %v3061, 1.442695
        %v3095 = vpow.pop %v3094
        %v3096 = vmul.f32 %v3062, 1.442695
        %v3097 = vpow.pop %v3096
        %v3098 = vmul.f32 %v3063, 1.442695
        %v3099 = vpow.pop %v3098
        %v3100 = vmul.f32 %v3064, 1.442695
        %v3101 = vpow.pop %v3100
        %v3102 = vmul.f32 %v3065, 1.442695
        %v3103 = vpow.pop %v3102
        %v3104 = vmul.f32 %v3066, 1.442695
        %v3105 = vpow.pop %v3104
        %v3106 = vmul.f32 %v3067, 1.442695
        %v3107 = vpow.pop %v3106
        %v3108 = vmul.f32 %v3068, 1.442695
        %v3109 = vpow.pop %v3108
        %v3110 = vmul.f32 %v3069, 1.442695
        %v3111 = vpow.pop %v3110
        %v3112 = vmul.f32 %v3070, 1.442695
        %v3113 = vpow.pop %v3112
        %v3114 = vmul.f32 %v3071, 1.442695
        %v3115 = vpow.pop %v3114
        %v3116 = vmul.f32 %v3072, 1.442695
        %v3117 = vpow.pop %v3116
        %v3118 = vmul.f32 %v3073, 1.442695
        %v3119 = vpow.pop %v3118
        %v3120 = vmul.f32 %v3074, 1.442695
        %v3121 = vpow.pop %v3120
        %v3122 = vmul.f32 %v3075, 1.442695
        %v3123 = vpow.pop %v3122
        %v3124 = vmul.f32 %v3076, 1.442695
        %v3125 = vpow.pop %v3124
        %v3126 = vmul.f32 %v3077, 1.442695
        %v3127 = vpow.pop %v3126
        %v3128 = vmul.f32 %v3078, 1.442695
        %v3129 = vpow.pop %v3128
        %v3130 = vmul.f32 %v3079, 1.442695
        %v3131 = vpow.pop %v3130
        %v3132 = vmul.f32 %v3080, 1.442695
        %v3133 = vpow.pop %v3132
        %v3134 = vmul.f32 %v3081, 1.442695
        %v3135 = vpow.pop %v3134
        %v3136 = vmul.f32 %v3082, 1.442695
        %v3137 = vpow.pop %v3136
        %v3138 = vmul.f32 %v3083, 1.442695
        %v3139 = vpow.pop %v3138
        %v3140 = vmul.f32 %v3084, 1.442695
        %v3141 = vpow.pop %v3140
        %v3142 = vmul.f32 %v3085, 1.442695
        %v3143 = vpow.pop %v3142
        %v3144 = vmul.f32 %v3086, 1.442695
        %v3145 = vpow.pop %v3144
        %v3146 = vmul.f32 %v3087, 1.442695
        %v3147 = vpow.pop %v3146
        %v3148 = vmul.f32 %v3088, 1.442695
        %v3149 = vpow.pop %v3148
        %v3150 = vmul.f32 %v3089, 1.442695
        %v3151 = vpow.pop %v3150
        %v3152 = vmul.f32 %v3090, 1.442695
        %v3153 = vpow.pop %v3152
        %v3154 = vmul.f32 %v3091, 1.442695
        %v3155 = vpow.pop %v3154
        %v3156 = vadd.f32 %v3093, %v3095
        %3157 = vadd.xlane.f32.xlu0 %v3156
        %v3158 = vpop.xlane.xlu0 %3157
        %v3159 = vadd.f32 %v3097, %v3099
        %3160 = vadd.xlane.f32.xlu0 %v3159
        %v3161 = vpop.xlane.xlu0 %3160
        %v3162 = vadd.f32 %v3101, %v3103
        %3163 = vadd.xlane.f32.xlu0 %v3162
        %v3164 = vpop.xlane.xlu0 %3163
        %v3165 = vadd.f32 %v3105, %v3107
        %3166 = vadd.xlane.f32.xlu0 %v3165
        %v3167 = vpop.xlane.xlu0 %3166
        %v3168 = vadd.f32 %v3109, %v3111
        %3169 = vadd.xlane.f32.xlu0 %v3168
        %v3170 = vpop.xlane.xlu0 %3169
        %v3171 = vadd.f32 %v3113, %v3115
        %3172 = vadd.xlane.f32.xlu0 %v3171
        %v3173 = vpop.xlane.xlu0 %3172
        %v3174 = vadd.f32 %v3117, %v3119
        %3175 = vadd.xlane.f32.xlu0 %v3174
        %v3176 = vpop.xlane.xlu0 %3175
        %v3177 = vadd.f32 %v3121, %v3123
        %3178 = vadd.xlane.f32.xlu0 %v3177
        %v3179 = vpop.xlane.xlu0 %3178
        %v3180 = vadd.f32 %v3125, %v3127
        %3181 = vadd.xlane.f32.xlu0 %v3180
        %v3182 = vpop.xlane.xlu0 %3181
        %v3183 = vadd.f32 %v3129, %v3131
        %3184 = vadd.xlane.f32.xlu0 %v3183
        %v3185 = vpop.xlane.xlu0 %3184
        %v3186 = vadd.f32 %v3133, %v3135
        %3187 = vadd.xlane.f32.xlu0 %v3186
        %v3188 = vpop.xlane.xlu0 %3187
        %v3189 = vadd.f32 %v3137, %v3139
        %3190 = vadd.xlane.f32.xlu0 %v3189
        %v3191 = vpop.xlane.xlu0 %3190
        %v3192 = vadd.f32 %v3141, %v3143
        %3193 = vadd.xlane.f32.xlu0 %v3192
        %v3194 = vpop.xlane.xlu0 %3193
        %v3195 = vadd.f32 %v3145, %v3147
        %3196 = vadd.xlane.f32.xlu0 %v3195
        %v3197 = vpop.xlane.xlu0 %3196
        %v3198 = vadd.f32 %v3149, %v3151
        %3199 = vadd.xlane.f32.xlu0 %v3198
        %v3200 = vpop.xlane.xlu0 %3199
        %v3201 = vadd.f32 %v3153, %v3155
        %3202 = vadd.xlane.f32.xlu0 %v3201
        %v3203 = vpop.xlane.xlu0 %3202
        %v3204 = vrcp.pop %v3158
        %v3205 = vrcp.pop %v3161
        %v3206 = vrcp.pop %v3164
        %v3207 = vrcp.pop %v3167
        %v3208 = vrcp.pop %v3170
        %v3209 = vrcp.pop %v3173
        %v3210 = vrcp.pop %v3176
        %v3211 = vrcp.pop %v3179
        %v3212 = vrcp.pop %v3182
        %v3213 = vrcp.pop %v3185
        %v3214 = vrcp.pop %v3188
        %v3215 = vrcp.pop %v3191
        %v3216 = vrcp.pop %v3194
        %v3217 = vrcp.pop %v3197
        %v3218 = vrcp.pop %v3200
        %v3219 = vrcp.pop %v3203
        %v3220 = vmul.f32 %v3093, %v3204
        %v3221 = vmul.f32 %v3095, %v3204
        %v3222 = vmul.f32 %v3097, %v3205
        %v3223 = vmul.f32 %v3099, %v3205
        %v3224 = vmul.f32 %v3101, %v3206
        %v3225 = vmul.f32 %v3103, %v3206
        %v3226 = vmul.f32 %v3105, %v3207
        %v3227 = vmul.f32 %v3107, %v3207
        %v3228 = vmul.f32 %v3109, %v3208
        %v3229 = vmul.f32 %v3111, %v3208
        %v3230 = vmul.f32 %v3113, %v3209
        %v3231 = vmul.f32 %v3115, %v3209
        %v3232 = vmul.f32 %v3117, %v3210
        %v3233 = vmul.f32 %v3119, %v3210
        %v3234 = vmul.f32 %v3121, %v3211
        %v3235 = vmul.f32 %v3123, %v3211
        %v3236 = vmul.f32 %v3125, %v3212
        %v3237 = vmul.f32 %v3127, %v3212
        %v3238 = vmul.f32 %v3129, %v3213
        %v3239 = vmul.f32 %v3131, %v3213
        %v3240 = vmul.f32 %v3133, %v3214
        %v3241 = vmul.f32 %v3135, %v3214
        %v3242 = vmul.f32 %v3137, %v3215
        %v3243 = vmul.f32 %v3139, %v3215
        %v3244 = vmul.f32 %v3141, %v3216
        %v3245 = vmul.f32 %v3143, %v3216
        %v3246 = vmul.f32 %v3145, %v3217
        %v3247 = vmul.f32 %v3147, %v3217
        %v3248 = vmul.f32 %v3149, %v3218
        %v3249 = vmul.f32 %v3151, %v3218
        %v3250 = vmul.f32 %v3153, %v3219
        %v3251 = vmul.f32 %v3155, %v3219
        %v3252 = vpack.c.bf16 %v3222, %v3220
        %v3253 = vpack.c.bf16 %v3223, %v3221
        %v3254 = vpack.c.bf16 %v3226, %v3224
        %v3255 = vpack.c.bf16 %v3227, %v3225
        %v3256 = vpack.c.bf16 %v3230, %v3228
        %v3257 = vpack.c.bf16 %v3231, %v3229
        %v3258 = vpack.c.bf16 %v3234, %v3232
        %v3259 = vpack.c.bf16 %v3235, %v3233
        %v3260 = vpack.c.bf16 %v3238, %v3236
        %v3261 = vpack.c.bf16 %v3239, %v3237
        %v3262 = vpack.c.bf16 %v3242, %v3240
        %v3263 = vpack.c.bf16 %v3243, %v3241
        %v3264 = vpack.c.bf16 %v3246, %v3244
        %v3265 = vpack.c.bf16 %v3247, %v3245
        %v3266 = vpack.c.bf16 %v3250, %v3248
        %v3267 = vpack.c.bf16 %v3251, %v3249
        %3268 = vrot.lane.b32.xlu0 %v1260, 32
        %v3269 = vpop.permute.xlu0 %3268
        %3270 = vrot.lane.b32.xlu0 %v1261, 32
        %v3271 = vpop.permute.xlu0 %3270
        %3272 = vrot.lane.b32.xlu0 %v1262, 32
        %v3273 = vpop.permute.xlu0 %3272
        %3274 = vrot.lane.b32.xlu0 %v1263, 32
        %v3275 = vpop.permute.xlu0 %3274
        %3276 = vrot.lane.b32.xlu0 %v1264, 32
        %v3277 = vpop.permute.xlu0 %3276
        %3278 = vrot.lane.b32.xlu0 %v1265, 32
        %v3279 = vpop.permute.xlu0 %3278
        %3280 = vrot.lane.b32.xlu0 %v1266, 32
        %v3281 = vpop.permute.xlu0 %3280
        %3282 = vrot.lane.b32.xlu0 %v1267, 32
        %v3283 = vpop.permute.xlu0 %3282
        %3284 = vrot.lane.b32.xlu0 %v1268, 32
        %v3285 = vpop.permute.xlu0 %3284
        %3286 = vrot.lane.b32.xlu0 %v1269, 32
        %v3287 = vpop.permute.xlu0 %3286
        %3288 = vrot.lane.b32.xlu0 %v1270, 32
        %v3289 = vpop.permute.xlu0 %3288
        %3290 = vrot.lane.b32.xlu0 %v1271, 32
        %v3291 = vpop.permute.xlu0 %3290
        %3292 = vrot.lane.b32.xlu0 %v1272, 32
        %v3293 = vpop.permute.xlu0 %3292
        %3294 = vrot.lane.b32.xlu0 %v1273, 32
        %v3295 = vpop.permute.xlu0 %3294
        %3296 = vrot.lane.b32.xlu0 %v1274, 32
        %v3297 = vpop.permute.xlu0 %3296
        %3298 = vrot.lane.b32.xlu0 %v1275, 32
        %v3299 = vpop.permute.xlu0 %3298
        %3316 = vmatprep.subr.bf16.mxu0 0
        %3317 = vmatpush1.bf16.msra.mxu0 %v3269
        %3318 = vmatprep.subr.bf16.mxu0 0
        %3319 = vmatpush1.bf16.msra.mxu0 %v3271
        %3320 = vmatprep.subr.bf16.mxu0 0
        %3321 = vmatpush1.bf16.msra.mxu0 %v3273
        %3322 = vmatprep.subr.bf16.mxu0 0
        %3323 = vmatpush1.bf16.msra.mxu0 %v3275
        %3324 = vmatprep.subr.bf16.mxu0 0
        %3325 = vmatpush1.bf16.msra.mxu0 %v3277
        %3326 = vmatprep.subr.bf16.mxu0 0
        %3327 = vmatpush1.bf16.msra.mxu0 %v3279
        %3328 = vmatprep.subr.bf16.mxu0 0
        %3329 = vmatpush1.bf16.msra.mxu0 %v3281
        %3330 = vmatprep.subr.bf16.mxu0 0
        %3331 = vmatpush1.bf16.msra.mxu0 %v3283
        %3332 = vmatprep.subr.bf16.mxu0 0
        %3333 = vmatpush1.bf16.msra.mxu0 %v3285
        %3334 = vmatprep.subr.bf16.mxu0 0
        %3335 = vmatpush1.bf16.msra.mxu0 %v3287
        %3336 = vmatprep.subr.bf16.mxu0 0
        %3337 = vmatpush1.bf16.msra.mxu0 %v3289
        %3338 = vmatprep.subr.bf16.mxu0 0
        %3339 = vmatpush1.bf16.msra.mxu0 %v3291
        %3340 = vmatprep.subr.bf16.mxu0 0
        %3341 = vmatpush1.bf16.msra.mxu0 %v3293
        %3342 = vmatprep.subr.bf16.mxu0 0
        %3343 = vmatpush1.bf16.msra.mxu0 %v3295
        %3344 = vmatprep.subr.bf16.mxu0 0
        %3345 = vmatpush1.bf16.msra.mxu0 %v3297
        %3346 = vmatprep.subr.bf16.mxu0 0
        %3347 = vmatpush1.bf16.msra.mxu0 %v3299
        %3348 = vmatprep.mubr.bf16.mxu0 %v3253
        %3349 = vmatmul.mubr.bf16.gmra.mrb[0].mxu0 %v3252
        %v3350 = vpop.f32.mrb[0].mxu0
        %v3351 = vadd.f32 0.0, %v3350
        %v3352 = vpop.f32.mrb[0].mxu0
        %v3353 = vpop.f32.mrb[0].mxu0
        %v3354 = vadd.f32 0.0, %v3353
        %v3355 = vpop.f32.mrb[0].mxu0
        %3356 = vmatprep.mubr.bf16.mxu0 %v3255
        %3357 = vmatmul.mubr.bf16.gmra.mrb[0].mxu0 %v3254
        %v3358 = vpop.f32.mrb[0].mxu0
        %v3359 = vadd.f32 0.0, %v3358
        %v3360 = vpop.f32.mrb[0].mxu0
        %v3361 = vpop.f32.mrb[0].mxu0
        %v3362 = vadd.f32 0.0, %v3361
        %v3363 = vpop.f32.mrb[0].mxu0
        %3364 = vmatprep.mubr.bf16.mxu0 %v3257
        %3365 = vmatmul.mubr.bf16.gmra.mrb[0].mxu0 %v3256
        %v3366 = vpop.f32.mrb[0].mxu0
        %v3367 = vadd.f32 0.0, %v3366
        %v3368 = vpop.f32.mrb[0].mxu0
        %v3369 = vpop.f32.mrb[0].mxu0
        %v3370 = vadd.f32 0.0, %v3369
        %v3371 = vpop.f32.mrb[0].mxu0
        %3372 = vmatprep.mubr.bf16.mxu0 %v3259
        %3373 = vmatmul.mubr.bf16.gmra.mrb[0].mxu0 %v3258
        %v3374 = vpop.f32.mrb[0].mxu0
        %v3375 = vadd.f32 0.0, %v3374
        %v3376 = vpop.f32.mrb[0].mxu0
        %v3377 = vpop.f32.mrb[0].mxu0
        %v3378 = vadd.f32 0.0, %v3377
        %v3379 = vpop.f32.mrb[0].mxu0
        %3380 = vmatprep.mubr.bf16.mxu0 %v3261
        %3381 = vmatmul.mubr.bf16.gmra.mrb[0].mxu0 %v3260
        %v3382 = vpop.f32.mrb[0].mxu0
        %v3383 = vadd.f32 0.0, %v3382
        %v3384 = vpop.f32.mrb[0].mxu0
        %v3385 = vpop.f32.mrb[0].mxu0
        %v3386 = vadd.f32 0.0, %v3385
        %v3387 = vpop.f32.mrb[0].mxu0
        %3388 = vmatprep.mubr.bf16.mxu0 %v3263
        %3389 = vmatmul.mubr.bf16.gmra.mrb[0].mxu0 %v3262
        %v3390 = vpop.f32.mrb[0].mxu0
        %v3391 = vadd.f32 0.0, %v3390
        %v3392 = vpop.f32.mrb[0].mxu0
        %v3393 = vpop.f32.mrb[0].mxu0
        %v3394 = vadd.f32 0.0, %v3393
        %v3395 = vpop.f32.mrb[0].mxu0
        %3396 = vmatprep.mubr.bf16.mxu0 %v3265
        %3397 = vmatmul.mubr.bf16.gmra.mrb[0].mxu0 %v3264
        %v3398 = vpop.f32.mrb[0].mxu0
        %v3399 = vadd.f32 0.0, %v3398
        %v3400 = vpop.f32.mrb[0].mxu0
        %v3401 = vpop.f32.mrb[0].mxu0
        %v3402 = vadd.f32 0.0, %v3401
        %v3403 = vpop.f32.mrb[0].mxu0
        %3404 = vmatprep.mubr.bf16.mxu0 %v3267
        %3405 = vmatmul.mubr.bf16.gmra.mrb[0].mxu0 %v3266
        %v3406 = vpop.f32.mrb[0].mxu0
        %v3407 = vadd.f32 0.0, %v3406
        %v3408 = vpop.f32.mrb[0].mxu0
        %v3409 = vpop.f32.mrb[0].mxu0
        %v3410 = vadd.f32 0.0, %v3409
        %v3411 = vpop.f32.mrb[0].mxu0
        %3412 = vdwg.mxu0
        %v3413 = vpack.c.bf16 %v3354, %v3351
        %v3414 = vpack.c.bf16 %v3362, %v3359
        %v3415 = vpack.c.bf16 %v3370, %v3367
        %v3416 = vpack.c.bf16 %v3378, %v3375
        %v3417 = vpack.c.bf16 %v3386, %v3383
        %v3418 = vpack.c.bf16 %v3394, %v3391
        %v3419 = vpack.c.bf16 %v3402, %v3399
        %v3420 = vpack.c.bf16 %v3410, %v3407
        %3429 = vrot.lane.b32.xlu0 %v3413, 96
        %v3430 = vpop.permute.xlu0 %3429
        %3431 = vrot.lane.b32.xlu0 %v3414, 96
        %v3432 = vpop.permute.xlu0 %3431
        %3433 = vrot.lane.b32.xlu0 %v3415, 96
        %v3434 = vpop.permute.xlu0 %3433
        %3435 = vrot.lane.b32.xlu0 %v3416, 96
        %v3436 = vpop.permute.xlu0 %3435
        %3437 = vrot.lane.b32.xlu0 %v3417, 96
        %v3438 = vpop.permute.xlu0 %3437
        %3439 = vrot.lane.b32.xlu0 %v3418, 96
        %v3440 = vpop.permute.xlu0 %3439
        %3441 = vrot.lane.b32.xlu0 %v3419, 96
        %v3442 = vpop.permute.xlu0 %3441
        %3443 = vrot.lane.b32.xlu0 %v3420, 96
        %v3444 = vpop.permute.xlu0 %3443
        %vm3453 = vcmask 1048320
        %3454 = vst.msk [vmem:[#allocation2] sm:$0xff] %vm3453, %v3430
        %3455 = vst.msk [vmem:[#allocation2 + $0x8] sm:$0xff] %vm3453, %v3432
        %3456 = vst.msk [vmem:[#allocation2 + $0x10] sm:$0xff] %vm3453, %v3434
        %3457 = vst.msk [vmem:[#allocation2 + $0x18] sm:$0xff] %vm3453, %v3436
        %3458 = vst.msk [vmem:[#allocation2 + $0x20] sm:$0xff] %vm3453, %v3438
        %3459 = vst.msk [vmem:[#allocation2 + $0x28] sm:$0xff] %vm3453, %v3440
        %3460 = vst.msk [vmem:[#allocation2 + $0x30] sm:$0xff] %vm3453, %v3442
        %3461 = vst.msk [vmem:[#allocation2 + $0x38] sm:$0xff] %vm3453, %v3444
        %v3462 = vld [vmem:[#allocation2] sm:$0xff]
        %v3463 = vld [vmem:[#allocation2 + $0x8] sm:$0xff]
        %v3464 = vld [vmem:[#allocation2 + $0x10] sm:$0xff]
        %v3465 = vld [vmem:[#allocation2 + $0x18] sm:$0xff]
        %v3466 = vld [vmem:[#allocation2 + $0x20] sm:$0xff]
        %v3467 = vld [vmem:[#allocation2 + $0x28] sm:$0xff]
        %v3468 = vld [vmem:[#allocation2 + $0x30] sm:$0xff]
        %v3469 = vld [vmem:[#allocation2 + $0x38] sm:$0xff]
        %v3470 = vld [vmem:[#allocation11] sm:$0xf]
        %v3471 = vld [vmem:[#allocation11 + $0x4] sm:$0xf]
        %v3472 = vld [vmem:[#allocation11 + $0x8] sm:$0xf]
        %v3473 = vld [vmem:[#allocation11 + $0xc] sm:$0xf]
        %v3474 = vld [vmem:[#allocation11 + $0x10] sm:$0xf]
        %v3475 = vld [vmem:[#allocation11 + $0x14] sm:$0xf]
        %v3476 = vld [vmem:[#allocation11 + $0x18] sm:$0xf]
        %v3477 = vld [vmem:[#allocation11 + $0x1c] sm:$0xf]
        %v3478 = vld [vmem:[#allocation11 + $0x20] sm:$0xf]
        %v3479 = vld [vmem:[#allocation11 + $0x24] sm:$0xf]
        %v3480 = vld [vmem:[#allocation11 + $0x28] sm:$0xf]
        %v3481 = vld [vmem:[#allocation11 + $0x2c] sm:$0xf]
        %v3482 = vld [vmem:[#allocation11 + $0x30] sm:$0xf]
        %v3483 = vld [vmem:[#allocation11 + $0x34] sm:$0xf]
        %v3484 = vld [vmem:[#allocation11 + $0x38] sm:$0xf]
        %v3485 = vld [vmem:[#allocation11 + $0x3c] sm:$0xf]
        %v3502 = vunpack.c.l.b16 %v3470
        %v3503 = vunpack.c.l.b16 %v3471
        %v3504 = vunpack.c.l.b16 %v3472
        %v3505 = vunpack.c.l.b16 %v3473
        %v3506 = vunpack.c.l.b16 %v3474
        %v3507 = vunpack.c.l.b16 %v3475
        %v3508 = vunpack.c.l.b16 %v3476
        %v3509 = vunpack.c.l.b16 %v3477
        %v3510 = vunpack.c.l.b16 %v3478
        %v3511 = vunpack.c.l.b16 %v3479
        %v3512 = vunpack.c.l.b16 %v3480
        %v3513 = vunpack.c.l.b16 %v3481
        %v3514 = vunpack.c.l.b16 %v3482
        %v3515 = vunpack.c.l.b16 %v3483
        %v3516 = vunpack.c.l.b16 %v3484
        %v3517 = vunpack.c.l.b16 %v3485
        %v3518 = vpack.c.b16 %v3503, %v3502
        %v3519 = vpack.c.b16 %v3505, %v3504
        %v3520 = vpack.c.b16 %v3507, %v3506
        %v3521 = vpack.c.b16 %v3509, %v3508
        %v3522 = vpack.c.b16 %v3511, %v3510
        %v3523 = vpack.c.b16 %v3513, %v3512
        %v3524 = vpack.c.b16 %v3515, %v3514
        %v3525 = vpack.c.b16 %v3517, %v3516
        %3534 = vmatprep.subr.bf16.mxu0 0
        %3535 = vmatpush1.bf16.msra.mxu0 %v3518
        %3536 = vmatprep.subr.bf16.mxu0 0
        %3537 = vmatpush1.bf16.msra.mxu0 %v3519
        %3538 = vmatprep.subr.bf16.mxu0 0
        %3539 = vmatpush1.bf16.msra.mxu0 %v3520
        %3540 = vmatprep.subr.bf16.mxu0 0
        %3541 = vmatpush1.bf16.msra.mxu0 %v3521
        %3542 = vmatprep.subr.bf16.mxu0 0
        %3543 = vmatpush1.bf16.msra.mxu0 %v3522
        %3544 = vmatprep.subr.bf16.mxu0 0
        %3545 = vmatpush1.bf16.msra.mxu0 %v3523
        %3546 = vmatprep.subr.bf16.mxu0 0
        %3547 = vmatpush1.bf16.msra.mxu0 %v3524
        %3548 = vmatprep.subr.bf16.mxu0 0
        %3549 = vmatpush1.bf16.msra.mxu0 %v3525
        %3550 = vmatprep.subr.bf16.mxu0 0
        %3551 = vmatpush1.bf16.msra.mxu0 0
        %3552 = vmatprep.subr.bf16.mxu0 0
        %3553 = vmatpush1.bf16.msra.mxu0 0
        %3554 = vmatprep.subr.bf16.mxu0 0
        %3555 = vmatpush1.bf16.msra.mxu0 0
        %3556 = vmatprep.subr.bf16.mxu0 0
        %3557 = vmatpush1.bf16.msra.mxu0 0
        %3558 = vmatprep.subr.bf16.mxu0 0
        %3559 = vmatpush1.bf16.msra.mxu0 0
        %3560 = vmatprep.subr.bf16.mxu0 0
        %3561 = vmatpush1.bf16.msra.mxu0 0
        %3562 = vmatprep.subr.bf16.mxu0 0
        %3563 = vmatpush1.bf16.msra.mxu0 0
        %3564 = vmatprep.subr.bf16.mxu0 0
        %3565 = vmatpush1.bf16.msra.mxu0 0
        %3566 = vmatprep.mubr.bf16.mxu0 0
        %3567 = vmatmul.mubr.bf16.gmra.mrb[0].mxu0 %v3462
        %v3568 = vpop.f32.mrb[0].mxu0
        %v3569 = vadd.f32 0.0, %v3568
        %v3570 = vpop.f32.mrb[0].mxu0
        %v3571 = vpop.f32.mrb[0].mxu0
        %v3572 = vadd.f32 0.0, %v3571
        %v3573 = vpop.f32.mrb[0].mxu0
        %3574 = vmatprep.mubr.bf16.mxu0 0
        %3575 = vmatmul.mubr.bf16.gmra.mrb[0].mxu0 %v3463
        %v3576 = vpop.f32.mrb[0].mxu0
        %v3577 = vadd.f32 0.0, %v3576
        %v3578 = vpop.f32.mrb[0].mxu0
        %v3579 = vpop.f32.mrb[0].mxu0
        %v3580 = vadd.f32 0.0, %v3579
        %v3581 = vpop.f32.mrb[0].mxu0
        %3582 = vmatprep.mubr.bf16.mxu0 0
        %3583 = vmatmul.mubr.bf16.gmra.mrb[0].mxu0 %v3464
        %v3584 = vpop.f32.mrb[0].mxu0
        %v3585 = vadd.f32 0.0, %v3584
        %v3586 = vpop.f32.mrb[0].mxu0
        %v3587 = vpop.f32.mrb[0].mxu0
        %v3588 = vadd.f32 0.0, %v3587
        %v3589 = vpop.f32.mrb[0].mxu0
        %3590 = vmatprep.mubr.bf16.mxu0 0
        %3591 = vmatmul.mubr.bf16.gmra.mrb[0].mxu0 %v3465
        %v3592 = vpop.f32.mrb[0].mxu0
        %v3593 = vadd.f32 0.0, %v3592
        %v3594 = vpop.f32.mrb[0].mxu0
        %v3595 = vpop.f32.mrb[0].mxu0
        %v3596 = vadd.f32 0.0, %v3595
        %v3597 = vpop.f32.mrb[0].mxu0
        %3598 = vmatprep.mubr.bf16.mxu0 0
        %3599 = vmatmul.mubr.bf16.gmra.mrb[0].mxu0 %v3466
        %v3600 = vpop.f32.mrb[0].mxu0
        %v3601 = vadd.f32 0.0, %v3600
        %v3602 = vpop.f32.mrb[0].mxu0
        %v3603 = vpop.f32.mrb[0].mxu0
        %v3604 = vadd.f32 0.0, %v3603
        %v3605 = vpop.f32.mrb[0].mxu0
        %3606 = vmatprep.mubr.bf16.mxu0 0
        %3607 = vmatmul.mubr.bf16.gmra.mrb[0].mxu0 %v3467
        %v3608 = vpop.f32.mrb[0].mxu0
        %v3609 = vadd.f32 0.0, %v3608
        %v3610 = vpop.f32.mrb[0].mxu0
        %v3611 = vpop.f32.mrb[0].mxu0
        %v3612 = vadd.f32 0.0, %v3611
        %v3613 = vpop.f32.mrb[0].mxu0
        %3614 = vmatprep.mubr.bf16.mxu0 0
        %3615 = vmatmul.mubr.bf16.gmra.mrb[0].mxu0 %v3468
        %v3616 = vpop.f32.mrb[0].mxu0
        %v3617 = vadd.f32 0.0, %v3616
        %v3618 = vpop.f32.mrb[0].mxu0
        %v3619 = vpop.f32.mrb[0].mxu0
        %v3620 = vadd.f32 0.0, %v3619
        %v3621 = vpop.f32.mrb[0].mxu0
        %3622 = vmatprep.mubr.bf16.mxu0 0
        %3623 = vmatmul.mubr.bf16.gmra.mrb[0].mxu0 %v3469
        %v3624 = vpop.f32.mrb[0].mxu0
        %v3625 = vadd.f32 0.0, %v3624
        %v3626 = vpop.f32.mrb[0].mxu0
        %v3627 = vpop.f32.mrb[0].mxu0
        %v3628 = vadd.f32 0.0, %v3627
        %v3629 = vpop.f32.mrb[0].mxu0
        %3630 = vdwg.mxu0
        %v3631 = vadd.f32 %v417, %v3569
        %v3632 = vadd.f32 %v418, %v3572
        %v3633 = vadd.f32 %v419, %v3577
        %v3634 = vadd.f32 %v420, %v3580
        %v3635 = vadd.f32 %v421, %v3585
        %v3636 = vadd.f32 %v422, %v3588
        %v3637 = vadd.f32 %v423, %v3593
        %v3638 = vadd.f32 %v424, %v3596
        %v3639 = vadd.f32 %v425, %v3601
        %v3640 = vadd.f32 %v426, %v3604
        %v3641 = vadd.f32 %v427, %v3609
        %v3642 = vadd.f32 %v428, %v3612
        %v3643 = vadd.f32 %v429, %v3617
        %v3644 = vadd.f32 %v430, %v3620
        %v3645 = vadd.f32 %v431, %v3625
        %v3646 = vadd.f32 %v432, %v3628
        %3647 = vadd.xlane.f32.xlu0 %v3631
        %v3648 = vpop.xlane.xlu0 %3647
        %3649 = vadd.xlane.f32.xlu0 %v3632
        %v3650 = vpop.xlane.xlu0 %3649
        %3651 = vadd.xlane.f32.xlu0 %v3633
        %v3652 = vpop.xlane.xlu0 %3651
        %3653 = vadd.xlane.f32.xlu0 %v3634
        %v3654 = vpop.xlane.xlu0 %3653
        %3655 = vadd.xlane.f32.xlu0 %v3635
        %v3656 = vpop.xlane.xlu0 %3655
        %3657 = vadd.xlane.f32.xlu0 %v3636
        %v3658 = vpop.xlane.xlu0 %3657
        %3659 = vadd.xlane.f32.xlu0 %v3637
        %v3660 = vpop.xlane.xlu0 %3659
        %3661 = vadd.xlane.f32.xlu0 %v3638
        %v3662 = vpop.xlane.xlu0 %3661
        %3663 = vadd.xlane.f32.xlu0 %v3639
        %v3664 = vpop.xlane.xlu0 %3663
        %3665 = vadd.xlane.f32.xlu0 %v3640
        %v3666 = vpop.xlane.xlu0 %3665
        %3667 = vadd.xlane.f32.xlu0 %v3641
        %v3668 = vpop.xlane.xlu0 %3667
        %3669 = vadd.xlane.f32.xlu0 %v3642
        %v3670 = vpop.xlane.xlu0 %3669
        %3671 = vadd.xlane.f32.xlu0 %v3643
        %v3672 = vpop.xlane.xlu0 %3671
        %3673 = vadd.xlane.f32.xlu0 %v3644
        %v3674 = vpop.xlane.xlu0 %3673
        %3675 = vadd.xlane.f32.xlu0 %v3645
        %v3676 = vpop.xlane.xlu0 %3675
        %3677 = vadd.xlane.f32.xlu0 %v3646
        %v3678 = vpop.xlane.xlu0 %3677
        %v3679 = vrcp.pop 128.0
        %v3680 = vmul.f32 %v3648, %v3679
        %v3681 = vmul.f32 %v3650, %v3679
        %v3682 = vmul.f32 %v3652, %v3679
        %v3683 = vmul.f32 %v3654, %v3679
        %v3684 = vmul.f32 %v3656, %v3679
        %v3685 = vmul.f32 %v3658, %v3679
        %v3686 = vmul.f32 %v3660, %v3679
        %v3687 = vmul.f32 %v3662, %v3679
        %v3688 = vmul.f32 %v3664, %v3679
        %v3689 = vmul.f32 %v3666, %v3679
        %v3690 = vmul.f32 %v3668, %v3679
        %v3691 = vmul.f32 %v3670, %v3679
        %v3692 = vmul.f32 %v3672, %v3679
        %v3693 = vmul.f32 %v3674, %v3679
        %v3694 = vmul.f32 %v3676, %v3679
        %v3695 = vmul.f32 %v3678, %v3679
        %v3696 = vsub.f32 %v3631, %v3680
        %v3697 = vsub.f32 %v3632, %v3681
        %v3698 = vsub.f32 %v3633, %v3682
        %v3699 = vsub.f32 %v3634, %v3683
        %v3700 = vsub.f32 %v3635, %v3684
        %v3701 = vsub.f32 %v3636, %v3685
        %v3702 = vsub.f32 %v3637, %v3686
        %v3703 = vsub.f32 %v3638, %v3687
        %v3704 = vsub.f32 %v3639, %v3688
        %v3705 = vsub.f32 %v3640, %v3689
        %v3706 = vsub.f32 %v3641, %v3690
        %v3707 = vsub.f32 %v3642, %v3691
        %v3708 = vsub.f32 %v3643, %v3692
        %v3709 = vsub.f32 %v3644, %v3693
        %v3710 = vsub.f32 %v3645, %v3694
        %v3711 = vsub.f32 %v3646, %v3695
        %v3712 = vmul.f32 %v3696, %v3696
        %v3713 = vmul.f32 %v3697, %v3697
        %v3714 = vmul.f32 %v3698, %v3698
        %v3715 = vmul.f32 %v3699, %v3699
        %v3716 = vmul.f32 %v3700, %v3700
        %v3717 = vmul.f32 %v3701, %v3701
        %v3718 = vmul.f32 %v3702, %v3702
        %v3719 = vmul.f32 %v3703, %v3703
        %v3720 = vmul.f32 %v3704, %v3704
        %v3721 = vmul.f32 %v3705, %v3705
        %v3722 = vmul.f32 %v3706, %v3706
        %v3723 = vmul.f32 %v3707, %v3707
        %v3724 = vmul.f32 %v3708, %v3708
        %v3725 = vmul.f32 %v3709, %v3709
        %v3726 = vmul.f32 %v3710, %v3710
        %v3727 = vmul.f32 %v3711, %v3711
        %3728 = vadd.xlane.f32.xlu0 %v3712
        %v3729 = vpop.xlane.xlu0 %3728
        %3730 = vadd.xlane.f32.xlu0 %v3713
        %v3731 = vpop.xlane.xlu0 %3730
        %3732 = vadd.xlane.f32.xlu0 %v3714
        %v3733 = vpop.xlane.xlu0 %3732
        %3734 = vadd.xlane.f32.xlu0 %v3715
        %v3735 = vpop.xlane.xlu0 %3734
        %3736 = vadd.xlane.f32.xlu0 %v3716
        %v3737 = vpop.xlane.xlu0 %3736
        %3738 = vadd.xlane.f32.xlu0 %v3717
        %v3739 = vpop.xlane.xlu0 %3738
        %3740 = vadd.xlane.f32.xlu0 %v3718
        %v3741 = vpop.xlane.xlu0 %3740
        %3742 = vadd.xlane.f32.xlu0 %v3719
        %v3743 = vpop.xlane.xlu0 %3742
        %3744 = vadd.xlane.f32.xlu0 %v3720
        %v3745 = vpop.xlane.xlu0 %3744
        %3746 = vadd.xlane.f32.xlu0 %v3721
        %v3747 = vpop.xlane.xlu0 %3746
        %3748 = vadd.xlane.f32.xlu0 %v3722
        %v3749 = vpop.xlane.xlu0 %3748
        %3750 = vadd.xlane.f32.xlu0 %v3723
        %v3751 = vpop.xlane.xlu0 %3750
        %3752 = vadd.xlane.f32.xlu0 %v3724
        %v3753 = vpop.xlane.xlu0 %3752
        %3754 = vadd.xlane.f32.xlu0 %v3725
        %v3755 = vpop.xlane.xlu0 %3754
        %3756 = vadd.xlane.f32.xlu0 %v3726
        %v3757 = vpop.xlane.xlu0 %3756
        %3758 = vadd.xlane.f32.xlu0 %v3727
        %v3759 = vpop.xlane.xlu0 %3758
        %v3760 = vmul.f32 %v3729, %v3679
        %v3761 = vmul.f32 %v3731, %v3679
        %v3762 = vmul.f32 %v3733, %v3679
        %v3763 = vmul.f32 %v3735, %v3679
        %v3764 = vmul.f32 %v3737, %v3679
        %v3765 = vmul.f32 %v3739, %v3679
        %v3766 = vmul.f32 %v3741, %v3679
        %v3767 = vmul.f32 %v3743, %v3679
        %v3768 = vmul.f32 %v3745, %v3679
        %v3769 = vmul.f32 %v3747, %v3679
        %v3770 = vmul.f32 %v3749, %v3679
        %v3771 = vmul.f32 %v3751, %v3679
        %v3772 = vmul.f32 %v3753, %v3679
        %v3773 = vmul.f32 %v3755, %v3679
        %v3774 = vmul.f32 %v3757, %v3679
        %v3775 = vmul.f32 %v3759, %v3679
        %v3776 = vadd.f32 %v3760, 1e-05
        %v3777 = vadd.f32 %v3761, 1e-05
        %v3778 = vadd.f32 %v3762, 1e-05
        %v3779 = vadd.f32 %v3763, 1e-05
        %v3780 = vadd.f32 %v3764, 1e-05
        %v3781 = vadd.f32 %v3765, 1e-05
        %v3782 = vadd.f32 %v3766, 1e-05
        %v3783 = vadd.f32 %v3767, 1e-05
        %v3784 = vadd.f32 %v3768, 1e-05
        %v3785 = vadd.f32 %v3769, 1e-05
        %v3786 = vadd.f32 %v3770, 1e-05
        %v3787 = vadd.f32 %v3771, 1e-05
        %v3788 = vadd.f32 %v3772, 1e-05
        %v3789 = vadd.f32 %v3773, 1e-05
        %v3790 = vadd.f32 %v3774, 1e-05
        %v3791 = vadd.f32 %v3775, 1e-05
        %v3792 = vrsqrt.pop %v3776
        %v3793 = vrsqrt.pop %v3777
        %v3794 = vrsqrt.pop %v3778
        %v3795 = vrsqrt.pop %v3779
        %v3796 = vrsqrt.pop %v3780
        %v3797 = vrsqrt.pop %v3781
        %v3798 = vrsqrt.pop %v3782
        %v3799 = vrsqrt.pop %v3783
        %v3800 = vrsqrt.pop %v3784
        %v3801 = vrsqrt.pop %v3785
        %v3802 = vrsqrt.pop %v3786
        %v3803 = vrsqrt.pop %v3787
        %v3804 = vrsqrt.pop %v3788
        %v3805 = vrsqrt.pop %v3789
        %v3806 = vrsqrt.pop %v3790
        %v3807 = vrsqrt.pop %v3791
        %v3808 = vmul.f32 %v3696, %v3792
        %v3809 = vmul.f32 %v3697, %v3793
        %v3810 = vmul.f32 %v3698, %v3794
        %v3811 = vmul.f32 %v3699, %v3795
        %v3812 = vmul.f32 %v3700, %v3796
        %v3813 = vmul.f32 %v3701, %v3797
        %v3814 = vmul.f32 %v3702, %v3798
        %v3815 = vmul.f32 %v3703, %v3799
        %v3816 = vmul.f32 %v3704, %v3800
        %v3817 = vmul.f32 %v3705, %v3801
        %v3818 = vmul.f32 %v3706, %v3802
        %v3819 = vmul.f32 %v3707, %v3803
        %v3820 = vmul.f32 %v3708, %v3804
        %v3821 = vmul.f32 %v3709, %v3805
        %v3822 = vmul.f32 %v3710, %v3806
        %v3823 = vmul.f32 %v3711, %v3807
        %v3824 = vpack.c.bf16 %v3809, %v3808
        %v3825 = vpack.c.bf16 %v3811, %v3810
        %v3826 = vpack.c.bf16 %v3813, %v3812
        %v3827 = vpack.c.bf16 %v3815, %v3814
        %v3828 = vpack.c.bf16 %v3817, %v3816
        %v3829 = vpack.c.bf16 %v3819, %v3818
        %v3830 = vpack.c.bf16 %v3821, %v3820
        %v3831 = vpack.c.bf16 %v3823, %v3822
        %v3832 = vld [vmem:[#allocation12] sm:$0xff]
        %v3833 = vld [vmem:[#allocation12 + $0x8] sm:$0xff]
        %v3834 = vld [vmem:[#allocation12 + $0x10] sm:$0xff]
        %v3835 = vld [vmem:[#allocation12 + $0x18] sm:$0xff]
        %v3836 = vld [vmem:[#allocation12 + $0x20] sm:$0xff]
        %v3837 = vld [vmem:[#allocation12 + $0x28] sm:$0xff]
        %v3838 = vld [vmem:[#allocation12 + $0x30] sm:$0xff]
        %v3839 = vld [vmem:[#allocation12 + $0x38] sm:$0xff]
        %v3840 = vld [vmem:[#allocation12 + $0x40] sm:$0xff]
        %v3841 = vld [vmem:[#allocation12 + $0x48] sm:$0xff]
        %v3842 = vld [vmem:[#allocation12 + $0x50] sm:$0xff]
        %v3843 = vld [vmem:[#allocation12 + $0x58] sm:$0xff]
        %v3844 = vld [vmem:[#allocation12 + $0x60] sm:$0xff]
        %v3845 = vld [vmem:[#allocation12 + $0x68] sm:$0xff]
        %v3846 = vld [vmem:[#allocation12 + $0x70] sm:$0xff]
        %v3847 = vld [vmem:[#allocation12 + $0x78] sm:$0xff]
        %v3848 = vld [vmem:[#allocation12 + $0x80] sm:$0xff]
        %v3849 = vld [vmem:[#allocation12 + $0x88] sm:$0xff]
        %v3850 = vld [vmem:[#allocation12 + $0x90] sm:$0xff]
        %v3851 = vld [vmem:[#allocation12 + $0x98] sm:$0xff]
        %v3852 = vld [vmem:[#allocation12 + $0xa0] sm:$0xff]
        %v3853 = vld [vmem:[#allocation12 + $0xa8] sm:$0xff]
        %v3854 = vld [vmem:[#allocation12 + $0xb0] sm:$0xff]
        %v3855 = vld [vmem:[#allocation12 + $0xb8] sm:$0xff]
        %v3856 = vld [vmem:[#allocation12 + $0xc0] sm:$0xff]
        %v3857 = vld [vmem:[#allocation12 + $0xc8] sm:$0xff]
        %v3858 = vld [vmem:[#allocation12 + $0xd0] sm:$0xff]
        %v3859 = vld [vmem:[#allocation12 + $0xd8] sm:$0xff]
        %v3860 = vld [vmem:[#allocation12 + $0xe0] sm:$0xff]
        %v3861 = vld [vmem:[#allocation12 + $0xe8] sm:$0xff]
        %v3862 = vld [vmem:[#allocation12 + $0xf0] sm:$0xff]
        %v3863 = vld [vmem:[#allocation12 + $0xf8] sm:$0xff]
        %v3864 = vld [vmem:[%s6] sm:$0xf]
        %v3866 = vlaneseq
        %v3867 = vshrl.u32 %v3866, 7
        %v3868 = vsub.s32 0, %v3867
        %v3869 = vrot.slane %v3864, %v3868
        %v3870 = vlaneseq
        %v3871 = vshrl.u32 %v3870, 7
        %v3872 = vsub.s32 1, %v3871
        %v3873 = vrot.slane %v3864, %v3872
        %v3874 = vlaneseq
        %v3875 = vshrl.u32 %v3874, 7
        %v3876 = vsub.s32 2, %v3875
        %v3877 = vrot.slane %v3864, %v3876
        %v3878 = vlaneseq
        %v3879 = vshrl.u32 %v3878, 7
        %v3880 = vsub.s32 3, %v3879
        %v3881 = vrot.slane %v3864, %v3880
        %v3918 = vunpack.c.l.b16 %v3832
        %v3919 = vunpack.c.h.b16 %v3832
        %v3920 = vunpack.c.l.b16 %v3833
        %v3921 = vunpack.c.h.b16 %v3833
        %v3922 = vunpack.c.l.b16 %v3834
        %v3923 = vunpack.c.h.b16 %v3834
        %v3924 = vunpack.c.l.b16 %v3835
        %v3925 = vunpack.c.h.b16 %v3835
        %v3926 = vunpack.c.l.b16 %v3836
        %v3927 = vunpack.c.h.b16 %v3836
        %v3928 = vunpack.c.l.b16 %v3837
        %v3929 = vunpack.c.h.b16 %v3837
        %v3930 = vunpack.c.l.b16 %v3838
        %v3931 = vunpack.c.h.b16 %v3838
        %v3932 = vunpack.c.l.b16 %v3839
        %v3933 = vunpack.c.h.b16 %v3839
        %v3934 = vunpack.c.l.b16 %v3840
        %v3935 = vunpack.c.h.b16 %v3840
        %v3936 = vunpack.c.l.b16 %v3841
        %v3937 = vunpack.c.h.b16 %v3841
        %v3938 = vunpack.c.l.b16 %v3842
        %v3939 = vunpack.c.h.b16 %v3842
        %v3940 = vunpack.c.l.b16 %v3843
        %v3941 = vunpack.c.h.b16 %v3843
        %v3942 = vunpack.c.l.b16 %v3844
        %v3943 = vunpack.c.h.b16 %v3844
        %v3944 = vunpack.c.l.b16 %v3845
        %v3945 = vunpack.c.h.b16 %v3845
        %v3946 = vunpack.c.l.b16 %v3846
        %v3947 = vunpack.c.h.b16 %v3846
        %v3948 = vunpack.c.l.b16 %v3847
        %v3949 = vunpack.c.h.b16 %v3847
        %v3950 = vunpack.c.l.b16 %v3848
        %v3951 = vunpack.c.h.b16 %v3848
        %v3952 = vunpack.c.l.b16 %v3849
        %v3953 = vunpack.c.h.b16 %v3849
        %v3954 = vunpack.c.l.b16 %v3850
        %v3955 = vunpack.c.h.b16 %v3850
        %v3956 = vunpack.c.l.b16 %v3851
        %v3957 = vunpack.c.h.b16 %v3851
        %v3958 = vunpack.c.l.b16 %v3852
        %v3959 = vunpack.c.h.b16 %v3852
        %v3960 = vunpack.c.l.b16 %v3853
        %v3961 = vunpack.c.h.b16 %v3853
        %v3962 = vunpack.c.l.b16 %v3854
        %v3963 = vunpack.c.h.b16 %v3854
        %v3964 = vunpack.c.l.b16 %v3855
        %v3965 = vunpack.c.h.b16 %v3855
        %v3966 = vunpack.c.l.b16 %v3856
        %v3967 = vunpack.c.h.b16 %v3856
        %v3968 = vunpack.c.l.b16 %v3857
        %v3969 = vunpack.c.h.b16 %v3857
        %v3970 = vunpack.c.l.b16 %v3858
        %v3971 = vunpack.c.h.b16 %v3858
        %v3972 = vunpack.c.l.b16 %v3859
        %v3973 = vunpack.c.h.b16 %v3859
        %v3974 = vunpack.c.l.b16 %v3860
        %v3975 = vunpack.c.h.b16 %v3860
        %v3976 = vunpack.c.l.b16 %v3861
        %v3977 = vunpack.c.h.b16 %v3861
        %v3978 = vunpack.c.l.b16 %v3862
        %v3979 = vunpack.c.h.b16 %v3862
        %v3980 = vunpack.c.l.b16 %v3863
        %v3981 = vunpack.c.h.b16 %v3863
        %v3982 = vpack.c.b16 %v3922, %v3918
        %v3983 = vpack.c.b16 %v3923, %v3919
        %v3984 = vpack.c.b16 %v3924, %v3920
        %v3985 = vpack.c.b16 %v3925, %v3921
        %v3986 = vpack.c.b16 %v3930, %v3926
        %v3987 = vpack.c.b16 %v3931, %v3927
        %v3988 = vpack.c.b16 %v3932, %v3928
        %v3989 = vpack.c.b16 %v3933, %v3929
        %v3990 = vpack.c.b16 %v3938, %v3934
        %v3991 = vpack.c.b16 %v3939, %v3935
        %v3992 = vpack.c.b16 %v3940, %v3936
        %v3993 = vpack.c.b16 %v3941, %v3937
        %v3994 = vpack.c.b16 %v3946, %v3942
        %v3995 = vpack.c.b16 %v3947, %v3943
        %v3996 = vpack.c.b16 %v3948, %v3944
        %v3997 = vpack.c.b16 %v3949, %v3945
        %v3998 = vpack.c.b16 %v3954, %v3950
        %v3999 = vpack.c.b16 %v3955, %v3951
        %v4000 = vpack.c.b16 %v3956, %v3952
        %v4001 = vpack.c.b16 %v3957, %v3953
        %v4002 = vpack.c.b16 %v3962, %v3958
        %v4003 = vpack.c.b16 %v3963, %v3959
        %v4004 = vpack.c.b16 %v3964, %v3960
        %v4005 = vpack.c.b16 %v3965, %v3961
        %v4006 = vpack.c.b16 %v3970, %v3966
        %v4007 = vpack.c.b16 %v3971, %v3967
        %v4008 = vpack.c.b16 %v3972, %v3968
        %v4009 = vpack.c.b16 %v3973, %v3969
        %v4010 = vpack.c.b16 %v3978, %v3974
        %v4011 = vpack.c.b16 %v3979, %v3975
        %v4012 = vpack.c.b16 %v3980, %v3976
        %v4013 = vpack.c.b16 %v3981, %v3977
        %4046 = vmatprep.subr.bf16.mxu0 %v3983
        %4047 = vmatpush1.bf16.msra.mxu0 %v3982
        %4048 = vmatprep.subr.bf16.mxu0 %v3987
        %4049 = vmatpush1.bf16.msra.mxu0 %v3986
        %4050 = vmatprep.subr.bf16.mxu0 %v3991
        %4051 = vmatpush1.bf16.msra.mxu0 %v3990
        %4052 = vmatprep.subr.bf16.mxu0 %v3995
        %4053 = vmatpush1.bf16.msra.mxu0 %v3994
        %4054 = vmatprep.subr.bf16.mxu0 %v3999
        %4055 = vmatpush1.bf16.msra.mxu0 %v3998
        %4056 = vmatprep.subr.bf16.mxu0 %v4003
        %4057 = vmatpush1.bf16.msra.mxu0 %v4002
        %4058 = vmatprep.subr.bf16.mxu0 %v4007
        %4059 = vmatpush1.bf16.msra.mxu0 %v4006
        %4060 = vmatprep.subr.bf16.mxu0 %v4011
        %4061 = vmatpush1.bf16.msra.mxu0 %v4010
        %4062 = vmatprep.subr.bf16.mxu0 0
        %4063 = vmatpush1.bf16.msra.mxu0 0
        %4064 = vmatprep.subr.bf16.mxu0 0
        %4065 = vmatpush1.bf16.msra.mxu0 0
        %4066 = vmatprep.subr.bf16.mxu0 0
        %4067 = vmatpush1.bf16.msra.mxu0 0
        %4068 = vmatprep.subr.bf16.mxu0 0
        %4069 = vmatpush1.bf16.msra.mxu0 0
        %4070 = vmatprep.subr.bf16.mxu0 0
        %4071 = vmatpush1.bf16.msra.mxu0 0
        %4072 = vmatprep.subr.bf16.mxu0 0
        %4073 = vmatpush1.bf16.msra.mxu0 0
        %4074 = vmatprep.subr.bf16.mxu0 0
        %4075 = vmatpush1.bf16.msra.mxu0 0
        %4076 = vmatprep.subr.bf16.mxu0 0
        %4077 = vmatpush1.bf16.msra.mxu0 0
        %4078 = vmatprep.mubr.bf16.mxu0 0
        %4079 = vmatmul.mubr.bf16.gmra.mrb[0].mxu0 %v3824
        %v4080 = vpop.f32.mrb[0].mxu0
        %v4081 = vadd.f32 %v3869, %v4080
        %v4082 = vpop.f32.mrb[0].mxu0
        %v4083 = vadd.f32 %v3873, %v4082
        %v4084 = vpop.f32.mrb[0].mxu0
        %v4085 = vadd.f32 %v3869, %v4084
        %v4086 = vpop.f32.mrb[0].mxu0
        %v4087 = vadd.f32 %v3873, %v4086
        %4088 = vmatprep.mubr.bf16.mxu0 0
        %4089 = vmatmul.mubr.bf16.gmra.mrb[0].mxu0 %v3825
        %v4090 = vpop.f32.mrb[0].mxu0
        %v4091 = vadd.f32 %v3869, %v4090
        %v4092 = vpop.f32.mrb[0].mxu0
        %v4093 = vadd.f32 %v3873, %v4092
        %v4094 = vpop.f32.mrb[0].mxu0
        %v4095 = vadd.f32 %v3869, %v4094
        %v4096 = vpop.f32.mrb[0].mxu0
        %v4097 = vadd.f32 %v3873, %v4096
        %4098 = vmatprep.mubr.bf16.mxu0 0
        %4099 = vmatmul.mubr.bf16.gmra.mrb[0].mxu0 %v3826
        %v4100 = vpop.f32.mrb[0].mxu0
        %v4101 = vadd.f32 %v3869, %v4100
        %v4102 = vpop.f32.mrb[0].mxu0
        %v4103 = vadd.f32 %v3873, %v4102
        %v4104 = vpop.f32.mrb[0].mxu0
        %v4105 = vadd.f32 %v3869, %v4104
        %v4106 = vpop.f32.mrb[0].mxu0
        %v4107 = vadd.f32 %v3873, %v4106
        %4108 = vmatprep.mubr.bf16.mxu0 0
        %4109 = vmatmul.mubr.bf16.gmra.mrb[0].mxu0 %v3827
        %v4110 = vpop.f32.mrb[0].mxu0
        %v4111 = vadd.f32 %v3869, %v4110
        %v4112 = vpop.f32.mrb[0].mxu0
        %v4113 = vadd.f32 %v3873, %v4112
        %v4114 = vpop.f32.mrb[0].mxu0
        %v4115 = vadd.f32 %v3869, %v4114
        %v4116 = vpop.f32.mrb[0].mxu0
        %v4117 = vadd.f32 %v3873, %v4116
        %4118 = vmatprep.mubr.bf16.mxu0 0
        %4119 = vmatmul.mubr.bf16.gmra.mrb[0].mxu0 %v3828
        %v4120 = vpop.f32.mrb[0].mxu0
        %v4121 = vadd.f32 %v3869, %v4120
        %v4122 = vpop.f32.mrb[0].mxu0
        %v4123 = vadd.f32 %v3873, %v4122
        %v4124 = vpop.f32.mrb[0].mxu0
        %v4125 = vadd.f32 %v3869, %v4124
        %v4126 = vpop.f32.mrb[0].mxu0
        %v4127 = vadd.f32 %v3873, %v4126
        %4128 = vmatprep.mubr.bf16.mxu0 0
        %4129 = vmatmul.mubr.bf16.gmra.mrb[0].mxu0 %v3829
        %v4130 = vpop.f32.mrb[0].mxu0
        %v4131 = vadd.f32 %v3869, %v4130
        %v4132 = vpop.f32.mrb[0].mxu0
        %v4133 = vadd.f32 %v3873, %v4132
        %v4134 = vpop.f32.mrb[0].mxu0
        %v4135 = vadd.f32 %v3869, %v4134
        %v4136 = vpop.f32.mrb[0].mxu0
        %v4137 = vadd.f32 %v3873, %v4136
        %4138 = vmatprep.mubr.bf16.mxu0 0
        %4139 = vmatmul.mubr.bf16.gmra.mrb[0].mxu0 %v3830
        %v4140 = vpop.f32.mrb[0].mxu0
        %v4141 = vadd.f32 %v3869, %v4140
        %v4142 = vpop.f32.mrb[0].mxu0
        %v4143 = vadd.f32 %v3873, %v4142
        %v4144 = vpop.f32.mrb[0].mxu0
        %v4145 = vadd.f32 %v3869, %v4144
        %v4146 = vpop.f32.mrb[0].mxu0
        %v4147 = vadd.f32 %v3873, %v4146
        %4148 = vmatprep.mubr.bf16.mxu0 0
        %4149 = vmatmul.mubr.bf16.gmra.mrb[0].mxu0 %v3831
        %v4150 = vpop.f32.mrb[0].mxu0
        %v4151 = vadd.f32 %v3869, %v4150
        %v4152 = vpop.f32.mrb[0].mxu0
        %v4153 = vadd.f32 %v3873, %v4152
        %v4154 = vpop.f32.mrb[0].mxu0
        %v4155 = vadd.f32 %v3869, %v4154
        %v4156 = vpop.f32.mrb[0].mxu0
        %v4157 = vadd.f32 %v3873, %v4156
        %4158 = vdwg.mxu0
        %4159 = vmatprep.subr.bf16.mxu0 %v3985
        %4160 = vmatpush1.bf16.msra.mxu0 %v3984
        %4161 = vmatprep.subr.bf16.mxu0 %v3989
        %4162 = vmatpush1.bf16.msra.mxu0 %v3988
        %4163 = vmatprep.subr.bf16.mxu0 %v3993
        %4164 = vmatpush1.bf16.msra.mxu0 %v3992
        %4165 = vmatprep.subr.bf16.mxu0 %v3997
        %4166 = vmatpush1.bf16.msra.mxu0 %v3996
        %4167 = vmatprep.subr.bf16.mxu0 %v4001
        %4168 = vmatpush1.bf16.msra.mxu0 %v4000
        %4169 = vmatprep.subr.bf16.mxu0 %v4005
        %4170 = vmatpush1.bf16.msra.mxu0 %v4004
        %4171 = vmatprep.subr.bf16.mxu0 %v4009
        %4172 = vmatpush1.bf16.msra.mxu0 %v4008
        %4173 = vmatprep.subr.bf16.mxu0 %v4013
        %4174 = vmatpush1.bf16.msra.mxu0 %v4012
        %4175 = vmatprep.subr.bf16.mxu0 0
        %4176 = vmatpush1.bf16.msra.mxu0 0
        %4177 = vmatprep.subr.bf16.mxu0 0
        %4178 = vmatpush1.bf16.msra.mxu0 0
        %4179 = vmatprep.subr.bf16.mxu0 0
        %4180 = vmatpush1.bf16.msra.mxu0 0
        %4181 = vmatprep.subr.bf16.mxu0 0
        %4182 = vmatpush1.bf16.msra.mxu0 0
        %4183 = vmatprep.subr.bf16.mxu0 0
        %4184 = vmatpush1.bf16.msra.mxu0 0
        %4185 = vmatprep.subr.bf16.mxu0 0
        %4186 = vmatpush1.bf16.msra.mxu0 0
        %4187 = vmatprep.subr.bf16.mxu0 0
        %4188 = vmatpush1.bf16.msra.mxu0 0
        %4189 = vmatprep.subr.bf16.mxu0 0
        %4190 = vmatpush1.bf16.msra.mxu0 0
        %4191 = vmatprep.mubr.bf16.mxu0 0
        %4192 = vmatmul.mubr.bf16.gmra.mrb[0].mxu0 %v3824
        %v4193 = vpop.f32.mrb[0].mxu0
        %v4194 = vadd.f32 %v3877, %v4193
        %v4195 = vpop.f32.mrb[0].mxu0
        %v4196 = vadd.f32 %v3881, %v4195
        %v4197 = vpop.f32.mrb[0].mxu0
        %v4198 = vadd.f32 %v3877, %v4197
        %v4199 = vpop.f32.mrb[0].mxu0
        %v4200 = vadd.f32 %v3881, %v4199
        %4201 = vmatprep.mubr.bf16.mxu0 0
        %4202 = vmatmul.mubr.bf16.gmra.mrb[0].mxu0 %v3825
        %v4203 = vpop.f32.mrb[0].mxu0
        %v4204 = vadd.f32 %v3877, %v4203
        %v4205 = vpop.f32.mrb[0].mxu0
        %v4206 = vadd.f32 %v3881, %v4205
        %v4207 = vpop.f32.mrb[0].mxu0
        %v4208 = vadd.f32 %v3877, %v4207
        %v4209 = vpop.f32.mrb[0].mxu0
        %v4210 = vadd.f32 %v3881, %v4209
        %4211 = vmatprep.mubr.bf16.mxu0 0
        %4212 = vmatmul.mubr.bf16.gmra.mrb[0].mxu0 %v3826
        %v4213 = vpop.f32.mrb[0].mxu0
        %v4214 = vadd.f32 %v3877, %v4213
        %v4215 = vpop.f32.mrb[0].mxu0
        %v4216 = vadd.f32 %v3881, %v4215
        %v4217 = vpop.f32.mrb[0].mxu0
        %v4218 = vadd.f32 %v3877, %v4217
        %v4219 = vpop.f32.mrb[0].mxu0
        %v4220 = vadd.f32 %v3881, %v4219
        %4221 = vmatprep.mubr.bf16.mxu0 0
        %4222 = vmatmul.mubr.bf16.gmra.mrb[0].mxu0 %v3827
        %v4223 = vpop.f32.mrb[0].mxu0
        %v4224 = vadd.f32 %v3877, %v4223
        %v4225 = vpop.f32.mrb[0].mxu0
        %v4226 = vadd.f32 %v3881, %v4225
        %v4227 = vpop.f32.mrb[0].mxu0
        %v4228 = vadd.f32 %v3877, %v4227
        %v4229 = vpop.f32.mrb[0].mxu0
        %v4230 = vadd.f32 %v3881, %v4229
        %4231 = vmatprep.mubr.bf16.mxu0 0
        %4232 = vmatmul.mubr.bf16.gmra.mrb[0].mxu0 %v3828
        %v4233 = vpop.f32.mrb[0].mxu0
        %v4234 = vadd.f32 %v3877, %v4233
        %v4235 = vpop.f32.mrb[0].mxu0
        %v4236 = vadd.f32 %v3881, %v4235
        %v4237 = vpop.f32.mrb[0].mxu0
        %v4238 = vadd.f32 %v3877, %v4237
        %v4239 = vpop.f32.mrb[0].mxu0
        %v4240 = vadd.f32 %v3881, %v4239
        %4241 = vmatprep.mubr.bf16.mxu0 0
        %4242 = vmatmul.mubr.bf16.gmra.mrb[0].mxu0 %v3829
        %v4243 = vpop.f32.mrb[0].mxu0
        %v4244 = vadd.f32 %v3877, %v4243
        %v4245 = vpop.f32.mrb[0].mxu0
        %v4246 = vadd.f32 %v3881, %v4245
        %v4247 = vpop.f32.mrb[0].mxu0
        %v4248 = vadd.f32 %v3877, %v4247
        %v4249 = vpop.f32.mrb[0].mxu0
        %v4250 = vadd.f32 %v3881, %v4249
        %4251 = vmatprep.mubr.bf16.mxu0 0
        %4252 = vmatmul.mubr.bf16.gmra.mrb[0].mxu0 %v3830
        %v4253 = vpop.f32.mrb[0].mxu0
        %v4254 = vadd.f32 %v3877, %v4253
        %v4255 = vpop.f32.mrb[0].mxu0
        %v4256 = vadd.f32 %v3881, %v4255
        %v4257 = vpop.f32.mrb[0].mxu0
        %v4258 = vadd.f32 %v3877, %v4257
        %v4259 = vpop.f32.mrb[0].mxu0
        %v4260 = vadd.f32 %v3881, %v4259
        %4261 = vmatprep.mubr.bf16.mxu0 0
        %4262 = vmatmul.mubr.bf16.gmra.mrb[0].mxu0 %v3831
        %v4263 = vpop.f32.mrb[0].mxu0
        %v4264 = vadd.f32 %v3877, %v4263
        %v4265 = vpop.f32.mrb[0].mxu0
        %v4266 = vadd.f32 %v3881, %v4265
        %v4267 = vpop.f32.mrb[0].mxu0
        %v4268 = vadd.f32 %v3877, %v4267
        %v4269 = vpop.f32.mrb[0].mxu0
        %v4270 = vadd.f32 %v3881, %v4269
        %4271 = vdwg.mxu0
        %v4272 = vmax.f32 %v4081, 0.0
        %v4273 = vmax.f32 %v4083, 0.0
        %v4274 = vmax.f32 %v4194, 0.0
        %v4275 = vmax.f32 %v4196, 0.0
        %v4276 = vmax.f32 %v4085, 0.0
        %v4277 = vmax.f32 %v4087, 0.0
        %v4278 = vmax.f32 %v4198, 0.0
        %v4279 = vmax.f32 %v4200, 0.0
        %v4280 = vmax.f32 %v4091, 0.0
        %v4281 = vmax.f32 %v4093, 0.0
        %v4282 = vmax.f32 %v4204, 0.0
        %v4283 = vmax.f32 %v4206, 0.0
        %v4284 = vmax.f32 %v4095, 0.0
        %v4285 = vmax.f32 %v4097, 0.0
        %v4286 = vmax.f32 %v4208, 0.0
        %v4287 = vmax.f32 %v4210, 0.0
        %v4288 = vmax.f32 %v4101, 0.0
        %v4289 = vmax.f32 %v4103, 0.0
        %v4290 = vmax.f32 %v4214, 0.0
        %v4291 = vmax.f32 %v4216, 0.0
        %v4292 = vmax.f32 %v4105, 0.0
        %v4293 = vmax.f32 %v4107, 0.0
        %v4294 = vmax.f32 %v4218, 0.0
        %v4295 = vmax.f32 %v4220, 0.0
        %v4296 = vmax.f32 %v4111, 0.0
        %v4297 = vmax.f32 %v4113, 0.0
        %v4298 = vmax.f32 %v4224, 0.0
        %v4299 = vmax.f32 %v4226, 0.0
        %v4300 = vmax.f32 %v4115, 0.0
        %v4301 = vmax.f32 %v4117, 0.0
        %v4302 = vmax.f32 %v4228, 0.0
        %v4303 = vmax.f32 %v4230, 0.0
        %v4304 = vmax.f32 %v4121, 0.0
        %v4305 = vmax.f32 %v4123, 0.0
        %v4306 = vmax.f32 %v4234, 0.0
        %v4307 = vmax.f32 %v4236, 0.0
        %v4308 = vmax.f32 %v4125, 0.0
        %v4309 = vmax.f32 %v4127, 0.0
        %v4310 = vmax.f32 %v4238, 0.0
        %v4311 = vmax.f32 %v4240, 0.0
        %v4312 = vmax.f32 %v4131, 0.0
        %v4313 = vmax.f32 %v4133, 0.0
        %v4314 = vmax.f32 %v4244, 0.0
        %v4315 = vmax.f32 %v4246, 0.0
        %v4316 = vmax.f32 %v4135, 0.0
        %v4317 = vmax.f32 %v4137, 0.0
        %v4318 = vmax.f32 %v4248, 0.0
        %v4319 = vmax.f32 %v4250, 0.0
        %v4320 = vmax.f32 %v4141, 0.0
        %v4321 = vmax.f32 %v4143, 0.0
        %v4322 = vmax.f32 %v4254, 0.0
        %v4323 = vmax.f32 %v4256, 0.0
        %v4324 = vmax.f32 %v4145, 0.0
        %v4325 = vmax.f32 %v4147, 0.0
        %v4326 = vmax.f32 %v4258, 0.0
        %v4327 = vmax.f32 %v4260, 0.0
        %v4328 = vmax.f32 %v4151, 0.0
        %v4329 = vmax.f32 %v4153, 0.0
        %v4330 = vmax.f32 %v4264, 0.0
        %v4331 = vmax.f32 %v4266, 0.0
        %v4332 = vmax.f32 %v4155, 0.0
        %v4333 = vmax.f32 %v4157, 0.0
        %v4334 = vmax.f32 %v4268, 0.0
        %v4335 = vmax.f32 %v4270, 0.0
        %v4336 = vpack.c.bf16 %v4276, %v4272
        %v4337 = vpack.c.bf16 %v4277, %v4273
        %v4338 = vpack.c.bf16 %v4278, %v4274
        %v4339 = vpack.c.bf16 %v4279, %v4275
        %v4340 = vpack.c.bf16 %v4284, %v4280
        %v4341 = vpack.c.bf16 %v4285, %v4281
        %v4342 = vpack.c.bf16 %v4286, %v4282
        %v4343 = vpack.c.bf16 %v4287, %v4283
        %v4344 = vpack.c.bf16 %v4292, %v4288
        %v4345 = vpack.c.bf16 %v4293, %v4289
        %v4346 = vpack.c.bf16 %v4294, %v4290
        %v4347 = vpack.c.bf16 %v4295, %v4291
        %v4348 = vpack.c.bf16 %v4300, %v4296
        %v4349 = vpack.c.bf16 %v4301, %v4297
        %v4350 = vpack.c.bf16 %v4302, %v4298
        %v4351 = vpack.c.bf16 %v4303, %v4299
        %v4352 = vpack.c.bf16 %v4308, %v4304
        %v4353 = vpack.c.bf16 %v4309, %v4305
        %v4354 = vpack.c.bf16 %v4310, %v4306
        %v4355 = vpack.c.bf16 %v4311, %v4307
        %v4356 = vpack.c.bf16 %v4316, %v4312
        %v4357 = vpack.c.bf16 %v4317, %v4313
        %v4358 = vpack.c.bf16 %v4318, %v4314
        %v4359 = vpack.c.bf16 %v4319, %v4315
        %v4360 = vpack.c.bf16 %v4324, %v4320
        %v4361 = vpack.c.bf16 %v4325, %v4321
        %v4362 = vpack.c.bf16 %v4326, %v4322
        %v4363 = vpack.c.bf16 %v4327, %v4323
        %v4364 = vpack.c.bf16 %v4332, %v4328
        %v4365 = vpack.c.bf16 %v4333, %v4329
        %v4366 = vpack.c.bf16 %v4334, %v4330
        %v4367 = vpack.c.bf16 %v4335, %v4331
        %v4368 = vld [vmem:[#allocation14] sm:$0xf]
        %v4369 = vld [vmem:[#allocation14 + $0x4] sm:$0xf]
        %v4370 = vld [vmem:[#allocation14 + $0x8] sm:$0xf]
        %v4371 = vld [vmem:[#allocation14 + $0xc] sm:$0xf]
        %v4372 = vld [vmem:[#allocation14 + $0x10] sm:$0xf]
        %v4373 = vld [vmem:[#allocation14 + $0x14] sm:$0xf]
        %v4374 = vld [vmem:[#allocation14 + $0x18] sm:$0xf]
        %v4375 = vld [vmem:[#allocation14 + $0x1c] sm:$0xf]
        %v4376 = vld [vmem:[#allocation14 + $0x20] sm:$0xf]
        %v4377 = vld [vmem:[#allocation14 + $0x24] sm:$0xf]
        %v4378 = vld [vmem:[#allocation14 + $0x28] sm:$0xf]
        %v4379 = vld [vmem:[#allocation14 + $0x2c] sm:$0xf]
        %v4380 = vld [vmem:[#allocation14 + $0x30] sm:$0xf]
        %v4381 = vld [vmem:[#allocation14 + $0x34] sm:$0xf]
        %v4382 = vld [vmem:[#allocation14 + $0x38] sm:$0xf]
        %v4383 = vld [vmem:[#allocation14 + $0x3c] sm:$0xf]
        %v4384 = vld [vmem:[#allocation14 + $0x40] sm:$0xf]
        %v4385 = vld [vmem:[#allocation14 + $0x44] sm:$0xf]
        %v4386 = vld [vmem:[#allocation14 + $0x48] sm:$0xf]
        %v4387 = vld [vmem:[#allocation14 + $0x4c] sm:$0xf]
        %v4388 = vld [vmem:[#allocation14 + $0x50] sm:$0xf]
        %v4389 = vld [vmem:[#allocation14 + $0x54] sm:$0xf]
        %v4390 = vld [vmem:[#allocation14 + $0x58] sm:$0xf]
        %v4391 = vld [vmem:[#allocation14 + $0x5c] sm:$0xf]
        %v4392 = vld [vmem:[#allocation14 + $0x60] sm:$0xf]
        %v4393 = vld [vmem:[#allocation14 + $0x64] sm:$0xf]
        %v4394 = vld [vmem:[#allocation14 + $0x68] sm:$0xf]
        %v4395 = vld [vmem:[#allocation14 + $0x6c] sm:$0xf]
        %v4396 = vld [vmem:[#allocation14 + $0x70] sm:$0xf]
        %v4397 = vld [vmem:[#allocation14 + $0x74] sm:$0xf]
        %v4398 = vld [vmem:[#allocation14 + $0x78] sm:$0xf]
        %v4399 = vld [vmem:[#allocation14 + $0x7c] sm:$0xf]
        %v4400 = vld [vmem:[#allocation14 + $0x80] sm:$0xf]
        %v4401 = vld [vmem:[#allocation14 + $0x84] sm:$0xf]
        %v4402 = vld [vmem:[#allocation14 + $0x88] sm:$0xf]
        %v4403 = vld [vmem:[#allocation14 + $0x8c] sm:$0xf]
        %v4404 = vld [vmem:[#allocation14 + $0x90] sm:$0xf]
        %v4405 = vld [vmem:[#allocation14 + $0x94] sm:$0xf]
        %v4406 = vld [vmem:[#allocation14 + $0x98] sm:$0xf]
        %v4407 = vld [vmem:[#allocation14 + $0x9c] sm:$0xf]
        %v4408 = vld [vmem:[#allocation14 + $0xa0] sm:$0xf]
        %v4409 = vld [vmem:[#allocation14 + $0xa4] sm:$0xf]
        %v4410 = vld [vmem:[#allocation14 + $0xa8] sm:$0xf]
        %v4411 = vld [vmem:[#allocation14 + $0xac] sm:$0xf]
        %v4412 = vld [vmem:[#allocation14 + $0xb0] sm:$0xf]
        %v4413 = vld [vmem:[#allocation14 + $0xb4] sm:$0xf]
        %v4414 = vld [vmem:[#allocation14 + $0xb8] sm:$0xf]
        %v4415 = vld [vmem:[#allocation14 + $0xbc] sm:$0xf]
        %v4416 = vld [vmem:[#allocation14 + $0xc0] sm:$0xf]
        %v4417 = vld [vmem:[#allocation14 + $0xc4] sm:$0xf]
        %v4418 = vld [vmem:[#allocation14 + $0xc8] sm:$0xf]
        %v4419 = vld [vmem:[#allocation14 + $0xcc] sm:$0xf]
        %v4420 = vld [vmem:[#allocation14 + $0xd0] sm:$0xf]
        %v4421 = vld [vmem:[#allocation14 + $0xd4] sm:$0xf]
        %v4422 = vld [vmem:[#allocation14 + $0xd8] sm:$0xf]
        %v4423 = vld [vmem:[#allocation14 + $0xdc] sm:$0xf]
        %v4424 = vld [vmem:[#allocation14 + $0xe0] sm:$0xf]
        %v4425 = vld [vmem:[#allocation14 + $0xe4] sm:$0xf]
        %v4426 = vld [vmem:[#allocation14 + $0xe8] sm:$0xf]
        %v4427 = vld [vmem:[#allocation14 + $0xec] sm:$0xf]
        %v4428 = vld [vmem:[#allocation14 + $0xf0] sm:$0xf]
        %v4429 = vld [vmem:[#allocation14 + $0xf4] sm:$0xf]
        %v4430 = vld [vmem:[#allocation14 + $0xf8] sm:$0xf]
        %v4431 = vld [vmem:[#allocation14 + $0xfc] sm:$0xf]
        %v4432 = vld [vmem:[%s8] sm:$0x1]
        %v4434 = vlaneseq
        %v4435 = vshrl.u32 %v4434, 7
        %v4436 = vsub.s32 0, %v4435
        %v4437 = vrot.slane %v4432, %v4436
        %v4503 = vunpack.c.l.b16 %v4368
        %v4504 = vunpack.c.l.b16 %v4369
        %v4505 = vunpack.c.l.b16 %v4370
        %v4506 = vunpack.c.l.b16 %v4371
        %v4507 = vunpack.c.l.b16 %v4372
        %v4508 = vunpack.c.l.b16 %v4373
        %v4509 = vunpack.c.l.b16 %v4374
        %v4510 = vunpack.c.l.b16 %v4375
        %v4511 = vunpack.c.l.b16 %v4376
        %v4512 = vunpack.c.l.b16 %v4377
        %v4513 = vunpack.c.l.b16 %v4378
        %v4514 = vunpack.c.l.b16 %v4379
        %v4515 = vunpack.c.l.b16 %v4380
        %v4516 = vunpack.c.l.b16 %v4381
        %v4517 = vunpack.c.l.b16 %v4382
        %v4518 = vunpack.c.l.b16 %v4383
        %v4519 = vunpack.c.l.b16 %v4384
        %v4520 = vunpack.c.l.b16 %v4385
        %v4521 = vunpack.c.l.b16 %v4386
        %v4522 = vunpack.c.l.b16 %v4387
        %v4523 = vunpack.c.l.b16 %v4388
        %v4524 = vunpack.c.l.b16 %v4389
        %v4525 = vunpack.c.l.b16 %v4390
        %v4526 = vunpack.c.l.b16 %v4391
        %v4527 = vunpack.c.l.b16 %v4392
        %v4528 = vunpack.c.l.b16 %v4393
        %v4529 = vunpack.c.l.b16 %v4394
        %v4530 = vunpack.c.l.b16 %v4395
        %v4531 = vunpack.c.l.b16 %v4396
        %v4532 = vunpack.c.l.b16 %v4397
        %v4533 = vunpack.c.l.b16 %v4398
        %v4534 = vunpack.c.l.b16 %v4399
        %v4535 = vunpack.c.l.b16 %v4400
        %v4536 = vunpack.c.l.b16 %v4401
        %v4537 = vunpack.c.l.b16 %v4402
        %v4538 = vunpack.c.l.b16 %v4403
        %v4539 = vunpack.c.l.b16 %v4404
        %v4540 = vunpack.c.l.b16 %v4405
        %v4541 = vunpack.c.l.b16 %v4406
        %v4542 = vunpack.c.l.b16 %v4407
        %v4543 = vunpack.c.l.b16 %v4408
        %v4544 = vunpack.c.l.b16 %v4409
        %v4545 = vunpack.c.l.b16 %v4410
        %v4546 = vunpack.c.l.b16 %v4411
        %v4547 = vunpack.c.l.b16 %v4412
        %v4548 = vunpack.c.l.b16 %v4413
        %v4549 = vunpack.c.l.b16 %v4414
        %v4550 = vunpack.c.l.b16 %v4415
        %v4551 = vunpack.c.l.b16 %v4416
        %v4552 = vunpack.c.l.b16 %v4417
        %v4553 = vunpack.c.l.b16 %v4418
        %v4554 = vunpack.c.l.b16 %v4419
        %v4555 = vunpack.c.l.b16 %v4420
        %v4556 = vunpack.c.l.b16 %v4421
        %v4557 = vunpack.c.l.b16 %v4422
        %v4558 = vunpack.c.l.b16 %v4423
        %v4559 = vunpack.c.l.b16 %v4424
        %v4560 = vunpack.c.l.b16 %v4425
        %v4561 = vunpack.c.l.b16 %v4426
        %v4562 = vunpack.c.l.b16 %v4427
        %v4563 = vunpack.c.l.b16 %v4428
        %v4564 = vunpack.c.l.b16 %v4429
        %v4565 = vunpack.c.l.b16 %v4430
        %v4566 = vunpack.c.l.b16 %v4431
        %v4567 = vpack.c.b16 %v4504, %v4503
        %v4568 = vpack.c.b16 %v4506, %v4505
        %v4569 = vpack.c.b16 %v4508, %v4507
        %v4570 = vpack.c.b16 %v4510, %v4509
        %v4571 = vpack.c.b16 %v4512, %v4511
        %v4572 = vpack.c.b16 %v4514, %v4513
        %v4573 = vpack.c.b16 %v4516, %v4515
        %v4574 = vpack.c.b16 %v4518, %v4517
        %v4575 = vpack.c.b16 %v4520, %v4519
        %v4576 = vpack.c.b16 %v4522, %v4521
        %v4577 = vpack.c.b16 %v4524, %v4523
        %v4578 = vpack.c.b16 %v4526, %v4525
        %v4579 = vpack.c.b16 %v4528, %v4527
        %v4580 = vpack.c.b16 %v4530, %v4529
        %v4581 = vpack.c.b16 %v4532, %v4531
        %v4582 = vpack.c.b16 %v4534, %v4533
        %v4583 = vpack.c.b16 %v4536, %v4535
        %v4584 = vpack.c.b16 %v4538, %v4537
        %v4585 = vpack.c.b16 %v4540, %v4539
        %v4586 = vpack.c.b16 %v4542, %v4541
        %v4587 = vpack.c.b16 %v4544, %v4543
        %v4588 = vpack.c.b16 %v4546, %v4545
        %v4589 = vpack.c.b16 %v4548, %v4547
        %v4590 = vpack.c.b16 %v4550, %v4549
        %v4591 = vpack.c.b16 %v4552, %v4551
        %v4592 = vpack.c.b16 %v4554, %v4553
        %v4593 = vpack.c.b16 %v4556, %v4555
        %v4594 = vpack.c.b16 %v4558, %v4557
        %v4595 = vpack.c.b16 %v4560, %v4559
        %v4596 = vpack.c.b16 %v4562, %v4561
        %v4597 = vpack.c.b16 %v4564, %v4563
        %v4598 = vpack.c.b16 %v4566, %v4565
        %4631 = vmatprep.subr.bf16.mxu0 0
        %4632 = vmatpush1.bf16.msra.mxu0 %v4567
        %4633 = vmatprep.subr.bf16.mxu0 0
        %4634 = vmatpush1.bf16.msra.mxu0 %v4568
        %4635 = vmatprep.subr.bf16.mxu0 0
        %4636 = vmatpush1.bf16.msra.mxu0 %v4569
        %4637 = vmatprep.subr.bf16.mxu0 0
        %4638 = vmatpush1.bf16.msra.mxu0 %v4570
        %4639 = vmatprep.subr.bf16.mxu0 0
        %4640 = vmatpush1.bf16.msra.mxu0 %v4571
        %4641 = vmatprep.subr.bf16.mxu0 0
        %4642 = vmatpush1.bf16.msra.mxu0 %v4572
        %4643 = vmatprep.subr.bf16.mxu0 0
        %4644 = vmatpush1.bf16.msra.mxu0 %v4573
        %4645 = vmatprep.subr.bf16.mxu0 0
        %4646 = vmatpush1.bf16.msra.mxu0 %v4574
        %4647 = vmatprep.subr.bf16.mxu0 0
        %4648 = vmatpush1.bf16.msra.mxu0 %v4575
        %4649 = vmatprep.subr.bf16.mxu0 0
        %4650 = vmatpush1.bf16.msra.mxu0 %v4576
        %4651 = vmatprep.subr.bf16.mxu0 0
        %4652 = vmatpush1.bf16.msra.mxu0 %v4577
        %4653 = vmatprep.subr.bf16.mxu0 0
        %4654 = vmatpush1.bf16.msra.mxu0 %v4578
        %4655 = vmatprep.subr.bf16.mxu0 0
        %4656 = vmatpush1.bf16.msra.mxu0 %v4579
        %4657 = vmatprep.subr.bf16.mxu0 0
        %4658 = vmatpush1.bf16.msra.mxu0 %v4580
        %4659 = vmatprep.subr.bf16.mxu0 0
        %4660 = vmatpush1.bf16.msra.mxu0 %v4581
        %4661 = vmatprep.subr.bf16.mxu0 0
        %4662 = vmatpush1.bf16.msra.mxu0 %v4582
        %4663 = vmatprep.mubr.bf16.mxu0 %v4337
        %4664 = vmatmul.mubr.bf16.gmra.mrb[0].mxu0 %v4336
        %v4665 = vpop.f32.mrb[0].mxu0
        %v4666 = vadd.f32 %v4437, %v4665
        %v4667 = vpop.f32.mrb[0].mxu0
        %v4668 = vpop.f32.mrb[0].mxu0
        %v4669 = vadd.f32 %v4437, %v4668
        %v4670 = vpop.f32.mrb[0].mxu0
        %4671 = vmatprep.mubr.bf16.mxu0 %v4341
        %4672 = vmatmul.mubr.bf16.gmra.mrb[0].mxu0 %v4340
        %v4673 = vpop.f32.mrb[0].mxu0
        %v4674 = vadd.f32 %v4437, %v4673
        %v4675 = vpop.f32.mrb[0].mxu0
        %v4676 = vpop.f32.mrb[0].mxu0
        %v4677 = vadd.f32 %v4437, %v4676
        %v4678 = vpop.f32.mrb[0].mxu0
        %4679 = vmatprep.mubr.bf16.mxu0 %v4345
        %4680 = vmatmul.mubr.bf16.gmra.mrb[0].mxu0 %v4344
        %v4681 = vpop.f32.mrb[0].mxu0
        %v4682 = vadd.f32 %v4437, %v4681
        %v4683 = vpop.f32.mrb[0].mxu0
        %v4684 = vpop.f32.mrb[0].mxu0
        %v4685 = vadd.f32 %v4437, %v4684
        %v4686 = vpop.f32.mrb[0].mxu0
        %4687 = vmatprep.mubr.bf16.mxu0 %v4349
        %4688 = vmatmul.mubr.bf16.gmra.mrb[0].mxu0 %v4348
        %v4689 = vpop.f32.mrb[0].mxu0
        %v4690 = vadd.f32 %v4437, %v4689
        %v4691 = vpop.f32.mrb[0].mxu0
        %v4692 = vpop.f32.mrb[0].mxu0
        %v4693 = vadd.f32 %v4437, %v4692
        %v4694 = vpop.f32.mrb[0].mxu0
        %4695 = vmatprep.mubr.bf16.mxu0 %v4353
        %4696 = vmatmul.mubr.bf16.gmra.mrb[0].mxu0 %v4352
        %v4697 = vpop.f32.mrb[0].mxu0
        %v4698 = vadd.f32 %v4437, %v4697
        %v4699 = vpop.f32.mrb[0].mxu0
        %v4700 = vpop.f32.mrb[0].mxu0
        %v4701 = vadd.f32 %v4437, %v4700
        %v4702 = vpop.f32.mrb[0].mxu0
        %4703 = vmatprep.mubr.bf16.mxu0 %v4357
        %4704 = vmatmul.mubr.bf16.gmra.mrb[0].mxu0 %v4356
        %v4705 = vpop.f32.mrb[0].mxu0
        %v4706 = vadd.f32 %v4437, %v4705
        %v4707 = vpop.f32.mrb[0].mxu0
        %v4708 = vpop.f32.mrb[0].mxu0
        %v4709 = vadd.f32 %v4437, %v4708
        %v4710 = vpop.f32.mrb[0].mxu0
        %4711 = vmatprep.mubr.bf16.mxu0 %v4361
        %4712 = vmatmul.mubr.bf16.gmra.mrb[0].mxu0 %v4360
        %v4713 = vpop.f32.mrb[0].mxu0
        %v4714 = vadd.f32 %v4437, %v4713
        %v4715 = vpop.f32.mrb[0].mxu0
        %v4716 = vpop.f32.mrb[0].mxu0
        %v4717 = vadd.f32 %v4437, %v4716
        %v4718 = vpop.f32.mrb[0].mxu0
        %4719 = vmatprep.mubr.bf16.mxu0 %v4365
        %4720 = vmatmul.mubr.bf16.gmra.mrb[0].mxu0 %v4364
        %v4721 = vpop.f32.mrb[0].mxu0
        %v4722 = vadd.f32 %v4437, %v4721
        %v4723 = vpop.f32.mrb[0].mxu0
        %v4724 = vpop.f32.mrb[0].mxu0
        %v4725 = vadd.f32 %v4437, %v4724
        %v4726 = vpop.f32.mrb[0].mxu0
        %4727 = vdwg.mxu0
        %4728 = vmatprep.subr.bf16.mxu0 0
        %4729 = vmatpush1.bf16.msra.mxu0 %v4583
        %4730 = vmatprep.subr.bf16.mxu0 0
        %4731 = vmatpush1.bf16.msra.mxu0 %v4584
        %4732 = vmatprep.subr.bf16.mxu0 0
        %4733 = vmatpush1.bf16.msra.mxu0 %v4585
        %4734 = vmatprep.subr.bf16.mxu0 0
        %4735 = vmatpush1.bf16.msra.mxu0 %v4586
        %4736 = vmatprep.subr.bf16.mxu0 0
        %4737 = vmatpush1.bf16.msra.mxu0 %v4587
        %4738 = vmatprep.subr.bf16.mxu0 0
        %4739 = vmatpush1.bf16.msra.mxu0 %v4588
        %4740 = vmatprep.subr.bf16.mxu0 0
        %4741 = vmatpush1.bf16.msra.mxu0 %v4589
        %4742 = vmatprep.subr.bf16.mxu0 0
        %4743 = vmatpush1.bf16.msra.mxu0 %v4590
        %4744 = vmatprep.subr.bf16.mxu0 0
        %4745 = vmatpush1.bf16.msra.mxu0 %v4591
        %4746 = vmatprep.subr.bf16.mxu0 0
        %4747 = vmatpush1.bf16.msra.mxu0 %v4592
        %4748 = vmatprep.subr.bf16.mxu0 0
        %4749 = vmatpush1.bf16.msra.mxu0 %v4593
        %4750 = vmatprep.subr.bf16.mxu0 0
        %4751 = vmatpush1.bf16.msra.mxu0 %v4594
        %4752 = vmatprep.subr.bf16.mxu0 0
        %4753 = vmatpush1.bf16.msra.mxu0 %v4595
        %4754 = vmatprep.subr.bf16.mxu0 0
        %4755 = vmatpush1.bf16.msra.mxu0 %v4596
        %4756 = vmatprep.subr.bf16.mxu0 0
        %4757 = vmatpush1.bf16.msra.mxu0 %v4597
        %4758 = vmatprep.subr.bf16.mxu0 0
        %4759 = vmatpush1.bf16.msra.mxu0 %v4598
        %4760 = vmatprep.mubr.bf16.mxu0 %v4339
        %4761 = vmatmul.mubr.bf16.gmra.mrb[0].mxu0 %v4338
        %v4762 = vpop.f32.mrb[0].mxu0
        %v4763 = vadd.f32 %v4666, %v4762
        %v4764 = vpop.f32.mrb[0].mxu0
        %v4765 = vpop.f32.mrb[0].mxu0
        %v4766 = vadd.f32 %v4669, %v4765
        %v4767 = vpop.f32.mrb[0].mxu0
        %4768 = vmatprep.mubr.bf16.mxu0 %v4343
        %4769 = vmatmul.mubr.bf16.gmra.mrb[0].mxu0 %v4342
        %v4770 = vpop.f32.mrb[0].mxu0
        %v4771 = vadd.f32 %v4674, %v4770
        %v4772 = vpop.f32.mrb[0].mxu0
        %v4773 = vpop.f32.mrb[0].mxu0
        %v4774 = vadd.f32 %v4677, %v4773
        %v4775 = vpop.f32.mrb[0].mxu0
        %4776 = vmatprep.mubr.bf16.mxu0 %v4347
        %4777 = vmatmul.mubr.bf16.gmra.mrb[0].mxu0 %v4346
        %v4778 = vpop.f32.mrb[0].mxu0
        %v4779 = vadd.f32 %v4682, %v4778
        %v4780 = vpop.f32.mrb[0].mxu0
        %v4781 = vpop.f32.mrb[0].mxu0
        %v4782 = vadd.f32 %v4685, %v4781
        %v4783 = vpop.f32.mrb[0].mxu0
        %4784 = vmatprep.mubr.bf16.mxu0 %v4351
        %4785 = vmatmul.mubr.bf16.gmra.mrb[0].mxu0 %v4350
        %v4786 = vpop.f32.mrb[0].mxu0
        %v4787 = vadd.f32 %v4690, %v4786
        %v4788 = vpop.f32.mrb[0].mxu0
        %v4789 = vpop.f32.mrb[0].mxu0
        %v4790 = vadd.f32 %v4693, %v4789
        %v4791 = vpop.f32.mrb[0].mxu0
        %4792 = vmatprep.mubr.bf16.mxu0 %v4355
        %4793 = vmatmul.mubr.bf16.gmra.mrb[0].mxu0 %v4354
        %v4794 = vpop.f32.mrb[0].mxu0
        %v4795 = vadd.f32 %v4698, %v4794
        %v4796 = vpop.f32.mrb[0].mxu0
        %v4797 = vpop.f32.mrb[0].mxu0
        %v4798 = vadd.f32 %v4701, %v4797
        %v4799 = vpop.f32.mrb[0].mxu0
        %4800 = vmatprep.mubr.bf16.mxu0 %v4359
        %4801 = vmatmul.mubr.bf16.gmra.mrb[0].mxu0 %v4358
        %v4802 = vpop.f32.mrb[0].mxu0
        %v4803 = vadd.f32 %v4706, %v4802
        %v4804 = vpop.f32.mrb[0].mxu0
        %v4805 = vpop.f32.mrb[0].mxu0
        %v4806 = vadd.f32 %v4709, %v4805
        %v4807 = vpop.f32.mrb[0].mxu0
        %4808 = vmatprep.mubr.bf16.mxu0 %v4363
        %4809 = vmatmul.mubr.bf16.gmra.mrb[0].mxu0 %v4362
        %v4810 = vpop.f32.mrb[0].mxu0
        %v4811 = vadd.f32 %v4714, %v4810
        %v4812 = vpop.f32.mrb[0].mxu0
        %v4813 = vpop.f32.mrb[0].mxu0
        %v4814 = vadd.f32 %v4717, %v4813
        %v4815 = vpop.f32.mrb[0].mxu0
        %4816 = vmatprep.mubr.bf16.mxu0 %v4367
        %4817 = vmatmul.mubr.bf16.gmra.mrb[0].mxu0 %v4366
        %v4818 = vpop.f32.mrb[0].mxu0
        %v4819 = vadd.f32 %v4722, %v4818
        %v4820 = vpop.f32.mrb[0].mxu0
        %v4821 = vpop.f32.mrb[0].mxu0
        %v4822 = vadd.f32 %v4725, %v4821
        %v4823 = vpop.f32.mrb[0].mxu0
        %4824 = vdwg.mxu0
        %v4825 = vadd.f32 %v3808, %v4763
        %v4826 = vadd.f32 %v3809, %v4766
        %v4827 = vadd.f32 %v3810, %v4771
        %v4828 = vadd.f32 %v3811, %v4774
        %v4829 = vadd.f32 %v3812, %v4779
        %v4830 = vadd.f32 %v3813, %v4782
        %v4831 = vadd.f32 %v3814, %v4787
        %v4832 = vadd.f32 %v3815, %v4790
        %v4833 = vadd.f32 %v3816, %v4795
        %v4834 = vadd.f32 %v3817, %v4798
        %v4835 = vadd.f32 %v3818, %v4803
        %v4836 = vadd.f32 %v3819, %v4806
        %v4837 = vadd.f32 %v3820, %v4811
        %v4838 = vadd.f32 %v3821, %v4814
        %v4839 = vadd.f32 %v3822, %v4819
        %v4840 = vadd.f32 %v3823, %v4822
        %4841 = vadd.xlane.f32.xlu0 %v4825
        %v4842 = vpop.xlane.xlu0 %4841
        %4843 = vadd.xlane.f32.xlu0 %v4826
        %v4844 = vpop.xlane.xlu0 %4843
        %4845 = vadd.xlane.f32.xlu0 %v4827
        %v4846 = vpop.xlane.xlu0 %4845
        %4847 = vadd.xlane.f32.xlu0 %v4828
        %v4848 = vpop.xlane.xlu0 %4847
        %4849 = vadd.xlane.f32.xlu0 %v4829
        %v4850 = vpop.xlane.xlu0 %4849
        %4851 = vadd.xlane.f32.xlu0 %v4830
        %v4852 = vpop.xlane.xlu0 %4851
        %4853 = vadd.xlane.f32.xlu0 %v4831
        %v4854 = vpop.xlane.xlu0 %4853
        %4855 = vadd.xlane.f32.xlu0 %v4832
        %v4856 = vpop.xlane.xlu0 %4855
        %4857 = vadd.xlane.f32.xlu0 %v4833
        %v4858 = vpop.xlane.xlu0 %4857
        %4859 = vadd.xlane.f32.xlu0 %v4834
        %v4860 = vpop.xlane.xlu0 %4859
        %4861 = vadd.xlane.f32.xlu0 %v4835
        %v4862 = vpop.xlane.xlu0 %4861
        %4863 = vadd.xlane.f32.xlu0 %v4836
        %v4864 = vpop.xlane.xlu0 %4863
        %4865 = vadd.xlane.f32.xlu0 %v4837
        %v4866 = vpop.xlane.xlu0 %4865
        %4867 = vadd.xlane.f32.xlu0 %v4838
        %v4868 = vpop.xlane.xlu0 %4867
        %4869 = vadd.xlane.f32.xlu0 %v4839
        %v4870 = vpop.xlane.xlu0 %4869
        %4871 = vadd.xlane.f32.xlu0 %v4840
        %v4872 = vpop.xlane.xlu0 %4871
        %v4873 = vmul.f32 %v4842, %v3679
        %v4874 = vmul.f32 %v4844, %v3679
        %v4875 = vmul.f32 %v4846, %v3679
        %v4876 = vmul.f32 %v4848, %v3679
        %v4877 = vmul.f32 %v4850, %v3679
        %v4878 = vmul.f32 %v4852, %v3679
        %v4879 = vmul.f32 %v4854, %v3679
        %v4880 = vmul.f32 %v4856, %v3679
        %v4881 = vmul.f32 %v4858, %v3679
        %v4882 = vmul.f32 %v4860, %v3679
        %v4883 = vmul.f32 %v4862, %v3679
        %v4884 = vmul.f32 %v4864, %v3679
        %v4885 = vmul.f32 %v4866, %v3679
        %v4886 = vmul.f32 %v4868, %v3679
        %v4887 = vmul.f32 %v4870, %v3679
        %v4888 = vmul.f32 %v4872, %v3679
        %v4889 = vsub.f32 %v4825, %v4873
        %v4890 = vsub.f32 %v4826, %v4874
        %v4891 = vsub.f32 %v4827, %v4875
        %v4892 = vsub.f32 %v4828, %v4876
        %v4893 = vsub.f32 %v4829, %v4877
        %v4894 = vsub.f32 %v4830, %v4878
        %v4895 = vsub.f32 %v4831, %v4879
        %v4896 = vsub.f32 %v4832, %v4880
        %v4897 = vsub.f32 %v4833, %v4881
        %v4898 = vsub.f32 %v4834, %v4882
        %v4899 = vsub.f32 %v4835, %v4883
        %v4900 = vsub.f32 %v4836, %v4884
        %v4901 = vsub.f32 %v4837, %v4885
        %v4902 = vsub.f32 %v4838, %v4886
        %v4903 = vsub.f32 %v4839, %v4887
        %v4904 = vsub.f32 %v4840, %v4888
        %v4905 = vmul.f32 %v4889, %v4889
        %v4906 = vmul.f32 %v4890, %v4890
        %v4907 = vmul.f32 %v4891, %v4891
        %v4908 = vmul.f32 %v4892, %v4892
        %v4909 = vmul.f32 %v4893, %v4893
        %v4910 = vmul.f32 %v4894, %v4894
        %v4911 = vmul.f32 %v4895, %v4895
        %v4912 = vmul.f32 %v4896, %v4896
        %v4913 = vmul.f32 %v4897, %v4897
        %v4914 = vmul.f32 %v4898, %v4898
        %v4915 = vmul.f32 %v4899, %v4899
        %v4916 = vmul.f32 %v4900, %v4900
        %v4917 = vmul.f32 %v4901, %v4901
        %v4918 = vmul.f32 %v4902, %v4902
        %v4919 = vmul.f32 %v4903, %v4903
        %v4920 = vmul.f32 %v4904, %v4904
        %4921 = vadd.xlane.f32.xlu0 %v4905
        %v4922 = vpop.xlane.xlu0 %4921
        %4923 = vadd.xlane.f32.xlu0 %v4906
        %v4924 = vpop.xlane.xlu0 %4923
        %4925 = vadd.xlane.f32.xlu0 %v4907
        %v4926 = vpop.xlane.xlu0 %4925
        %4927 = vadd.xlane.f32.xlu0 %v4908
        %v4928 = vpop.xlane.xlu0 %4927
        %4929 = vadd.xlane.f32.xlu0 %v4909
        %v4930 = vpop.xlane.xlu0 %4929
        %4931 = vadd.xlane.f32.xlu0 %v4910
        %v4932 = vpop.xlane.xlu0 %4931
        %4933 = vadd.xlane.f32.xlu0 %v4911
        %v4934 = vpop.xlane.xlu0 %4933
        %4935 = vadd.xlane.f32.xlu0 %v4912
        %v4936 = vpop.xlane.xlu0 %4935
        %4937 = vadd.xlane.f32.xlu0 %v4913
        %v4938 = vpop.xlane.xlu0 %4937
        %4939 = vadd.xlane.f32.xlu0 %v4914
        %v4940 = vpop.xlane.xlu0 %4939
        %4941 = vadd.xlane.f32.xlu0 %v4915
        %v4942 = vpop.xlane.xlu0 %4941
        %4943 = vadd.xlane.f32.xlu0 %v4916
        %v4944 = vpop.xlane.xlu0 %4943
        %4945 = vadd.xlane.f32.xlu0 %v4917
        %v4946 = vpop.xlane.xlu0 %4945
        %4947 = vadd.xlane.f32.xlu0 %v4918
        %v4948 = vpop.xlane.xlu0 %4947
        %4949 = vadd.xlane.f32.xlu0 %v4919
        %v4950 = vpop.xlane.xlu0 %4949
        %4951 = vadd.xlane.f32.xlu0 %v4920
        %v4952 = vpop.xlane.xlu0 %4951
        %v4953 = vmul.f32 %v4922, %v3679
        %v4954 = vmul.f32 %v4924, %v3679
        %v4955 = vmul.f32 %v4926, %v3679
        %v4956 = vmul.f32 %v4928, %v3679
        %v4957 = vmul.f32 %v4930, %v3679
        %v4958 = vmul.f32 %v4932, %v3679
        %v4959 = vmul.f32 %v4934, %v3679
        %v4960 = vmul.f32 %v4936, %v3679
        %v4961 = vmul.f32 %v4938, %v3679
        %v4962 = vmul.f32 %v4940, %v3679
        %v4963 = vmul.f32 %v4942, %v3679
        %v4964 = vmul.f32 %v4944, %v3679
        %v4965 = vmul.f32 %v4946, %v3679
        %v4966 = vmul.f32 %v4948, %v3679
        %v4967 = vmul.f32 %v4950, %v3679
        %v4968 = vmul.f32 %v4952, %v3679
        %v4969 = vadd.f32 %v4953, 1e-05
        %v4970 = vadd.f32 %v4954, 1e-05
        %v4971 = vadd.f32 %v4955, 1e-05
        %v4972 = vadd.f32 %v4956, 1e-05
        %v4973 = vadd.f32 %v4957, 1e-05
        %v4974 = vadd.f32 %v4958, 1e-05
        %v4975 = vadd.f32 %v4959, 1e-05
        %v4976 = vadd.f32 %v4960, 1e-05
        %v4977 = vadd.f32 %v4961, 1e-05
        %v4978 = vadd.f32 %v4962, 1e-05
        %v4979 = vadd.f32 %v4963, 1e-05
        %v4980 = vadd.f32 %v4964, 1e-05
        %v4981 = vadd.f32 %v4965, 1e-05
        %v4982 = vadd.f32 %v4966, 1e-05
        %v4983 = vadd.f32 %v4967, 1e-05
        %v4984 = vadd.f32 %v4968, 1e-05
        %v4985 = vrsqrt.pop %v4969
        %v4986 = vrsqrt.pop %v4970
        %v4987 = vrsqrt.pop %v4971
        %v4988 = vrsqrt.pop %v4972
        %v4989 = vrsqrt.pop %v4973
        %v4990 = vrsqrt.pop %v4974
        %v4991 = vrsqrt.pop %v4975
        %v4992 = vrsqrt.pop %v4976
        %v4993 = vrsqrt.pop %v4977
        %v4994 = vrsqrt.pop %v4978
        %v4995 = vrsqrt.pop %v4979
        %v4996 = vrsqrt.pop %v4980
        %v4997 = vrsqrt.pop %v4981
        %v4998 = vrsqrt.pop %v4982
        %v4999 = vrsqrt.pop %v4983
        %v5000 = vrsqrt.pop %v4984
        %v5001 = vmul.f32 %v4889, %v4985
        %v5002 = vmul.f32 %v4890, %v4986
        %v5003 = vmul.f32 %v4891, %v4987
        %v5004 = vmul.f32 %v4892, %v4988
        %v5005 = vmul.f32 %v4893, %v4989
        %v5006 = vmul.f32 %v4894, %v4990
        %v5007 = vmul.f32 %v4895, %v4991
        %v5008 = vmul.f32 %v4896, %v4992
        %v5009 = vmul.f32 %v4897, %v4993
        %v5010 = vmul.f32 %v4898, %v4994
        %v5011 = vmul.f32 %v4899, %v4995
        %v5012 = vmul.f32 %v4900, %v4996
        %v5013 = vmul.f32 %v4901, %v4997
        %v5014 = vmul.f32 %v4902, %v4998
        %v5015 = vmul.f32 %v4903, %v4999
        %v5016 = vmul.f32 %v4904, %v5000
        %5017 = vst [vmem:[%s412] sm:$0xff] %v5001
        %5018 = vst [vmem:[%s412 + $0x8] sm:$0xff] %v5002
        %5019 = vst [vmem:[%s412 + $0x10] sm:$0xff] %v5003
        %5020 = vst [vmem:[%s412 + $0x18] sm:$0xff] %v5004
        %5021 = vst [vmem:[%s412 + $0x20] sm:$0xff] %v5005
        %5022 = vst [vmem:[%s412 + $0x28] sm:$0xff] %v5006
        %5023 = vst [vmem:[%s412 + $0x30] sm:$0xff] %v5007
        %5024 = vst [vmem:[%s412 + $0x38] sm:$0xff] %v5008
        %5025 = vst [vmem:[%s412 + $0x40] sm:$0xff] %v5009
        %5026 = vst [vmem:[%s412 + $0x48] sm:$0xff] %v5010
        %5027 = vst [vmem:[%s412 + $0x50] sm:$0xff] %v5011
        %5028 = vst [vmem:[%s412 + $0x58] sm:$0xff] %v5012
        %5029 = vst [vmem:[%s412 + $0x60] sm:$0xff] %v5013
        %5030 = vst [vmem:[%s412 + $0x68] sm:$0xff] %v5014
        %5031 = vst [vmem:[%s412 + $0x70] sm:$0xff] %v5015
        %5032 = vst [vmem:[%s412 + $0x78] sm:$0xff] %v5016
        %s5033 = sand.u32 %s224, 1
        %s5034 = scalar_lea.sflag [#allocation5], %s5033
        %s5035 = sand.u32 %s224, 1
        %s5036 = smul.addr %s5035, 128
        %s5037 = scalar_lea.vmem [#allocation15], %s5036
        // Predicated region
        $region85: #{tpu_custom_call.1} parent=55 // pred_check
          %p5038 = pneg %p234
        $region86: #{tpu_custom_call.1} parent=55 // pred_check_branch
          %5040 = sbr.rel (%p5038) target = $region88
        $region87: #{tpu_custom_call.1} parent=55 // pred_region
          %s5041 = smul.u32 16, %s27
          %s5043 = ssub.s32 2048, 2048
          %5044 = vsyncadd %s5034, %s5043
          %s5045 = smul.addr %s5041, 128
          %s5046 = scalar_lea.hbm %s9, %s5045
          %s5047 = sshll.u32 %s5037, 4
          %s5048 = int_to_ptr.vmem [resolvable:$true] %s5047
          %5053 = dma.vmem_to_hbm [thread:$0]  %s5048, 2048, %s5046, %s5034, 128, 128, 8
        $region88: #{tpu_custom_call.1} parent=55 // pred_fallthru
          _
      $region56: #{tpu_custom_call.1} parent=5 // pred_fallthru
        _
      %p5054 = scmp.le.s32.totalorder 2, %s22
      // Predicated region
      $region89: #{tpu_custom_call.1} parent=5 // pred_check
        %p5055 = pneg %p5054
      $region90: #{tpu_custom_call.1} parent=5 // pred_check_branch
        %5057 = sbr.rel (%p5055) target = $region92
      $region91: #{tpu_custom_call.1} parent=5 // pred_region
        %s5058 = ssub.s32 %s22, 2
        // Predicated region
        $region93: #{tpu_custom_call.1} parent=91 // pred_check
          %p5059 = pneg %p240
        $region94: #{tpu_custom_call.1} parent=91 // pred_check_branch
          %5061 = sbr.rel (%p5059) target = $region96
        $region95: #{tpu_custom_call.1} parent=91 // pred_region
          %s5062 = sand.u32 %s225, 1
          %s5063 = scalar_lea.sflag [#allocation5], %s5062
          %s5064 = sand.u32 %s225, 1
          %s5065 = smul.addr %s5064, 128
          %s5066 = scalar_lea.vmem [#allocation15], %s5065
          %5067 = dma.done %s5063, 2048
        $region96: #{tpu_custom_call.1} parent=91 // pred_fallthru
          _
      $region92: #{tpu_custom_call.1} parent=5 // pred_fallthru
        _
    $region6: #{tpu_custom_call.1} parent=1 // loop_footer
      %s26 = sadd.s32 1, %s22
    $region7: #{tpu_custom_call.1} parent=1 // loop_footer_branch
      %21 = sbr.rel target = $region3
    $region8: #{tpu_custom_call.1} parent=1 // loop_exit
      _
    %5068 = vsyncpa [#allocation4], 1
    %s5069 = scalar_lea.sflag [#allocation4], 1
    %5070 = vsyncpa %s5069, 1
    %5071 = vsyncpa [#allocation7], 1
    %5072 = vsyncpa [#allocation10], 1
    %5073 = vsyncpa [#allocation13], 1
    %5074 = vsyncpa [#allocation5], 1
    %s5075 = scalar_lea.sflag [#allocation5], 1
    %5076 = vsyncpa %s5075, 1

// kernel: tpu_custom_call.1
$region0: #{tpu_custom_call.1}
  #allocation0 [shape = 'u32[]', space=smem, size = 0x4, offset = 0x4, fixed_abs, tag = 'smem constant byte address 0x4 - core index']
  #allocation1 [shape = 'u32[144,128]{1,0:T(1,128)}', space=vmem, size = 0x12000, scoped, tag = 'internal scratch']
  #allocation2 [shape = 'bf16[128,128]{1,0:T(16,128)(2,1)}', space=vmem, size = 0x8000, scoped, tag = 'scratch operand']
  %s0 = inlined_call_operand.hbm [shape: f32[256,128], index: 0, kind: input, shape index: {}]
  %s1 = inlined_call_operand.hbm [shape: bf16[256,128], index: 1, kind: input, shape index: {}]
  %s2 = inlined_call_operand.hbm [shape: bf16[256,128], index: 2, kind: input, shape index: {}]
  %s3 = inlined_call_operand.hbm [shape: bf16[128,128], index: 3, kind: input, shape index: {}]
  %s4 = inlined_call_operand.hbm [shape: bf16[128,128], index: 4, kind: input, shape index: {}]
  %s5 = inlined_call_operand.hbm [shape: bf16[128,512], index: 5, kind: input, shape index: {}]
  %s6 = inlined_call_operand.vmem [shape: f32[1,512], index: 6, kind: input, shape index: {}]
  %s7 = inlined_call_operand.hbm [shape: bf16[512,128], index: 7, kind: input, shape index: {}]
  %s8 = inlined_call_operand.vmem [shape: f32[1,128], index: 8, kind: input, shape index: {}]
  %s9 = inlined_call_operand.hbm [shape: f32[256,128], index: 9, kind: output, shape index: {}]
  %s10 = sld [smem:[#allocation0]]
  $region97: #{tpu_custom_call.1} parent=0
    _
  %s12 = ssub.s32 1, %s10
  %s13 = scalar_select 0, %s12, %s10
  $region1: #{tpu_custom_call.1} parent=0
    #allocation3 [shape = 'u8[131072]{0}', space=vmem, size = 0x20000, scoped, tag = 'input window, operand 0, single buffered']
    #allocation4 [shape = 's32[2]{0}', space=sflag, size = 0x8, scoped, tag = 'scoped memory for tpu_custom_call.1']
    #allocation5 [shape = 's32[2]{0}', space=sflag, size = 0x8, scoped, tag = 'scoped memory for tpu_custom_call.1']
    #allocation6 [shape = 'u8[65536]{0}', space=vmem, size = 0x10000, scoped, tag = 'input window, operand 1, single buffered']
    #allocation7 [shape = 's32[1]{0}', space=sflag, size = 0x4, scoped, tag = 'scoped memory for tpu_custom_call.1']
    #allocation8 [shape = 'u8[65536]{0}', space=vmem, size = 0x10000, scoped, tag = 'input window, operand 2, single buffered']
    #allocation9 [shape = 'u8[32768]{0}', space=vmem, size = 0x8000, scoped, tag = 'input window, operand 3, single buffered']
    #allocation10 [shape = 's32[1]{0}', space=sflag, size = 0x4, scoped, tag = 'scoped memory for tpu_custom_call.1']
    #allocation11 [shape = 'u8[32768]{0}', space=vmem, size = 0x8000, scoped, tag = 'input window, operand 4, single buffered']
    #allocation12 [shape = 'u8[131072]{0}', space=vmem, size = 0x20000, scoped, tag = 'input window, operand 5, single buffered']
    #allocation13 [shape = 's32[1]{0}', space=sflag, size = 0x4, scoped, tag = 'scoped memory for tpu_custom_call.1']
    #allocation14 [shape = 'u8[131072]{0}', space=vmem, size = 0x20000, scoped, tag = 'input window, operand 7, single buffered']
    #allocation15 [shape = 'u8[131072]{0}', space=vmem, size = 0x20000, scoped, tag = 'output window, operand 0']
    %14 = vsyncpa [#allocation4], 0
    %15 = vsyncpa [#allocation7], 0
    %16 = vsyncpa [#allocation10], 0
    %17 = vsyncpa [#allocation13], 0
    %18 = vsyncpa [#allocation5], 0
    %s19 = scalar_lea.sflag [#allocation5], 1
    %20 = vsyncpa %s19, 0
    loop: start=0, step=1, limit=4
    $region2: #{tpu_custom_call.1} parent=1 // loop_pre_header
      _
    $region3: #{tpu_custom_call.1} parent=1 // loop_header
      %s22 = sphi 0, %s26
      %p23 = scmp.ge.s32.totalorder %s22, 4
      %s30 = sphi 0, %s30
      %s32 = sphi 0, %s30
      %s33 = sphi 0, %s32
      %s47 = sphi 0, %s33
      %s51 = sphi 0, %s51
      %s53 = sphi 0, %s51
      %s54 = sphi 0, %s53
      %s68 = sphi 0, %s54
      %s72 = sphi 0, %s72
      %s74 = sphi 0, %s72
      %s75 = sphi 0, %s74
      %s89 = sphi 0, %s75
      %s93 = sphi 0, %s93
      %s95 = sphi 0, %s93
      %s96 = sphi 0, %s95
      %s110 = sphi 0, %s96
      %s114 = sphi 0, %s114
      %s116 = sphi 0, %s114
      %s117 = sphi 0, %s116
      %s131 = sphi 0, %s117
      %s135 = sphi 0, %s135
      %s137 = sphi 0, %s135
      %s138 = sphi 0, %s137
      %s152 = sphi 0, %s138
      %s156 = sphi 0, %s156
      %s158 = sphi 0, %s156
      %s159 = sphi 0, %s158
      %s173 = sphi 0, %s159
      %s177 = sphi 0, %s177
      %s179 = sphi 0, %s177
      %s180 = sphi 0, %s179
      %s194 = sphi 0, %s180
      %s198 = sphi 0, %s198
      %s200 = sphi 0, %s198
      %s201 = sphi 0, %s200
      %s215 = sphi 0, %s201
      %s221 = sphi 0, %s223
      %s224 = sphi 0, %s221
      %s225 = sphi 0, %s224
      %s241 = sphi 0, %s225
    $region4: #{tpu_custom_call.1} parent=1 // loop_header_branch
      %25 = sbr.rel (%p23) target = $region8
    $region5: #{tpu_custom_call.1} parent=1 // loop_body
      %s27 = ssub.s32 %s22, 1
      %s28 = ssub.s32 %s22, 2
      %s29 = sadd.s32 %s22, 1
      %s31 = sadd.s32 %s30, 1
      %p34 = scmp.eq.s32.totalorder %s22, 1
      %p35 = scmp.ne.s32.totalorder %s30, %s32
      %p36 = scmp.eq.s32.totalorder %s22, 0
      %p37 = por %p35, %p36
      %p38 = scmp.ne.s32.totalorder %s30, %s32
      %p39 = scmp.eq.s32.totalorder %s27, 1
      %p40 = por %p38, %p39
      %p41 = scmp.ne.s32.totalorder %s32, %s33
      %p42 = scmp.eq.s32.totalorder %s27, 0
      %p43 = por %p41, %p42
      %p44 = scmp.ne.s32.totalorder %s32, %s33
      %p45 = scmp.eq.s32.totalorder %s28, 1
      %p46 = por %p44, %p45
      %p48 = scmp.ne.s32.totalorder %s33, %s47
      %p49 = scmp.eq.s32.totalorder %s28, 0
      %p50 = por %p48, %p49
      %s52 = sadd.s32 %s51, 1
      %p55 = scmp.eq.s32.totalorder %s22, 1
      %p56 = scmp.ne.s32.totalorder %s51, %s53
      %p57 = scmp.eq.s32.totalorder %s22, 0
      %p58 = por %p56, %p57
      %p59 = scmp.ne.s32.totalorder %s51, %s53
      %p60 = scmp.eq.s32.totalorder %s27, 1
      %p61 = por %p59, %p60
      %p62 = scmp.ne.s32.totalorder %s53, %s54
      %p63 = scmp.eq.s32.totalorder %s27, 0
      %p64 = por %p62, %p63
      %p65 = scmp.ne.s32.totalorder %s53, %s54
      %p66 = scmp.eq.s32.totalorder %s28, 1
      %p67 = por %p65, %p66
      %p69 = scmp.ne.s32.totalorder %s54, %s68
      %p70 = scmp.eq.s32.totalorder %s28, 0
      %p71 = por %p69, %p70
      %s73 = sadd.s32 %s72, 1
      %p76 = scmp.eq.s32.totalorder %s22, 1
      %p77 = scmp.ne.s32.totalorder %s72, %s74
      %p78 = scmp.eq.s32.totalorder %s22, 0
      %p79 = por %p77, %p78
      %p80 = scmp.ne.s32.totalorder %s72, %s74
      %p81 = scmp.eq.s32.totalorder %s27, 1
      %p82 = por %p80, %p81
      %p83 = scmp.ne.s32.totalorder %s74, %s75
      %p84 = scmp.eq.s32.totalorder %s27, 0
      %p85 = por %p83, %p84
      %p86 = scmp.ne.s32.totalorder %s74, %s75
      %p87 = scmp.eq.s32.totalorder %s28, 1
      %p88 = por %p86, %p87
      %p90 = scmp.ne.s32.totalorder %s75, %s89
      %p91 = scmp.eq.s32.totalorder %s28, 0
      %p92 = por %p90, %p91
      %s94 = sadd.s32 %s93, 1
      %p97 = scmp.eq.s32.totalorder %s22, 1
      %p98 = scmp.ne.s32.totalorder %s93, %s95
      %p99 = scmp.eq.s32.totalorder %s22, 0
      %p100 = por %p98, %p99
      %p101 = scmp.ne.s32.totalorder %s93, %s95
      %p102 = scmp.eq.s32.totalorder %s27, 1
      %p103 = por %p101, %p102
      %p104 = scmp.ne.s32.totalorder %s95, %s96
      %p105 = scmp.eq.s32.totalorder %s27, 0
      %p106 = por %p104, %p105
      %p107 = scmp.ne.s32.totalorder %s95, %s96
      %p108 = scmp.eq.s32.totalorder %s28, 1
      %p109 = por %p107, %p108
      %p111 = scmp.ne.s32.totalorder %s96, %s110
      %p112 = scmp.eq.s32.totalorder %s28, 0
      %p113 = por %p111, %p112
      %s115 = sadd.s32 %s114, 1
      %p118 = scmp.eq.s32.totalorder %s22, 1
      %p119 = scmp.ne.s32.totalorder %s114, %s116
      %p120 = scmp.eq.s32.totalorder %s22, 0
      %p121 = por %p119, %p120
      %p122 = scmp.ne.s32.totalorder %s114, %s116
      %p123 = scmp.eq.s32.totalorder %s27, 1
      %p124 = por %p122, %p123
      %p125 = scmp.ne.s32.totalorder %s116, %s117
      %p126 = scmp.eq.s32.totalorder %s27, 0
      %p127 = por %p125, %p126
      %p128 = scmp.ne.s32.totalorder %s116, %s117
      %p129 = scmp.eq.s32.totalorder %s28, 1
      %p130 = por %p128, %p129
      %p132 = scmp.ne.s32.totalorder %s117, %s131
      %p133 = scmp.eq.s32.totalorder %s28, 0
      %p134 = por %p132, %p133
      %s136 = sadd.s32 %s135, 1
      %p139 = scmp.eq.s32.totalorder %s22, 1
      %p140 = scmp.ne.s32.totalorder %s135, %s137
      %p141 = scmp.eq.s32.totalorder %s22, 0
      %p142 = por %p140, %p141
      %p143 = scmp.ne.s32.totalorder %s135, %s137
      %p144 = scmp.eq.s32.totalorder %s27, 1
      %p145 = por %p143, %p144
      %p146 = scmp.ne.s32.totalorder %s137, %s138
      %p147 = scmp.eq.s32.totalorder %s27, 0
      %p148 = por %p146, %p147
      %p149 = scmp.ne.s32.totalorder %s137, %s138
      %p150 = scmp.eq.s32.totalorder %s28, 1
      %p151 = por %p149, %p150
      %p153 = scmp.ne.s32.totalorder %s138, %s152
      %p154 = scmp.eq.s32.totalorder %s28, 0
      %p155 = por %p153, %p154
      %s157 = sadd.s32 %s156, 1
      %p160 = scmp.eq.s32.totalorder %s22, 1
      %p161 = scmp.ne.s32.totalorder %s156, %s158
      %p162 = scmp.eq.s32.totalorder %s22, 0
      %p163 = por %p161, %p162
      %p164 = scmp.ne.s32.totalorder %s156, %s158
      %p165 = scmp.eq.s32.totalorder %s27, 1
      %p166 = por %p164, %p165
      %p167 = scmp.ne.s32.totalorder %s158, %s159
      %p168 = scmp.eq.s32.totalorder %s27, 0
      %p169 = por %p167, %p168
      %p170 = scmp.ne.s32.totalorder %s158, %s159
      %p171 = scmp.eq.s32.totalorder %s28, 1
      %p172 = por %p170, %p171
      %p174 = scmp.ne.s32.totalorder %s159, %s173
      %p175 = scmp.eq.s32.totalorder %s28, 0
      %p176 = por %p174, %p175
      %s178 = sadd.s32 %s177, 1
      %p181 = scmp.eq.s32.totalorder %s22, 1
      %p182 = scmp.ne.s32.totalorder %s177, %s179
      %p183 = scmp.eq.s32.totalorder %s22, 0
      %p184 = por %p182, %p183
      %p185 = scmp.ne.s32.totalorder %s177, %s179
      %p186 = scmp.eq.s32.totalorder %s27, 1
      %p187 = por %p185, %p186
      %p188 = scmp.ne.s32.totalorder %s179, %s180
      %p189 = scmp.eq.s32.totalorder %s27, 0
      %p190 = por %p188, %p189
      %p191 = scmp.ne.s32.totalorder %s179, %s180
      %p192 = scmp.eq.s32.totalorder %s28, 1
      %p193 = por %p191, %p192
      %p195 = scmp.ne.s32.totalorder %s180, %s194
      %p196 = scmp.eq.s32.totalorder %s28, 0
      %p197 = por %p195, %p196
      %s199 = sadd.s32 %s198, 1
      %p202 = scmp.eq.s32.totalorder %s22, 1
      %p203 = scmp.ne.s32.totalorder %s198, %s200
      %p204 = scmp.eq.s32.totalorder %s22, 0
      %p205 = por %p203, %p204
      %p206 = scmp.ne.s32.totalorder %s198, %s200
      %p207 = scmp.eq.s32.totalorder %s27, 1
      %p208 = por %p206, %p207
      %p209 = scmp.ne.s32.totalorder %s200, %s201
      %p210 = scmp.eq.s32.totalorder %s27, 0
      %p211 = por %p209, %p210
      %p212 = scmp.ne.s32.totalorder %s200, %s201
      %p213 = scmp.eq.s32.totalorder %s28, 1
      %p214 = por %p212, %p213
      %p216 = scmp.ne.s32.totalorder %s201, %s215
      %p217 = scmp.eq.s32.totalorder %s28, 0
      %p218 = por %p216, %p217
      %s219 = ssub.s32 %s22, %s29
      %p220 = scmp.eq.s32.totalorder %s219, 0
      %s222 = sadd.s32 %s221, 1
      %s223 = scalar_select %p220, %s221, %s222
      %p226 = pneg %p220
      %p227 = scmp.eq.s32.totalorder %s22, 1
      %p228 = por %p226, %p227
      %p229 = scmp.ne.s32.totalorder %s221, %s224
      %p230 = scmp.eq.s32.totalorder %s22, 0
      %p231 = por %p229, %p230
      %p232 = scmp.ne.s32.totalorder %s221, %s224
      %p233 = scmp.eq.s32.totalorder %s27, 1
      %p234 = por %p232, %p233
      %p235 = scmp.ne.s32.totalorder %s224, %s225
      %p236 = scmp.eq.s32.totalorder %s27, 0
      %p237 = por %p235, %p236
      %p238 = scmp.ne.s32.totalorder %s224, %s225
      %p239 = scmp.eq.s32.totalorder %s28, 1
      %p240 = por %p238, %p239
      %p242 = scmp.ne.s32.totalorder %s225, %s241
      %p243 = scmp.eq.s32.totalorder %s28, 0
      %p244 = por %p242, %p243
      %p245 = scmp.le.s32.totalorder 1, %s22
      %p246 = scmp.lt.s32.totalorder %s22, 3
      %p247 = pnand %p245, %p246
      %p248 = pneg %p247
      // Predicated region
      $region9: #{tpu_custom_call.1} parent=5 // pred_check
        _
      $region10: #{tpu_custom_call.1} parent=5 // pred_check_branch
        %250 = sbr.rel (%p247) target = $region12
      $region11: #{tpu_custom_call.1} parent=5 // pred_region
        %s251 = ssub.s32 %s22, 1
        // Predicated region
        $region13: #{tpu_custom_call.1} parent=11 // pred_check
          %p252 = pneg %p43
        $region14: #{tpu_custom_call.1} parent=11 // pred_check_branch
          %254 = sbr.rel (%p252) target = $region16
        $region15: #{tpu_custom_call.1} parent=11 // pred_region
          %s256 = ssub.s32 4096, 4096
          %257 = vsyncadd [#allocation4], %s256
          %s258 = sshll.u32 [#allocation3], 4
          %s259 = int_to_ptr.vmem [resolvable:$true] %s258
          %264 = dma.hbm_to_vmem [thread:$0]  %s0, 4096, %s259, [#allocation4], 128, 128, 8
        $region16: #{tpu_custom_call.1} parent=11 // pred_fallthru
          _
        // Predicated region
        $region17: #{tpu_custom_call.1} parent=11 // pred_check
          %p265 = pneg %p64
        $region18: #{tpu_custom_call.1} parent=11 // pred_check_branch
          %267 = sbr.rel (%p265) target = $region20
        $region19: #{tpu_custom_call.1} parent=11 // pred_region
          %s269 = ssub.s32 2048, 2048
          %270 = vsyncadd [#allocation7], %s269
          %s271 = sshll.u32 [#allocation6], 4
          %s272 = int_to_ptr.vmem [resolvable:$true] %s271
          %277 = dma.hbm_to_vmem [thread:$0]  %s1, 2048, %s272, [#allocation7], 64, 64, 4
        $region20: #{tpu_custom_call.1} parent=11 // pred_fallthru
          _
        // Predicated region
        $region21: #{tpu_custom_call.1} parent=11 // pred_check
          %p278 = pneg %p85
        $region22: #{tpu_custom_call.1} parent=11 // pred_check_branch
          %280 = sbr.rel (%p278) target = $region24
        $region23: #{tpu_custom_call.1} parent=11 // pred_region
          %s282 = ssub.s32 2048, 2048
          %283 = vsyncadd [#allocation7], %s282
          %s284 = sshll.u32 [#allocation8], 4
          %s285 = int_to_ptr.vmem [resolvable:$true] %s284
          %290 = dma.hbm_to_vmem [thread:$0]  %s2, 2048, %s285, [#allocation7], 64, 64, 4
        $region24: #{tpu_custom_call.1} parent=11 // pred_fallthru
          _
        // Predicated region
        $region25: #{tpu_custom_call.1} parent=11 // pred_check
          %p291 = pneg %p106
        $region26: #{tpu_custom_call.1} parent=11 // pred_check_branch
          %293 = sbr.rel (%p291) target = $region28
        $region27: #{tpu_custom_call.1} parent=11 // pred_region
          %s295 = ssub.s32 1024, 1024
          %296 = vsyncadd [#allocation10], %s295
          %s297 = sshll.u32 [#allocation9], 4
          %s298 = int_to_ptr.vmem [resolvable:$true] %s297
          %303 = dma.hbm_to_vmem [thread:$0]  %s3, 1024, %s298, [#allocation10], 64, 64, 4
        $region28: #{tpu_custom_call.1} parent=11 // pred_fallthru
          _
        // Predicated region
        $region29: #{tpu_custom_call.1} parent=11 // pred_check
          %p304 = pneg %p127
        $region30: #{tpu_custom_call.1} parent=11 // pred_check_branch
          %306 = sbr.rel (%p304) target = $region32
        $region31: #{tpu_custom_call.1} parent=11 // pred_region
          %s308 = ssub.s32 1024, 1024
          %309 = vsyncadd [#allocation10], %s308
          %s310 = sshll.u32 [#allocation11], 4
          %s311 = int_to_ptr.vmem [resolvable:$true] %s310
          %316 = dma.hbm_to_vmem [thread:$0]  %s4, 1024, %s311, [#allocation10], 64, 64, 4
        $region32: #{tpu_custom_call.1} parent=11 // pred_fallthru
          _
        // Predicated region
        $region33: #{tpu_custom_call.1} parent=11 // pred_check
          %p317 = pneg %p148
        $region34: #{tpu_custom_call.1} parent=11 // pred_check_branch
          %319 = sbr.rel (%p317) target = $region36
        $region35: #{tpu_custom_call.1} parent=11 // pred_region
          %s321 = ssub.s32 4096, 4096
          %322 = vsyncadd [#allocation13], %s321
          %s323 = sshll.u32 [#allocation12], 4
          %s324 = int_to_ptr.vmem [resolvable:$true] %s323
          %329 = dma.hbm_to_vmem [thread:$0]  %s5, 4096, %s324, [#allocation13], 256, 256, 16
        $region36: #{tpu_custom_call.1} parent=11 // pred_fallthru
          _
        // Predicated region
        $region37: #{tpu_custom_call.1} parent=11 // pred_check
          %p330 = pneg %p169
        $region38: #{tpu_custom_call.1} parent=11 // pred_check_branch
          %332 = sbr.rel (%p330) target = $region40
        $region39: #{tpu_custom_call.1} parent=11 // pred_region
          _
        $region40: #{tpu_custom_call.1} parent=11 // pred_fallthru
          _
        // Predicated region
        $region41: #{tpu_custom_call.1} parent=11 // pred_check
          %p333 = pneg %p190
        $region42: #{tpu_custom_call.1} parent=11 // pred_check_branch
          %335 = sbr.rel (%p333) target = $region44
        $region43: #{tpu_custom_call.1} parent=11 // pred_region
          %s337 = ssub.s32 4096, 4096
          %338 = vsyncadd [#allocation13], %s337
          %s339 = sshll.u32 [#allocation14], 4
          %s340 = int_to_ptr.vmem [resolvable:$true] %s339
          %345 = dma.hbm_to_vmem [thread:$0]  %s7, 4096, %s340, [#allocation13], 64, 64, 4
        $region44: #{tpu_custom_call.1} parent=11 // pred_fallthru
          _
        // Predicated region
        $region45: #{tpu_custom_call.1} parent=11 // pred_check
          %p346 = pneg %p211
        $region46: #{tpu_custom_call.1} parent=11 // pred_check_branch
          %348 = sbr.rel (%p346) target = $region48
        $region47: #{tpu_custom_call.1} parent=11 // pred_region
          _
        $region48: #{tpu_custom_call.1} parent=11 // pred_fallthru
          _
      $region12: #{tpu_custom_call.1} parent=5 // pred_fallthru
        _
      %p349 = scmp.lt.s32.totalorder %s22, 2
      // Predicated region
      $region49: #{tpu_custom_call.1} parent=5 // pred_check
        %p350 = pneg %p349
      $region50: #{tpu_custom_call.1} parent=5 // pred_check_branch
        %352 = sbr.rel (%p350) target = $region52
      $region51: #{tpu_custom_call.1} parent=5 // pred_region
        _
      $region52: #{tpu_custom_call.1} parent=5 // pred_fallthru
        _
      %p353 = scmp.le.s32.totalorder 1, %s22
      %p354 = scmp.lt.s32.totalorder %s22, 3
      %p355 = pnand %p353, %p354
      %p356 = pneg %p355
      // Predicated region
      $region53: #{tpu_custom_call.1} parent=5 // pred_check
        _
      $region54: #{tpu_custom_call.1} parent=5 // pred_check_branch
        %358 = sbr.rel (%p355) target = $region56
      $region55: #{tpu_custom_call.1} parent=5 // pred_region
        %s359 = ssub.s32 %s22, 1
        // Predicated region
        $region57: #{tpu_custom_call.1} parent=55 // pred_check
          %p360 = pneg %p43
        $region58: #{tpu_custom_call.1} parent=55 // pred_check_branch
          %362 = sbr.rel (%p360) target = $region60
        $region59: #{tpu_custom_call.1} parent=55 // pred_region
          %363 = dma.done [#allocation4], 4096
        $region60: #{tpu_custom_call.1} parent=55 // pred_fallthru
          _
        // Predicated region
        $region61: #{tpu_custom_call.1} parent=55 // pred_check
          %p364 = pneg %p64
        $region62: #{tpu_custom_call.1} parent=55 // pred_check_branch
          %366 = sbr.rel (%p364) target = $region64
        $region63: #{tpu_custom_call.1} parent=55 // pred_region
          %367 = dma.done [#allocation7], 2048
        $region64: #{tpu_custom_call.1} parent=55 // pred_fallthru
          _
        // Predicated region
        $region65: #{tpu_custom_call.1} parent=55 // pred_check
          %p368 = pneg %p85
        $region66: #{tpu_custom_call.1} parent=55 // pred_check_branch
          %370 = sbr.rel (%p368) target = $region68
        $region67: #{tpu_custom_call.1} parent=55 // pred_region
          %371 = dma.done [#allocation7], 2048
        $region68: #{tpu_custom_call.1} parent=55 // pred_fallthru
          _
        // Predicated region
        $region69: #{tpu_custom_call.1} parent=55 // pred_check
          %p372 = pneg %p106
        $region70: #{tpu_custom_call.1} parent=55 // pred_check_branch
          %374 = sbr.rel (%p372) target = $region72
        $region71: #{tpu_custom_call.1} parent=55 // pred_region
          %375 = dma.done [#allocation10], 1024
        $region72: #{tpu_custom_call.1} parent=55 // pred_fallthru
          _
        // Predicated region
        $region73: #{tpu_custom_call.1} parent=55 // pred_check
          %p376 = pneg %p127
        $region74: #{tpu_custom_call.1} parent=55 // pred_check_branch
          %378 = sbr.rel (%p376) target = $region76
        $region75: #{tpu_custom_call.1} parent=55 // pred_region
          %379 = dma.done [#allocation10], 1024
        $region76: #{tpu_custom_call.1} parent=55 // pred_fallthru
          _
        // Predicated region
        $region77: #{tpu_custom_call.1} parent=55 // pred_check
          %p380 = pneg %p148
        $region78: #{tpu_custom_call.1} parent=55 // pred_check_branch
          %382 = sbr.rel (%p380) target = $region80
        $region79: #{tpu_custom_call.1} parent=55 // pred_region
          %383 = dma.done [#allocation13], 4096
        $region80: #{tpu_custom_call.1} parent=55 // pred_fallthru
          _
        // Predicated region
        $region81: #{tpu_custom_call.1} parent=55 // pred_check
          %p384 = pneg %p190
        $region82: #{tpu_custom_call.1} parent=55 // pred_check_branch
          %386 = sbr.rel (%p384) target = $region84
        $region83: #{tpu_custom_call.1} parent=55 // pred_region
          %387 = dma.done [#allocation13], 4096
        $region84: #{tpu_custom_call.1} parent=55 // pred_fallthru
          _
        %p388 = pneg %p43
        %p389 = pneg %p40
        %p390 = pneg %p64
        %p391 = pneg %p61
        %p392 = pneg %p85
        %p393 = pneg %p82
        %p394 = pneg %p106
        %p395 = pneg %p103
        %p396 = pneg %p127
        %p397 = pneg %p124
        %p398 = pneg %p148
        %p399 = pneg %p145
        %p400 = pneg %p169
        %p401 = pneg %p166
        %p402 = pneg %p190
        %p403 = pneg %p187
        %p404 = pneg %p211
        %p405 = pneg %p208
        %p406 = pneg %p237
        %p407 = pneg %p234
        %s408 = sand.u32 %s224, 1
        %s409 = scalar_lea.sflag [#allocation5], %s408
        %s410 = sand.u32 %s224, 1
        %s411 = smul.addr %s410, 128
        %s412 = scalar_lea.vmem [#allocation15], %s411
        %s413 = smul.u32 16, %s27
        %s415 = smul.u32 %s27, 128
        %s416 = scalar_lea.vmem [#allocation3], %s415
        %v417 = vld [vmem:[%s416] sm:$0xff]
        %v418 = vld [vmem:[%s416 + $0x8] sm:$0xff]
        %v419 = vld [vmem:[%s416 + $0x10] sm:$0xff]
        %v420 = vld [vmem:[%s416 + $0x18] sm:$0xff]
        %v421 = vld [vmem:[%s416 + $0x20] sm:$0xff]
        %v422 = vld [vmem:[%s416 + $0x28] sm:$0xff]
        %v423 = vld [vmem:[%s416 + $0x30] sm:$0xff]
        %v424 = vld [vmem:[%s416 + $0x38] sm:$0xff]
        %v425 = vld [vmem:[%s416 + $0x40] sm:$0xff]
        %v426 = vld [vmem:[%s416 + $0x48] sm:$0xff]
        %v427 = vld [vmem:[%s416 + $0x50] sm:$0xff]
        %v428 = vld [vmem:[%s416 + $0x58] sm:$0xff]
        %v429 = vld [vmem:[%s416 + $0x60] sm:$0xff]
        %v430 = vld [vmem:[%s416 + $0x68] sm:$0xff]
        %v431 = vld [vmem:[%s416 + $0x70] sm:$0xff]
        %v432 = vld [vmem:[%s416 + $0x78] sm:$0xff]
        %v433 = vpack.c.bf16 %v418, %v417
        %v434 = vpack.c.bf16 %v420, %v419
        %v435 = vpack.c.bf16 %v422, %v421
        %v436 = vpack.c.bf16 %v424, %v423
        %v437 = vpack.c.bf16 %v426, %v425
        %v438 = vpack.c.bf16 %v428, %v427
        %v439 = vpack.c.bf16 %v430, %v429
        %v440 = vpack.c.bf16 %v432, %v431
        %v441 = vld [vmem:[#allocation9] sm:$0xf]
        %v442 = vld [vmem:[#allocation9 + $0x4] sm:$0xf]
        %v443 = vld [vmem:[#allocation9 + $0x8] sm:$0xf]
        %v444 = vld [vmem:[#allocation9 + $0xc] sm:$0xf]
        %v445 = vld [vmem:[#allocation9 + $0x10] sm:$0xf]
        %v446 = vld [vmem:[#allocation9 + $0x14] sm:$0xf]
        %v447 = vld [vmem:[#allocation9 + $0x18] sm:$0xf]
        %v448 = vld [vmem:[#allocation9 + $0x1c] sm:$0xf]
        %v449 = vld [vmem:[#allocation9 + $0x20] sm:$0xf]
        %v450 = vld [vmem:[#allocation9 + $0x24] sm:$0xf]
        %v451 = vld [vmem:[#allocation9 + $0x28] sm:$0xf]
        %v452 = vld [vmem:[#allocation9 + $0x2c] sm:$0xf]
        %v453 = vld [vmem:[#allocation9 + $0x30] sm:$0xf]
        %v454 = vld [vmem:[#allocation9 + $0x34] sm:$0xf]
        %v455 = vld [vmem:[#allocation9 + $0x38] sm:$0xf]
        %v456 = vld [vmem:[#allocation9 + $0x3c] sm:$0xf]
        %v473 = vunpack.c.l.b16 %v441
        %v474 = vunpack.c.l.b16 %v442
        %v475 = vunpack.c.l.b16 %v443
        %v476 = vunpack.c.l.b16 %v444
        %v477 = vunpack.c.l.b16 %v445
        %v478 = vunpack.c.l.b16 %v446
        %v479 = vunpack.c.l.b16 %v447
        %v480 = vunpack.c.l.b16 %v448
        %v481 = vunpack.c.l.b16 %v449
        %v482 = vunpack.c.l.b16 %v450
        %v483 = vunpack.c.l.b16 %v451
        %v484 = vunpack.c.l.b16 %v452
        %v485 = vunpack.c.l.b16 %v453
        %v486 = vunpack.c.l.b16 %v454
        %v487 = vunpack.c.l.b16 %v455
        %v488 = vunpack.c.l.b16 %v456
        %v489 = vpack.c.b16 %v474, %v473
        %v490 = vpack.c.b16 %v476, %v475
        %v491 = vpack.c.b16 %v478, %v477
        %v492 = vpack.c.b16 %v480, %v479
        %v493 = vpack.c.b16 %v482, %v481
        %v494 = vpack.c.b16 %v484, %v483
        %v495 = vpack.c.b16 %v486, %v485
        %v496 = vpack.c.b16 %v488, %v487
        %505 = vmatprep.subr.bf16.mxu0 0
        %506 = vmatpush1.bf16.msra.mxu0 %v489
        %507 = vmatprep.subr.bf16.mxu0 0
        %508 = vmatpush1.bf16.msra.mxu0 %v490
        %509 = vmatprep.subr.bf16.mxu0 0
        %510 = vmatpush1.bf16.msra.mxu0 %v491
        %511 = vmatprep.subr.bf16.mxu0 0
        %512 = vmatpush1.bf16.msra.mxu0 %v492
        %513 = vmatprep.subr.bf16.mxu0 0
        %514 = vmatpush1.bf16.msra.mxu0 %v493
        %515 = vmatprep.subr.bf16.mxu0 0
        %516 = vmatpush1.bf16.msra.mxu0 %v494
        %517 = vmatprep.subr.bf16.mxu0 0
        %518 = vmatpush1.bf16.msra.mxu0 %v495
        %519 = vmatprep.subr.bf16.mxu0 0
        %520 = vmatpush1.bf16.msra.mxu0 %v496
        %521 = vmatprep.subr.bf16.mxu0 0
        %522 = vmatpush1.bf16.msra.mxu0 0
        %523 = vmatprep.subr.bf16.mxu0 0
        %524 = vmatpush1.bf16.msra.mxu0 0
        %525 = vmatprep.subr.bf16.mxu0 0
        %526 = vmatpush1.bf16.msra.mxu0 0
        %527 = vmatprep.subr.bf16.mxu0 0
        %528 = vmatpush1.bf16.msra.mxu0 0
        %529 = vmatprep.subr.bf16.mxu0 0
        %530 = vmatpush1.bf16.msra.mxu0 0
        %531 = vmatprep.subr.bf16.mxu0 0
        %532 = vmatpush1.bf16.msra.mxu0 0
        %533 = vmatprep.subr.bf16.mxu0 0
        %534 = vmatpush1.bf16.msra.mxu0 0
        %535 = vmatprep.subr.bf16.mxu0 0
        %536 = vmatpush1.bf16.msra.mxu0 0
        %537 = vmatprep.mubr.bf16.mxu0 0
        %538 = vmatmul.mubr.bf16.gmra.mrb[0].mxu0 %v433
        %v539 = vpop.f32.mrb[0].mxu0
        %v540 = vadd.f32 0.0, %v539
        %v541 = vpop.f32.mrb[0].mxu0
        %v542 = vpop.f32.mrb[0].mxu0
        %v543 = vadd.f32 0.0, %v542
        %v544 = vpop.f32.mrb[0].mxu0
        %545 = vmatprep.mubr.bf16.mxu0 0
        %546 = vmatmul.mubr.bf16.gmra.mrb[0].mxu0 %v434
        %v547 = vpop.f32.mrb[0].mxu0
        %v548 = vadd.f32 0.0, %v547
        %v549 = vpop.f32.mrb[0].mxu0
        %v550 = vpop.f32.mrb[0].mxu0
        %v551 = vadd.f32 0.0, %v550
        %v552 = vpop.f32.mrb[0].mxu0
        %553 = vmatprep.mubr.bf16.mxu0 0
        %554 = vmatmul.mubr.bf16.gmra.mrb[0].mxu0 %v435
        %v555 = vpop.f32.mrb[0].mxu0
        %v556 = vadd.f32 0.0, %v555
        %v557 = vpop.f32.mrb[0].mxu0
        %v558 = vpop.f32.mrb[0].mxu0
        %v559 = vadd.f32 0.0, %v558
        %v560 = vpop.f32.mrb[0].mxu0
        %561 = vmatprep.mubr.bf16.mxu0 0
        %562 = vmatmul.mubr.bf16.gmra.mrb[0].mxu0 %v436
        %v563 = vpop.f32.mrb[0].mxu0
        %v564 = vadd.f32 0.0, %v563
        %v565 = vpop.f32.mrb[0].mxu0
        %v566 = vpop.f32.mrb[0].mxu0
        %v567 = vadd.f32 0.0, %v566
        %v568 = vpop.f32.mrb[0].mxu0
        %569 = vmatprep.mubr.bf16.mxu0 0
        %570 = vmatmul.mubr.bf16.gmra.mrb[0].mxu0 %v437
        %v571 = vpop.f32.mrb[0].mxu0
        %v572 = vadd.f32 0.0, %v571
        %v573 = vpop.f32.mrb[0].mxu0
        %v574 = vpop.f32.mrb[0].mxu0
        %v575 = vadd.f32 0.0, %v574
        %v576 = vpop.f32.mrb[0].mxu0
        %577 = vmatprep.mubr.bf16.mxu0 0
        %578 = vmatmul.mubr.bf16.gmra.mrb[0].mxu0 %v438
        %v579 = vpop.f32.mrb[0].mxu0
        %v580 = vadd.f32 0.0, %v579
        %v581 = vpop.f32.mrb[0].mxu0
        %v582 = vpop.f32.mrb[0].mxu0
        %v583 = vadd.f32 0.0, %v582
        %v584 = vpop.f32.mrb[0].mxu0
        %585 = vmatprep.mubr.bf16.mxu0 0
        %586 = vmatmul.mubr.bf16.gmra.mrb[0].mxu0 %v439
        %v587 = vpop.f32.mrb[0].mxu0
        %v588 = vadd.f32 0.0, %v587
        %v589 = vpop.f32.mrb[0].mxu0
        %v590 = vpop.f32.mrb[0].mxu0
        %v591 = vadd.f32 0.0, %v590
        %v592 = vpop.f32.mrb[0].mxu0
        %593 = vmatprep.mubr.bf16.mxu0 0
        %594 = vmatmul.mubr.bf16.gmra.mrb[0].mxu0 %v440
        %v595 = vpop.f32.mrb[0].mxu0
        %v596 = vadd.f32 0.0, %v595
        %v597 = vpop.f32.mrb[0].mxu0
        %v598 = vpop.f32.mrb[0].mxu0
        %v599 = vadd.f32 0.0, %v598
        %v600 = vpop.f32.mrb[0].mxu0
        %601 = vdwg.mxu0
        %v602 = vpack.c.bf16 %v543, %v540
        %v603 = vpack.c.bf16 %v551, %v548
        %v604 = vpack.c.bf16 %v559, %v556
        %v605 = vpack.c.bf16 %v567, %v564
        %v606 = vpack.c.bf16 %v575, %v572
        %v607 = vpack.c.bf16 %v583, %v580
        %v608 = vpack.c.bf16 %v591, %v588
        %v609 = vpack.c.bf16 %v599, %v596
        %v610 = vld [vmem:[#allocation6] sm:$0xf]
        %v611 = vld [vmem:[#allocation6 + $0x4] sm:$0xf]
        %v612 = vld [vmem:[#allocation6 + $0x8] sm:$0xf]
        %v613 = vld [vmem:[#allocation6 + $0xc] sm:$0xf]
        %v614 = vld [vmem:[#allocation6 + $0x10] sm:$0xf]
        %v615 = vld [vmem:[#allocation6 + $0x14] sm:$0xf]
        %v616 = vld [vmem:[#allocation6 + $0x18] sm:$0xf]
        %v617 = vld [vmem:[#allocation6 + $0x1c] sm:$0xf]
        %v618 = vld [vmem:[#allocation6 + $0x20] sm:$0xf]
        %v619 = vld [vmem:[#allocation6 + $0x24] sm:$0xf]
        %v620 = vld [vmem:[#allocation6 + $0x28] sm:$0xf]
        %v621 = vld [vmem:[#allocation6 + $0x2c] sm:$0xf]
        %v622 = vld [vmem:[#allocation6 + $0x30] sm:$0xf]
        %v623 = vld [vmem:[#allocation6 + $0x34] sm:$0xf]
        %v624 = vld [vmem:[#allocation6 + $0x38] sm:$0xf]
        %v625 = vld [vmem:[#allocation6 + $0x3c] sm:$0xf]
        %v626 = vld [vmem:[#allocation6 + $0x40] sm:$0xf]
        %v627 = vld [vmem:[#allocation6 + $0x44] sm:$0xf]
        %v628 = vld [vmem:[#allocation6 + $0x48] sm:$0xf]
        %v629 = vld [vmem:[#allocation6 + $0x4c] sm:$0xf]
        %v630 = vld [vmem:[#allocation6 + $0x50] sm:$0xf]
        %v631 = vld [vmem:[#allocation6 + $0x54] sm:$0xf]
        %v632 = vld [vmem:[#allocation6 + $0x58] sm:$0xf]
        %v633 = vld [vmem:[#allocation6 + $0x5c] sm:$0xf]
        %v634 = vld [vmem:[#allocation6 + $0x60] sm:$0xf]
        %v635 = vld [vmem:[#allocation6 + $0x64] sm:$0xf]
        %v636 = vld [vmem:[#allocation6 + $0x68] sm:$0xf]
        %v637 = vld [vmem:[#allocation6 + $0x6c] sm:$0xf]
        %v638 = vld [vmem:[#allocation6 + $0x70] sm:$0xf]
        %v639 = vld [vmem:[#allocation6 + $0x74] sm:$0xf]
        %v640 = vld [vmem:[#allocation6 + $0x78] sm:$0xf]
        %v641 = vld [vmem:[#allocation6 + $0x7c] sm:$0xf]
        %v642 = vld [vmem:[#allocation8] sm:$0xf]
        %v643 = vld [vmem:[#allocation8 + $0x4] sm:$0xf]
        %v644 = vld [vmem:[#allocation8 + $0x8] sm:$0xf]
        %v645 = vld [vmem:[#allocation8 + $0xc] sm:$0xf]
        %v646 = vld [vmem:[#allocation8 + $0x10] sm:$0xf]
        %v647 = vld [vmem:[#allocation8 + $0x14] sm:$0xf]
        %v648 = vld [vmem:[#allocation8 + $0x18] sm:$0xf]
        %v649 = vld [vmem:[#allocation8 + $0x1c] sm:$0xf]
        %v650 = vld [vmem:[#allocation8 + $0x20] sm:$0xf]
        %v651 = vld [vmem:[#allocation8 + $0x24] sm:$0xf]
        %v652 = vld [vmem:[#allocation8 + $0x28] sm:$0xf]
        %v653 = vld [vmem:[#allocation8 + $0x2c] sm:$0xf]
        %v654 = vld [vmem:[#allocation8 + $0x30] sm:$0xf]
        %v655 = vld [vmem:[#allocation8 + $0x34] sm:$0xf]
        %v656 = vld [vmem:[#allocation8 + $0x38] sm:$0xf]
        %v657 = vld [vmem:[#allocation8 + $0x3c] sm:$0xf]
        %v658 = vld [vmem:[#allocation8 + $0x40] sm:$0xf]
        %v659 = vld [vmem:[#allocation8 + $0x44] sm:$0xf]
        %v660 = vld [vmem:[#allocation8 + $0x48] sm:$0xf]
        %v661 = vld [vmem:[#allocation8 + $0x4c] sm:$0xf]
        %v662 = vld [vmem:[#allocation8 + $0x50] sm:$0xf]
        %v663 = vld [vmem:[#allocation8 + $0x54] sm:$0xf]
        %v664 = vld [vmem:[#allocation8 + $0x58] sm:$0xf]
        %v665 = vld [vmem:[#allocation8 + $0x5c] sm:$0xf]
        %v666 = vld [vmem:[#allocation8 + $0x60] sm:$0xf]
        %v667 = vld [vmem:[#allocation8 + $0x64] sm:$0xf]
        %v668 = vld [vmem:[#allocation8 + $0x68] sm:$0xf]
        %v669 = vld [vmem:[#allocation8 + $0x6c] sm:$0xf]
        %v670 = vld [vmem:[#allocation8 + $0x70] sm:$0xf]
        %v671 = vld [vmem:[#allocation8 + $0x74] sm:$0xf]
        %v672 = vld [vmem:[#allocation8 + $0x78] sm:$0xf]
        %v673 = vld [vmem:[#allocation8 + $0x7c] sm:$0xf]
        %v706 = vunpack.c.l.b16 %v610
        %v707 = vunpack.c.l.b16 %v611
        %v708 = vunpack.c.l.b16 %v612
        %v709 = vunpack.c.l.b16 %v613
        %v710 = vunpack.c.l.b16 %v614
        %v711 = vunpack.c.l.b16 %v615
        %v712 = vunpack.c.l.b16 %v616
        %v713 = vunpack.c.l.b16 %v617
        %v714 = vunpack.c.l.b16 %v618
        %v715 = vunpack.c.l.b16 %v619
        %v716 = vunpack.c.l.b16 %v620
        %v717 = vunpack.c.l.b16 %v621
        %v718 = vunpack.c.l.b16 %v622
        %v719 = vunpack.c.l.b16 %v623
        %v720 = vunpack.c.l.b16 %v624
        %v721 = vunpack.c.l.b16 %v625
        %v722 = vunpack.c.l.b16 %v626
        %v723 = vunpack.c.l.b16 %v627
        %v724 = vunpack.c.l.b16 %v628
        %v725 = vunpack.c.l.b16 %v629
        %v726 = vunpack.c.l.b16 %v630
        %v727 = vunpack.c.l.b16 %v631
        %v728 = vunpack.c.l.b16 %v632
        %v729 = vunpack.c.l.b16 %v633
        %v730 = vunpack.c.l.b16 %v634
        %v731 = vunpack.c.l.b16 %v635
        %v732 = vunpack.c.l.b16 %v636
        %v733 = vunpack.c.l.b16 %v637
        %v734 = vunpack.c.l.b16 %v638
        %v735 = vunpack.c.l.b16 %v639
        %v736 = vunpack.c.l.b16 %v640
        %v737 = vunpack.c.l.b16 %v641
        %v738 = vpack.c.b16 %v707, %v706
        %v739 = vpack.c.b16 %v709, %v708
        %v740 = vpack.c.b16 %v711, %v710
        %v741 = vpack.c.b16 %v713, %v712
        %v742 = vpack.c.b16 %v715, %v714
        %v743 = vpack.c.b16 %v717, %v716
        %v744 = vpack.c.b16 %v719, %v718
        %v745 = vpack.c.b16 %v721, %v720
        %v746 = vpack.c.b16 %v723, %v722
        %v747 = vpack.c.b16 %v725, %v724
        %v748 = vpack.c.b16 %v727, %v726
        %v749 = vpack.c.b16 %v729, %v728
        %v750 = vpack.c.b16 %v731, %v730
        %v751 = vpack.c.b16 %v733, %v732
        %v752 = vpack.c.b16 %v735, %v734
        %v753 = vpack.c.b16 %v737, %v736
        %vm754 = vcmask 261120
        %v756 = vsel %vm754, %v602, 0
        %v759 = vsel %vm754, %v603, 0
        %v762 = vsel %vm754, %v604, 0
        %v765 = vsel %vm754, %v605, 0
        %v768 = vsel %vm754, %v606, 0
        %v771 = vsel %vm754, %v607, 0
        %v774 = vsel %vm754, %v608, 0
        %v777 = vsel %vm754, %v609, 0
        %v780 = vsel %vm754, %v738, 0
        %v783 = vsel %vm754, %v739, 0
        %v786 = vsel %vm754, %v740, 0
        %v789 = vsel %vm754, %v741, 0
        %v792 = vsel %vm754, %v742, 0
        %v795 = vsel %vm754, %v743, 0
        %v798 = vsel %vm754, %v744, 0
        %v801 = vsel %vm754, %v745, 0
        %v804 = vsel %vm754, %v746, 0
        %v807 = vsel %vm754, %v747, 0
        %v810 = vsel %vm754, %v748, 0
        %v813 = vsel %vm754, %v749, 0
        %v816 = vsel %vm754, %v750, 0
        %v819 = vsel %vm754, %v751, 0
        %v822 = vsel %vm754, %v752, 0
        %v825 = vsel %vm754, %v753, 0
        %827 = vmatprep.subr.bf16.mxu0 0
        %828 = vmatpush1.bf16.xpose.msra.mxu0 %v780
        %829 = vmatprep.subr.bf16.mxu0 0
        %830 = vmatpush1.bf16.xpose.msra.mxu0 %v783
        %831 = vmatprep.subr.bf16.mxu0 0
        %832 = vmatpush1.bf16.xpose.msra.mxu0 %v786
        %833 = vmatprep.subr.bf16.mxu0 0
        %834 = vmatpush1.bf16.xpose.msra.mxu0 %v789
        %835 = vmatprep.subr.bf16.mxu0 0
        %836 = vmatpush1.bf16.xpose.msra.mxu0 %v792
        %837 = vmatprep.subr.bf16.mxu0 0
        %838 = vmatpush1.bf16.xpose.msra.mxu0 %v795
        %839 = vmatprep.subr.bf16.mxu0 0
        %840 = vmatpush1.bf16.xpose.msra.mxu0 %v798
        %841 = vmatprep.subr.bf16.mxu0 0
        %842 = vmatpush1.bf16.xpose.msra.mxu0 %v801
        %843 = vmatprep.subr.bf16.mxu0 0
        %844 = vmatpush1.bf16.xpose.msra.mxu0 %v804
        %845 = vmatprep.subr.bf16.mxu0 0
        %846 = vmatpush1.bf16.xpose.msra.mxu0 %v807
        %847 = vmatprep.subr.bf16.mxu0 0
        %848 = vmatpush1.bf16.xpose.msra.mxu0 %v810
        %849 = vmatprep.subr.bf16.mxu0 0
        %850 = vmatpush1.bf16.xpose.msra.mxu0 %v813
        %851 = vmatprep.subr.bf16.mxu0 0
        %852 = vmatpush1.bf16.xpose.msra.mxu0 %v816
        %853 = vmatprep.subr.bf16.mxu0 0
        %854 = vmatpush1.bf16.xpose.msra.mxu0 %v819
        %855 = vmatprep.subr.bf16.mxu0 0
        %856 = vmatpush1.bf16.xpose.msra.mxu0 %v822
        %857 = vmatprep.subr.bf16.mxu0 0
        %858 = vmatpush1.bf16.xpose.msra.mxu0 %v825
        %859 = vmatprep.mubr.bf16.mxu0 0
        %860 = vmatmul.mubr.bf16.gmra.mrb[0].mxu0 %v756
        %v861 = vpop.f32.mrb[0].mxu0
        %v862 = vadd.f32 0.0, %v861
        %v863 = vpop.f32.mrb[0].mxu0
        %v864 = vadd.f32 0.0, %v863
        %v865 = vpop.f32.mrb[0].mxu0
        %v866 = vadd.f32 0.0, %v865
        %v867 = vpop.f32.mrb[0].mxu0
        %v868 = vadd.f32 0.0, %v867
        %869 = vmatprep.mubr.bf16.mxu0 0
        %870 = vmatmul.mubr.bf16.gmra.mrb[0].mxu0 %v759
        %v871 = vpop.f32.mrb[0].mxu0
        %v872 = vadd.f32 0.0, %v871
        %v873 = vpop.f32.mrb[0].mxu0
        %v874 = vadd.f32 0.0, %v873
        %v875 = vpop.f32.mrb[0].mxu0
        %v876 = vadd.f32 0.0, %v875
        %v877 = vpop.f32.mrb[0].mxu0
        %v878 = vadd.f32 0.0, %v877
        %879 = vmatprep.mubr.bf16.mxu0 0
        %880 = vmatmul.mubr.bf16.gmra.mrb[0].mxu0 %v762
        %v881 = vpop.f32.mrb[0].mxu0
        %v882 = vadd.f32 0.0, %v881
        %v883 = vpop.f32.mrb[0].mxu0
        %v884 = vadd.f32 0.0, %v883
        %v885 = vpop.f32.mrb[0].mxu0
        %v886 = vadd.f32 0.0, %v885
        %v887 = vpop.f32.mrb[0].mxu0
        %v888 = vadd.f32 0.0, %v887
        %889 = vmatprep.mubr.bf16.mxu0 0
        %890 = vmatmul.mubr.bf16.gmra.mrb[0].mxu0 %v765
        %v891 = vpop.f32.mrb[0].mxu0
        %v892 = vadd.f32 0.0, %v891
        %v893 = vpop.f32.mrb[0].mxu0
        %v894 = vadd.f32 0.0, %v893
        %v895 = vpop.f32.mrb[0].mxu0
        %v896 = vadd.f32 0.0, %v895
        %v897 = vpop.f32.mrb[0].mxu0
        %v898 = vadd.f32 0.0, %v897
        %899 = vmatprep.mubr.bf16.mxu0 0
        %900 = vmatmul.mubr.bf16.gmra.mrb[0].mxu0 %v768
        %v901 = vpop.f32.mrb[0].mxu0
        %v902 = vadd.f32 0.0, %v901
        %v903 = vpop.f32.mrb[0].mxu0
        %v904 = vadd.f32 0.0, %v903
        %v905 = vpop.f32.mrb[0].mxu0
        %v906 = vadd.f32 0.0, %v905
        %v907 = vpop.f32.mrb[0].mxu0
        %v908 = vadd.f32 0.0, %v907
        %909 = vmatprep.mubr.bf16.mxu0 0
        %910 = vmatmul.mubr.bf16.gmra.mrb[0].mxu0 %v771
        %v911 = vpop.f32.mrb[0].mxu0
        %v912 = vadd.f32 0.0, %v911
        %v913 = vpop.f32.mrb[0].mxu0
        %v914 = vadd.f32 0.0, %v913
        %v915 = vpop.f32.mrb[0].mxu0
        %v916 = vadd.f32 0.0, %v915
        %v917 = vpop.f32.mrb[0].mxu0
        %v918 = vadd.f32 0.0, %v917
        %919 = vmatprep.mubr.bf16.mxu0 0
        %920 = vmatmul.mubr.bf16.gmra.mrb[0].mxu0 %v774
        %v921 = vpop.f32.mrb[0].mxu0
        %v922 = vadd.f32 0.0, %v921
        %v923 = vpop.f32.mrb[0].mxu0
        %v924 = vadd.f32 0.0, %v923
        %v925 = vpop.f32.mrb[0].mxu0
        %v926 = vadd.f32 0.0, %v925
        %v927 = vpop.f32.mrb[0].mxu0
        %v928 = vadd.f32 0.0, %v927
        %929 = vmatprep.mubr.bf16.mxu0 0
        %930 = vmatmul.mubr.bf16.gmra.mrb[0].mxu0 %v777
        %v931 = vpop.f32.mrb[0].mxu0
        %v932 = vadd.f32 0.0, %v931
        %v933 = vpop.f32.mrb[0].mxu0
        %v934 = vadd.f32 0.0, %v933
        %v935 = vpop.f32.mrb[0].mxu0
        %v936 = vadd.f32 0.0, %v935
        %v937 = vpop.f32.mrb[0].mxu0
        %v938 = vadd.f32 0.0, %v937
        %939 = vdwg.mxu0
        %v940 = vmax.f32 %v862, %v864
        %941 = vmax.xlane.f32.xlu0 %v940
        %v942 = vpop.xlane.xlu0 %941
        %v943 = vmax.f32 %v866, %v868
        %944 = vmax.xlane.f32.xlu0 %v943
        %v945 = vpop.xlane.xlu0 %944
        %v946 = vmax.f32 %v872, %v874
        %947 = vmax.xlane.f32.xlu0 %v946
        %v948 = vpop.xlane.xlu0 %947
        %v949 = vmax.f32 %v876, %v878
        %950 = vmax.xlane.f32.xlu0 %v949
        %v951 = vpop.xlane.xlu0 %950
        %v952 = vmax.f32 %v882, %v884
        %953 = vmax.xlane.f32.xlu0 %v952
        %v954 = vpop.xlane.xlu0 %953
        %v955 = vmax.f32 %v886, %v888
        %956 = vmax.xlane.f32.xlu0 %v955
        %v957 = vpop.xlane.xlu0 %956
        %v958 = vmax.f32 %v892, %v894
        %959 = vmax.xlane.f32.xlu0 %v958
        %v960 = vpop.xlane.xlu0 %959
        %v961 = vmax.f32 %v896, %v898
        %962 = vmax.xlane.f32.xlu0 %v961
        %v963 = vpop.xlane.xlu0 %962
        %v964 = vmax.f32 %v902, %v904
        %965 = vmax.xlane.f32.xlu0 %v964
        %v966 = vpop.xlane.xlu0 %965
        %v967 = vmax.f32 %v906, %v908
        %968 = vmax.xlane.f32.xlu0 %v967
        %v969 = vpop.xlane.xlu0 %968
        %v970 = vmax.f32 %v912, %v914
        %971 = vmax.xlane.f32.xlu0 %v970
        %v972 = vpop.xlane.xlu0 %971
        %v973 = vmax.f32 %v916, %v918
        %974 = vmax.xlane.f32.xlu0 %v973
        %v975 = vpop.xlane.xlu0 %974
        %v976 = vmax.f32 %v922, %v924
        %977 = vmax.xlane.f32.xlu0 %v976
        %v978 = vpop.xlane.xlu0 %977
        %v979 = vmax.f32 %v926, %v928
        %980 = vmax.xlane.f32.xlu0 %v979
        %v981 = vpop.xlane.xlu0 %980
        %v982 = vmax.f32 %v932, %v934
        %983 = vmax.xlane.f32.xlu0 %v982
        %v984 = vpop.xlane.xlu0 %983
        %v985 = vmax.f32 %v936, %v938
        %986 = vmax.xlane.f32.xlu0 %v985
        %v987 = vpop.xlane.xlu0 %986
        %v988 = vsub.f32 %v862, %v942
        %v989 = vsub.f32 %v864, %v942
        %v990 = vsub.f32 %v866, %v945
        %v991 = vsub.f32 %v868, %v945
        %v992 = vsub.f32 %v872, %v948
        %v993 = vsub.f32 %v874, %v948
        %v994 = vsub.f32 %v876, %v951
        %v995 = vsub.f32 %v878, %v951
        %v996 = vsub.f32 %v882, %v954
        %v997 = vsub.f32 %v884, %v954
        %v998 = vsub.f32 %v886, %v957
        %v999 = vsub.f32 %v888, %v957
        %v1000 = vsub.f32 %v892, %v960
        %v1001 = vsub.f32 %v894, %v960
        %v1002 = vsub.f32 %v896, %v963
        %v1003 = vsub.f32 %v898, %v963
        %v1004 = vsub.f32 %v902, %v966
        %v1005 = vsub.f32 %v904, %v966
        %v1006 = vsub.f32 %v906, %v969
        %v1007 = vsub.f32 %v908, %v969
        %v1008 = vsub.f32 %v912, %v972
        %v1009 = vsub.f32 %v914, %v972
        %v1010 = vsub.f32 %v916, %v975
        %v1011 = vsub.f32 %v918, %v975
        %v1012 = vsub.f32 %v922, %v978
        %v1013 = vsub.f32 %v924, %v978
        %v1014 = vsub.f32 %v926, %v981
        %v1015 = vsub.f32 %v928, %v981
        %v1016 = vsub.f32 %v932, %v984
        %v1017 = vsub.f32 %v934, %v984
        %v1018 = vsub.f32 %v936, %v987
        %v1019 = vsub.f32 %v938, %v987
        %v1020 = vmul.f32 %v988, 1.442695
        %v1021 = vpow.pop %v1020
        %v1022 = vmul.f32 %v989, 1.442695
        %v1023 = vpow.pop %v1022
        %v1024 = vmul.f32 %v990, 1.442695
        %v1025 = vpow.pop %v1024
        %v1026 = vmul.f32 %v991, 1.442695
        %v1027 = vpow.pop %v1026
        %v1028 = vmul.f32 %v992, 1.442695
        %v1029 = vpow.pop %v1028
        %v1030 = vmul.f32 %v993, 1.442695
        %v1031 = vpow.pop %v1030
        %v1032 = vmul.f32 %v994, 1.442695
        %v1033 = vpow.pop %v1032
        %v1034 = vmul.f32 %v995, 1.442695
        %v1035 = vpow.pop %v1034
        %v1036 = vmul.f32 %v996, 1.442695
        %v1037 = vpow.pop %v1036
        %v1038 = vmul.f32 %v997, 1.442695
        %v1039 = vpow.pop %v1038
        %v1040 = vmul.f32 %v998, 1.442695
        %v1041 = vpow.pop %v1040
        %v1042 = vmul.f32 %v999, 1.442695
        %v1043 = vpow.pop %v1042
        %v1044 = vmul.f32 %v1000, 1.442695
        %v1045 = vpow.pop %v1044
        %v1046 = vmul.f32 %v1001, 1.442695
        %v1047 = vpow.pop %v1046
        %v1048 = vmul.f32 %v1002, 1.442695
        %v1049 = vpow.pop %v1048
        %v1050 = vmul.f32 %v1003, 1.442695
        %v1051 = vpow.pop %v1050
        %v1052 = vmul.f32 %v1004, 1.442695
        %v1053 = vpow.pop %v1052
        %v1054 = vmul.f32 %v1005, 1.442695
        %v1055 = vpow.pop %v1054
        %v1056 = vmul.f32 %v1006, 1.442695
        %v1057 = vpow.pop %v1056
        %v1058 = vmul.f32 %v1007, 1.442695
        %v1059 = vpow.pop %v1058
        %v1060 = vmul.f32 %v1008, 1.442695
        %v1061 = vpow.pop %v1060
        %v1062 = vmul.f32 %v1009, 1.442695
        %v1063 = vpow.pop %v1062
        %v1064 = vmul.f32 %v1010, 1.442695
        %v1065 = vpow.pop %v1064
        %v1066 = vmul.f32 %v1011, 1.442695
        %v1067 = vpow.pop %v1066
        %v1068 = vmul.f32 %v1012, 1.442695
        %v1069 = vpow.pop %v1068
        %v1070 = vmul.f32 %v1013, 1.442695
        %v1071 = vpow.pop %v1070
        %v1072 = vmul.f32 %v1014, 1.442695
        %v1073 = vpow.pop %v1072
        %v1074 = vmul.f32 %v1015, 1.442695
        %v1075 = vpow.pop %v1074
        %v1076 = vmul.f32 %v1016, 1.442695
        %v1077 = vpow.pop %v1076
        %v1078 = vmul.f32 %v1017, 1.442695
        %v1079 = vpow.pop %v1078
        %v1080 = vmul.f32 %v1018, 1.442695
        %v1081 = vpow.pop %v1080
        %v1082 = vmul.f32 %v1019, 1.442695
        %v1083 = vpow.pop %v1082
        %v1084 = vadd.f32 %v1021, %v1023
        %1085 = vadd.xlane.f32.xlu0 %v1084
        %v1086 = vpop.xlane.xlu0 %1085
        %v1087 = vadd.f32 %v1025, %v1027
        %1088 = vadd.xlane.f32.xlu0 %v1087
        %v1089 = vpop.xlane.xlu0 %1088
        %v1090 = vadd.f32 %v1029, %v1031
        %1091 = vadd.xlane.f32.xlu0 %v1090
        %v1092 = vpop.xlane.xlu0 %1091
        %v1093 = vadd.f32 %v1033, %v1035
        %1094 = vadd.xlane.f32.xlu0 %v1093
        %v1095 = vpop.xlane.xlu0 %1094
        %v1096 = vadd.f32 %v1037, %v1039
        %1097 = vadd.xlane.f32.xlu0 %v1096
        %v1098 = vpop.xlane.xlu0 %1097
        %v1099 = vadd.f32 %v1041, %v1043
        %1100 = vadd.xlane.f32.xlu0 %v1099
        %v1101 = vpop.xlane.xlu0 %1100
        %v1102 = vadd.f32 %v1045, %v1047
        %1103 = vadd.xlane.f32.xlu0 %v1102
        %v1104 = vpop.xlane.xlu0 %1103
        %v1105 = vadd.f32 %v1049, %v1051
        %1106 = vadd.xlane.f32.xlu0 %v1105
        %v1107 = vpop.xlane.xlu0 %1106
        %v1108 = vadd.f32 %v1053, %v1055
        %1109 = vadd.xlane.f32.xlu0 %v1108
        %v1110 = vpop.xlane.xlu0 %1109
        %v1111 = vadd.f32 %v1057, %v1059
        %1112 = vadd.xlane.f32.xlu0 %v1111
        %v1113 = vpop.xlane.xlu0 %1112
        %v1114 = vadd.f32 %v1061, %v1063
        %1115 = vadd.xlane.f32.xlu0 %v1114
        %v1116 = vpop.xlane.xlu0 %1115
        %v1117 = vadd.f32 %v1065, %v1067
        %1118 = vadd.xlane.f32.xlu0 %v1117
        %v1119 = vpop.xlane.xlu0 %1118
        %v1120 = vadd.f32 %v1069, %v1071
        %1121 = vadd.xlane.f32.xlu0 %v1120
        %v1122 = vpop.xlane.xlu0 %1121
        %v1123 = vadd.f32 %v1073, %v1075
        %1124 = vadd.xlane.f32.xlu0 %v1123
        %v1125 = vpop.xlane.xlu0 %1124
        %v1126 = vadd.f32 %v1077, %v1079
        %1127 = vadd.xlane.f32.xlu0 %v1126
        %v1128 = vpop.xlane.xlu0 %1127
        %v1129 = vadd.f32 %v1081, %v1083
        %1130 = vadd.xlane.f32.xlu0 %v1129
        %v1131 = vpop.xlane.xlu0 %1130
        %v1132 = vrcp.pop %v1086
        %v1133 = vrcp.pop %v1089
        %v1134 = vrcp.pop %v1092
        %v1135 = vrcp.pop %v1095
        %v1136 = vrcp.pop %v1098
        %v1137 = vrcp.pop %v1101
        %v1138 = vrcp.pop %v1104
        %v1139 = vrcp.pop %v1107
        %v1140 = vrcp.pop %v1110
        %v1141 = vrcp.pop %v1113
        %v1142 = vrcp.pop %v1116
        %v1143 = vrcp.pop %v1119
        %v1144 = vrcp.pop %v1122
        %v1145 = vrcp.pop %v1125
        %v1146 = vrcp.pop %v1128
        %v1147 = vrcp.pop %v1131
        %v1148 = vmul.f32 %v1021, %v1132
        %v1149 = vmul.f32 %v1023, %v1132
        %v1150 = vmul.f32 %v1025, %v1133
        %v1151 = vmul.f32 %v1027, %v1133
        %v1152 = vmul.f32 %v1029, %v1134
        %v1153 = vmul.f32 %v1031, %v1134
        %v1154 = vmul.f32 %v1033, %v1135
        %v1155 = vmul.f32 %v1035, %v1135
        %v1156 = vmul.f32 %v1037, %v1136
        %v1157 = vmul.f32 %v1039, %v1136
        %v1158 = vmul.f32 %v1041, %v1137
        %v1159 = vmul.f32 %v1043, %v1137
        %v1160 = vmul.f32 %v1045, %v1138
        %v1161 = vmul.f32 %v1047, %v1138
        %v1162 = vmul.f32 %v1049, %v1139
        %v1163 = vmul.f32 %v1051, %v1139
        %v1164 = vmul.f32 %v1053, %v1140
        %v1165 = vmul.f32 %v1055, %v1140
        %v1166 = vmul.f32 %v1057, %v1141
        %v1167 = vmul.f32 %v1059, %v1141
        %v1168 = vmul.f32 %v1061, %v1142
        %v1169 = vmul.f32 %v1063, %v1142
        %v1170 = vmul.f32 %v1065, %v1143
        %v1171 = vmul.f32 %v1067, %v1143
        %v1172 = vmul.f32 %v1069, %v1144
        %v1173 = vmul.f32 %v1071, %v1144
        %v1174 = vmul.f32 %v1073, %v1145
        %v1175 = vmul.f32 %v1075, %v1145
        %v1176 = vmul.f32 %v1077, %v1146
        %v1177 = vmul.f32 %v1079, %v1146
        %v1178 = vmul.f32 %v1081, %v1147
        %v1179 = vmul.f32 %v1083, %v1147
        %v1180 = vpack.c.bf16 %v1150, %v1148
        %v1181 = vpack.c.bf16 %v1151, %v1149
        %v1182 = vpack.c.bf16 %v1154, %v1152
        %v1183 = vpack.c.bf16 %v1155, %v1153
        %v1184 = vpack.c.bf16 %v1158, %v1156
        %v1185 = vpack.c.bf16 %v1159, %v1157
        %v1186 = vpack.c.bf16 %v1162, %v1160
        %v1187 = vpack.c.bf16 %v1163, %v1161
        %v1188 = vpack.c.bf16 %v1166, %v1164
        %v1189 = vpack.c.bf16 %v1167, %v1165
        %v1190 = vpack.c.bf16 %v1170, %v1168
        %v1191 = vpack.c.bf16 %v1171, %v1169
        %v1192 = vpack.c.bf16 %v1174, %v1172
        %v1193 = vpack.c.bf16 %v1175, %v1173
        %v1194 = vpack.c.bf16 %v1178, %v1176
        %v1195 = vpack.c.bf16 %v1179, %v1177
        %v1228 = vunpack.c.l.b16 %v642
        %v1229 = vunpack.c.l.b16 %v643
        %v1230 = vunpack.c.l.b16 %v644
        %v1231 = vunpack.c.l.b16 %v645
        %v1232 = vunpack.c.l.b16 %v646
        %v1233 = vunpack.c.l.b16 %v647
        %v1234 = vunpack.c.l.b16 %v648
        %v1235 = vunpack.c.l.b16 %v649
        %v1236 = vunpack.c.l.b16 %v650
        %v1237 = vunpack.c.l.b16 %v651
        %v1238 = vunpack.c.l.b16 %v652
        %v1239 = vunpack.c.l.b16 %v653
        %v1240 = vunpack.c.l.b16 %v654
        %v1241 = vunpack.c.l.b16 %v655
        %v1242 = vunpack.c.l.b16 %v656
        %v1243 = vunpack.c.l.b16 %v657
        %v1244 = vunpack.c.l.b16 %v658
        %v1245 = vunpack.c.l.b16 %v659
        %v1246 = vunpack.c.l.b16 %v660
        %v1247 = vunpack.c.l.b16 %v661
        %v1248 = vunpack.c.l.b16 %v662
        %v1249 = vunpack.c.l.b16 %v663
        %v1250 = vunpack.c.l.b16 %v664
        %v1251 = vunpack.c.l.b16 %v665
        %v1252 = vunpack.c.l.b16 %v666
        %v1253 = vunpack.c.l.b16 %v667
        %v1254 = vunpack.c.l.b16 %v668
        %v1255 = vunpack.c.l.b16 %v669
        %v1256 = vunpack.c.l.b16 %v670
        %v1257 = vunpack.c.l.b16 %v671
        %v1258 = vunpack.c.l.b16 %v672
        %v1259 = vunpack.c.l.b16 %v673
        %v1260 = vpack.c.b16 %v1229, %v1228
        %v1261 = vpack.c.b16 %v1231, %v1230
        %v1262 = vpack.c.b16 %v1233, %v1232
        %v1263 = vpack.c.b16 %v1235, %v1234
        %v1264 = vpack.c.b16 %v1237, %v1236
        %v1265 = vpack.c.b16 %v1239, %v1238
        %v1266 = vpack.c.b16 %v1241, %v1240
        %v1267 = vpack.c.b16 %v1243, %v1242
        %v1268 = vpack.c.b16 %v1245, %v1244
        %v1269 = vpack.c.b16 %v1247, %v1246
        %v1270 = vpack.c.b16 %v1249, %v1248
        %v1271 = vpack.c.b16 %v1251, %v1250
        %v1272 = vpack.c.b16 %v1253, %v1252
        %v1273 = vpack.c.b16 %v1255, %v1254
        %v1274 = vpack.c.b16 %v1257, %v1256
        %v1275 = vpack.c.b16 %v1259, %v1258
        %1292 = vmatprep.subr.bf16.mxu0 0
        %1293 = vmatpush1.bf16.msra.mxu0 %v1260
        %1294 = vmatprep.subr.bf16.mxu0 0
        %1295 = vmatpush1.bf16.msra.mxu0 %v1261
        %1296 = vmatprep.subr.bf16.mxu0 0
        %1297 = vmatpush1.bf16.msra.mxu0 %v1262
        %1298 = vmatprep.subr.bf16.mxu0 0
        %1299 = vmatpush1.bf16.msra.mxu0 %v1263
        %1300 = vmatprep.subr.bf16.mxu0 0
        %1301 = vmatpush1.bf16.msra.mxu0 %v1264
        %1302 = vmatprep.subr.bf16.mxu0 0
        %1303 = vmatpush1.bf16.msra.mxu0 %v1265
        %1304 = vmatprep.subr.bf16.mxu0 0
        %1305 = vmatpush1.bf16.msra.mxu0 %v1266
        %1306 = vmatprep.subr.bf16.mxu0 0
        %1307 = vmatpush1.bf16.msra.mxu0 %v1267
        %1308 = vmatprep.subr.bf16.mxu0 0
        %1309 = vmatpush1.bf16.msra.mxu0 %v1268
        %1310 = vmatprep.subr.bf16.mxu0 0
        %1311 = vmatpush1.bf16.msra.mxu0 %v1269
        %1312 = vmatprep.subr.bf16.mxu0 0
        %1313 = vmatpush1.bf16.msra.mxu0 %v1270
        %1314 = vmatprep.subr.bf16.mxu0 0
        %1315 = vmatpush1.bf16.msra.mxu0 %v1271
        %1316 = vmatprep.subr.bf16.mxu0 0
        %1317 = vmatpush1.bf16.msra.mxu0 %v1272
        %1318 = vmatprep.subr.bf16.mxu0 0
        %1319 = vmatpush1.bf16.msra.mxu0 %v1273
        %1320 = vmatprep.subr.bf16.mxu0 0
        %1321 = vmatpush1.bf16.msra.mxu0 %v1274
        %1322 = vmatprep.subr.bf16.mxu0 0
        %1323 = vmatpush1.bf16.msra.mxu0 %v1275
        %1324 = vmatprep.mubr.bf16.mxu0 %v1181
        %1325 = vmatmul.mubr.bf16.gmra.mrb[0].mxu0 %v1180
        %v1326 = vpop.f32.mrb[0].mxu0
        %v1327 = vadd.f32 0.0, %v1326
        %v1328 = vpop.f32.mrb[0].mxu0
        %v1329 = vpop.f32.mrb[0].mxu0
        %v1330 = vadd.f32 0.0, %v1329
        %v1331 = vpop.f32.mrb[0].mxu0
        %1332 = vmatprep.mubr.bf16.mxu0 %v1183
        %1333 = vmatmul.mubr.bf16.gmra.mrb[0].mxu0 %v1182
        %v1334 = vpop.f32.mrb[0].mxu0
        %v1335 = vadd.f32 0.0, %v1334
        %v1336 = vpop.f32.mrb[0].mxu0
        %v1337 = vpop.f32.mrb[0].mxu0
        %v1338 = vadd.f32 0.0, %v1337
        %v1339 = vpop.f32.mrb[0].mxu0
        %1340 = vmatprep.mubr.bf16.mxu0 %v1185
        %1341 = vmatmul.mubr.bf16.gmra.mrb[0].mxu0 %v1184
        %v1342 = vpop.f32.mrb[0].mxu0
        %v1343 = vadd.f32 0.0, %v1342
        %v1344 = vpop.f32.mrb[0].mxu0
        %v1345 = vpop.f32.mrb[0].mxu0
        %v1346 = vadd.f32 0.0, %v1345
        %v1347 = vpop.f32.mrb[0].mxu0
        %1348 = vmatprep.mubr.bf16.mxu0 %v1187
        %1349 = vmatmul.mubr.bf16.gmra.mrb[0].mxu0 %v1186
        %v1350 = vpop.f32.mrb[0].mxu0
        %v1351 = vadd.f32 0.0, %v1350
        %v1352 = vpop.f32.mrb[0].mxu0
        %v1353 = vpop.f32.mrb[0].mxu0
        %v1354 = vadd.f32 0.0, %v1353
        %v1355 = vpop.f32.mrb[0].mxu0
        %1356 = vmatprep.mubr.bf16.mxu0 %v1189
        %1357 = vmatmul.mubr.bf16.gmra.mrb[0].mxu0 %v1188
        %v1358 = vpop.f32.mrb[0].mxu0
        %v1359 = vadd.f32 0.0, %v1358
        %v1360 = vpop.f32.mrb[0].mxu0
        %v1361 = vpop.f32.mrb[0].mxu0
        %v1362 = vadd.f32 0.0, %v1361
        %v1363 = vpop.f32.mrb[0].mxu0
        %1364 = vmatprep.mubr.bf16.mxu0 %v1191
        %1365 = vmatmul.mubr.bf16.gmra.mrb[0].mxu0 %v1190
        %v1366 = vpop.f32.mrb[0].mxu0
        %v1367 = vadd.f32 0.0, %v1366
        %v1368 = vpop.f32.mrb[0].mxu0
        %v1369 = vpop.f32.mrb[0].mxu0
        %v1370 = vadd.f32 0.0, %v1369
        %v1371 = vpop.f32.mrb[0].mxu0
        %1372 = vmatprep.mubr.bf16.mxu0 %v1193
        %1373 = vmatmul.mubr.bf16.gmra.mrb[0].mxu0 %v1192
        %v1374 = vpop.f32.mrb[0].mxu0
        %v1375 = vadd.f32 0.0, %v1374
        %v1376 = vpop.f32.mrb[0].mxu0
        %v1377 = vpop.f32.mrb[0].mxu0
        %v1378 = vadd.f32 0.0, %v1377
        %v1379 = vpop.f32.mrb[0].mxu0
        %1380 = vmatprep.mubr.bf16.mxu0 %v1195
        %1381 = vmatmul.mubr.bf16.gmra.mrb[0].mxu0 %v1194
        %v1382 = vpop.f32.mrb[0].mxu0
        %v1383 = vadd.f32 0.0, %v1382
        %v1384 = vpop.f32.mrb[0].mxu0
        %v1385 = vpop.f32.mrb[0].mxu0
        %v1386 = vadd.f32 0.0, %v1385
        %v1387 = vpop.f32.mrb[0].mxu0
        %1388 = vdwg.mxu0
        %v1389 = vpack.c.bf16 %v1330, %v1327
        %v1390 = vpack.c.bf16 %v1338, %v1335
        %v1391 = vpack.c.bf16 %v1346, %v1343
        %v1392 = vpack.c.bf16 %v1354, %v1351
        %v1393 = vpack.c.bf16 %v1362, %v1359
        %v1394 = vpack.c.bf16 %v1370, %v1367
        %v1395 = vpack.c.bf16 %v1378, %v1375
        %v1396 = vpack.c.bf16 %v1386, %v1383
        %1397 = vst.msk [vmem:[#allocation2] sm:$0xff] %vm754, %v1389
        %1398 = vst.msk [vmem:[#allocation2 + $0x8] sm:$0xff] %vm754, %v1390
        %1399 = vst.msk [vmem:[#allocation2 + $0x10] sm:$0xff] %vm754, %v1391
        %1400 = vst.msk [vmem:[#allocation2 + $0x18] sm:$0xff] %vm754, %v1392
        %1401 = vst.msk [vmem:[#allocation2 + $0x20] sm:$0xff] %vm754, %v1393
        %1402 = vst.msk [vmem:[#allocation2 + $0x28] sm:$0xff] %vm754, %v1394
        %1403 = vst.msk [vmem:[#allocation2 + $0x30] sm:$0xff] %vm754, %v1395
        %1404 = vst.msk [vmem:[#allocation2 + $0x38] sm:$0xff] %vm754, %v1396
        %1413 = vrot.lane.b32.xlu0 %v602, 96
        %v1414 = vpop.permute.xlu0 %1413
        %1415 = vrot.lane.b32.xlu0 %v603, 96
        %v1416 = vpop.permute.xlu0 %1415
        %1417 = vrot.lane.b32.xlu0 %v604, 96
        %v1418 = vpop.permute.xlu0 %1417
        %1419 = vrot.lane.b32.xlu0 %v605, 96
        %v1420 = vpop.permute.xlu0 %1419
        %1421 = vrot.lane.b32.xlu0 %v606, 96
        %v1422 = vpop.permute.xlu0 %1421
        %1423 = vrot.lane.b32.xlu0 %v607, 96
        %v1424 = vpop.permute.xlu0 %1423
        %1425 = vrot.lane.b32.xlu0 %v608, 96
        %v1426 = vpop.permute.xlu0 %1425
        %1427 = vrot.lane.b32.xlu0 %v609, 96
        %v1428 = vpop.permute.xlu0 %1427
        %1429 = vrot.lane.b32.xlu0 %v738, 96
        %v1430 = vpop.permute.xlu0 %1429
        %1431 = vrot.lane.b32.xlu0 %v739, 96
        %v1432 = vpop.permute.xlu0 %1431
        %1433 = vrot.lane.b32.xlu0 %v740, 96
        %v1434 = vpop.permute.xlu0 %1433
        %1435 = vrot.lane.b32.xlu0 %v741, 96
        %v1436 = vpop.permute.xlu0 %1435
        %1437 = vrot.lane.b32.xlu0 %v742, 96
        %v1438 = vpop.permute.xlu0 %1437
        %1439 = vrot.lane.b32.xlu0 %v743, 96
        %v1440 = vpop.permute.xlu0 %1439
        %1441 = vrot.lane.b32.xlu0 %v744, 96
        %v1442 = vpop.permute.xlu0 %1441
        %1443 = vrot.lane.b32.xlu0 %v745, 96
        %v1444 = vpop.permute.xlu0 %1443
        %1445 = vrot.lane.b32.xlu0 %v746, 96
        %v1446 = vpop.permute.xlu0 %1445
        %1447 = vrot.lane.b32.xlu0 %v747, 96
        %v1448 = vpop.permute.xlu0 %1447
        %1449 = vrot.lane.b32.xlu0 %v748, 96
        %v1450 = vpop.permute.xlu0 %1449
        %1451 = vrot.lane.b32.xlu0 %v749, 96
        %v1452 = vpop.permute.xlu0 %1451
        %1453 = vrot.lane.b32.xlu0 %v750, 96
        %v1454 = vpop.permute.xlu0 %1453
        %1455 = vrot.lane.b32.xlu0 %v751, 96
        %v1456 = vpop.permute.xlu0 %1455
        %1457 = vrot.lane.b32.xlu0 %v752, 96
        %v1458 = vpop.permute.xlu0 %1457
        %1459 = vrot.lane.b32.xlu0 %v753, 96
        %v1460 = vpop.permute.xlu0 %1459
        %v1462 = vsel %vm754, %v1414, 0
        %v1465 = vsel %vm754, %v1416, 0
        %v1468 = vsel %vm754, %v1418, 0
        %v1471 = vsel %vm754, %v1420, 0
        %v1474 = vsel %vm754, %v1422, 0
        %v1477 = vsel %vm754, %v1424, 0
        %v1480 = vsel %vm754, %v1426, 0
        %v1483 = vsel %vm754, %v1428, 0
        %v1486 = vsel %vm754, %v1430, 0
        %v1489 = vsel %vm754, %v1432, 0
        %v1492 = vsel %vm754, %v1434, 0
        %v1495 = vsel %vm754, %v1436, 0
        %v1498 = vsel %vm754, %v1438, 0
        %v1501 = vsel %vm754, %v1440, 0
        %v1504 = vsel %vm754, %v1442, 0
        %v1507 = vsel %vm754, %v1444, 0
        %v1510 = vsel %vm754, %v1446, 0
        %v1513 = vsel %vm754, %v1448, 0
        %v1516 = vsel %vm754, %v1450, 0
        %v1519 = vsel %vm754, %v1452, 0
        %v1522 = vsel %vm754, %v1454, 0
        %v1525 = vsel %vm754, %v1456, 0
        %v1528 = vsel %vm754, %v1458, 0
        %v1531 = vsel %vm754, %v1460, 0
        %1533 = vmatprep.subr.bf16.mxu0 0
        %1534 = vmatpush1.bf16.xpose.msra.mxu0 %v1486
        %1535 = vmatprep.subr.bf16.mxu0 0
        %1536 = vmatpush1.bf16.xpose.msra.mxu0 %v1489
        %1537 = vmatprep.subr.bf16.mxu0 0
        %1538 = vmatpush1.bf16.xpose.msra.mxu0 %v1492
        %1539 = vmatprep.subr.bf16.mxu0 0
        %1540 = vmatpush1.bf16.xpose.msra.mxu0 %v1495
        %1541 = vmatprep.subr.bf16.mxu0 0
        %1542 = vmatpush1.bf16.xpose.msra.mxu0 %v1498
        %1543 = vmatprep.subr.bf16.mxu0 0
        %1544 = vmatpush1.bf16.xpose.msra.mxu0 %v1501
        %1545 = vmatprep.subr.bf16.mxu0 0
        %1546 = vmatpush1.bf16.xpose.msra.mxu0 %v1504
        %1547 = vmatprep.subr.bf16.mxu0 0
        %1548 = vmatpush1.bf16.xpose.msra.mxu0 %v1507
        %1549 = vmatprep.subr.bf16.mxu0 0
        %1550 = vmatpush1.bf16.xpose.msra.mxu0 %v1510
        %1551 = vmatprep.subr.bf16.mxu0 0
        %1552 = vmatpush1.bf16.xpose.msra.mxu0 %v1513
        %1553 = vmatprep.subr.bf16.mxu0 0
        %1554 = vmatpush1.bf16.xpose.msra.mxu0 %v1516
        %1555 = vmatprep.subr.bf16.mxu0 0
        %1556 = vmatpush1.bf16.xpose.msra.mxu0 %v1519
        %1557 = vmatprep.subr.bf16.mxu0 0
        %1558 = vmatpush1.bf16.xpose.msra.mxu0 %v1522
        %1559 = vmatprep.subr.bf16.mxu0 0
        %1560 = vmatpush1.bf16.xpose.msra.mxu0 %v1525
        %1561 = vmatprep.subr.bf16.mxu0 0
        %1562 = vmatpush1.bf16.xpose.msra.mxu0 %v1528
        %1563 = vmatprep.subr.bf16.mxu0 0
        %1564 = vmatpush1.bf16.xpose.msra.mxu0 %v1531
        %1565 = vmatprep.mubr.bf16.mxu0 0
        %1566 = vmatmul.mubr.bf16.gmra.mrb[0].mxu0 %v1462
        %v1567 = vpop.f32.mrb[0].mxu0
        %v1568 = vadd.f32 0.0, %v1567
        %v1569 = vpop.f32.mrb[0].mxu0
        %v1570 = vadd.f32 0.0, %v1569
        %v1571 = vpop.f32.mrb[0].mxu0
        %v1572 = vadd.f32 0.0, %v1571
        %v1573 = vpop.f32.mrb[0].mxu0
        %v1574 = vadd.f32 0.0, %v1573
        %1575 = vmatprep.mubr.bf16.mxu0 0
        %1576 = vmatmul.mubr.bf16.gmra.mrb[0].mxu0 %v1465
        %v1577 = vpop.f32.mrb[0].mxu0
        %v1578 = vadd.f32 0.0, %v1577
        %v1579 = vpop.f32.mrb[0].mxu0
        %v1580 = vadd.f32 0.0, %v1579
        %v1581 = vpop.f32.mrb[0].mxu0
        %v1582 = vadd.f32 0.0, %v1581
        %v1583 = vpop.f32.mrb[0].mxu0
        %v1584 = vadd.f32 0.0, %v1583
        %1585 = vmatprep.mubr.bf16.mxu0 0
        %1586 = vmatmul.mubr.bf16.gmra.mrb[0].mxu0 %v1468
        %v1587 = vpop.f32.mrb[0].mxu0
        %v1588 = vadd.f32 0.0, %v1587
        %v1589 = vpop.f32.mrb[0].mxu0
        %v1590 = vadd.f32 0.0, %v1589
        %v1591 = vpop.f32.mrb[0].mxu0
        %v1592 = vadd.f32 0.0, %v1591
        %v1593 = vpop.f32.mrb[0].mxu0
        %v1594 = vadd.f32 0.0, %v1593
        %1595 = vmatprep.mubr.bf16.mxu0 0
        %1596 = vmatmul.mubr.bf16.gmra.mrb[0].mxu0 %v1471
        %v1597 = vpop.f32.mrb[0].mxu0
        %v1598 = vadd.f32 0.0, %v1597
        %v1599 = vpop.f32.mrb[0].mxu0
        %v1600 = vadd.f32 0.0, %v1599
        %v1601 = vpop.f32.mrb[0].mxu0
        %v1602 = vadd.f32 0.0, %v1601
        %v1603 = vpop.f32.mrb[0].mxu0
        %v1604 = vadd.f32 0.0, %v1603
        %1605 = vmatprep.mubr.bf16.mxu0 0
        %1606 = vmatmul.mubr.bf16.gmra.mrb[0].mxu0 %v1474
        %v1607 = vpop.f32.mrb[0].mxu0
        %v1608 = vadd.f32 0.0, %v1607
        %v1609 = vpop.f32.mrb[0].mxu0
        %v1610 = vadd.f32 0.0, %v1609
        %v1611 = vpop.f32.mrb[0].mxu0
        %v1612 = vadd.f32 0.0, %v1611
        %v1613 = vpop.f32.mrb[0].mxu0
        %v1614 = vadd.f32 0.0, %v1613
        %1615 = vmatprep.mubr.bf16.mxu0 0
        %1616 = vmatmul.mubr.bf16.gmra.mrb[0].mxu0 %v1477
        %v1617 = vpop.f32.mrb[0].mxu0
        %v1618 = vadd.f32 0.0, %v1617
        %v1619 = vpop.f32.mrb[0].mxu0
        %v1620 = vadd.f32 0.0, %v1619
        %v1621 = vpop.f32.mrb[0].mxu0
        %v1622 = vadd.f32 0.0, %v1621
        %v1623 = vpop.f32.mrb[0].mxu0
        %v1624 = vadd.f32 0.0, %v1623
        %1625 = vmatprep.mubr.bf16.mxu0 0
        %1626 = vmatmul.mubr.bf16.gmra.mrb[0].mxu0 %v1480
        %v1627 = vpop.f32.mrb[0].mxu0
        %v1628 = vadd.f32 0.0, %v1627
        %v1629 = vpop.f32.mrb[0].mxu0
        %v1630 = vadd.f32 0.0, %v1629
        %v1631 = vpop.f32.mrb[0].mxu0
        %v1632 = vadd.f32 0.0, %v1631
        %v1633 = vpop.f32.mrb[0].mxu0
        %v1634 = vadd.f32 0.0, %v1633
        %1635 = vmatprep.mubr.bf16.mxu0 0
        %1636 = vmatmul.mubr.bf16.gmra.mrb[0].mxu0 %v1483
        %v1637 = vpop.f32.mrb[0].mxu0
        %v1638 = vadd.f32 0.0, %v1637
        %v1639 = vpop.f32.mrb[0].mxu0
        %v1640 = vadd.f32 0.0, %v1639
        %v1641 = vpop.f32.mrb[0].mxu0
        %v1642 = vadd.f32 0.0, %v1641
        %v1643 = vpop.f32.mrb[0].mxu0
        %v1644 = vadd.f32 0.0, %v1643
        %1645 = vdwg.mxu0
        %v1646 = vmax.f32 %v1568, %v1570
        %1647 = vmax.xlane.f32.xlu0 %v1646
        %v1648 = vpop.xlane.xlu0 %1647
        %v1649 = vmax.f32 %v1572, %v1574
        %1650 = vmax.xlane.f32.xlu0 %v1649
        %v1651 = vpop.xlane.xlu0 %1650
        %v1652 = vmax.f32 %v1578, %v1580
        %1653 = vmax.xlane.f32.xlu0 %v1652
        %v1654 = vpop.xlane.xlu0 %1653
        %v1655 = vmax.f32 %v1582, %v1584
        %1656 = vmax.xlane.f32.xlu0 %v1655
        %v1657 = vpop.xlane.xlu0 %1656
        %v1658 = vmax.f32 %v1588, %v1590
        %1659 = vmax.xlane.f32.xlu0 %v1658
        %v1660 = vpop.xlane.xlu0 %1659
        %v1661 = vmax.f32 %v1592, %v1594
        %1662 = vmax.xlane.f32.xlu0 %v1661
        %v1663 = vpop.xlane.xlu0 %1662
        %v1664 = vmax.f32 %v1598, %v1600
        %1665 = vmax.xlane.f32.xlu0 %v1664
        %v1666 = vpop.xlane.xlu0 %1665
        %v1667 = vmax.f32 %v1602, %v1604
        %1668 = vmax.xlane.f32.xlu0 %v1667
        %v1669 = vpop.xlane.xlu0 %1668
        %v1670 = vmax.f32 %v1608, %v1610
        %1671 = vmax.xlane.f32.xlu0 %v1670
        %v1672 = vpop.xlane.xlu0 %1671
        %v1673 = vmax.f32 %v1612, %v1614
        %1674 = vmax.xlane.f32.xlu0 %v1673
        %v1675 = vpop.xlane.xlu0 %1674
        %v1676 = vmax.f32 %v1618, %v1620
        %1677 = vmax.xlane.f32.xlu0 %v1676
        %v1678 = vpop.xlane.xlu0 %1677
        %v1679 = vmax.f32 %v1622, %v1624
        %1680 = vmax.xlane.f32.xlu0 %v1679
        %v1681 = vpop.xlane.xlu0 %1680
        %v1682 = vmax.f32 %v1628, %v1630
        %1683 = vmax.xlane.f32.xlu0 %v1682
        %v1684 = vpop.xlane.xlu0 %1683
        %v1685 = vmax.f32 %v1632, %v1634
        %1686 = vmax.xlane.f32.xlu0 %v1685
        %v1687 = vpop.xlane.xlu0 %1686
        %v1688 = vmax.f32 %v1638, %v1640
        %1689 = vmax.xlane.f32.xlu0 %v1688
        %v1690 = vpop.xlane.xlu0 %1689
        %v1691 = vmax.f32 %v1642, %v1644
        %1692 = vmax.xlane.f32.xlu0 %v1691
        %v1693 = vpop.xlane.xlu0 %1692
        %v1694 = vsub.f32 %v1568, %v1648
        %v1695 = vsub.f32 %v1570, %v1648
        %v1696 = vsub.f32 %v1572, %v1651
        %v1697 = vsub.f32 %v1574, %v1651
        %v1698 = vsub.f32 %v1578, %v1654
        %v1699 = vsub.f32 %v1580, %v1654
        %v1700 = vsub.f32 %v1582, %v1657
        %v1701 = vsub.f32 %v1584, %v1657
        %v1702 = vsub.f32 %v1588, %v1660
        %v1703 = vsub.f32 %v1590, %v1660
        %v1704 = vsub.f32 %v1592, %v1663
        %v1705 = vsub.f32 %v1594, %v1663
        %v1706 = vsub.f32 %v1598, %v1666
        %v1707 = vsub.f32 %v1600, %v1666
        %v1708 = vsub.f32 %v1602, %v1669
        %v1709 = vsub.f32 %v1604, %v1669
        %v1710 = vsub.f32 %v1608, %v1672
        %v1711 = vsub.f32 %v1610, %v1672
        %v1712 = vsub.f32 %v1612, %v1675
        %v1713 = vsub.f32 %v1614, %v1675
        %v1714 = vsub.f32 %v1618, %v1678
        %v1715 = vsub.f32 %v1620, %v1678
        %v1716 = vsub.f32 %v1622, %v1681
        %v1717 = vsub.f32 %v1624, %v1681
        %v1718 = vsub.f32 %v1628, %v1684
        %v1719 = vsub.f32 %v1630, %v1684
        %v1720 = vsub.f32 %v1632, %v1687
        %v1721 = vsub.f32 %v1634, %v1687
        %v1722 = vsub.f32 %v1638, %v1690
        %v1723 = vsub.f32 %v1640, %v1690
        %v1724 = vsub.f32 %v1642, %v1693
        %v1725 = vsub.f32 %v1644, %v1693
        %v1726 = vmul.f32 %v1694, 1.442695
        %v1727 = vpow.pop %v1726
        %v1728 = vmul.f32 %v1695, 1.442695
        %v1729 = vpow.pop %v1728
        %v1730 = vmul.f32 %v1696, 1.442695
        %v1731 = vpow.pop %v1730
        %v1732 = vmul.f32 %v1697, 1.442695
        %v1733 = vpow.pop %v1732
        %v1734 = vmul.f32 %v1698, 1.442695
        %v1735 = vpow.pop %v1734
        %v1736 = vmul.f32 %v1699, 1.442695
        %v1737 = vpow.pop %v1736
        %v1738 = vmul.f32 %v1700, 1.442695
        %v1739 = vpow.pop %v1738
        %v1740 = vmul.f32 %v1701, 1.442695
        %v1741 = vpow.pop %v1740
        %v1742 = vmul.f32 %v1702, 1.442695
        %v1743 = vpow.pop %v1742
        %v1744 = vmul.f32 %v1703, 1.442695
        %v1745 = vpow.pop %v1744
        %v1746 = vmul.f32 %v1704, 1.442695
        %v1747 = vpow.pop %v1746
        %v1748 = vmul.f32 %v1705, 1.442695
        %v1749 = vpow.pop %v1748
        %v1750 = vmul.f32 %v1706, 1.442695
        %v1751 = vpow.pop %v1750
        %v1752 = vmul.f32 %v1707, 1.442695
        %v1753 = vpow.pop %v1752
        %v1754 = vmul.f32 %v1708, 1.442695
        %v1755 = vpow.pop %v1754
        %v1756 = vmul.f32 %v1709, 1.442695
        %v1757 = vpow.pop %v1756
        %v1758 = vmul.f32 %v1710, 1.442695
        %v1759 = vpow.pop %v1758
        %v1760 = vmul.f32 %v1711, 1.442695
        %v1761 = vpow.pop %v1760
        %v1762 = vmul.f32 %v1712, 1.442695
        %v1763 = vpow.pop %v1762
        %v1764 = vmul.f32 %v1713, 1.442695
        %v1765 = vpow.pop %v1764
        %v1766 = vmul.f32 %v1714, 1.442695
        %v1767 = vpow.pop %v1766
        %v1768 = vmul.f32 %v1715, 1.442695
        %v1769 = vpow.pop %v1768
        %v1770 = vmul.f32 %v1716, 1.442695
        %v1771 = vpow.pop %v1770
        %v1772 = vmul.f32 %v1717, 1.442695
        %v1773 = vpow.pop %v1772
        %v1774 = vmul.f32 %v1718, 1.442695
        %v1775 = vpow.pop %v1774
        %v1776 = vmul.f32 %v1719, 1.442695
        %v1777 = vpow.pop %v1776
        %v1778 = vmul.f32 %v1720, 1.442695
        %v1779 = vpow.pop %v1778
        %v1780 = vmul.f32 %v1721, 1.442695
        %v1781 = vpow.pop %v1780
        %v1782 = vmul.f32 %v1722, 1.442695
        %v1783 = vpow.pop %v1782
        %v1784 = vmul.f32 %v1723, 1.442695
        %v1785 = vpow.pop %v1784
        %v1786 = vmul.f32 %v1724, 1.442695
        %v1787 = vpow.pop %v1786
        %v1788 = vmul.f32 %v1725, 1.442695
        %v1789 = vpow.pop %v1788
        %v1790 = vadd.f32 %v1727, %v1729
        %1791 = vadd.xlane.f32.xlu0 %v1790
        %v1792 = vpop.xlane.xlu0 %1791
        %v1793 = vadd.f32 %v1731, %v1733
        %1794 = vadd.xlane.f32.xlu0 %v1793
        %v1795 = vpop.xlane.xlu0 %1794
        %v1796 = vadd.f32 %v1735, %v1737
        %1797 = vadd.xlane.f32.xlu0 %v1796
        %v1798 = vpop.xlane.xlu0 %1797
        %v1799 = vadd.f32 %v1739, %v1741
        %1800 = vadd.xlane.f32.xlu0 %v1799
        %v1801 = vpop.xlane.xlu0 %1800
        %v1802 = vadd.f32 %v1743, %v1745
        %1803 = vadd.xlane.f32.xlu0 %v1802
        %v1804 = vpop.xlane.xlu0 %1803
        %v1805 = vadd.f32 %v1747, %v1749
        %1806 = vadd.xlane.f32.xlu0 %v1805
        %v1807 = vpop.xlane.xlu0 %1806
        %v1808 = vadd.f32 %v1751, %v1753
        %1809 = vadd.xlane.f32.xlu0 %v1808
        %v1810 = vpop.xlane.xlu0 %1809
        %v1811 = vadd.f32 %v1755, %v1757
        %1812 = vadd.xlane.f32.xlu0 %v1811
        %v1813 = vpop.xlane.xlu0 %1812
        %v1814 = vadd.f32 %v1759, %v1761
        %1815 = vadd.xlane.f32.xlu0 %v1814
        %v1816 = vpop.xlane.xlu0 %1815
        %v1817 = vadd.f32 %v1763, %v1765
        %1818 = vadd.xlane.f32.xlu0 %v1817
        %v1819 = vpop.xlane.xlu0 %1818
        %v1820 = vadd.f32 %v1767, %v1769
        %1821 = vadd.xlane.f32.xlu0 %v1820
        %v1822 = vpop.xlane.xlu0 %1821
        %v1823 = vadd.f32 %v1771, %v1773
        %1824 = vadd.xlane.f32.xlu0 %v1823
        %v1825 = vpop.xlane.xlu0 %1824
        %v1826 = vadd.f32 %v1775, %v1777
        %1827 = vadd.xlane.f32.xlu0 %v1826
        %v1828 = vpop.xlane.xlu0 %1827
        %v1829 = vadd.f32 %v1779, %v1781
        %1830 = vadd.xlane.f32.xlu0 %v1829
        %v1831 = vpop.xlane.xlu0 %1830
        %v1832 = vadd.f32 %v1783, %v1785
        %1833 = vadd.xlane.f32.xlu0 %v1832
        %v1834 = vpop.xlane.xlu0 %1833
        %v1835 = vadd.f32 %v1787, %v1789
        %1836 = vadd.xlane.f32.xlu0 %v1835
        %v1837 = vpop.xlane.xlu0 %1836
        %v1838 = vrcp.pop %v1792
        %v1839 = vrcp.pop %v1795
        %v1840 = vrcp.pop %v1798
        %v1841 = vrcp.pop %v1801
        %v1842 = vrcp.pop %v1804
        %v1843 = vrcp.pop %v1807
        %v1844 = vrcp.pop %v1810
        %v1845 = vrcp.pop %v1813
        %v1846 = vrcp.pop %v1816
        %v1847 = vrcp.pop %v1819
        %v1848 = vrcp.pop %v1822
        %v1849 = vrcp.pop %v1825
        %v1850 = vrcp.pop %v1828
        %v1851 = vrcp.pop %v1831
        %v1852 = vrcp.pop %v1834
        %v1853 = vrcp.pop %v1837
        %v1854 = vmul.f32 %v1727, %v1838
        %v1855 = vmul.f32 %v1729, %v1838
        %v1856 = vmul.f32 %v1731, %v1839
        %v1857 = vmul.f32 %v1733, %v1839
        %v1858 = vmul.f32 %v1735, %v1840
        %v1859 = vmul.f32 %v1737, %v1840
        %v1860 = vmul.f32 %v1739, %v1841
        %v1861 = vmul.f32 %v1741, %v1841
        %v1862 = vmul.f32 %v1743, %v1842
        %v1863 = vmul.f32 %v1745, %v1842
        %v1864 = vmul.f32 %v1747, %v1843
        %v1865 = vmul.f32 %v1749, %v1843
        %v1866 = vmul.f32 %v1751, %v1844
        %v1867 = vmul.f32 %v1753, %v1844
        %v1868 = vmul.f32 %v1755, %v1845
        %v1869 = vmul.f32 %v1757, %v1845
        %v1870 = vmul.f32 %v1759, %v1846
        %v1871 = vmul.f32 %v1761, %v1846
        %v1872 = vmul.f32 %v1763, %v1847
        %v1873 = vmul.f32 %v1765, %v1847
        %v1874 = vmul.f32 %v1767, %v1848
        %v1875 = vmul.f32 %v1769, %v1848
        %v1876 = vmul.f32 %v1771, %v1849
        %v1877 = vmul.f32 %v1773, %v1849
        %v1878 = vmul.f32 %v1775, %v1850
        %v1879 = vmul.f32 %v1777, %v1850
        %v1880 = vmul.f32 %v1779, %v1851
        %v1881 = vmul.f32 %v1781, %v1851
        %v1882 = vmul.f32 %v1783, %v1852
        %v1883 = vmul.f32 %v1785, %v1852
        %v1884 = vmul.f32 %v1787, %v1853
        %v1885 = vmul.f32 %v1789, %v1853
        %v1886 = vpack.c.bf16 %v1856, %v1854
        %v1887 = vpack.c.bf16 %v1857, %v1855
        %v1888 = vpack.c.bf16 %v1860, %v1858
        %v1889 = vpack.c.bf16 %v1861, %v1859
        %v1890 = vpack.c.bf16 %v1864, %v1862
        %v1891 = vpack.c.bf16 %v1865, %v1863
        %v1892 = vpack.c.bf16 %v1868, %v1866
        %v1893 = vpack.c.bf16 %v1869, %v1867
        %v1894 = vpack.c.bf16 %v1872, %v1870
        %v1895 = vpack.c.bf16 %v1873, %v1871
        %v1896 = vpack.c.bf16 %v1876, %v1874
        %v1897 = vpack.c.bf16 %v1877, %v1875
        %v1898 = vpack.c.bf16 %v1880, %v1878
        %v1899 = vpack.c.bf16 %v1881, %v1879
        %v1900 = vpack.c.bf16 %v1884, %v1882
        %v1901 = vpack.c.bf16 %v1885, %v1883
        %1902 = vrot.lane.b32.xlu0 %v1260, 96
        %v1903 = vpop.permute.xlu0 %1902
        %1904 = vrot.lane.b32.xlu0 %v1261, 96
        %v1905 = vpop.permute.xlu0 %1904
        %1906 = vrot.lane.b32.xlu0 %v1262, 96
        %v1907 = vpop.permute.xlu0 %1906
        %1908 = vrot.lane.b32.xlu0 %v1263, 96
        %v1909 = vpop.permute.xlu0 %1908
        %1910 = vrot.lane.b32.xlu0 %v1264, 96
        %v1911 = vpop.permute.xlu0 %1910
        %1912 = vrot.lane.b32.xlu0 %v1265, 96
        %v1913 = vpop.permute.xlu0 %1912
        %1914 = vrot.lane.b32.xlu0 %v1266, 96
        %v1915 = vpop.permute.xlu0 %1914
        %1916 = vrot.lane.b32.xlu0 %v1267, 96
        %v1917 = vpop.permute.xlu0 %1916
        %1918 = vrot.lane.b32.xlu0 %v1268, 96
        %v1919 = vpop.permute.xlu0 %1918
        %1920 = vrot.lane.b32.xlu0 %v1269, 96
        %v1921 = vpop.permute.xlu0 %1920
        %1922 = vrot.lane.b32.xlu0 %v1270, 96
        %v1923 = vpop.permute.xlu0 %1922
        %1924 = vrot.lane.b32.xlu0 %v1271, 96
        %v1925 = vpop.permute.xlu0 %1924
        %1926 = vrot.lane.b32.xlu0 %v1272, 96
        %v1927 = vpop.permute.xlu0 %1926
        %1928 = vrot.lane.b32.xlu0 %v1273, 96
        %v1929 = vpop.permute.xlu0 %1928
        %1930 = vrot.lane.b32.xlu0 %v1274, 96
        %v1931 = vpop.permute.xlu0 %1930
        %1932 = vrot.lane.b32.xlu0 %v1275, 96
        %v1933 = vpop.permute.xlu0 %1932
        %1950 = vmatprep.subr.bf16.mxu0 0
        %1951 = vmatpush1.bf16.msra.mxu0 %v1903
        %1952 = vmatprep.subr.bf16.mxu0 0
        %1953 = vmatpush1.bf16.msra.mxu0 %v1905
        %1954 = vmatprep.subr.bf16.mxu0 0
        %1955 = vmatpush1.bf16.msra.mxu0 %v1907
        %1956 = vmatprep.subr.bf16.mxu0 0
        %1957 = vmatpush1.bf16.msra.mxu0 %v1909
        %1958 = vmatprep.subr.bf16.mxu0 0
        %1959 = vmatpush1.bf16.msra.mxu0 %v1911
        %1960 = vmatprep.subr.bf16.mxu0 0
        %1961 = vmatpush1.bf16.msra.mxu0 %v1913
        %1962 = vmatprep.subr.bf16.mxu0 0
        %1963 = vmatpush1.bf16.msra.mxu0 %v1915
        %1964 = vmatprep.subr.bf16.mxu0 0
        %1965 = vmatpush1.bf16.msra.mxu0 %v1917
        %1966 = vmatprep.subr.bf16.mxu0 0
        %1967 = vmatpush1.bf16.msra.mxu0 %v1919
        %1968 = vmatprep.subr.bf16.mxu0 0
        %1969 = vmatpush1.bf16.msra.mxu0 %v1921
        %1970 = vmatprep.subr.bf16.mxu0 0
        %1971 = vmatpush1.bf16.msra.mxu0 %v1923
        %1972 = vmatprep.subr.bf16.mxu0 0
        %1973 = vmatpush1.bf16.msra.mxu0 %v1925
        %1974 = vmatprep.subr.bf16.mxu0 0
        %1975 = vmatpush1.bf16.msra.mxu0 %v1927
        %1976 = vmatprep.subr.bf16.mxu0 0
        %1977 = vmatpush1.bf16.msra.mxu0 %v1929
        %1978 = vmatprep.subr.bf16.mxu0 0
        %1979 = vmatpush1.bf16.msra.mxu0 %v1931
        %1980 = vmatprep.subr.bf16.mxu0 0
        %1981 = vmatpush1.bf16.msra.mxu0 %v1933
        %1982 = vmatprep.mubr.bf16.mxu0 %v1887
        %1983 = vmatmul.mubr.bf16.gmra.mrb[0].mxu0 %v1886
        %v1984 = vpop.f32.mrb[0].mxu0
        %v1985 = vadd.f32 0.0, %v1984
        %v1986 = vpop.f32.mrb[0].mxu0
        %v1987 = vpop.f32.mrb[0].mxu0
        %v1988 = vadd.f32 0.0, %v1987
        %v1989 = vpop.f32.mrb[0].mxu0
        %1990 = vmatprep.mubr.bf16.mxu0 %v1889
        %1991 = vmatmul.mubr.bf16.gmra.mrb[0].mxu0 %v1888
        %v1992 = vpop.f32.mrb[0].mxu0
        %v1993 = vadd.f32 0.0, %v1992
        %v1994 = vpop.f32.mrb[0].mxu0
        %v1995 = vpop.f32.mrb[0].mxu0
        %v1996 = vadd.f32 0.0, %v1995
        %v1997 = vpop.f32.mrb[0].mxu0
        %1998 = vmatprep.mubr.bf16.mxu0 %v1891
        %1999 = vmatmul.mubr.bf16.gmra.mrb[0].mxu0 %v1890
        %v2000 = vpop.f32.mrb[0].mxu0
        %v2001 = vadd.f32 0.0, %v2000
        %v2002 = vpop.f32.mrb[0].mxu0
        %v2003 = vpop.f32.mrb[0].mxu0
        %v2004 = vadd.f32 0.0, %v2003
        %v2005 = vpop.f32.mrb[0].mxu0
        %2006 = vmatprep.mubr.bf16.mxu0 %v1893
        %2007 = vmatmul.mubr.bf16.gmra.mrb[0].mxu0 %v1892
        %v2008 = vpop.f32.mrb[0].mxu0
        %v2009 = vadd.f32 0.0, %v2008
        %v2010 = vpop.f32.mrb[0].mxu0
        %v2011 = vpop.f32.mrb[0].mxu0
        %v2012 = vadd.f32 0.0, %v2011
        %v2013 = vpop.f32.mrb[0].mxu0
        %2014 = vmatprep.mubr.bf16.mxu0 %v1895
        %2015 = vmatmul.mubr.bf16.gmra.mrb[0].mxu0 %v1894
        %v2016 = vpop.f32.mrb[0].mxu0
        %v2017 = vadd.f32 0.0, %v2016
        %v2018 = vpop.f32.mrb[0].mxu0
        %v2019 = vpop.f32.mrb[0].mxu0
        %v2020 = vadd.f32 0.0, %v2019
        %v2021 = vpop.f32.mrb[0].mxu0
        %2022 = vmatprep.mubr.bf16.mxu0 %v1897
        %2023 = vmatmul.mubr.bf16.gmra.mrb[0].mxu0 %v1896
        %v2024 = vpop.f32.mrb[0].mxu0
        %v2025 = vadd.f32 0.0, %v2024
        %v2026 = vpop.f32.mrb[0].mxu0
        %v2027 = vpop.f32.mrb[0].mxu0
        %v2028 = vadd.f32 0.0, %v2027
        %v2029 = vpop.f32.mrb[0].mxu0
        %2030 = vmatprep.mubr.bf16.mxu0 %v1899
        %2031 = vmatmul.mubr.bf16.gmra.mrb[0].mxu0 %v1898
        %v2032 = vpop.f32.mrb[0].mxu0
        %v2033 = vadd.f32 0.0, %v2032
        %v2034 = vpop.f32.mrb[0].mxu0
        %v2035 = vpop.f32.mrb[0].mxu0
        %v2036 = vadd.f32 0.0, %v2035
        %v2037 = vpop.f32.mrb[0].mxu0
        %2038 = vmatprep.mubr.bf16.mxu0 %v1901
        %2039 = vmatmul.mubr.bf16.gmra.mrb[0].mxu0 %v1900
        %v2040 = vpop.f32.mrb[0].mxu0
        %v2041 = vadd.f32 0.0, %v2040
        %v2042 = vpop.f32.mrb[0].mxu0
        %v2043 = vpop.f32.mrb[0].mxu0
        %v2044 = vadd.f32 0.0, %v2043
        %v2045 = vpop.f32.mrb[0].mxu0
        %2046 = vdwg.mxu0
        %v2047 = vpack.c.bf16 %v1988, %v1985
        %v2048 = vpack.c.bf16 %v1996, %v1993
        %v2049 = vpack.c.bf16 %v2004, %v2001
        %v2050 = vpack.c.bf16 %v2012, %v2009
        %v2051 = vpack.c.bf16 %v2020, %v2017
        %v2052 = vpack.c.bf16 %v2028, %v2025
        %v2053 = vpack.c.bf16 %v2036, %v2033
        %v2054 = vpack.c.bf16 %v2044, %v2041
        %2063 = vrot.lane.b32.xlu0 %v2047, 32
        %v2064 = vpop.permute.xlu0 %2063
        %2065 = vrot.lane.b32.xlu0 %v2048, 32
        %v2066 = vpop.permute.xlu0 %2065
        %2067 = vrot.lane.b32.xlu0 %v2049, 32
        %v2068 = vpop.permute.xlu0 %2067
        %2069 = vrot.lane.b32.xlu0 %v2050, 32
        %v2070 = vpop.permute.xlu0 %2069
        %2071 = vrot.lane.b32.xlu0 %v2051, 32
        %v2072 = vpop.permute.xlu0 %2071
        %2073 = vrot.lane.b32.xlu0 %v2052, 32
        %v2074 = vpop.permute.xlu0 %2073
        %2075 = vrot.lane.b32.xlu0 %v2053, 32
        %v2076 = vpop.permute.xlu0 %2075
        %2077 = vrot.lane.b32.xlu0 %v2054, 32
        %v2078 = vpop.permute.xlu0 %2077
        %vm2087 = vcmask 523520
        %2088 = vst.msk [vmem:[#allocation2] sm:$0xff] %vm2087, %v2064
        %2089 = vst.msk [vmem:[#allocation2 + $0x8] sm:$0xff] %vm2087, %v2066
        %2090 = vst.msk [vmem:[#allocation2 + $0x10] sm:$0xff] %vm2087, %v2068
        %2091 = vst.msk [vmem:[#allocation2 + $0x18] sm:$0xff] %vm2087, %v2070
        %2092 = vst.msk [vmem:[#allocation2 + $0x20] sm:$0xff] %vm2087, %v2072
        %2093 = vst.msk [vmem:[#allocation2 + $0x28] sm:$0xff] %vm2087, %v2074
        %2094 = vst.msk [vmem:[#allocation2 + $0x30] sm:$0xff] %vm2087, %v2076
        %2095 = vst.msk [vmem:[#allocation2 + $0x38] sm:$0xff] %vm2087, %v2078
        %2096 = vrot.lane.b32.xlu0 %v602, 64
        %v2097 = vpop.permute.xlu0 %2096
        %2098 = vrot.lane.b32.xlu0 %v603, 64
        %v2099 = vpop.permute.xlu0 %2098
        %2100 = vrot.lane.b32.xlu0 %v604, 64
        %v2101 = vpop.permute.xlu0 %2100
        %2102 = vrot.lane.b32.xlu0 %v605, 64
        %v2103 = vpop.permute.xlu0 %2102
        %2104 = vrot.lane.b32.xlu0 %v606, 64
        %v2105 = vpop.permute.xlu0 %2104
        %2106 = vrot.lane.b32.xlu0 %v607, 64
        %v2107 = vpop.permute.xlu0 %2106
        %2108 = vrot.lane.b32.xlu0 %v608, 64
        %v2109 = vpop.permute.xlu0 %2108
        %2110 = vrot.lane.b32.xlu0 %v609, 64
        %v2111 = vpop.permute.xlu0 %2110
        %2112 = vrot.lane.b32.xlu0 %v738, 64
        %v2113 = vpop.permute.xlu0 %2112
        %2114 = vrot.lane.b32.xlu0 %v739, 64
        %v2115 = vpop.permute.xlu0 %2114
        %2116 = vrot.lane.b32.xlu0 %v740, 64
        %v2117 = vpop.permute.xlu0 %2116
        %2118 = vrot.lane.b32.xlu0 %v741, 64
        %v2119 = vpop.permute.xlu0 %2118
        %2120 = vrot.lane.b32.xlu0 %v742, 64
        %v2121 = vpop.permute.xlu0 %2120
        %2122 = vrot.lane.b32.xlu0 %v743, 64
        %v2123 = vpop.permute.xlu0 %2122
        %2124 = vrot.lane.b32.xlu0 %v744, 64
        %v2125 = vpop.permute.xlu0 %2124
        %2126 = vrot.lane.b32.xlu0 %v745, 64
        %v2127 = vpop.permute.xlu0 %2126
        %2128 = vrot.lane.b32.xlu0 %v746, 64
        %v2129 = vpop.permute.xlu0 %2128
        %2130 = vrot.lane.b32.xlu0 %v747, 64
        %v2131 = vpop.permute.xlu0 %2130
        %2132 = vrot.lane.b32.xlu0 %v748, 64
        %v2133 = vpop.permute.xlu0 %2132
        %2134 = vrot.lane.b32.xlu0 %v749, 64
        %v2135 = vpop.permute.xlu0 %2134
        %2136 = vrot.lane.b32.xlu0 %v750, 64
        %v2137 = vpop.permute.xlu0 %2136
        %2138 = vrot.lane.b32.xlu0 %v751, 64
        %v2139 = vpop.permute.xlu0 %2138
        %2140 = vrot.lane.b32.xlu0 %v752, 64
        %v2141 = vpop.permute.xlu0 %2140
        %2142 = vrot.lane.b32.xlu0 %v753, 64
        %v2143 = vpop.permute.xlu0 %2142
        %v2145 = vsel %vm754, %v2097, 0
        %v2148 = vsel %vm754, %v2099, 0
        %v2151 = vsel %vm754, %v2101, 0
        %v2154 = vsel %vm754, %v2103, 0
        %v2157 = vsel %vm754, %v2105, 0
        %v2160 = vsel %vm754, %v2107, 0
        %v2163 = vsel %vm754, %v2109, 0
        %v2166 = vsel %vm754, %v2111, 0
        %v2169 = vsel %vm754, %v2113, 0
        %v2172 = vsel %vm754, %v2115, 0
        %v2175 = vsel %vm754, %v2117, 0
        %v2178 = vsel %vm754, %v2119, 0
        %v2181 = vsel %vm754, %v2121, 0
        %v2184 = vsel %vm754, %v2123, 0
        %v2187 = vsel %vm754, %v2125, 0
        %v2190 = vsel %vm754, %v2127, 0
        %v2193 = vsel %vm754, %v2129, 0
        %v2196 = vsel %vm754, %v2131, 0
        %v2199 = vsel %vm754, %v2133, 0
        %v2202 = vsel %vm754, %v2135, 0
        %v2205 = vsel %vm754, %v2137, 0
        %v2208 = vsel %vm754, %v2139, 0
        %v2211 = vsel %vm754, %v2141, 0
        %v2214 = vsel %vm754, %v2143, 0
        %2216 = vmatprep.subr.bf16.mxu0 0
        %2217 = vmatpush1.bf16.xpose.msra.mxu0 %v2169
        %2218 = vmatprep.subr.bf16.mxu0 0
        %2219 = vmatpush1.bf16.xpose.msra.mxu0 %v2172
        %2220 = vmatprep.subr.bf16.mxu0 0
        %2221 = vmatpush1.bf16.xpose.msra.mxu0 %v2175
        %2222 = vmatprep.subr.bf16.mxu0 0
        %2223 = vmatpush1.bf16.xpose.msra.mxu0 %v2178
        %2224 = vmatprep.subr.bf16.mxu0 0
        %2225 = vmatpush1.bf16.xpose.msra.mxu0 %v2181
        %2226 = vmatprep.subr.bf16.mxu0 0
        %2227 = vmatpush1.bf16.xpose.msra.mxu0 %v2184
        %2228 = vmatprep.subr.bf16.mxu0 0
        %2229 = vmatpush1.bf16.xpose.msra.mxu0 %v2187
        %2230 = vmatprep.subr.bf16.mxu0 0
        %2231 = vmatpush1.bf16.xpose.msra.mxu0 %v2190
        %2232 = vmatprep.subr.bf16.mxu0 0
        %2233 = vmatpush1.bf16.xpose.msra.mxu0 %v2193
        %2234 = vmatprep.subr.bf16.mxu0 0
        %2235 = vmatpush1.bf16.xpose.msra.mxu0 %v2196
        %2236 = vmatprep.subr.bf16.mxu0 0
        %2237 = vmatpush1.bf16.xpose.msra.mxu0 %v2199
        %2238 = vmatprep.subr.bf16.mxu0 0
        %2239 = vmatpush1.bf16.xpose.msra.mxu0 %v2202
        %2240 = vmatprep.subr.bf16.mxu0 0
        %2241 = vmatpush1.bf16.xpose.msra.mxu0 %v2205
        %2242 = vmatprep.subr.bf16.mxu0 0
        %2243 = vmatpush1.bf16.xpose.msra.mxu0 %v2208
        %2244 = vmatprep.subr.bf16.mxu0 0
        %2245 = vmatpush1.bf16.xpose.msra.mxu0 %v2211
        %2246 = vmatprep.subr.bf16.mxu0 0
        %2247 = vmatpush1.bf16.xpose.msra.mxu0 %v2214
        %2248 = vmatprep.mubr.bf16.mxu0 0
        %2249 = vmatmul.mubr.bf16.gmra.mrb[0].mxu0 %v2145
        %v2250 = vpop.f32.mrb[0].mxu0
        %v2251 = vadd.f32 0.0, %v2250
        %v2252 = vpop.f32.mrb[0].mxu0
        %v2253 = vadd.f32 0.0, %v2252
        %v2254 = vpop.f32.mrb[0].mxu0
        %v2255 = vadd.f32 0.0, %v2254
        %v2256 = vpop.f32.mrb[0].mxu0
        %v2257 = vadd.f32 0.0, %v2256
        %2258 = vmatprep.mubr.bf16.mxu0 0
        %2259 = vmatmul.mubr.bf16.gmra.mrb[0].mxu0 %v2148
        %v2260 = vpop.f32.mrb[0].mxu0
        %v2261 = vadd.f32 0.0, %v2260
        %v2262 = vpop.f32.mrb[0].mxu0
        %v2263 = vadd.f32 0.0, %v2262
        %v2264 = vpop.f32.mrb[0].mxu0
        %v2265 = vadd.f32 0.0, %v2264
        %v2266 = vpop.f32.mrb[0].mxu0
        %v2267 = vadd.f32 0.0, %v2266
        %2268 = vmatprep.mubr.bf16.mxu0 0
        %2269 = vmatmul.mubr.bf16.gmra.mrb[0].mxu0 %v2151
        %v2270 = vpop.f32.mrb[0].mxu0
        %v2271 = vadd.f32 0.0, %v2270
        %v2272 = vpop.f32.mrb[0].mxu0
        %v2273 = vadd.f32 0.0, %v2272
        %v2274 = vpop.f32.mrb[0].mxu0
        %v2275 = vadd.f32 0.0, %v2274
        %v2276 = vpop.f32.mrb[0].mxu0
        %v2277 = vadd.f32 0.0, %v2276
        %2278 = vmatprep.mubr.bf16.mxu0 0
        %2279 = vmatmul.mubr.bf16.gmra.mrb[0].mxu0 %v2154
        %v2280 = vpop.f32.mrb[0].mxu0
        %v2281 = vadd.f32 0.0, %v2280
        %v2282 = vpop.f32.mrb[0].mxu0
        %v2283 = vadd.f32 0.0, %v2282
        %v2284 = vpop.f32.mrb[0].mxu0
        %v2285 = vadd.f32 0.0, %v2284
        %v2286 = vpop.f32.mrb[0].mxu0
        %v2287 = vadd.f32 0.0, %v2286
        %2288 = vmatprep.mubr.bf16.mxu0 0
        %2289 = vmatmul.mubr.bf16.gmra.mrb[0].mxu0 %v2157
        %v2290 = vpop.f32.mrb[0].mxu0
        %v2291 = vadd.f32 0.0, %v2290
        %v2292 = vpop.f32.mrb[0].mxu0
        %v2293 = vadd.f32 0.0, %v2292
        %v2294 = vpop.f32.mrb[0].mxu0
        %v2295 = vadd.f32 0.0, %v2294
        %v2296 = vpop.f32.mrb[0].mxu0
        %v2297 = vadd.f32 0.0, %v2296
        %2298 = vmatprep.mubr.bf16.mxu0 0
        %2299 = vmatmul.mubr.bf16.gmra.mrb[0].mxu0 %v2160
        %v2300 = vpop.f32.mrb[0].mxu0
        %v2301 = vadd.f32 0.0, %v2300
        %v2302 = vpop.f32.mrb[0].mxu0
        %v2303 = vadd.f32 0.0, %v2302
        %v2304 = vpop.f32.mrb[0].mxu0
        %v2305 = vadd.f32 0.0, %v2304
        %v2306 = vpop.f32.mrb[0].mxu0
        %v2307 = vadd.f32 0.0, %v2306
        %2308 = vmatprep.mubr.bf16.mxu0 0
        %2309 = vmatmul.mubr.bf16.gmra.mrb[0].mxu0 %v2163
        %v2310 = vpop.f32.mrb[0].mxu0
        %v2311 = vadd.f32 0.0, %v2310
        %v2312 = vpop.f32.mrb[0].mxu0
        %v2313 = vadd.f32 0.0, %v2312
        %v2314 = vpop.f32.mrb[0].mxu0
        %v2315 = vadd.f32 0.0, %v2314
        %v2316 = vpop.f32.mrb[0].mxu0
        %v2317 = vadd.f32 0.0, %v2316
        %2318 = vmatprep.mubr.bf16.mxu0 0
        %2319 = vmatmul.mubr.bf16.gmra.mrb[0].mxu0 %v2166
        %v2320 = vpop.f32.mrb[0].mxu0
        %v2321 = vadd.f32 0.0, %v2320
        %v2322 = vpop.f32.mrb[0].mxu0
        %v2323 = vadd.f32 0.0, %v2322
        %v2324 = vpop.f32.mrb[0].mxu0
        %v2325 = vadd.f32 0.0, %v2324
        %v2326 = vpop.f32.mrb[0].mxu0
        %v2327 = vadd.f32 0.0, %v2326
        %2328 = vdwg.mxu0
        %v2329 = vmax.f32 %v2251, %v2253
        %2330 = vmax.xlane.f32.xlu0 %v2329
        %v2331 = vpop.xlane.xlu0 %2330
        %v2332 = vmax.f32 %v2255, %v2257
        %2333 = vmax.xlane.f32.xlu0 %v2332
        %v2334 = vpop.xlane.xlu0 %2333
        %v2335 = vmax.f32 %v2261, %v2263
        %2336 = vmax.xlane.f32.xlu0 %v2335
        %v2337 = vpop.xlane.xlu0 %2336
        %v2338 = vmax.f32 %v2265, %v2267
        %2339 = vmax.xlane.f32.xlu0 %v2338
        %v2340 = vpop.xlane.xlu0 %2339
        %v2341 = vmax.f32 %v2271, %v2273
        %2342 = vmax.xlane.f32.xlu0 %v2341
        %v2343 = vpop.xlane.xlu0 %2342
        %v2344 = vmax.f32 %v2275, %v2277
        %2345 = vmax.xlane.f32.xlu0 %v2344
        %v2346 = vpop.xlane.xlu0 %2345
        %v2347 = vmax.f32 %v2281, %v2283
        %2348 = vmax.xlane.f32.xlu0 %v2347
        %v2349 = vpop.xlane.xlu0 %2348
        %v2350 = vmax.f32 %v2285, %v2287
        %2351 = vmax.xlane.f32.xlu0 %v2350
        %v2352 = vpop.xlane.xlu0 %2351
        %v2353 = vmax.f32 %v2291, %v2293
        %2354 = vmax.xlane.f32.xlu0 %v2353
        %v2355 = vpop.xlane.xlu0 %2354
        %v2356 = vmax.f32 %v2295, %v2297
        %2357 = vmax.xlane.f32.xlu0 %v2356
        %v2358 = vpop.xlane.xlu0 %2357
        %v2359 = vmax.f32 %v2301, %v2303
        %2360 = vmax.xlane.f32.xlu0 %v2359
        %v2361 = vpop.xlane.xlu0 %2360
        %v2362 = vmax.f32 %v2305, %v2307
        %2363 = vmax.xlane.f32.xlu0 %v2362
        %v2364 = vpop.xlane.xlu0 %2363
        %v2365 = vmax.f32 %v2311, %v2313
        %2366 = vmax.xlane.f32.xlu0 %v2365
        %v2367 = vpop.xlane.xlu0 %2366
        %v2368 = vmax.f32 %v2315, %v2317
        %2369 = vmax.xlane.f32.xlu0 %v2368
        %v2370 = vpop.xlane.xlu0 %2369
        %v2371 = vmax.f32 %v2321, %v2323
        %2372 = vmax.xlane.f32.xlu0 %v2371
        %v2373 = vpop.xlane.xlu0 %2372
        %v2374 = vmax.f32 %v2325, %v2327
        %2375 = vmax.xlane.f32.xlu0 %v2374
        %v2376 = vpop.xlane.xlu0 %2375
        %v2377 = vsub.f32 %v2251, %v2331
        %v2378 = vsub.f32 %v2253, %v2331
        %v2379 = vsub.f32 %v2255, %v2334
        %v2380 = vsub.f32 %v2257, %v2334
        %v2381 = vsub.f32 %v2261, %v2337
        %v2382 = vsub.f32 %v2263, %v2337
        %v2383 = vsub.f32 %v2265, %v2340
        %v2384 = vsub.f32 %v2267, %v2340
        %v2385 = vsub.f32 %v2271, %v2343
        %v2386 = vsub.f32 %v2273, %v2343
        %v2387 = vsub.f32 %v2275, %v2346
        %v2388 = vsub.f32 %v2277, %v2346
        %v2389 = vsub.f32 %v2281, %v2349
        %v2390 = vsub.f32 %v2283, %v2349
        %v2391 = vsub.f32 %v2285, %v2352
        %v2392 = vsub.f32 %v2287, %v2352
        %v2393 = vsub.f32 %v2291, %v2355
        %v2394 = vsub.f32 %v2293, %v2355
        %v2395 = vsub.f32 %v2295, %v2358
        %v2396 = vsub.f32 %v2297, %v2358
        %v2397 = vsub.f32 %v2301, %v2361
        %v2398 = vsub.f32 %v2303, %v2361
        %v2399 = vsub.f32 %v2305, %v2364
        %v2400 = vsub.f32 %v2307, %v2364
        %v2401 = vsub.f32 %v2311, %v2367
        %v2402 = vsub.f32 %v2313, %v2367
        %v2403 = vsub.f32 %v2315, %v2370
        %v2404 = vsub.f32 %v2317, %v2370
        %v2405 = vsub.f32 %v2321, %v2373
        %v2406 = vsub.f32 %v2323, %v2373
        %v2407 = vsub.f32 %v2325, %v2376
        %v2408 = vsub.f32 %v2327, %v2376
        %v2409 = vmul.f32 %v2377, 1.442695
        %v2410 = vpow.pop %v2409
        %v2411 = vmul.f32 %v2378, 1.442695
        %v2412 = vpow.pop %v2411
        %v2413 = vmul.f32 %v2379, 1.442695
        %v2414 = vpow.pop %v2413
        %v2415 = vmul.f32 %v2380, 1.442695
        %v2416 = vpow.pop %v2415
        %v2417 = vmul.f32 %v2381, 1.442695
        %v2418 = vpow.pop %v2417
        %v2419 = vmul.f32 %v2382, 1.442695
        %v2420 = vpow.pop %v2419
        %v2421 = vmul.f32 %v2383, 1.442695
        %v2422 = vpow.pop %v2421
        %v2423 = vmul.f32 %v2384, 1.442695
        %v2424 = vpow.pop %v2423
        %v2425 = vmul.f32 %v2385, 1.442695
        %v2426 = vpow.pop %v2425
        %v2427 = vmul.f32 %v2386, 1.442695
        %v2428 = vpow.pop %v2427
        %v2429 = vmul.f32 %v2387, 1.442695
        %v2430 = vpow.pop %v2429
        %v2431 = vmul.f32 %v2388, 1.442695
        %v2432 = vpow.pop %v2431
        %v2433 = vmul.f32 %v2389, 1.442695
        %v2434 = vpow.pop %v2433
        %v2435 = vmul.f32 %v2390, 1.442695
        %v2436 = vpow.pop %v2435
        %v2437 = vmul.f32 %v2391, 1.442695
        %v2438 = vpow.pop %v2437
        %v2439 = vmul.f32 %v2392, 1.442695
        %v2440 = vpow.pop %v2439
        %v2441 = vmul.f32 %v2393, 1.442695
        %v2442 = vpow.pop %v2441
        %v2443 = vmul.f32 %v2394, 1.442695
        %v2444 = vpow.pop %v2443
        %v2445 = vmul.f32 %v2395, 1.442695
        %v2446 = vpow.pop %v2445
        %v2447 = vmul.f32 %v2396, 1.442695
        %v2448 = vpow.pop %v2447
        %v2449 = vmul.f32 %v2397, 1.442695
        %v2450 = vpow.pop %v2449
        %v2451 = vmul.f32 %v2398, 1.442695
        %v2452 = vpow.pop %v2451
        %v2453 = vmul.f32 %v2399, 1.442695
        %v2454 = vpow.pop %v2453
        %v2455 = vmul.f32 %v2400, 1.442695
        %v2456 = vpow.pop %v2455
        %v2457 = vmul.f32 %v2401, 1.442695
        %v2458 = vpow.pop %v2457
        %v2459 = vmul.f32 %v2402, 1.442695
        %v2460 = vpow.pop %v2459
        %v2461 = vmul.f32 %v2403, 1.442695
        %v2462 = vpow.pop %v2461
        %v2463 = vmul.f32 %v2404, 1.442695
        %v2464 = vpow.pop %v2463
        %v2465 = vmul.f32 %v2405, 1.442695
        %v2466 = vpow.pop %v2465
        %v2467 = vmul.f32 %v2406, 1.442695
        %v2468 = vpow.pop %v2467
        %v2469 = vmul.f32 %v2407, 1.442695
        %v2470 = vpow.pop %v2469
        %v2471 = vmul.f32 %v2408, 1.442695
        %v2472 = vpow.pop %v2471
        %v2473 = vadd.f32 %v2410, %v2412
        %2474 = vadd.xlane.f32.xlu0 %v2473
        %v2475 = vpop.xlane.xlu0 %2474
        %v2476 = vadd.f32 %v2414, %v2416
        %2477 = vadd.xlane.f32.xlu0 %v2476
        %v2478 = vpop.xlane.xlu0 %2477
        %v2479 = vadd.f32 %v2418, %v2420
        %2480 = vadd.xlane.f32.xlu0 %v2479
        %v2481 = vpop.xlane.xlu0 %2480
        %v2482 = vadd.f32 %v2422, %v2424
        %2483 = vadd.xlane.f32.xlu0 %v2482
        %v2484 = vpop.xlane.xlu0 %2483
        %v2485 = vadd.f32 %v2426, %v2428
        %2486 = vadd.xlane.f32.xlu0 %v2485
        %v2487 = vpop.xlane.xlu0 %2486
        %v2488 = vadd.f32 %v2430, %v2432
        %2489 = vadd.xlane.f32.xlu0 %v2488
        %v2490 = vpop.xlane.xlu0 %2489
        %v2491 = vadd.f32 %v2434, %v2436
        %2492 = vadd.xlane.f32.xlu0 %v2491
        %v2493 = vpop.xlane.xlu0 %2492
        %v2494 = vadd.f32 %v2438, %v2440
        %2495 = vadd.xlane.f32.xlu0 %v2494
        %v2496 = vpop.xlane.xlu0 %2495
        %v2497 = vadd.f32 %v2442, %v2444
        %2498 = vadd.xlane.f32.xlu0 %v2497
        %v2499 = vpop.xlane.xlu0 %2498
        %v2500 = vadd.f32 %v2446, %v2448
        %2501 = vadd.xlane.f32.xlu0 %v2500
        %v2502 = vpop.xlane.xlu0 %2501
        %v2503 = vadd.f32 %v2450, %v2452
        %2504 = vadd.xlane.f32.xlu0 %v2503
        %v2505 = vpop.xlane.xlu0 %2504
        %v2506 = vadd.f32 %v2454, %v2456
        %2507 = vadd.xlane.f32.xlu0 %v2506
        %v2508 = vpop.xlane.xlu0 %2507
        %v2509 = vadd.f32 %v2458, %v2460
        %2510 = vadd.xlane.f32.xlu0 %v2509
        %v2511 = vpop.xlane.xlu0 %2510
        %v2512 = vadd.f32 %v2462, %v2464
        %2513 = vadd.xlane.f32.xlu0 %v2512
        %v2514 = vpop.xlane.xlu0 %2513
        %v2515 = vadd.f32 %v2466, %v2468
        %2516 = vadd.xlane.f32.xlu0 %v2515
        %v2517 = vpop.xlane.xlu0 %2516
        %v2518 = vadd.f32 %v2470, %v2472
        %2519 = vadd.xlane.f32.xlu0 %v2518
        %v2520 = vpop.xlane.xlu0 %2519
        %v2521 = vrcp.pop %v2475
        %v2522 = vrcp.pop %v2478
        %v2523 = vrcp.pop %v2481
        %v2524 = vrcp.pop %v2484
        %v2525 = vrcp.pop %v2487
        %v2526 = vrcp.pop %v2490
        %v2527 = vrcp.pop %v2493
        %v2528 = vrcp.pop %v2496
        %v2529 = vrcp.pop %v2499
        %v2530 = vrcp.pop %v2502
        %v2531 = vrcp.pop %v2505
        %v2532 = vrcp.pop %v2508
        %v2533 = vrcp.pop %v2511
        %v2534 = vrcp.pop %v2514
        %v2535 = vrcp.pop %v2517
        %v2536 = vrcp.pop %v2520
        %v2537 = vmul.f32 %v2410, %v2521
        %v2538 = vmul.f32 %v2412, %v2521
        %v2539 = vmul.f32 %v2414, %v2522
        %v2540 = vmul.f32 %v2416, %v2522
        %v2541 = vmul.f32 %v2418, %v2523
        %v2542 = vmul.f32 %v2420, %v2523
        %v2543 = vmul.f32 %v2422, %v2524
        %v2544 = vmul.f32 %v2424, %v2524
        %v2545 = vmul.f32 %v2426, %v2525
        %v2546 = vmul.f32 %v2428, %v2525
        %v2547 = vmul.f32 %v2430, %v2526
        %v2548 = vmul.f32 %v2432, %v2526
        %v2549 = vmul.f32 %v2434, %v2527
        %v2550 = vmul.f32 %v2436, %v2527
        %v2551 = vmul.f32 %v2438, %v2528
        %v2552 = vmul.f32 %v2440, %v2528
        %v2553 = vmul.f32 %v2442, %v2529
        %v2554 = vmul.f32 %v2444, %v2529
        %v2555 = vmul.f32 %v2446, %v2530
        %v2556 = vmul.f32 %v2448, %v2530
        %v2557 = vmul.f32 %v2450, %v2531
        %v2558 = vmul.f32 %v2452, %v2531
        %v2559 = vmul.f32 %v2454, %v2532
        %v2560 = vmul.f32 %v2456, %v2532
        %v2561 = vmul.f32 %v2458, %v2533
        %v2562 = vmul.f32 %v2460, %v2533
        %v2563 = vmul.f32 %v2462, %v2534
        %v2564 = vmul.f32 %v2464, %v2534
        %v2565 = vmul.f32 %v2466, %v2535
        %v2566 = vmul.f32 %v2468, %v2535
        %v2567 = vmul.f32 %v2470, %v2536
        %v2568 = vmul.f32 %v2472, %v2536
        %v2569 = vpack.c.bf16 %v2539, %v2537
        %v2570 = vpack.c.bf16 %v2540, %v2538
        %v2571 = vpack.c.bf16 %v2543, %v2541
        %v2572 = vpack.c.bf16 %v2544, %v2542
        %v2573 = vpack.c.bf16 %v2547, %v2545
        %v2574 = vpack.c.bf16 %v2548, %v2546
        %v2575 = vpack.c.bf16 %v2551, %v2549
        %v2576 = vpack.c.bf16 %v2552, %v2550
        %v2577 = vpack.c.bf16 %v2555, %v2553
        %v2578 = vpack.c.bf16 %v2556, %v2554
        %v2579 = vpack.c.bf16 %v2559, %v2557
        %v2580 = vpack.c.bf16 %v2560, %v2558
        %v2581 = vpack.c.bf16 %v2563, %v2561
        %v2582 = vpack.c.bf16 %v2564, %v2562
        %v2583 = vpack.c.bf16 %v2567, %v2565
        %v2584 = vpack.c.bf16 %v2568, %v2566
        %2585 = vrot.lane.b32.xlu0 %v1260, 64
        %v2586 = vpop.permute.xlu0 %2585
        %2587 = vrot.lane.b32.xlu0 %v1261, 64
        %v2588 = vpop.permute.xlu0 %2587
        %2589 = vrot.lane.b32.xlu0 %v1262, 64
        %v2590 = vpop.permute.xlu0 %2589
        %2591 = vrot.lane.b32.xlu0 %v1263, 64
        %v2592 = vpop.permute.xlu0 %2591
        %2593 = vrot.lane.b32.xlu0 %v1264, 64
        %v2594 = vpop.permute.xlu0 %2593
        %2595 = vrot.lane.b32.xlu0 %v1265, 64
        %v2596 = vpop.permute.xlu0 %2595
        %2597 = vrot.lane.b32.xlu0 %v1266, 64
        %v2598 = vpop.permute.xlu0 %2597
        %2599 = vrot.lane.b32.xlu0 %v1267, 64
        %v2600 = vpop.permute.xlu0 %2599
        %2601 = vrot.lane.b32.xlu0 %v1268, 64
        %v2602 = vpop.permute.xlu0 %2601
        %2603 = vrot.lane.b32.xlu0 %v1269, 64
        %v2604 = vpop.permute.xlu0 %2603
        %2605 = vrot.lane.b32.xlu0 %v1270, 64
        %v2606 = vpop.permute.xlu0 %2605
        %2607 = vrot.lane.b32.xlu0 %v1271, 64
        %v2608 = vpop.permute.xlu0 %2607
        %2609 = vrot.lane.b32.xlu0 %v1272, 64
        %v2610 = vpop.permute.xlu0 %2609
        %2611 = vrot.lane.b32.xlu0 %v1273, 64
        %v2612 = vpop.permute.xlu0 %2611
        %2613 = vrot.lane.b32.xlu0 %v1274, 64
        %v2614 = vpop.permute.xlu0 %2613
        %2615 = vrot.lane.b32.xlu0 %v1275, 64
        %v2616 = vpop.permute.xlu0 %2615
        %2633 = vmatprep.subr.bf16.mxu0 0
        %2634 = vmatpush1.bf16.msra.mxu0 %v2586
        %2635 = vmatprep.subr.bf16.mxu0 0
        %2636 = vmatpush1.bf16.msra.mxu0 %v2588
        %2637 = vmatprep.subr.bf16.mxu0 0
        %2638 = vmatpush1.bf16.msra.mxu0 %v2590
        %2639 = vmatprep.subr.bf16.mxu0 0
        %2640 = vmatpush1.bf16.msra.mxu0 %v2592
        %2641 = vmatprep.subr.bf16.mxu0 0
        %2642 = vmatpush1.bf16.msra.mxu0 %v2594
        %2643 = vmatprep.subr.bf16.mxu0 0
        %2644 = vmatpush1.bf16.msra.mxu0 %v2596
        %2645 = vmatprep.subr.bf16.mxu0 0
        %2646 = vmatpush1.bf16.msra.mxu0 %v2598
        %2647 = vmatprep.subr.bf16.mxu0 0
        %2648 = vmatpush1.bf16.msra.mxu0 %v2600
        %2649 = vmatprep.subr.bf16.mxu0 0
        %2650 = vmatpush1.bf16.msra.mxu0 %v2602
        %2651 = vmatprep.subr.bf16.mxu0 0
        %2652 = vmatpush1.bf16.msra.mxu0 %v2604
        %2653 = vmatprep.subr.bf16.mxu0 0
        %2654 = vmatpush1.bf16.msra.mxu0 %v2606
        %2655 = vmatprep.subr.bf16.mxu0 0
        %2656 = vmatpush1.bf16.msra.mxu0 %v2608
        %2657 = vmatprep.subr.bf16.mxu0 0
        %2658 = vmatpush1.bf16.msra.mxu0 %v2610
        %2659 = vmatprep.subr.bf16.mxu0 0
        %2660 = vmatpush1.bf16.msra.mxu0 %v2612
        %2661 = vmatprep.subr.bf16.mxu0 0
        %2662 = vmatpush1.bf16.msra.mxu0 %v2614
        %2663 = vmatprep.subr.bf16.mxu0 0
        %2664 = vmatpush1.bf16.msra.mxu0 %v2616
        %2665 = vmatprep.mubr.bf16.mxu0 %v2570
        %2666 = vmatmul.mubr.bf16.gmra.mrb[0].mxu0 %v2569
        %v2667 = vpop.f32.mrb[0].mxu0
        %v2668 = vadd.f32 0.0, %v2667
        %v2669 = vpop.f32.mrb[0].mxu0
        %v2670 = vpop.f32.mrb[0].mxu0
        %v2671 = vadd.f32 0.0, %v2670
        %v2672 = vpop.f32.mrb[0].mxu0
        %2673 = vmatprep.mubr.bf16.mxu0 %v2572
        %2674 = vmatmul.mubr.bf16.gmra.mrb[0].mxu0 %v2571
        %v2675 = vpop.f32.mrb[0].mxu0
        %v2676 = vadd.f32 0.0, %v2675
        %v2677 = vpop.f32.mrb[0].mxu0
        %v2678 = vpop.f32.mrb[0].mxu0
        %v2679 = vadd.f32 0.0, %v2678
        %v2680 = vpop.f32.mrb[0].mxu0
        %2681 = vmatprep.mubr.bf16.mxu0 %v2574
        %2682 = vmatmul.mubr.bf16.gmra.mrb[0].mxu0 %v2573
        %v2683 = vpop.f32.mrb[0].mxu0
        %v2684 = vadd.f32 0.0, %v2683
        %v2685 = vpop.f32.mrb[0].mxu0
        %v2686 = vpop.f32.mrb[0].mxu0
        %v2687 = vadd.f32 0.0, %v2686
        %v2688 = vpop.f32.mrb[0].mxu0
        %2689 = vmatprep.mubr.bf16.mxu0 %v2576
        %2690 = vmatmul.mubr.bf16.gmra.mrb[0].mxu0 %v2575
        %v2691 = vpop.f32.mrb[0].mxu0
        %v2692 = vadd.f32 0.0, %v2691
        %v2693 = vpop.f32.mrb[0].mxu0
        %v2694 = vpop.f32.mrb[0].mxu0
        %v2695 = vadd.f32 0.0, %v2694
        %v2696 = vpop.f32.mrb[0].mxu0
        %2697 = vmatprep.mubr.bf16.mxu0 %v2578
        %2698 = vmatmul.mubr.bf16.gmra.mrb[0].mxu0 %v2577
        %v2699 = vpop.f32.mrb[0].mxu0
        %v2700 = vadd.f32 0.0, %v2699
        %v2701 = vpop.f32.mrb[0].mxu0
        %v2702 = vpop.f32.mrb[0].mxu0
        %v2703 = vadd.f32 0.0, %v2702
        %v2704 = vpop.f32.mrb[0].mxu0
        %2705 = vmatprep.mubr.bf16.mxu0 %v2580
        %2706 = vmatmul.mubr.bf16.gmra.mrb[0].mxu0 %v2579
        %v2707 = vpop.f32.mrb[0].mxu0
        %v2708 = vadd.f32 0.0, %v2707
        %v2709 = vpop.f32.mrb[0].mxu0
        %v2710 = vpop.f32.mrb[0].mxu0
        %v2711 = vadd.f32 0.0, %v2710
        %v2712 = vpop.f32.mrb[0].mxu0
        %2713 = vmatprep.mubr.bf16.mxu0 %v2582
        %2714 = vmatmul.mubr.bf16.gmra.mrb[0].mxu0 %v2581
        %v2715 = vpop.f32.mrb[0].mxu0
        %v2716 = vadd.f32 0.0, %v2715
        %v2717 = vpop.f32.mrb[0].mxu0
        %v2718 = vpop.f32.mrb[0].mxu0
        %v2719 = vadd.f32 0.0, %v2718
        %v2720 = vpop.f32.mrb[0].mxu0
        %2721 = vmatprep.mubr.bf16.mxu0 %v2584
        %2722 = vmatmul.mubr.bf16.gmra.mrb[0].mxu0 %v2583
        %v2723 = vpop.f32.mrb[0].mxu0
        %v2724 = vadd.f32 0.0, %v2723
        %v2725 = vpop.f32.mrb[0].mxu0
        %v2726 = vpop.f32.mrb[0].mxu0
        %v2727 = vadd.f32 0.0, %v2726
        %v2728 = vpop.f32.mrb[0].mxu0
        %2729 = vdwg.mxu0
        %v2730 = vpack.c.bf16 %v2671, %v2668
        %v2731 = vpack.c.bf16 %v2679, %v2676
        %v2732 = vpack.c.bf16 %v2687, %v2684
        %v2733 = vpack.c.bf16 %v2695, %v2692
        %v2734 = vpack.c.bf16 %v2703, %v2700
        %v2735 = vpack.c.bf16 %v2711, %v2708
        %v2736 = vpack.c.bf16 %v2719, %v2716
        %v2737 = vpack.c.bf16 %v2727, %v2724
        %2746 = vrot.lane.b32.xlu0 %v2730, 64
        %v2747 = vpop.permute.xlu0 %2746
        %2748 = vrot.lane.b32.xlu0 %v2731, 64
        %v2749 = vpop.permute.xlu0 %2748
        %2750 = vrot.lane.b32.xlu0 %v2732, 64
        %v2751 = vpop.permute.xlu0 %2750
        %2752 = vrot.lane.b32.xlu0 %v2733, 64
        %v2753 = vpop.permute.xlu0 %2752
        %2754 = vrot.lane.b32.xlu0 %v2734, 64
        %v2755 = vpop.permute.xlu0 %2754
        %2756 = vrot.lane.b32.xlu0 %v2735, 64
        %v2757 = vpop.permute.xlu0 %2756
        %2758 = vrot.lane.b32.xlu0 %v2736, 64
        %v2759 = vpop.permute.xlu0 %2758
        %2760 = vrot.lane.b32.xlu0 %v2737, 64
        %v2761 = vpop.permute.xlu0 %2760
        %vm2770 = vcmask 785920
        %2771 = vst.msk [vmem:[#allocation2] sm:$0xff] %vm2770, %v2747
        %2772 = vst.msk [vmem:[#allocation2 + $0x8] sm:$0xff] %vm2770, %v2749
        %2773 = vst.msk [vmem:[#allocation2 + $0x10] sm:$0xff] %vm2770, %v2751
        %2774 = vst.msk [vmem:[#allocation2 + $0x18] sm:$0xff] %vm2770, %v2753
        %2775 = vst.msk [vmem:[#allocation2 + $0x20] sm:$0xff] %vm2770, %v2755
        %2776 = vst.msk [vmem:[#allocation2 + $0x28] sm:$0xff] %vm2770, %v2757
        %2777 = vst.msk [vmem:[#allocation2 + $0x30] sm:$0xff] %vm2770, %v2759
        %2778 = vst.msk [vmem:[#allocation2 + $0x38] sm:$0xff] %vm2770, %v2761
        %2779 = vrot.lane.b32.xlu0 %v602, 32
        %v2780 = vpop.permute.xlu0 %2779
        %2781 = vrot.lane.b32.xlu0 %v603, 32
        %v2782 = vpop.permute.xlu0 %2781
        %2783 = vrot.lane.b32.xlu0 %v604, 32
        %v2784 = vpop.permute.xlu0 %2783
        %2785 = vrot.lane.b32.xlu0 %v605, 32
        %v2786 = vpop.permute.xlu0 %2785
        %2787 = vrot.lane.b32.xlu0 %v606, 32
        %v2788 = vpop.permute.xlu0 %2787
        %2789 = vrot.lane.b32.xlu0 %v607, 32
        %v2790 = vpop.permute.xlu0 %2789
        %2791 = vrot.lane.b32.xlu0 %v608, 32
        %v2792 = vpop.permute.xlu0 %2791
        %2793 = vrot.lane.b32.xlu0 %v609, 32
        %v2794 = vpop.permute.xlu0 %2793
        %2795 = vrot.lane.b32.xlu0 %v738, 32
        %v2796 = vpop.permute.xlu0 %2795
        %2797 = vrot.lane.b32.xlu0 %v739, 32
        %v2798 = vpop.permute.xlu0 %2797
        %2799 = vrot.lane.b32.xlu0 %v740, 32
        %v2800 = vpop.permute.xlu0 %2799
        %2801 = vrot.lane.b32.xlu0 %v741, 32
        %v2802 = vpop.permute.xlu0 %2801
        %2803 = vrot.lane.b32.xlu0 %v742, 32
        %v2804 = vpop.permute.xlu0 %2803
        %2805 = vrot.lane.b32.xlu0 %v743, 32
        %v2806 = vpop.permute.xlu0 %2805
        %2807 = vrot.lane.b32.xlu0 %v744, 32
        %v2808 = vpop.permute.xlu0 %2807
        %2809 = vrot.lane.b32.xlu0 %v745, 32
        %v2810 = vpop.permute.xlu0 %2809
        %2811 = vrot.lane.b32.xlu0 %v746, 32
        %v2812 = vpop.permute.xlu0 %2811
        %2813 = vrot.lane.b32.xlu0 %v747, 32
        %v2814 = vpop.permute.xlu0 %2813
        %2815 = vrot.lane.b32.xlu0 %v748, 32
        %v2816 = vpop.permute.xlu0 %2815
        %2817 = vrot.lane.b32.xlu0 %v749, 32
        %v2818 = vpop.permute.xlu0 %2817
        %2819 = vrot.lane.b32.xlu0 %v750, 32
        %v2820 = vpop.permute.xlu0 %2819
        %2821 = vrot.lane.b32.xlu0 %v751, 32
        %v2822 = vpop.permute.xlu0 %2821
        %2823 = vrot.lane.b32.xlu0 %v752, 32
        %v2824 = vpop.permute.xlu0 %2823
        %2825 = vrot.lane.b32.xlu0 %v753, 32
        %v2826 = vpop.permute.xlu0 %2825
        %v2828 = vsel %vm754, %v2780, 0
        %v2831 = vsel %vm754, %v2782, 0
        %v2834 = vsel %vm754, %v2784, 0
        %v2837 = vsel %vm754, %v2786, 0
        %v2840 = vsel %vm754, %v2788, 0
        %v2843 = vsel %vm754, %v2790, 0
        %v2846 = vsel %vm754, %v2792, 0
        %v2849 = vsel %vm754, %v2794, 0
        %v2852 = vsel %vm754, %v2796, 0
        %v2855 = vsel %vm754, %v2798, 0
        %v2858 = vsel %vm754, %v2800, 0
        %v2861 = vsel %vm754, %v2802, 0
        %v2864 = vsel %vm754, %v2804, 0
        %v2867 = vsel %vm754, %v2806, 0
        %v2870 = vsel %vm754, %v2808, 0
        %v2873 = vsel %vm754, %v2810, 0
        %v2876 = vsel %vm754, %v2812, 0
        %v2879 = vsel %vm754, %v2814, 0
        %v2882 = vsel %vm754, %v2816, 0
        %v2885 = vsel %vm754, %v2818, 0
        %v2888 = vsel %vm754, %v2820, 0
        %v2891 = vsel %vm754, %v2822, 0
        %v2894 = vsel %vm754, %v2824, 0
        %v2897 = vsel %vm754, %v2826, 0
        %2899 = vmatprep.subr.bf16.mxu0 0
        %2900 = vmatpush1.bf16.xpose.msra.mxu0 %v2852
        %2901 = vmatprep.subr.bf16.mxu0 0
        %2902 = vmatpush1.bf16.xpose.msra.mxu0 %v2855
        %2903 = vmatprep.subr.bf16.mxu0 0
        %2904 = vmatpush1.bf16.xpose.msra.mxu0 %v2858
        %2905 = vmatprep.subr.bf16.mxu0 0
        %2906 = vmatpush1.bf16.xpose.msra.mxu0 %v2861
        %2907 = vmatprep.subr.bf16.mxu0 0
        %2908 = vmatpush1.bf16.xpose.msra.mxu0 %v2864
        %2909 = vmatprep.subr.bf16.mxu0 0
        %2910 = vmatpush1.bf16.xpose.msra.mxu0 %v2867
        %2911 = vmatprep.subr.bf16.mxu0 0
        %2912 = vmatpush1.bf16.xpose.msra.mxu0 %v2870
        %2913 = vmatprep.subr.bf16.mxu0 0
        %2914 = vmatpush1.bf16.xpose.msra.mxu0 %v2873
        %2915 = vmatprep.subr.bf16.mxu0 0
        %2916 = vmatpush1.bf16.xpose.msra.mxu0 %v2876
        %2917 = vmatprep.subr.bf16.mxu0 0
        %2918 = vmatpush1.bf16.xpose.msra.mxu0 %v2879
        %2919 = vmatprep.subr.bf16.mxu0 0
        %2920 = vmatpush1.bf16.xpose.msra.mxu0 %v2882
        %2921 = vmatprep.subr.bf16.mxu0 0
        %2922 = vmatpush1.bf16.xpose.msra.mxu0 %v2885
        %2923 = vmatprep.subr.bf16.mxu0 0
        %2924 = vmatpush1.bf16.xpose.msra.mxu0 %v2888
        %2925 = vmatprep.subr.bf16.mxu0 0
        %2926 = vmatpush1.bf16.xpose.msra.mxu0 %v2891
        %2927 = vmatprep.subr.bf16.mxu0 0
        %2928 = vmatpush1.bf16.xpose.msra.mxu0 %v2894
        %2929 = vmatprep.subr.bf16.mxu0 0
        %2930 = vmatpush1.bf16.xpose.msra.mxu0 %v2897
        %2931 = vmatprep.mubr.bf16.mxu0 0
        %2932 = vmatmul.mubr.bf16.gmra.mrb[0].mxu0 %v2828
        %v2933 = vpop.f32.mrb[0].mxu0
        %v2934 = vadd.f32 0.0, %v2933
        %v2935 = vpop.f32.mrb[0].mxu0
        %v2936 = vadd.f32 0.0, %v2935
        %v2937 = vpop.f32.mrb[0].mxu0
        %v2938 = vadd.f32 0.0, %v2937
        %v2939 = vpop.f32.mrb[0].mxu0
        %v2940 = vadd.f32 0.0, %v2939
        %2941 = vmatprep.mubr.bf16.mxu0 0
        %2942 = vmatmul.mubr.bf16.gmra.mrb[0].mxu0 %v2831
        %v2943 = vpop.f32.mrb[0].mxu0
        %v2944 = vadd.f32 0.0, %v2943
        %v2945 = vpop.f32.mrb[0].mxu0
        %v2946 = vadd.f32 0.0, %v2945
        %v2947 = vpop.f32.mrb[0].mxu0
        %v2948 = vadd.f32 0.0, %v2947
        %v2949 = vpop.f32.mrb[0].mxu0
        %v2950 = vadd.f32 0.0, %v2949
        %2951 = vmatprep.mubr.bf16.mxu0 0
        %2952 = vmatmul.mubr.bf16.gmra.mrb[0].mxu0 %v2834
        %v2953 = vpop.f32.mrb[0].mxu0
        %v2954 = vadd.f32 0.0, %v2953
        %v2955 = vpop.f32.mrb[0].mxu0
        %v2956 = vadd.f32 0.0, %v2955
        %v2957 = vpop.f32.mrb[0].mxu0
        %v2958 = vadd.f32 0.0, %v2957
        %v2959 = vpop.f32.mrb[0].mxu0
        %v2960 = vadd.f32 0.0, %v2959
        %2961 = vmatprep.mubr.bf16.mxu0 0
        %2962 = vmatmul.mubr.bf16.gmra.mrb[0].mxu0 %v2837
        %v2963 = vpop.f32.mrb[0].mxu0
        %v2964 = vadd.f32 0.0, %v2963
        %v2965 = vpop.f32.mrb[0].mxu0
        %v2966 = vadd.f32 0.0, %v2965
        %v2967 = vpop.f32.mrb[0].mxu0
        %v2968 = vadd.f32 0.0, %v2967
        %v2969 = vpop.f32.mrb[0].mxu0
        %v2970 = vadd.f32 0.0, %v2969
        %2971 = vmatprep.mubr.bf16.mxu0 0
        %2972 = vmatmul.mubr.bf16.gmra.mrb[0].mxu0 %v2840
        %v2973 = vpop.f32.mrb[0].mxu0
        %v2974 = vadd.f32 0.0, %v2973
        %v2975 = vpop.f32.mrb[0].mxu0
        %v2976 = vadd.f32 0.0, %v2975
        %v2977 = vpop.f32.mrb[0].mxu0
        %v2978 = vadd.f32 0.0, %v2977
        %v2979 = vpop.f32.mrb[0].mxu0
        %v2980 = vadd.f32 0.0, %v2979
        %2981 = vmatprep.mubr.bf16.mxu0 0
        %2982 = vmatmul.mubr.bf16.gmra.mrb[0].mxu0 %v2843
        %v2983 = vpop.f32.mrb[0].mxu0
        %v2984 = vadd.f32 0.0, %v2983
        %v2985 = vpop.f32.mrb[0].mxu0
        %v2986 = vadd.f32 0.0, %v2985
        %v2987 = vpop.f32.mrb[0].mxu0
        %v2988 = vadd.f32 0.0, %v2987
        %v2989 = vpop.f32.mrb[0].mxu0
        %v2990 = vadd.f32 0.0, %v2989
        %2991 = vmatprep.mubr.bf16.mxu0 0
        %2992 = vmatmul.mubr.bf16.gmra.mrb[0].mxu0 %v2846
        %v2993 = vpop.f32.mrb[0].mxu0
        %v2994 = vadd.f32 0.0, %v2993
        %v2995 = vpop.f32.mrb[0].mxu0
        %v2996 = vadd.f32 0.0, %v2995
        %v2997 = vpop.f32.mrb[0].mxu0
        %v2998 = vadd.f32 0.0, %v2997
        %v2999 = vpop.f32.mrb[0].mxu0
        %v3000 = vadd.f32 0.0, %v2999
        %3001 = vmatprep.mubr.bf16.mxu0 0
        %3002 = vmatmul.mubr.bf16.gmra.mrb[0].mxu0 %v2849
        %v3003 = vpop.f32.mrb[0].mxu0
        %v3004 = vadd.f32 0.0, %v3003
        %v3005 = vpop.f32.mrb[0].mxu0
        %v3006 = vadd.f32 0.0, %v3005
        %v3007 = vpop.f32.mrb[0].mxu0
        %v3008 = vadd.f32 0.0, %v3007
        %v3009 = vpop.f32.mrb[0].mxu0
        %v3010 = vadd.f32 0.0, %v3009
        %3011 = vdwg.mxu0
        %v3012 = vmax.f32 %v2934, %v2936
        %3013 = vmax.xlane.f32.xlu0 %v3012
        %v3014 = vpop.xlane.xlu0 %3013
        %v3015 = vmax.f32 %v2938, %v2940
        %3016 = vmax.xlane.f32.xlu0 %v3015
        %v3017 = vpop.xlane.xlu0 %3016
        %v3018 = vmax.f32 %v2944, %v2946
        %3019 = vmax.xlane.f32.xlu0 %v3018
        %v3020 = vpop.xlane.xlu0 %3019
        %v3021 = vmax.f32 %v2948, %v2950
        %3022 = vmax.xlane.f32.xlu0 %v3021
        %v3023 = vpop.xlane.xlu0 %3022
        %v3024 = vmax.f32 %v2954, %v2956
        %3025 = vmax.xlane.f32.xlu0 %v3024
        %v3026 = vpop.xlane.xlu0 %3025
        %v3027 = vmax.f32 %v2958, %v2960
        %3028 = vmax.xlane.f32.xlu0 %v3027
        %v3029 = vpop.xlane.xlu0 %3028
        %v3030 = vmax.f32 %v2964, %v2966
        %3031 = vmax.xlane.f32.xlu0 %v3030
        %v3032 = vpop.xlane.xlu0 %3031
        %v3033 = vmax.f32 %v2968, %v2970
        %3034 = vmax.xlane.f32.xlu0 %v3033
        %v3035 = vpop.xlane.xlu0 %3034
        %v3036 = vmax.f32 %v2974, %v2976
        %3037 = vmax.xlane.f32.xlu0 %v3036
        %v3038 = vpop.xlane.xlu0 %3037
        %v3039 = vmax.f32 %v2978, %v2980
        %3040 = vmax.xlane.f32.xlu0 %v3039
        %v3041 = vpop.xlane.xlu0 %3040
        %v3042 = vmax.f32 %v2984, %v2986
        %3043 = vmax.xlane.f32.xlu0 %v3042
        %v3044 = vpop.xlane.xlu0 %3043
        %v3045 = vmax.f32 %v2988, %v2990
        %3046 = vmax.xlane.f32.xlu0 %v3045
        %v3047 = vpop.xlane.xlu0 %3046
        %v3048 = vmax.f32 %v2994, %v2996
        %3049 = vmax.xlane.f32.xlu0 %v3048
        %v3050 = vpop.xlane.xlu0 %3049
        %v3051 = vmax.f32 %v2998, %v3000
        %3052 = vmax.xlane.f32.xlu0 %v3051
        %v3053 = vpop.xlane.xlu0 %3052
        %v3054 = vmax.f32 %v3004, %v3006
        %3055 = vmax.xlane.f32.xlu0 %v3054
        %v3056 = vpop.xlane.xlu0 %3055
        %v3057 = vmax.f32 %v3008, %v3010
        %3058 = vmax.xlane.f32.xlu0 %v3057
        %v3059 = vpop.xlane.xlu0 %3058
        %v3060 = vsub.f32 %v2934, %v3014
        %v3061 = vsub.f32 %v2936, %v3014
        %v3062 = vsub.f32 %v2938, %v3017
        %v3063 = vsub.f32 %v2940, %v3017
        %v3064 = vsub.f32 %v2944, %v3020
        %v3065 = vsub.f32 %v2946, %v3020
        %v3066 = vsub.f32 %v2948, %v3023
        %v3067 = vsub.f32 %v2950, %v3023
        %v3068 = vsub.f32 %v2954, %v3026
        %v3069 = vsub.f32 %v2956, %v3026
        %v3070 = vsub.f32 %v2958, %v3029
        %v3071 = vsub.f32 %v2960, %v3029
        %v3072 = vsub.f32 %v2964, %v3032
        %v3073 = vsub.f32 %v2966, %v3032
        %v3074 = vsub.f32 %v2968, %v3035
        %v3075 = vsub.f32 %v2970, %v3035
        %v3076 = vsub.f32 %v2974, %v3038
        %v3077 = vsub.f32 %v2976, %v3038
        %v3078 = vsub.f32 %v2978, %v3041
        %v3079 = vsub.f32 %v2980, %v3041
        %v3080 = vsub.f32 %v2984, %v3044
        %v3081 = vsub.f32 %v2986, %v3044
        %v3082 = vsub.f32 %v2988, %v3047
        %v3083 = vsub.f32 %v2990, %v3047
        %v3084 = vsub.f32 %v2994, %v3050
        %v3085 = vsub.f32 %v2996, %v3050
        %v3086 = vsub.f32 %v2998, %v3053
        %v3087 = vsub.f32 %v3000, %v3053
        %v3088 = vsub.f32 %v3004, %v3056
        %v3089 = vsub.f32 %v3006, %v3056
        %v3090 = vsub.f32 %v3008, %v3059
        %v3091 = vsub.f32 %v3010, %v3059
        %v3092 = vmul.f32 %v3060, 1.442695
        %v3093 = vpow.pop %v3092
        %v3094 = vmul.f32 %v3061, 1.442695
        %v3095 = vpow.pop %v3094
        %v3096 = vmul.f32 %v3062, 1.442695
        %v3097 = vpow.pop %v3096
        %v3098 = vmul.f32 %v3063, 1.442695
        %v3099 = vpow.pop %v3098
        %v3100 = vmul.f32 %v3064, 1.442695
        %v3101 = vpow.pop %v3100
        %v3102 = vmul.f32 %v3065, 1.442695
        %v3103 = vpow.pop %v3102
        %v3104 = vmul.f32 %v3066, 1.442695
        %v3105 = vpow.pop %v3104
        %v3106 = vmul.f32 %v3067, 1.442695
        %v3107 = vpow.pop %v3106
        %v3108 = vmul.f32 %v3068, 1.442695
        %v3109 = vpow.pop %v3108
        %v3110 = vmul.f32 %v3069, 1.442695
        %v3111 = vpow.pop %v3110
        %v3112 = vmul.f32 %v3070, 1.442695
        %v3113 = vpow.pop %v3112
        %v3114 = vmul.f32 %v3071, 1.442695
        %v3115 = vpow.pop %v3114
        %v3116 = vmul.f32 %v3072, 1.442695
        %v3117 = vpow.pop %v3116
        %v3118 = vmul.f32 %v3073, 1.442695
        %v3119 = vpow.pop %v3118
        %v3120 = vmul.f32 %v3074, 1.442695
        %v3121 = vpow.pop %v3120
        %v3122 = vmul.f32 %v3075, 1.442695
        %v3123 = vpow.pop %v3122
        %v3124 = vmul.f32 %v3076, 1.442695
        %v3125 = vpow.pop %v3124
        %v3126 = vmul.f32 %v3077, 1.442695
        %v3127 = vpow.pop %v3126
        %v3128 = vmul.f32 %v3078, 1.442695
        %v3129 = vpow.pop %v3128
        %v3130 = vmul.f32 %v3079, 1.442695
        %v3131 = vpow.pop %v3130
        %v3132 = vmul.f32 %v3080, 1.442695
        %v3133 = vpow.pop %v3132
        %v3134 = vmul.f32 %v3081, 1.442695
        %v3135 = vpow.pop %v3134
        %v3136 = vmul.f32 %v3082, 1.442695
        %v3137 = vpow.pop %v3136
        %v3138 = vmul.f32 %v3083, 1.442695
        %v3139 = vpow.pop %v3138
        %v3140 = vmul.f32 %v3084, 1.442695
        %v3141 = vpow.pop %v3140
        %v3142 = vmul.f32 %v3085, 1.442695
        %v3143 = vpow.pop %v3142
        %v3144 = vmul.f32 %v3086, 1.442695
        %v3145 = vpow.pop %v3144
        %v3146 = vmul.f32 %v3087, 1.442695
        %v3147 = vpow.pop %v3146
        %v3148 = vmul.f32 %v3088, 1.442695
        %v3149 = vpow.pop %v3148
        %v3150 = vmul.f32 %v3089, 1.442695
        %v3151 = vpow.pop %v3150
        %v3152 = vmul.f32 %v3090, 1.442695
        %v3153 = vpow.pop %v3152
        %v3154 = vmul.f32 %v3091, 1.442695
        %v3155 = vpow.pop %v3154
        %v3156 = vadd.f32 %v3093, %v3095
        %3157 = vadd.xlane.f32.xlu0 %v3156
        %v3158 = vpop.xlane.xlu0 %3157
        %v3159 = vadd.f32 %v3097, %v3099
        %3160 = vadd.xlane.f32.xlu0 %v3159
        %v3161 = vpop.xlane.xlu0 %3160
        %v3162 = vadd.f32 %v3101, %v3103
        %3163 = vadd.xlane.f32.xlu0 %v3162
        %v3164 = vpop.xlane.xlu0 %3163
        %v3165 = vadd.f32 %v3105, %v3107
        %3166 = vadd.xlane.f32.xlu0 %v3165
        %v3167 = vpop.xlane.xlu0 %3166
        %v3168 = vadd.f32 %v3109, %v3111
        %3169 = vadd.xlane.f32.xlu0 %v3168
        %v3170 = vpop.xlane.xlu0 %3169
        %v3171 = vadd.f32 %v3113, %v3115
        %3172 = vadd.xlane.f32.xlu0 %v3171
        %v3173 = vpop.xlane.xlu0 %3172
        %v3174 = vadd.f32 %v3117, %v3119
        %3175 = vadd.xlane.f32.xlu0 %v3174
        %v3176 = vpop.xlane.xlu0 %3175
        %v3177 = vadd.f32 %v3121, %v3123
        %3178 = vadd.xlane.f32.xlu0 %v3177
        %v3179 = vpop.xlane.xlu0 %3178
        %v3180 = vadd.f32 %v3125, %v3127
        %3181 = vadd.xlane.f32.xlu0 %v3180
        %v3182 = vpop.xlane.xlu0 %3181
        %v3183 = vadd.f32 %v3129, %v3131
        %3184 = vadd.xlane.f32.xlu0 %v3183
        %v3185 = vpop.xlane.xlu0 %3184
        %v3186 = vadd.f32 %v3133, %v3135
        %3187 = vadd.xlane.f32.xlu0 %v3186
        %v3188 = vpop.xlane.xlu0 %3187
        %v3189 = vadd.f32 %v3137, %v3139
        %3190 = vadd.xlane.f32.xlu0 %v3189
        %v3191 = vpop.xlane.xlu0 %3190
        %v3192 = vadd.f32 %v3141, %v3143
        %3193 = vadd.xlane.f32.xlu0 %v3192
        %v3194 = vpop.xlane.xlu0 %3193
        %v3195 = vadd.f32 %v3145, %v3147
        %3196 = vadd.xlane.f32.xlu0 %v3195
        %v3197 = vpop.xlane.xlu0 %3196
        %v3198 = vadd.f32 %v3149, %v3151
        %3199 = vadd.xlane.f32.xlu0 %v3198
        %v3200 = vpop.xlane.xlu0 %3199
        %v3201 = vadd.f32 %v3153, %v3155
        %3202 = vadd.xlane.f32.xlu0 %v3201
        %v3203 = vpop.xlane.xlu0 %3202
        %v3204 = vrcp.pop %v3158
        %v3205 = vrcp.pop %v3161
        %v3206 = vrcp.pop %v3164
        %v3207 = vrcp.pop %v3167
        %v3208 = vrcp.pop %v3170
        %v3209 = vrcp.pop %v3173
        %v3210 = vrcp.pop %v3176
        %v3211 = vrcp.pop %v3179
        %v3212 = vrcp.pop %v3182
        %v3213 = vrcp.pop %v3185
        %v3214 = vrcp.pop %v3188
        %v3215 = vrcp.pop %v3191
        %v3216 = vrcp.pop %v3194
        %v3217 = vrcp.pop %v3197
        %v3218 = vrcp.pop %v3200
        %v3219 = vrcp.pop %v3203
        %v3220 = vmul.f32 %v3093, %v3204
        %v3221 = vmul.f32 %v3095, %v3204
        %v3222 = vmul.f32 %v3097, %v3205
        %v3223 = vmul.f32 %v3099, %v3205
        %v3224 = vmul.f32 %v3101, %v3206
        %v3225 = vmul.f32 %v3103, %v3206
        %v3226 = vmul.f32 %v3105, %v3207
        %v3227 = vmul.f32 %v3107, %v3207
        %v3228 = vmul.f32 %v3109, %v3208
        %v3229 = vmul.f32 %v3111, %v3208
        %v3230 = vmul.f32 %v3113, %v3209
        %v3231 = vmul.f32 %v3115, %v3209
        %v3232 = vmul.f32 %v3117, %v3210
        %v3233 = vmul.f32 %v3119, %v3210
        %v3234 = vmul.f32 %v3121, %v3211
        %v3235 = vmul.f32 %v3123, %v3211
        %v3236 = vmul.f32 %v3125, %v3212
        %v3237 = vmul.f32 %v3127, %v3212
        %v3238 = vmul.f32 %v3129, %v3213
        %v3239 = vmul.f32 %v3131, %v3213
        %v3240 = vmul.f32 %v3133, %v3214
        %v3241 = vmul.f32 %v3135, %v3214
        %v3242 = vmul.f32 %v3137, %v3215
        %v3243 = vmul.f32 %v3139, %v3215
        %v3244 = vmul.f32 %v3141, %v3216
        %v3245 = vmul.f32 %v3143, %v3216
        %v3246 = vmul.f32 %v3145, %v3217
        %v3247 = vmul.f32 %v3147, %v3217
        %v3248 = vmul.f32 %v3149, %v3218
        %v3249 = vmul.f32 %v3151, %v3218
        %v3250 = vmul.f32 %v3153, %v3219
        %v3251 = vmul.f32 %v3155, %v3219
        %v3252 = vpack.c.bf16 %v3222, %v3220
        %v3253 = vpack.c.bf16 %v3223, %v3221
        %v3254 = vpack.c.bf16 %v3226, %v3224
        %v3255 = vpack.c.bf16 %v3227, %v3225
        %v3256 = vpack.c.bf16 %v3230, %v3228
        %v3257 = vpack.c.bf16 %v3231, %v3229
        %v3258 = vpack.c.bf16 %v3234, %v3232
        %v3259 = vpack.c.bf16 %v3235, %v3233
        %v3260 = vpack.c.bf16 %v3238, %v3236
        %v3261 = vpack.c.bf16 %v3239, %v3237
        %v3262 = vpack.c.bf16 %v3242, %v3240
        %v3263 = vpack.c.bf16 %v3243, %v3241
        %v3264 = vpack.c.bf16 %v3246, %v3244
        %v3265 = vpack.c.bf16 %v3247, %v3245
        %v3266 = vpack.c.bf16 %v3250, %v3248
        %v3267 = vpack.c.bf16 %v3251, %v3249
        %3268 = vrot.lane.b32.xlu0 %v1260, 32
        %v3269 = vpop.permute.xlu0 %3268
        %3270 = vrot.lane.b32.xlu0 %v1261, 32
        %v3271 = vpop.permute.xlu0 %3270
        %3272 = vrot.lane.b32.xlu0 %v1262, 32
        %v3273 = vpop.permute.xlu0 %3272
        %3274 = vrot.lane.b32.xlu0 %v1263, 32
        %v3275 = vpop.permute.xlu0 %3274
        %3276 = vrot.lane.b32.xlu0 %v1264, 32
        %v3277 = vpop.permute.xlu0 %3276
        %3278 = vrot.lane.b32.xlu0 %v1265, 32
        %v3279 = vpop.permute.xlu0 %3278
        %3280 = vrot.lane.b32.xlu0 %v1266, 32
        %v3281 = vpop.permute.xlu0 %3280
        %3282 = vrot.lane.b32.xlu0 %v1267, 32
        %v3283 = vpop.permute.xlu0 %3282
        %3284 = vrot.lane.b32.xlu0 %v1268, 32
        %v3285 = vpop.permute.xlu0 %3284
        %3286 = vrot.lane.b32.xlu0 %v1269, 32
        %v3287 = vpop.permute.xlu0 %3286
        %3288 = vrot.lane.b32.xlu0 %v1270, 32
        %v3289 = vpop.permute.xlu0 %3288
        %3290 = vrot.lane.b32.xlu0 %v1271, 32
        %v3291 = vpop.permute.xlu0 %3290
        %3292 = vrot.lane.b32.xlu0 %v1272, 32
        %v3293 = vpop.permute.xlu0 %3292
        %3294 = vrot.lane.b32.xlu0 %v1273, 32
        %v3295 = vpop.permute.xlu0 %3294
        %3296 = vrot.lane.b32.xlu0 %v1274, 32
        %v3297 = vpop.permute.xlu0 %3296
        %3298 = vrot.lane.b32.xlu0 %v1275, 32
        %v3299 = vpop.permute.xlu0 %3298
        %3316 = vmatprep.subr.bf16.mxu0 0
        %3317 = vmatpush1.bf16.msra.mxu0 %v3269
        %3318 = vmatprep.subr.bf16.mxu0 0
        %3319 = vmatpush1.bf16.msra.mxu0 %v3271
        %3320 = vmatprep.subr.bf16.mxu0 0
        %3321 = vmatpush1.bf16.msra.mxu0 %v3273
        %3322 = vmatprep.subr.bf16.mxu0 0
        %3323 = vmatpush1.bf16.msra.mxu0 %v3275
        %3324 = vmatprep.subr.bf16.mxu0 0
        %3325 = vmatpush1.bf16.msra.mxu0 %v3277
        %3326 = vmatprep.subr.bf16.mxu0 0
        %3327 = vmatpush1.bf16.msra.mxu0 %v3279
        %3328 = vmatprep.subr.bf16.mxu0 0
        %3329 = vmatpush1.bf16.msra.mxu0 %v3281
        %3330 = vmatprep.subr.bf16.mxu0 0
        %3331 = vmatpush1.bf16.msra.mxu0 %v3283
        %3332 = vmatprep.subr.bf16.mxu0 0
        %3333 = vmatpush1.bf16.msra.mxu0 %v3285
        %3334 = vmatprep.subr.bf16.mxu0 0
        %3335 = vmatpush1.bf16.msra.mxu0 %v3287
        %3336 = vmatprep.subr.bf16.mxu0 0
        %3337 = vmatpush1.bf16.msra.mxu0 %v3289
        %3338 = vmatprep.subr.bf16.mxu0 0
        %3339 = vmatpush1.bf16.msra.mxu0 %v3291
        %3340 = vmatprep.subr.bf16.mxu0 0
        %3341 = vmatpush1.bf16.msra.mxu0 %v3293
        %3342 = vmatprep.subr.bf16.mxu0 0
        %3343 = vmatpush1.bf16.msra.mxu0 %v3295
        %3344 = vmatprep.subr.bf16.mxu0 0
        %3345 = vmatpush1.bf16.msra.mxu0 %v3297
        %3346 = vmatprep.subr.bf16.mxu0 0
        %3347 = vmatpush1.bf16.msra.mxu0 %v3299
        %3348 = vmatprep.mubr.bf16.mxu0 %v3253
        %3349 = vmatmul.mubr.bf16.gmra.mrb[0].mxu0 %v3252
        %v3350 = vpop.f32.mrb[0].mxu0
        %v3351 = vadd.f32 0.0, %v3350
        %v3352 = vpop.f32.mrb[0].mxu0
        %v3353 = vpop.f32.mrb[0].mxu0
        %v3354 = vadd.f32 0.0, %v3353
        %v3355 = vpop.f32.mrb[0].mxu0
        %3356 = vmatprep.mubr.bf16.mxu0 %v3255
        %3357 = vmatmul.mubr.bf16.gmra.mrb[0].mxu0 %v3254
        %v3358 = vpop.f32.mrb[0].mxu0
        %v3359 = vadd.f32 0.0, %v3358
        %v3360 = vpop.f32.mrb[0].mxu0
        %v3361 = vpop.f32.mrb[0].mxu0
        %v3362 = vadd.f32 0.0, %v3361
        %v3363 = vpop.f32.mrb[0].mxu0
        %3364 = vmatprep.mubr.bf16.mxu0 %v3257
        %3365 = vmatmul.mubr.bf16.gmra.mrb[0].mxu0 %v3256
        %v3366 = vpop.f32.mrb[0].mxu0
        %v3367 = vadd.f32 0.0, %v3366
        %v3368 = vpop.f32.mrb[0].mxu0
        %v3369 = vpop.f32.mrb[0].mxu0
        %v3370 = vadd.f32 0.0, %v3369
        %v3371 = vpop.f32.mrb[0].mxu0
        %3372 = vmatprep.mubr.bf16.mxu0 %v3259
        %3373 = vmatmul.mubr.bf16.gmra.mrb[0].mxu0 %v3258
        %v3374 = vpop.f32.mrb[0].mxu0
        %v3375 = vadd.f32 0.0, %v3374
        %v3376 = vpop.f32.mrb[0].mxu0
        %v3377 = vpop.f32.mrb[0].mxu0
        %v3378 = vadd.f32 0.0, %v3377
        %v3379 = vpop.f32.mrb[0].mxu0
        %3380 = vmatprep.mubr.bf16.mxu0 %v3261
        %3381 = vmatmul.mubr.bf16.gmra.mrb[0].mxu0 %v3260
        %v3382 = vpop.f32.mrb[0].mxu0
        %v3383 = vadd.f32 0.0, %v3382
        %v3384 = vpop.f32.mrb[0].mxu0
        %v3385 = vpop.f32.mrb[0].mxu0
        %v3386 = vadd.f32 0.0, %v3385
        %v3387 = vpop.f32.mrb[0].mxu0
        %3388 = vmatprep.mubr.bf16.mxu0 %v3263
        %3389 = vmatmul.mubr.bf16.gmra.mrb[0].mxu0 %v3262
        %v3390 = vpop.f32.mrb[0].mxu0
        %v3391 = vadd.f32 0.0, %v3390
        %v3392 = vpop.f32.mrb[0].mxu0
        %v3393 = vpop.f32.mrb[0].mxu0
        %v3394 = vadd.f32 0.0, %v3393
        %v3395 = vpop.f32.mrb[0].mxu0
        %3396 = vmatprep.mubr.bf16.mxu0 %v3265
        %3397 = vmatmul.mubr.bf16.gmra.mrb[0].mxu0 %v3264
        %v3398 = vpop.f32.mrb[0].mxu0
        %v3399 = vadd.f32 0.0, %v3398
        %v3400 = vpop.f32.mrb[0].mxu0
        %v3401 = vpop.f32.mrb[0].mxu0
        %v3402 = vadd.f32 0.0, %v3401
        %v3403 = vpop.f32.mrb[0].mxu0
        %3404 = vmatprep.mubr.bf16.mxu0 %v3267
        %3405 = vmatmul.mubr.bf16.gmra.mrb[0].mxu0 %v3266
        %v3406 = vpop.f32.mrb[0].mxu0
        %v3407 = vadd.f32 0.0, %v3406
        %v3408 = vpop.f32.mrb[0].mxu0
        %v3409 = vpop.f32.mrb[0].mxu0
        %v3410 = vadd.f32 0.0, %v3409
        %v3411 = vpop.f32.mrb[0].mxu0
        %3412 = vdwg.mxu0
        %v3413 = vpack.c.bf16 %v3354, %v3351
        %v3414 = vpack.c.bf16 %v3362, %v3359
        %v3415 = vpack.c.bf16 %v3370, %v3367
        %v3416 = vpack.c.bf16 %v3378, %v3375
        %v3417 = vpack.c.bf16 %v3386, %v3383
        %v3418 = vpack.c.bf16 %v3394, %v3391
        %v3419 = vpack.c.bf16 %v3402, %v3399
        %v3420 = vpack.c.bf16 %v3410, %v3407
        %3429 = vrot.lane.b32.xlu0 %v3413, 96
        %v3430 = vpop.permute.xlu0 %3429
        %3431 = vrot.lane.b32.xlu0 %v3414, 96
        %v3432 = vpop.permute.xlu0 %3431
        %3433 = vrot.lane.b32.xlu0 %v3415, 96
        %v3434 = vpop.permute.xlu0 %3433
        %3435 = vrot.lane.b32.xlu0 %v3416, 96
        %v3436 = vpop.permute.xlu0 %3435
        %3437 = vrot.lane.b32.xlu0 %v3417, 96
        %v3438 = vpop.permute.xlu0 %3437
        %3439 = vrot.lane.b32.xlu0 %v3418, 96
        %v3440 = vpop.permute.xlu0 %3439
        %3441 = vrot.lane.b32.xlu0 %v3419, 96
        %v3442 = vpop.permute.xlu0 %3441
        %3443 = vrot.lane.b32.xlu0 %v3420, 96
        %v3444 = vpop.permute.xlu0 %3443
        %vm3453 = vcmask 1048320
        %3454 = vst.msk [vmem:[#allocation2] sm:$0xff] %vm3453, %v3430
        %3455 = vst.msk [vmem:[#allocation2 + $0x8] sm:$0xff] %vm3453, %v3432
        %3456 = vst.msk [vmem:[#allocation2 + $0x10] sm:$0xff] %vm3453, %v3434
        %3457 = vst.msk [vmem:[#allocation2 + $0x18] sm:$0xff] %vm3453, %v3436
        %3458 = vst.msk [vmem:[#allocation2 + $0x20] sm:$0xff] %vm3453, %v3438
        %3459 = vst.msk [vmem:[#allocation2 + $0x28] sm:$0xff] %vm3453, %v3440
        %3460 = vst.msk [vmem:[#allocation2 + $0x30] sm:$0xff] %vm3453, %v3442
        %3461 = vst.msk [vmem:[#allocation2 + $0x38] sm:$0xff] %vm3453, %v3444
        %v3462 = vld [vmem:[#allocation2] sm:$0xff]
        %v3463 = vld [vmem:[#allocation2 + $0x8] sm:$0xff]
        %v3464 = vld [vmem:[#allocation2 + $0x10] sm:$0xff]
        %v3465 = vld [vmem:[#allocation2 + $0x18] sm:$0xff]
        %v3466 = vld [vmem:[#allocation2 + $0x20] sm:$0xff]
        %v3467 = vld [vmem:[#allocation2 + $0x28] sm:$0xff]
        %v3468 = vld [vmem:[#allocation2 + $0x30] sm:$0xff]
        %v3469 = vld [vmem:[#allocation2 + $0x38] sm:$0xff]
        %v3470 = vld [vmem:[#allocation11] sm:$0xf]
        %v3471 = vld [vmem:[#allocation11 + $0x4] sm:$0xf]
        %v3472 = vld [vmem:[#allocation11 + $0x8] sm:$0xf]
        %v3473 = vld [vmem:[#allocation11 + $0xc] sm:$0xf]
        %v3474 = vld [vmem:[#allocation11 + $0x10] sm:$0xf]
        %v3475 = vld [vmem:[#allocation11 + $0x14] sm:$0xf]
        %v3476 = vld [vmem:[#allocation11 + $0x18] sm:$0xf]
        %v3477 = vld [vmem:[#allocation11 + $0x1c] sm:$0xf]
        %v3478 = vld [vmem:[#allocation11 + $0x20] sm:$0xf]
        %v3479 = vld [vmem:[#allocation11 + $0x24] sm:$0xf]
        %v3480 = vld [vmem:[#allocation11 + $0x28] sm:$0xf]
        %v3481 = vld [vmem:[#allocation11 + $0x2c] sm:$0xf]
        %v3482 = vld [vmem:[#allocation11 + $0x30] sm:$0xf]
        %v3483 = vld [vmem:[#allocation11 + $0x34] sm:$0xf]
        %v3484 = vld [vmem:[#allocation11 + $0x38] sm:$0xf]
        %v3485 = vld [vmem:[#allocation11 + $0x3c] sm:$0xf]
        %v3502 = vunpack.c.l.b16 %v3470
        %v3503 = vunpack.c.l.b16 %v3471
        %v3504 = vunpack.c.l.b16 %v3472
        %v3505 = vunpack.c.l.b16 %v3473
        %v3506 = vunpack.c.l.b16 %v3474
        %v3507 = vunpack.c.l.b16 %v3475
        %v3508 = vunpack.c.l.b16 %v3476
        %v3509 = vunpack.c.l.b16 %v3477
        %v3510 = vunpack.c.l.b16 %v3478
        %v3511 = vunpack.c.l.b16 %v3479
        %v3512 = vunpack.c.l.b16 %v3480
        %v3513 = vunpack.c.l.b16 %v3481
        %v3514 = vunpack.c.l.b16 %v3482
        %v3515 = vunpack.c.l.b16 %v3483
        %v3516 = vunpack.c.l.b16 %v3484
        %v3517 = vunpack.c.l.b16 %v3485
        %v3518 = vpack.c.b16 %v3503, %v3502
        %v3519 = vpack.c.b16 %v3505, %v3504
        %v3520 = vpack.c.b16 %v3507, %v3506
        %v3521 = vpack.c.b16 %v3509, %v3508
        %v3522 = vpack.c.b16 %v3511, %v3510
        %v3523 = vpack.c.b16 %v3513, %v3512
        %v3524 = vpack.c.b16 %v3515, %v3514
        %v3525 = vpack.c.b16 %v3517, %v3516
        %3534 = vmatprep.subr.bf16.mxu0 0
        %3535 = vmatpush1.bf16.msra.mxu0 %v3518
        %3536 = vmatprep.subr.bf16.mxu0 0
        %3537 = vmatpush1.bf16.msra.mxu0 %v3519
        %3538 = vmatprep.subr.bf16.mxu0 0
        %3539 = vmatpush1.bf16.msra.mxu0 %v3520
        %3540 = vmatprep.subr.bf16.mxu0 0
        %3541 = vmatpush1.bf16.msra.mxu0 %v3521
        %3542 = vmatprep.subr.bf16.mxu0 0
        %3543 = vmatpush1.bf16.msra.mxu0 %v3522
        %3544 = vmatprep.subr.bf16.mxu0 0
        %3545 = vmatpush1.bf16.msra.mxu0 %v3523
        %3546 = vmatprep.subr.bf16.mxu0 0
        %3547 = vmatpush1.bf16.msra.mxu0 %v3524
        %3548 = vmatprep.subr.bf16.mxu0 0
        %3549 = vmatpush1.bf16.msra.mxu0 %v3525
        %3550 = vmatprep.subr.bf16.mxu0 0
        %3551 = vmatpush1.bf16.msra.mxu0 0
        %3552 = vmatprep.subr.bf16.mxu0 0
        %3553 = vmatpush1.bf16.msra.mxu0 0
        %3554 = vmatprep.subr.bf16.mxu0 0
        %3555 = vmatpush1.bf16.msra.mxu0 0
        %3556 = vmatprep.subr.bf16.mxu0 0
        %3557 = vmatpush1.bf16.msra.mxu0 0
        %3558 = vmatprep.subr.bf16.mxu0 0
        %3559 = vmatpush1.bf16.msra.mxu0 0
        %3560 = vmatprep.subr.bf16.mxu0 0
        %3561 = vmatpush1.bf16.msra.mxu0 0
        %3562 = vmatprep.subr.bf16.mxu0 0
        %3563 = vmatpush1.bf16.msra.mxu0 0
        %3564 = vmatprep.subr.bf16.mxu0 0
        %3565 = vmatpush1.bf16.msra.mxu0 0
        %3566 = vmatprep.mubr.bf16.mxu0 0
        %3567 = vmatmul.mubr.bf16.gmra.mrb[0].mxu0 %v3462
        %v3568 = vpop.f32.mrb[0].mxu0
        %v3569 = vadd.f32 0.0, %v3568
        %v3570 = vpop.f32.mrb[0].mxu0
        %v3571 = vpop.f32.mrb[0].mxu0
        %v3572 = vadd.f32 0.0, %v3571
        %v3573 = vpop.f32.mrb[0].mxu0
        %3574 = vmatprep.mubr.bf16.mxu0 0
        %3575 = vmatmul.mubr.bf16.gmra.mrb[0].mxu0 %v3463
        %v3576 = vpop.f32.mrb[0].mxu0
        %v3577 = vadd.f32 0.0, %v3576
        %v3578 = vpop.f32.mrb[0].mxu0
        %v3579 = vpop.f32.mrb[0].mxu0
        %v3580 = vadd.f32 0.0, %v3579
        %v3581 = vpop.f32.mrb[0].mxu0
        %3582 = vmatprep.mubr.bf16.mxu0 0
        %3583 = vmatmul.mubr.bf16.gmra.mrb[0].mxu0 %v3464
        %v3584 = vpop.f32.mrb[0].mxu0
        %v3585 = vadd.f32 0.0, %v3584
        %v3586 = vpop.f32.mrb[0].mxu0
        %v3587 = vpop.f32.mrb[0].mxu0
        %v3588 = vadd.f32 0.0, %v3587
        %v3589 = vpop.f32.mrb[0].mxu0
        %3590 = vmatprep.mubr.bf16.mxu0 0
        %3591 = vmatmul.mubr.bf16.gmra.mrb[0].mxu0 %v3465
        %v3592 = vpop.f32.mrb[0].mxu0
        %v3593 = vadd.f32 0.0, %v3592
        %v3594 = vpop.f32.mrb[0].mxu0
        %v3595 = vpop.f32.mrb[0].mxu0
        %v3596 = vadd.f32 0.0, %v3595
        %v3597 = vpop.f32.mrb[0].mxu0
        %3598 = vmatprep.mubr.bf16.mxu0 0
        %3599 = vmatmul.mubr.bf16.gmra.mrb[0].mxu0 %v3466
        %v3600 = vpop.f32.mrb[0].mxu0
        %v3601 = vadd.f32 0.0, %v3600
        %v3602 = vpop.f32.mrb[0].mxu0
        %v3603 = vpop.f32.mrb[0].mxu0
        %v3604 = vadd.f32 0.0, %v3603
        %v3605 = vpop.f32.mrb[0].mxu0
        %3606 = vmatprep.mubr.bf16.mxu0 0
        %3607 = vmatmul.mubr.bf16.gmra.mrb[0].mxu0 %v3467
        %v3608 = vpop.f32.mrb[0].mxu0
        %v3609 = vadd.f32 0.0, %v3608
        %v3610 = vpop.f32.mrb[0].mxu0
        %v3611 = vpop.f32.mrb[0].mxu0
        %v3612 = vadd.f32 0.0, %v3611
        %v3613 = vpop.f32.mrb[0].mxu0
        %3614 = vmatprep.mubr.bf16.mxu0 0
        %3615 = vmatmul.mubr.bf16.gmra.mrb[0].mxu0 %v3468
        %v3616 = vpop.f32.mrb[0].mxu0
        %v3617 = vadd.f32 0.0, %v3616
        %v3618 = vpop.f32.mrb[0].mxu0
        %v3619 = vpop.f32.mrb[0].mxu0
        %v3620 = vadd.f32 0.0, %v3619
        %v3621 = vpop.f32.mrb[0].mxu0
        %3622 = vmatprep.mubr.bf16.mxu0 0
        %3623 = vmatmul.mubr.bf16.gmra.mrb[0].mxu0 %v3469
        %v3624 = vpop.f32.mrb[0].mxu0
        %v3625 = vadd.f32 0.0, %v3624
        %v3626 = vpop.f32.mrb[0].mxu0
        %v3627 = vpop.f32.mrb[0].mxu0
        %v3628 = vadd.f32 0.0, %v3627
        %v3629 = vpop.f32.mrb[0].mxu0
        %3630 = vdwg.mxu0
        %v3631 = vadd.f32 %v417, %v3569
        %v3632 = vadd.f32 %v418, %v3572
        %v3633 = vadd.f32 %v419, %v3577
        %v3634 = vadd.f32 %v420, %v3580
        %v3635 = vadd.f32 %v421, %v3585
        %v3636 = vadd.f32 %v422, %v3588
        %v3637 = vadd.f32 %v423, %v3593
        %v3638 = vadd.f32 %v424, %v3596
        %v3639 = vadd.f32 %v425, %v3601
        %v3640 = vadd.f32 %v426, %v3604
        %v3641 = vadd.f32 %v427, %v3609
        %v3642 = vadd.f32 %v428, %v3612
        %v3643 = vadd.f32 %v429, %v3617
        %v3644 = vadd.f32 %v430, %v3620
        %v3645 = vadd.f32 %v431, %v3625
        %v3646 = vadd.f32 %v432, %v3628
        %3647 = vadd.xlane.f32.xlu0 %v3631
        %v3648 = vpop.xlane.xlu0 %3647
        %3649 = vadd.xlane.f32.xlu0 %v3632
        %v3650 = vpop.xlane.xlu0 %3649
        %3651 = vadd.xlane.f32.xlu0 %v3633
        %v3652 = vpop.xlane.xlu0 %3651
        %3653 = vadd.xlane.f32.xlu0 %v3634
        %v3654 = vpop.xlane.xlu0 %3653
        %3655 = vadd.xlane.f32.xlu0 %v3635
        %v3656 = vpop.xlane.xlu0 %3655
        %3657 = vadd.xlane.f32.xlu0 %v3636
        %v3658 = vpop.xlane.xlu0 %3657
        %3659 = vadd.xlane.f32.xlu0 %v3637
        %v3660 = vpop.xlane.xlu0 %3659
        %3661 = vadd.xlane.f32.xlu0 %v3638
        %v3662 = vpop.xlane.xlu0 %3661
        %3663 = vadd.xlane.f32.xlu0 %v3639
        %v3664 = vpop.xlane.xlu0 %3663
        %3665 = vadd.xlane.f32.xlu0 %v3640
        %v3666 = vpop.xlane.xlu0 %3665
        %3667 = vadd.xlane.f32.xlu0 %v3641
        %v3668 = vpop.xlane.xlu0 %3667
        %3669 = vadd.xlane.f32.xlu0 %v3642
        %v3670 = vpop.xlane.xlu0 %3669
        %3671 = vadd.xlane.f32.xlu0 %v3643
        %v3672 = vpop.xlane.xlu0 %3671
        %3673 = vadd.xlane.f32.xlu0 %v3644
        %v3674 = vpop.xlane.xlu0 %3673
        %3675 = vadd.xlane.f32.xlu0 %v3645
        %v3676 = vpop.xlane.xlu0 %3675
        %3677 = vadd.xlane.f32.xlu0 %v3646
        %v3678 = vpop.xlane.xlu0 %3677
        %v3679 = vrcp.pop 128.0
        %v3680 = vmul.f32 %v3648, %v3679
        %v3681 = vmul.f32 %v3650, %v3679
        %v3682 = vmul.f32 %v3652, %v3679
        %v3683 = vmul.f32 %v3654, %v3679
        %v3684 = vmul.f32 %v3656, %v3679
        %v3685 = vmul.f32 %v3658, %v3679
        %v3686 = vmul.f32 %v3660, %v3679
        %v3687 = vmul.f32 %v3662, %v3679
        %v3688 = vmul.f32 %v3664, %v3679
        %v3689 = vmul.f32 %v3666, %v3679
        %v3690 = vmul.f32 %v3668, %v3679
        %v3691 = vmul.f32 %v3670, %v3679
        %v3692 = vmul.f32 %v3672, %v3679
        %v3693 = vmul.f32 %v3674, %v3679
        %v3694 = vmul.f32 %v3676, %v3679
        %v3695 = vmul.f32 %v3678, %v3679
        %v3696 = vsub.f32 %v3631, %v3680
        %v3697 = vsub.f32 %v3632, %v3681
        %v3698 = vsub.f32 %v3633, %v3682
        %v3699 = vsub.f32 %v3634, %v3683
        %v3700 = vsub.f32 %v3635, %v3684
        %v3701 = vsub.f32 %v3636, %v3685
        %v3702 = vsub.f32 %v3637, %v3686
        %v3703 = vsub.f32 %v3638, %v3687
        %v3704 = vsub.f32 %v3639, %v3688
        %v3705 = vsub.f32 %v3640, %v3689
        %v3706 = vsub.f32 %v3641, %v3690
        %v3707 = vsub.f32 %v3642, %v3691
        %v3708 = vsub.f32 %v3643, %v3692
        %v3709 = vsub.f32 %v3644, %v3693
        %v3710 = vsub.f32 %v3645, %v3694
        %v3711 = vsub.f32 %v3646, %v3695
        %v3712 = vmul.f32 %v3696, %v3696
        %v3713 = vmul.f32 %v3697, %v3697
        %v3714 = vmul.f32 %v3698, %v3698
        %v3715 = vmul.f32 %v3699, %v3699
        %v3716 = vmul.f32 %v3700, %v3700
        %v3717 = vmul.f32 %v3701, %v3701
        %v3718 = vmul.f32 %v3702, %v3702
        %v3719 = vmul.f32 %v3703, %v3703
        %v3720 = vmul.f32 %v3704, %v3704
        %v3721 = vmul.f32 %v3705, %v3705
        %v3722 = vmul.f32 %v3706, %v3706
        %v3723 = vmul.f32 %v3707, %v3707
        %v3724 = vmul.f32 %v3708, %v3708
        %v3725 = vmul.f32 %v3709, %v3709
        %v3726 = vmul.f32 %v3710, %v3710
        %v3727 = vmul.f32 %v3711, %v3711
        %3728 = vadd.xlane.f32.xlu0 %v3712
        %v3729 = vpop.xlane.xlu0 %3728
        %3730 = vadd.xlane.f32.xlu0 %v3713
        %v3731 = vpop.xlane.xlu0 %3730
        %3732 = vadd.xlane.f32.xlu0 %v3714
        %v3733 = vpop.xlane.xlu0 %3732
        %3734 = vadd.xlane.f32.xlu0 %v3715
        %v3735 = vpop.xlane.xlu0 %3734
        %3736 = vadd.xlane.f32.xlu0 %v3716
        %v3737 = vpop.xlane.xlu0 %3736
        %3738 = vadd.xlane.f32.xlu0 %v3717
        %v3739 = vpop.xlane.xlu0 %3738
        %3740 = vadd.xlane.f32.xlu0 %v3718
        %v3741 = vpop.xlane.xlu0 %3740
        %3742 = vadd.xlane.f32.xlu0 %v3719
        %v3743 = vpop.xlane.xlu0 %3742
        %3744 = vadd.xlane.f32.xlu0 %v3720
        %v3745 = vpop.xlane.xlu0 %3744
        %3746 = vadd.xlane.f32.xlu0 %v3721
        %v3747 = vpop.xlane.xlu0 %3746
        %3748 = vadd.xlane.f32.xlu0 %v3722
        %v3749 = vpop.xlane.xlu0 %3748
        %3750 = vadd.xlane.f32.xlu0 %v3723
        %v3751 = vpop.xlane.xlu0 %3750
        %3752 = vadd.xlane.f32.xlu0 %v3724
        %v3753 = vpop.xlane.xlu0 %3752
        %3754 = vadd.xlane.f32.xlu0 %v3725
        %v3755 = vpop.xlane.xlu0 %3754
        %3756 = vadd.xlane.f32.xlu0 %v3726
        %v3757 = vpop.xlane.xlu0 %3756
        %3758 = vadd.xlane.f32.xlu0 %v3727
        %v3759 = vpop.xlane.xlu0 %3758
        %v3760 = vmul.f32 %v3729, %v3679
        %v3761 = vmul.f32 %v3731, %v3679
        %v3762 = vmul.f32 %v3733, %v3679
        %v3763 = vmul.f32 %v3735, %v3679
        %v3764 = vmul.f32 %v3737, %v3679
        %v3765 = vmul.f32 %v3739, %v3679
        %v3766 = vmul.f32 %v3741, %v3679
        %v3767 = vmul.f32 %v3743, %v3679
        %v3768 = vmul.f32 %v3745, %v3679
        %v3769 = vmul.f32 %v3747, %v3679
        %v3770 = vmul.f32 %v3749, %v3679
        %v3771 = vmul.f32 %v3751, %v3679
        %v3772 = vmul.f32 %v3753, %v3679
        %v3773 = vmul.f32 %v3755, %v3679
        %v3774 = vmul.f32 %v3757, %v3679
        %v3775 = vmul.f32 %v3759, %v3679
        %v3776 = vadd.f32 %v3760, 1e-05
        %v3777 = vadd.f32 %v3761, 1e-05
        %v3778 = vadd.f32 %v3762, 1e-05
        %v3779 = vadd.f32 %v3763, 1e-05
        %v3780 = vadd.f32 %v3764, 1e-05
        %v3781 = vadd.f32 %v3765, 1e-05
        %v3782 = vadd.f32 %v3766, 1e-05
        %v3783 = vadd.f32 %v3767, 1e-05
        %v3784 = vadd.f32 %v3768, 1e-05
        %v3785 = vadd.f32 %v3769, 1e-05
        %v3786 = vadd.f32 %v3770, 1e-05
        %v3787 = vadd.f32 %v3771, 1e-05
        %v3788 = vadd.f32 %v3772, 1e-05
        %v3789 = vadd.f32 %v3773, 1e-05
        %v3790 = vadd.f32 %v3774, 1e-05
        %v3791 = vadd.f32 %v3775, 1e-05
        %v3792 = vrsqrt.pop %v3776
        %v3793 = vrsqrt.pop %v3777
        %v3794 = vrsqrt.pop %v3778
        %v3795 = vrsqrt.pop %v3779
        %v3796 = vrsqrt.pop %v3780
        %v3797 = vrsqrt.pop %v3781
        %v3798 = vrsqrt.pop %v3782
        %v3799 = vrsqrt.pop %v3783
        %v3800 = vrsqrt.pop %v3784
        %v3801 = vrsqrt.pop %v3785
        %v3802 = vrsqrt.pop %v3786
        %v3803 = vrsqrt.pop %v3787
        %v3804 = vrsqrt.pop %v3788
        %v3805 = vrsqrt.pop %v3789
        %v3806 = vrsqrt.pop %v3790
        %v3807 = vrsqrt.pop %v3791
        %v3808 = vmul.f32 %v3696, %v3792
        %v3809 = vmul.f32 %v3697, %v3793
        %v3810 = vmul.f32 %v3698, %v3794
        %v3811 = vmul.f32 %v3699, %v3795
        %v3812 = vmul.f32 %v3700, %v3796
        %v3813 = vmul.f32 %v3701, %v3797
        %v3814 = vmul.f32 %v3702, %v3798
        %v3815 = vmul.f32 %v3703, %v3799
        %v3816 = vmul.f32 %v3704, %v3800
        %v3817 = vmul.f32 %v3705, %v3801
        %v3818 = vmul.f32 %v3706, %v3802
        %v3819 = vmul.f32 %v3707, %v3803
        %v3820 = vmul.f32 %v3708, %v3804
        %v3821 = vmul.f32 %v3709, %v3805
        %v3822 = vmul.f32 %v3710, %v3806
        %v3823 = vmul.f32 %v3711, %v3807
        %v3824 = vpack.c.bf16 %v3809, %v3808
        %v3825 = vpack.c.bf16 %v3811, %v3810
        %v3826 = vpack.c.bf16 %v3813, %v3812
        %v3827 = vpack.c.bf16 %v3815, %v3814
        %v3828 = vpack.c.bf16 %v3817, %v3816
        %v3829 = vpack.c.bf16 %v3819, %v3818
        %v3830 = vpack.c.bf16 %v3821, %v3820
        %v3831 = vpack.c.bf16 %v3823, %v3822
        %v3832 = vld [vmem:[#allocation12] sm:$0xff]
        %v3833 = vld [vmem:[#allocation12 + $0x8] sm:$0xff]
        %v3834 = vld [vmem:[#allocation12 + $0x10] sm:$0xff]
        %v3835 = vld [vmem:[#allocation12 + $0x18] sm:$0xff]
        %v3836 = vld [vmem:[#allocation12 + $0x20] sm:$0xff]
        %v3837 = vld [vmem:[#allocation12 + $0x28] sm:$0xff]
        %v3838 = vld [vmem:[#allocation12 + $0x30] sm:$0xff]
        %v3839 = vld [vmem:[#allocation12 + $0x38] sm:$0xff]
        %v3840 = vld [vmem:[#allocation12 + $0x40] sm:$0xff]
        %v3841 = vld [vmem:[#allocation12 + $0x48] sm:$0xff]
        %v3842 = vld [vmem:[#allocation12 + $0x50] sm:$0xff]
        %v3843 = vld [vmem:[#allocation12 + $0x58] sm:$0xff]
        %v3844 = vld [vmem:[#allocation12 + $0x60] sm:$0xff]
        %v3845 = vld [vmem:[#allocation12 + $0x68] sm:$0xff]
        %v3846 = vld [vmem:[#allocation12 + $0x70] sm:$0xff]
        %v3847 = vld [vmem:[#allocation12 + $0x78] sm:$0xff]
        %v3848 = vld [vmem:[#allocation12 + $0x80] sm:$0xff]
        %v3849 = vld [vmem:[#allocation12 + $0x88] sm:$0xff]
        %v3850 = vld [vmem:[#allocation12 + $0x90] sm:$0xff]
        %v3851 = vld [vmem:[#allocation12 + $0x98] sm:$0xff]
        %v3852 = vld [vmem:[#allocation12 + $0xa0] sm:$0xff]
        %v3853 = vld [vmem:[#allocation12 + $0xa8] sm:$0xff]
        %v3854 = vld [vmem:[#allocation12 + $0xb0] sm:$0xff]
        %v3855 = vld [vmem:[#allocation12 + $0xb8] sm:$0xff]
        %v3856 = vld [vmem:[#allocation12 + $0xc0] sm:$0xff]
        %v3857 = vld [vmem:[#allocation12 + $0xc8] sm:$0xff]
        %v3858 = vld [vmem:[#allocation12 + $0xd0] sm:$0xff]
        %v3859 = vld [vmem:[#allocation12 + $0xd8] sm:$0xff]
        %v3860 = vld [vmem:[#allocation12 + $0xe0] sm:$0xff]
        %v3861 = vld [vmem:[#allocation12 + $0xe8] sm:$0xff]
        %v3862 = vld [vmem:[#allocation12 + $0xf0] sm:$0xff]
        %v3863 = vld [vmem:[#allocation12 + $0xf8] sm:$0xff]
        %v3864 = vld [vmem:[%s6] sm:$0xf]
        %v3866 = vlaneseq
        %v3867 = vshrl.u32 %v3866, 7
        %v3868 = vsub.s32 0, %v3867
        %v3869 = vrot.slane %v3864, %v3868
        %v3870 = vlaneseq
        %v3871 = vshrl.u32 %v3870, 7
        %v3872 = vsub.s32 1, %v3871
        %v3873 = vrot.slane %v3864, %v3872
        %v3874 = vlaneseq
        %v3875 = vshrl.u32 %v3874, 7
        %v3876 = vsub.s32 2, %v3875
        %v3877 = vrot.slane %v3864, %v3876
        %v3878 = vlaneseq
        %v3879 = vshrl.u32 %v3878, 7
        %v3880 = vsub.s32 3, %v3879
        %v3881 = vrot.slane %v3864, %v3880
        %v3918 = vunpack.c.l.b16 %v3832
        %v3919 = vunpack.c.h.b16 %v3832
        %v3920 = vunpack.c.l.b16 %v3833
        %v3921 = vunpack.c.h.b16 %v3833
        %v3922 = vunpack.c.l.b16 %v3834
        %v3923 = vunpack.c.h.b16 %v3834
        %v3924 = vunpack.c.l.b16 %v3835
        %v3925 = vunpack.c.h.b16 %v3835
        %v3926 = vunpack.c.l.b16 %v3836
        %v3927 = vunpack.c.h.b16 %v3836
        %v3928 = vunpack.c.l.b16 %v3837
        %v3929 = vunpack.c.h.b16 %v3837
        %v3930 = vunpack.c.l.b16 %v3838
        %v3931 = vunpack.c.h.b16 %v3838
        %v3932 = vunpack.c.l.b16 %v3839
        %v3933 = vunpack.c.h.b16 %v3839
        %v3934 = vunpack.c.l.b16 %v3840
        %v3935 = vunpack.c.h.b16 %v3840
        %v3936 = vunpack.c.l.b16 %v3841
        %v3937 = vunpack.c.h.b16 %v3841
        %v3938 = vunpack.c.l.b16 %v3842
        %v3939 = vunpack.c.h.b16 %v3842
        %v3940 = vunpack.c.l.b16 %v3843
        %v3941 = vunpack.c.h.b16 %v3843
        %v3942 = vunpack.c.l.b16 %v3844
        %v3943 = vunpack.c.h.b16 %v3844
        %v3944 = vunpack.c.l.b16 %v3845
        %v3945 = vunpack.c.h.b16 %v3845
        %v3946 = vunpack.c.l.b16 %v3846
        %v3947 = vunpack.c.h.b16 %v3846
        %v3948 = vunpack.c.l.b16 %v3847
        %v3949 = vunpack.c.h.b16 %v3847
        %v3950 = vunpack.c.l.b16 %v3848
        %v3951 = vunpack.c.h.b16 %v3848
        %v3952 = vunpack.c.l.b16 %v3849
        %v3953 = vunpack.c.h.b16 %v3849
        %v3954 = vunpack.c.l.b16 %v3850
        %v3955 = vunpack.c.h.b16 %v3850
        %v3956 = vunpack.c.l.b16 %v3851
        %v3957 = vunpack.c.h.b16 %v3851
        %v3958 = vunpack.c.l.b16 %v3852
        %v3959 = vunpack.c.h.b16 %v3852
        %v3960 = vunpack.c.l.b16 %v3853
        %v3961 = vunpack.c.h.b16 %v3853
        %v3962 = vunpack.c.l.b16 %v3854
        %v3963 = vunpack.c.h.b16 %v3854
        %v3964 = vunpack.c.l.b16 %v3855
        %v3965 = vunpack.c.h.b16 %v3855
        %v3966 = vunpack.c.l.b16 %v3856
        %v3967 = vunpack.c.h.b16 %v3856
        %v3968 = vunpack.c.l.b16 %v3857
        %v3969 = vunpack.c.h.b16 %v3857
        %v3970 = vunpack.c.l.b16 %v3858
        %v3971 = vunpack.c.h.b16 %v3858
        %v3972 = vunpack.c.l.b16 %v3859
        %v3973 = vunpack.c.h.b16 %v3859
        %v3974 = vunpack.c.l.b16 %v3860
        %v3975 = vunpack.c.h.b16 %v3860
        %v3976 = vunpack.c.l.b16 %v3861
        %v3977 = vunpack.c.h.b16 %v3861
        %v3978 = vunpack.c.l.b16 %v3862
        %v3979 = vunpack.c.h.b16 %v3862
        %v3980 = vunpack.c.l.b16 %v3863
        %v3981 = vunpack.c.h.b16 %v3863
        %v3982 = vpack.c.b16 %v3922, %v3918
        %v3983 = vpack.c.b16 %v3923, %v3919
        %v3984 = vpack.c.b16 %v3924, %v3920
        %v3985 = vpack.c.b16 %v3925, %v3921
        %v3986 = vpack.c.b16 %v3930, %v3926
        %v3987 = vpack.c.b16 %v3931, %v3927
        %v3988 = vpack.c.b16 %v3932, %v3928
        %v3989 = vpack.c.b16 %v3933, %v3929
        %v3990 = vpack.c.b16 %v3938, %v3934
        %v3991 = vpack.c.b16 %v3939, %v3935
        %v3992 = vpack.c.b16 %v3940, %v3936
        %v3993 = vpack.c.b16 %v3941, %v3937
        %v3994 = vpack.c.b16 %v3946, %v3942
        %v3995 = vpack.c.b16 %v3947, %v3943
        %v3996 = vpack.c.b16 %v3948, %v3944
        %v3997 = vpack.c.b16 %v3949, %v3945
        %v3998 = vpack.c.b16 %v3954, %v3950
        %v3999 = vpack.c.b16 %v3955, %v3951
        %v4000 = vpack.c.b16 %v3956, %v3952
        %v4001 = vpack.c.b16 %v3957, %v3953
        %v4002 = vpack.c.b16 %v3962, %v3958
        %v4003 = vpack.c.b16 %v3963, %v3959
        %v4004 = vpack.c.b16 %v3964, %v3960
        %v4005 = vpack.c.b16 %v3965, %v3961
        %v4006 = vpack.c.b16 %v3970, %v3966
        %v4007 = vpack.c.b16 %v3971, %v3967
        %v4008 = vpack.c.b16 %v3972, %v3968
        %v4009 = vpack.c.b16 %v3973, %v3969
        %v4010 = vpack.c.b16 %v3978, %v3974
        %v4011 = vpack.c.b16 %v3979, %v3975
        %v4012 = vpack.c.b16 %v3980, %v3976
        %v4013 = vpack.c.b16 %v3981, %v3977
        %4046 = vmatprep.subr.bf16.mxu0 %v3983
        %4047 = vmatpush1.bf16.msra.mxu0 %v3982
        %4048 = vmatprep.subr.bf16.mxu0 %v3987
        %4049 = vmatpush1.bf16.msra.mxu0 %v3986
        %4050 = vmatprep.subr.bf16.mxu0 %v3991
        %4051 = vmatpush1.bf16.msra.mxu0 %v3990
        %4052 = vmatprep.subr.bf16.mxu0 %v3995
        %4053 = vmatpush1.bf16.msra.mxu0 %v3994
        %4054 = vmatprep.subr.bf16.mxu0 %v3999
        %4055 = vmatpush1.bf16.msra.mxu0 %v3998
        %4056 = vmatprep.subr.bf16.mxu0 %v4003
        %4057 = vmatpush1.bf16.msra.mxu0 %v4002
        %4058 = vmatprep.subr.bf16.mxu0 %v4007
        %4059 = vmatpush1.bf16.msra.mxu0 %v4006
        %4060 = vmatprep.subr.bf16.mxu0 %v4011
        %4061 = vmatpush1.bf16.msra.mxu0 %v4010
        %4062 = vmatprep.subr.bf16.mxu0 0
        %4063 = vmatpush1.bf16.msra.mxu0 0
        %4064 = vmatprep.subr.bf16.mxu0 0
        %4065 = vmatpush1.bf16.msra.mxu0 0
        %4066 = vmatprep.subr.bf16.mxu0 0
        %4067 = vmatpush1.bf16.msra.mxu0 0
        %4068 = vmatprep.subr.bf16.mxu0 0
        %4069 = vmatpush1.bf16.msra.mxu0 0
        %4070 = vmatprep.subr.bf16.mxu0 0
        %4071 = vmatpush1.bf16.msra.mxu0 0
        %4072 = vmatprep.subr.bf16.mxu0 0
        %4073 = vmatpush1.bf16.msra.mxu0 0
        %4074 = vmatprep.subr.bf16.mxu0 0
        %4075 = vmatpush1.bf16.msra.mxu0 0
        %4076 = vmatprep.subr.bf16.mxu0 0
        %4077 = vmatpush1.bf16.msra.mxu0 0
        %4078 = vmatprep.mubr.bf16.mxu0 0
        %4079 = vmatmul.mubr.bf16.gmra.mrb[0].mxu0 %v3824
        %v4080 = vpop.f32.mrb[0].mxu0
        %v4081 = vadd.f32 %v3869, %v4080
        %v4082 = vpop.f32.mrb[0].mxu0
        %v4083 = vadd.f32 %v3873, %v4082
        %v4084 = vpop.f32.mrb[0].mxu0
        %v4085 = vadd.f32 %v3869, %v4084
        %v4086 = vpop.f32.mrb[0].mxu0
        %v4087 = vadd.f32 %v3873, %v4086
        %4088 = vmatprep.mubr.bf16.mxu0 0
        %4089 = vmatmul.mubr.bf16.gmra.mrb[0].mxu0 %v3825
        %v4090 = vpop.f32.mrb[0].mxu0
        %v4091 = vadd.f32 %v3869, %v4090
        %v4092 = vpop.f32.mrb[0].mxu0
        %v4093 = vadd.f32 %v3873, %v4092
        %v4094 = vpop.f32.mrb[0].mxu0
        %v4095 = vadd.f32 %v3869, %v4094
        %v4096 = vpop.f32.mrb[0].mxu0
        %v4097 = vadd.f32 %v3873, %v4096
        %4098 = vmatprep.mubr.bf16.mxu0 0
        %4099 = vmatmul.mubr.bf16.gmra.mrb[0].mxu0 %v3826
        %v4100 = vpop.f32.mrb[0].mxu0
        %v4101 = vadd.f32 %v3869, %v4100
        %v4102 = vpop.f32.mrb[0].mxu0
        %v4103 = vadd.f32 %v3873, %v4102
        %v4104 = vpop.f32.mrb[0].mxu0
        %v4105 = vadd.f32 %v3869, %v4104
        %v4106 = vpop.f32.mrb[0].mxu0
        %v4107 = vadd.f32 %v3873, %v4106
        %4108 = vmatprep.mubr.bf16.mxu0 0
        %4109 = vmatmul.mubr.bf16.gmra.mrb[0].mxu0 %v3827
        %v4110 = vpop.f32.mrb[0].mxu0
        %v4111 = vadd.f32 %v3869, %v4110
        %v4112 = vpop.f32.mrb[0].mxu0
        %v4113 = vadd.f32 %v3873, %v4112
        %v4114 = vpop.f32.mrb[0].mxu0
        %v4115 = vadd.f32 %v3869, %v4114
        %v4116 = vpop.f32.mrb[0].mxu0
        %v4117 = vadd.f32 %v3873, %v4116
        %4118 = vmatprep.mubr.bf16.mxu0 0
        %4119 = vmatmul.mubr.bf16.gmra.mrb[0].mxu0 %v3828
        %v4120 = vpop.f32.mrb[0].mxu0
        %v4121 = vadd.f32 %v3869, %v4120
        %v4122 = vpop.f32.mrb[0].mxu0
        %v4123 = vadd.f32 %v3873, %v4122
        %v4124 = vpop.f32.mrb[0].mxu0
        %v4125 = vadd.f32 %v3869, %v4124
        %v4126 = vpop.f32.mrb[0].mxu0
        %v4127 = vadd.f32 %v3873, %v4126
        %4128 = vmatprep.mubr.bf16.mxu0 0
        %4129 = vmatmul.mubr.bf16.gmra.mrb[0].mxu0 %v3829
        %v4130 = vpop.f32.mrb[0].mxu0
        %v4131 = vadd.f32 %v3869, %v4130
        %v4132 = vpop.f32.mrb[0].mxu0
        %v4133 = vadd.f32 %v3873, %v4132
        %v4134 = vpop.f32.mrb[0].mxu0
        %v4135 = vadd.f32 %v3869, %v4134
        %v4136 = vpop.f32.mrb[0].mxu0
        %v4137 = vadd.f32 %v3873, %v4136
        %4138 = vmatprep.mubr.bf16.mxu0 0
        %4139 = vmatmul.mubr.bf16.gmra.mrb[0].mxu0 %v3830
        %v4140 = vpop.f32.mrb[0].mxu0
        %v4141 = vadd.f32 %v3869, %v4140
        %v4142 = vpop.f32.mrb[0].mxu0
        %v4143 = vadd.f32 %v3873, %v4142
        %v4144 = vpop.f32.mrb[0].mxu0
        %v4145 = vadd.f32 %v3869, %v4144
        %v4146 = vpop.f32.mrb[0].mxu0
        %v4147 = vadd.f32 %v3873, %v4146
        %4148 = vmatprep.mubr.bf16.mxu0 0
        %4149 = vmatmul.mubr.bf16.gmra.mrb[0].mxu0 %v3831
        %v4150 = vpop.f32.mrb[0].mxu0
        %v4151 = vadd.f32 %v3869, %v4150
        %v4152 = vpop.f32.mrb[0].mxu0
        %v4153 = vadd.f32 %v3873, %v4152
        %v4154 = vpop.f32.mrb[0].mxu0
        %v4155 = vadd.f32 %v3869, %v4154
        %v4156 = vpop.f32.mrb[0].mxu0
        %v4157 = vadd.f32 %v3873, %v4156
        %4158 = vdwg.mxu0
        %4159 = vmatprep.subr.bf16.mxu0 %v3985
        %4160 = vmatpush1.bf16.msra.mxu0 %v3984
        %4161 = vmatprep.subr.bf16.mxu0 %v3989
        %4162 = vmatpush1.bf16.msra.mxu0 %v3988
        %4163 = vmatprep.subr.bf16.mxu0 %v3993
        %4164 = vmatpush1.bf16.msra.mxu0 %v3992
        %4165 = vmatprep.subr.bf16.mxu0 %v3997
        %4166 = vmatpush1.bf16.msra.mxu0 %v3996
        %4167 = vmatprep.subr.bf16.mxu0 %v4001
        %4168 = vmatpush1.bf16.msra.mxu0 %v4000
        %4169 = vmatprep.subr.bf16.mxu0 %v4005
        %4170 = vmatpush1.bf16.msra.mxu0 %v4004
        %4171 = vmatprep.subr.bf16.mxu0 %v4009
        %4172 = vmatpush1.bf16.msra.mxu0 %v4008
        %4173 = vmatprep.subr.bf16.mxu0 %v4013
        %4174 = vmatpush1.bf16.msra.mxu0 %v4012
        %4175 = vmatprep.subr.bf16.mxu0 0
        %4176 = vmatpush1.bf16.msra.mxu0 0
        %4177 = vmatprep.subr.bf16.mxu0 0
        %4178 = vmatpush1.bf16.msra.mxu0 0
        %4179 = vmatprep.subr.bf16.mxu0 0
        %4180 = vmatpush1.bf16.msra.mxu0 0
        %4181 = vmatprep.subr.bf16.mxu0 0
        %4182 = vmatpush1.bf16.msra.mxu0 0
        %4183 = vmatprep.subr.bf16.mxu0 0
        %4184 = vmatpush1.bf16.msra.mxu0 0
        %4185 = vmatprep.subr.bf16.mxu0 0
        %4186 = vmatpush1.bf16.msra.mxu0 0
        %4187 = vmatprep.subr.bf16.mxu0 0
        %4188 = vmatpush1.bf16.msra.mxu0 0
        %4189 = vmatprep.subr.bf16.mxu0 0
        %4190 = vmatpush1.bf16.msra.mxu0 0
        %4191 = vmatprep.mubr.bf16.mxu0 0
        %4192 = vmatmul.mubr.bf16.gmra.mrb[0].mxu0 %v3824
        %v4193 = vpop.f32.mrb[0].mxu0
        %v4194 = vadd.f32 %v3877, %v4193
        %v4195 = vpop.f32.mrb[0].mxu0
        %v4196 = vadd.f32 %v3881, %v4195
        %v4197 = vpop.f32.mrb[0].mxu0
        %v4198 = vadd.f32 %v3877, %v4197
        %v4199 = vpop.f32.mrb[0].mxu0
        %v4200 = vadd.f32 %v3881, %v4199
        %4201 = vmatprep.mubr.bf16.mxu0 0
        %4202 = vmatmul.mubr.bf16.gmra.mrb[0].mxu0 %v3825
        %v4203 = vpop.f32.mrb[0].mxu0
        %v4204 = vadd.f32 %v3877, %v4203
        %v4205 = vpop.f32.mrb[0].mxu0
        %v4206 = vadd.f32 %v3881, %v4205
        %v4207 = vpop.f32.mrb[0].mxu0
        %v4208 = vadd.f32 %v3877, %v4207
        %v4209 = vpop.f32.mrb[0].mxu0
        %v4210 = vadd.f32 %v3881, %v4209
        %4211 = vmatprep.mubr.bf16.mxu0 0
        %4212 = vmatmul.mubr.bf16.gmra.mrb[0].mxu0 %v3826
        %v4213 = vpop.f32.mrb[0].mxu0
        %v4214 = vadd.f32 %v3877, %v4213
        %v4215 = vpop.f32.mrb[0].mxu0
        %v4216 = vadd.f32 %v3881, %v4215
        %v4217 = vpop.f32.mrb[0].mxu0
        %v4218 = vadd.f32 %v3877, %v4217
        %v4219 = vpop.f32.mrb[0].mxu0
        %v4220 = vadd.f32 %v3881, %v4219
        %4221 = vmatprep.mubr.bf16.mxu0 0
        %4222 = vmatmul.mubr.bf16.gmra.mrb[0].mxu0 %v3827
        %v4223 = vpop.f32.mrb[0].mxu0
        %v4224 = vadd.f32 %v3877, %v4223
        %v4225 = vpop.f32.mrb[0].mxu0
        %v4226 = vadd.f32 %v3881, %v4225
        %v4227 = vpop.f32.mrb[0].mxu0
        %v4228 = vadd.f32 %v3877, %v4227
        %v4229 = vpop.f32.mrb[0].mxu0
        %v4230 = vadd.f32 %v3881, %v4229
        %4231 = vmatprep.mubr.bf16.mxu0 0
        %4232 = vmatmul.mubr.bf16.gmra.mrb[0].mxu0 %v3828
        %v4233 = vpop.f32.mrb[0].mxu0
        %v4234 = vadd.f32 %v3877, %v4233
        %v4235 = vpop.f32.mrb[0].mxu0
        %v4236 = vadd.f32 %v3881, %v4235
        %v4237 = vpop.f32.mrb[0].mxu0
        %v4238 = vadd.f32 %v3877, %v4237
        %v4239 = vpop.f32.mrb[0].mxu0
        %v4240 = vadd.f32 %v3881, %v4239
        %4241 = vmatprep.mubr.bf16.mxu0 0
        %4242 = vmatmul.mubr.bf16.gmra.mrb[0].mxu0 %v3829
        %v4243 = vpop.f32.mrb[0].mxu0
        %v4244 = vadd.f32 %v3877, %v4243
        %v4245 = vpop.f32.mrb[0].mxu0
        %v4246 = vadd.f32 %v3881, %v4245
        %v4247 = vpop.f32.mrb[0].mxu0
        %v4248 = vadd.f32 %v3877, %v4247
        %v4249 = vpop.f32.mrb[0].mxu0
        %v4250 = vadd.f32 %v3881, %v4249
        %4251 = vmatprep.mubr.bf16.mxu0 0
        %4252 = vmatmul.mubr.bf16.gmra.mrb[0].mxu0 %v3830
        %v4253 = vpop.f32.mrb[0].mxu0
        %v4254 = vadd.f32 %v3877, %v4253
        %v4255 = vpop.f32.mrb[0].mxu0
        %v4256 = vadd.f32 %v3881, %v4255
        %v4257 = vpop.f32.mrb[0].mxu0
        %v4258 = vadd.f32 %v3877, %v4257
        %v4259 = vpop.f32.mrb[0].mxu0
        %v4260 = vadd.f32 %v3881, %v4259
        %4261 = vmatprep.mubr.bf16.mxu0 0
        %4262 = vmatmul.mubr.bf16.gmra.mrb[0].mxu0 %v3831
        %v4263 = vpop.f32.mrb[0].mxu0
        %v4264 = vadd.f32 %v3877, %v4263
        %v4265 = vpop.f32.mrb[0].mxu0
        %v4266 = vadd.f32 %v3881, %v4265
        %v4267 = vpop.f32.mrb[0].mxu0
        %v4268 = vadd.f32 %v3877, %v4267
        %v4269 = vpop.f32.mrb[0].mxu0
        %v4270 = vadd.f32 %v3881, %v4269
        %4271 = vdwg.mxu0
        %v4272 = vmax.f32 %v4081, 0.0
        %v4273 = vmax.f32 %v4083, 0.0
        %v4274 = vmax.f32 %v4194, 0.0
        %v4275 = vmax.f32 %v4196, 0.0
        %v4276 = vmax.f32 %v4085, 0.0
        %v4277 = vmax.f32 %v4087, 0.0
        %v4278 = vmax.f32 %v4198, 0.0
        %v4279 = vmax.f32 %v4200, 0.0
        %v4280 = vmax.f32 %v4091, 0.0
        %v4281 = vmax.f32 %v4093, 0.0
        %v4282 = vmax.f32 %v4204, 0.0
        %v4283 = vmax.f32 %v4206, 0.0
        %v4284 = vmax.f32 %v4095, 0.0
        %v4285 = vmax.f32 %v4097, 0.0
        %v4286 = vmax.f32 %v4208, 0.0
        %v4287 = vmax.f32 %v4210, 0.0
        %v4288 = vmax.f32 %v4101, 0.0
        %v4289 = vmax.f32 %v4103, 0.0
        %v4290 = vmax.f32 %v4214, 0.0
        %v4291 = vmax.f32 %v4216, 0.0
        %v4292 = vmax.f32 %v4105, 0.0
        %v4293 = vmax.f32 %v4107, 0.0
        %v4294 = vmax.f32 %v4218, 0.0
        %v4295 = vmax.f32 %v4220, 0.0
        %v4296 = vmax.f32 %v4111, 0.0
        %v4297 = vmax.f32 %v4113, 0.0
        %v4298 = vmax.f32 %v4224, 0.0
        %v4299 = vmax.f32 %v4226, 0.0
        %v4300 = vmax.f32 %v4115, 0.0
        %v4301 = vmax.f32 %v4117, 0.0
        %v4302 = vmax.f32 %v4228, 0.0
        %v4303 = vmax.f32 %v4230, 0.0
        %v4304 = vmax.f32 %v4121, 0.0
        %v4305 = vmax.f32 %v4123, 0.0
        %v4306 = vmax.f32 %v4234, 0.0
        %v4307 = vmax.f32 %v4236, 0.0
        %v4308 = vmax.f32 %v4125, 0.0
        %v4309 = vmax.f32 %v4127, 0.0
        %v4310 = vmax.f32 %v4238, 0.0
        %v4311 = vmax.f32 %v4240, 0.0
        %v4312 = vmax.f32 %v4131, 0.0
        %v4313 = vmax.f32 %v4133, 0.0
        %v4314 = vmax.f32 %v4244, 0.0
        %v4315 = vmax.f32 %v4246, 0.0
        %v4316 = vmax.f32 %v4135, 0.0
        %v4317 = vmax.f32 %v4137, 0.0
        %v4318 = vmax.f32 %v4248, 0.0
        %v4319 = vmax.f32 %v4250, 0.0
        %v4320 = vmax.f32 %v4141, 0.0
        %v4321 = vmax.f32 %v4143, 0.0
        %v4322 = vmax.f32 %v4254, 0.0
        %v4323 = vmax.f32 %v4256, 0.0
        %v4324 = vmax.f32 %v4145, 0.0
        %v4325 = vmax.f32 %v4147, 0.0
        %v4326 = vmax.f32 %v4258, 0.0
        %v4327 = vmax.f32 %v4260, 0.0
        %v4328 = vmax.f32 %v4151, 0.0
        %v4329 = vmax.f32 %v4153, 0.0
        %v4330 = vmax.f32 %v4264, 0.0
        %v4331 = vmax.f32 %v4266, 0.0
        %v4332 = vmax.f32 %v4155, 0.0
        %v4333 = vmax.f32 %v4157, 0.0
        %v4334 = vmax.f32 %v4268, 0.0
        %v4335 = vmax.f32 %v4270, 0.0
        %v4336 = vpack.c.bf16 %v4276, %v4272
        %v4337 = vpack.c.bf16 %v4277, %v4273
        %v4338 = vpack.c.bf16 %v4278, %v4274
        %v4339 = vpack.c.bf16 %v4279, %v4275
        %v4340 = vpack.c.bf16 %v4284, %v4280
        %v4341 = vpack.c.bf16 %v4285, %v4281
        %v4342 = vpack.c.bf16 %v4286, %v4282
        %v4343 = vpack.c.bf16 %v4287, %v4283
        %v4344 = vpack.c.bf16 %v4292, %v4288
        %v4345 = vpack.c.bf16 %v4293, %v4289
        %v4346 = vpack.c.bf16 %v4294, %v4290
        %v4347 = vpack.c.bf16 %v4295, %v4291
        %v4348 = vpack.c.bf16 %v4300, %v4296
        %v4349 = vpack.c.bf16 %v4301, %v4297
        %v4350 = vpack.c.bf16 %v4302, %v4298
        %v4351 = vpack.c.bf16 %v4303, %v4299
        %v4352 = vpack.c.bf16 %v4308, %v4304
        %v4353 = vpack.c.bf16 %v4309, %v4305
        %v4354 = vpack.c.bf16 %v4310, %v4306
        %v4355 = vpack.c.bf16 %v4311, %v4307
        %v4356 = vpack.c.bf16 %v4316, %v4312
        %v4357 = vpack.c.bf16 %v4317, %v4313
        %v4358 = vpack.c.bf16 %v4318, %v4314
        %v4359 = vpack.c.bf16 %v4319, %v4315
        %v4360 = vpack.c.bf16 %v4324, %v4320
        %v4361 = vpack.c.bf16 %v4325, %v4321
        %v4362 = vpack.c.bf16 %v4326, %v4322
        %v4363 = vpack.c.bf16 %v4327, %v4323
        %v4364 = vpack.c.bf16 %v4332, %v4328
        %v4365 = vpack.c.bf16 %v4333, %v4329
        %v4366 = vpack.c.bf16 %v4334, %v4330
        %v4367 = vpack.c.bf16 %v4335, %v4331
        %v4368 = vld [vmem:[#allocation14] sm:$0xf]
        %v4369 = vld [vmem:[#allocation14 + $0x4] sm:$0xf]
        %v4370 = vld [vmem:[#allocation14 + $0x8] sm:$0xf]
        %v4371 = vld [vmem:[#allocation14 + $0xc] sm:$0xf]
        %v4372 = vld [vmem:[#allocation14 + $0x10] sm:$0xf]
        %v4373 = vld [vmem:[#allocation14 + $0x14] sm:$0xf]
        %v4374 = vld [vmem:[#allocation14 + $0x18] sm:$0xf]
        %v4375 = vld [vmem:[#allocation14 + $0x1c] sm:$0xf]
        %v4376 = vld [vmem:[#allocation14 + $0x20] sm:$0xf]
        %v4377 = vld [vmem:[#allocation14 + $0x24] sm:$0xf]
        %v4378 = vld [vmem:[#allocation14 + $0x28] sm:$0xf]
        %v4379 = vld [vmem:[#allocation14 + $0x2c] sm:$0xf]
        %v4380 = vld [vmem:[#allocation14 + $0x30] sm:$0xf]
        %v4381 = vld [vmem:[#allocation14 + $0x34] sm:$0xf]
        %v4382 = vld [vmem:[#allocation14 + $0x38] sm:$0xf]
        %v4383 = vld [vmem:[#allocation14 + $0x3c] sm:$0xf]
        %v4384 = vld [vmem:[#allocation14 + $0x40] sm:$0xf]
        %v4385 = vld [vmem:[#allocation14 + $0x44] sm:$0xf]
        %v4386 = vld [vmem:[#allocation14 + $0x48] sm:$0xf]
        %v4387 = vld [vmem:[#allocation14 + $0x4c] sm:$0xf]
        %v4388 = vld [vmem:[#allocation14 + $0x50] sm:$0xf]
        %v4389 = vld [vmem:[#allocation14 + $0x54] sm:$0xf]
        %v4390 = vld [vmem:[#allocation14 + $0x58] sm:$0xf]
        %v4391 = vld [vmem:[#allocation14 + $0x5c] sm:$0xf]
        %v4392 = vld [vmem:[#allocation14 + $0x60] sm:$0xf]
        %v4393 = vld [vmem:[#allocation14 + $0x64] sm:$0xf]
        %v4394 = vld [vmem:[#allocation14 + $0x68] sm:$0xf]
        %v4395 = vld [vmem:[#allocation14 + $0x6c] sm:$0xf]
        %v4396 = vld [vmem:[#allocation14 + $0x70] sm:$0xf]
        %v4397 = vld [vmem:[#allocation14 + $0x74] sm:$0xf]
        %v4398 = vld [vmem:[#allocation14 + $0x78] sm:$0xf]
        %v4399 = vld [vmem:[#allocation14 + $0x7c] sm:$0xf]
        %v4400 = vld [vmem:[#allocation14 + $0x80] sm:$0xf]
        %v4401 = vld [vmem:[#allocation14 + $0x84] sm:$0xf]
        %v4402 = vld [vmem:[#allocation14 + $0x88] sm:$0xf]
        %v4403 = vld [vmem:[#allocation14 + $0x8c] sm:$0xf]
        %v4404 = vld [vmem:[#allocation14 + $0x90] sm:$0xf]
        %v4405 = vld [vmem:[#allocation14 + $0x94] sm:$0xf]
        %v4406 = vld [vmem:[#allocation14 + $0x98] sm:$0xf]
        %v4407 = vld [vmem:[#allocation14 + $0x9c] sm:$0xf]
        %v4408 = vld [vmem:[#allocation14 + $0xa0] sm:$0xf]
        %v4409 = vld [vmem:[#allocation14 + $0xa4] sm:$0xf]
        %v4410 = vld [vmem:[#allocation14 + $0xa8] sm:$0xf]
        %v4411 = vld [vmem:[#allocation14 + $0xac] sm:$0xf]
        %v4412 = vld [vmem:[#allocation14 + $0xb0] sm:$0xf]
        %v4413 = vld [vmem:[#allocation14 + $0xb4] sm:$0xf]
        %v4414 = vld [vmem:[#allocation14 + $0xb8] sm:$0xf]
        %v4415 = vld [vmem:[#allocation14 + $0xbc] sm:$0xf]
        %v4416 = vld [vmem:[#allocation14 + $0xc0] sm:$0xf]
        %v4417 = vld [vmem:[#allocation14 + $0xc4] sm:$0xf]
        %v4418 = vld [vmem:[#allocation14 + $0xc8] sm:$0xf]
        %v4419 = vld [vmem:[#allocation14 + $0xcc] sm:$0xf]
        %v4420 = vld [vmem:[#allocation14 + $0xd0] sm:$0xf]
        %v4421 = vld [vmem:[#allocation14 + $0xd4] sm:$0xf]
        %v4422 = vld [vmem:[#allocation14 + $0xd8] sm:$0xf]
        %v4423 = vld [vmem:[#allocation14 + $0xdc] sm:$0xf]
        %v4424 = vld [vmem:[#allocation14 + $0xe0] sm:$0xf]
        %v4425 = vld [vmem:[#allocation14 + $0xe4] sm:$0xf]
        %v4426 = vld [vmem:[#allocation14 + $0xe8] sm:$0xf]
        %v4427 = vld [vmem:[#allocation14 + $0xec] sm:$0xf]
        %v4428 = vld [vmem:[#allocation14 + $0xf0] sm:$0xf]
        %v4429 = vld [vmem:[#allocation14 + $0xf4] sm:$0xf]
        %v4430 = vld [vmem:[#allocation14 + $0xf8] sm:$0xf]
        %v4431 = vld [vmem:[#allocation14 + $0xfc] sm:$0xf]
        %v4432 = vld [vmem:[%s8] sm:$0x1]
        %v4434 = vlaneseq
        %v4435 = vshrl.u32 %v4434, 7
        %v4436 = vsub.s32 0, %v4435
        %v4437 = vrot.slane %v4432, %v4436
        %v4503 = vunpack.c.l.b16 %v4368
        %v4504 = vunpack.c.l.b16 %v4369
        %v4505 = vunpack.c.l.b16 %v4370
        %v4506 = vunpack.c.l.b16 %v4371
        %v4507 = vunpack.c.l.b16 %v4372
        %v4508 = vunpack.c.l.b16 %v4373
        %v4509 = vunpack.c.l.b16 %v4374
        %v4510 = vunpack.c.l.b16 %v4375
        %v4511 = vunpack.c.l.b16 %v4376
        %v4512 = vunpack.c.l.b16 %v4377
        %v4513 = vunpack.c.l.b16 %v4378
        %v4514 = vunpack.c.l.b16 %v4379
        %v4515 = vunpack.c.l.b16 %v4380
        %v4516 = vunpack.c.l.b16 %v4381
        %v4517 = vunpack.c.l.b16 %v4382
        %v4518 = vunpack.c.l.b16 %v4383
        %v4519 = vunpack.c.l.b16 %v4384
        %v4520 = vunpack.c.l.b16 %v4385
        %v4521 = vunpack.c.l.b16 %v4386
        %v4522 = vunpack.c.l.b16 %v4387
        %v4523 = vunpack.c.l.b16 %v4388
        %v4524 = vunpack.c.l.b16 %v4389
        %v4525 = vunpack.c.l.b16 %v4390
        %v4526 = vunpack.c.l.b16 %v4391
        %v4527 = vunpack.c.l.b16 %v4392
        %v4528 = vunpack.c.l.b16 %v4393
        %v4529 = vunpack.c.l.b16 %v4394
        %v4530 = vunpack.c.l.b16 %v4395
        %v4531 = vunpack.c.l.b16 %v4396
        %v4532 = vunpack.c.l.b16 %v4397
        %v4533 = vunpack.c.l.b16 %v4398
        %v4534 = vunpack.c.l.b16 %v4399
        %v4535 = vunpack.c.l.b16 %v4400
        %v4536 = vunpack.c.l.b16 %v4401
        %v4537 = vunpack.c.l.b16 %v4402
        %v4538 = vunpack.c.l.b16 %v4403
        %v4539 = vunpack.c.l.b16 %v4404
        %v4540 = vunpack.c.l.b16 %v4405
        %v4541 = vunpack.c.l.b16 %v4406
        %v4542 = vunpack.c.l.b16 %v4407
        %v4543 = vunpack.c.l.b16 %v4408
        %v4544 = vunpack.c.l.b16 %v4409
        %v4545 = vunpack.c.l.b16 %v4410
        %v4546 = vunpack.c.l.b16 %v4411
        %v4547 = vunpack.c.l.b16 %v4412
        %v4548 = vunpack.c.l.b16 %v4413
        %v4549 = vunpack.c.l.b16 %v4414
        %v4550 = vunpack.c.l.b16 %v4415
        %v4551 = vunpack.c.l.b16 %v4416
        %v4552 = vunpack.c.l.b16 %v4417
        %v4553 = vunpack.c.l.b16 %v4418
        %v4554 = vunpack.c.l.b16 %v4419
        %v4555 = vunpack.c.l.b16 %v4420
        %v4556 = vunpack.c.l.b16 %v4421
        %v4557 = vunpack.c.l.b16 %v4422
        %v4558 = vunpack.c.l.b16 %v4423
        %v4559 = vunpack.c.l.b16 %v4424
        %v4560 = vunpack.c.l.b16 %v4425
        %v4561 = vunpack.c.l.b16 %v4426
        %v4562 = vunpack.c.l.b16 %v4427
        %v4563 = vunpack.c.l.b16 %v4428
        %v4564 = vunpack.c.l.b16 %v4429
        %v4565 = vunpack.c.l.b16 %v4430
        %v4566 = vunpack.c.l.b16 %v4431
        %v4567 = vpack.c.b16 %v4504, %v4503
        %v4568 = vpack.c.b16 %v4506, %v4505
        %v4569 = vpack.c.b16 %v4508, %v4507
        %v4570 = vpack.c.b16 %v4510, %v4509
        %v4571 = vpack.c.b16 %v4512, %v4511
        %v4572 = vpack.c.b16 %v4514, %v4513
        %v4573 = vpack.c.b16 %v4516, %v4515
        %v4574 = vpack.c.b16 %v4518, %v4517
        %v4575 = vpack.c.b16 %v4520, %v4519
        %v4576 = vpack.c.b16 %v4522, %v4521
        %v4577 = vpack.c.b16 %v4524, %v4523
        %v4578 = vpack.c.b16 %v4526, %v4525
        %v4579 = vpack.c.b16 %v4528, %v4527
        %v4580 = vpack.c.b16 %v4530, %v4529
        %v4581 = vpack.c.b16 %v4532, %v4531
        %v4582 = vpack.c.b16 %v4534, %v4533
        %v4583 = vpack.c.b16 %v4536, %v4535
        %v4584 = vpack.c.b16 %v4538, %v4537
        %v4585 = vpack.c.b16 %v4540, %v4539
        %v4586 = vpack.c.b16 %v4542, %v4541
        %v4587 = vpack.c.b16 %v4544, %v4543
        %v4588 = vpack.c.b16 %v4546, %v4545
        %v4589 = vpack.c.b16 %v4548, %v4547
        %v4590 = vpack.c.b16 %v4550, %v4549
        %v4591 = vpack.c.b16 %v4552, %v4551
        %v4592 = vpack.c.b16 %v4554, %v4553
        %v4593 = vpack.c.b16 %v4556, %v4555
        %v4594 = vpack.c.b16 %v4558, %v4557
        %v4595 = vpack.c.b16 %v4560, %v4559
        %v4596 = vpack.c.b16 %v4562, %v4561
        %v4597 = vpack.c.b16 %v4564, %v4563
        %v4598 = vpack.c.b16 %v4566, %v4565
        %4631 = vmatprep.subr.bf16.mxu0 0
        %4632 = vmatpush1.bf16.msra.mxu0 %v4567
        %4633 = vmatprep.subr.bf16.mxu0 0
        %4634 = vmatpush1.bf16.msra.mxu0 %v4568
        %4635 = vmatprep.subr.bf16.mxu0 0
        %4636 = vmatpush1.bf16.msra.mxu0 %v4569
        %4637 = vmatprep.subr.bf16.mxu0 0
        %4638 = vmatpush1.bf16.msra.mxu0 %v4570
        %4639 = vmatprep.subr.bf16.mxu0 0
        %4640 = vmatpush1.bf16.msra.mxu0 %v4571
        %4641 = vmatprep.subr.bf16.mxu0 0
        %4642 = vmatpush1.bf16.msra.mxu0 %v4572
        %4643 = vmatprep.subr.bf16.mxu0 0
        %4644 = vmatpush1.bf16.msra.mxu0 %v4573
        %4645 = vmatprep.subr.bf16.mxu0 0
        %4646 = vmatpush1.bf16.msra.mxu0 %v4574
        %4647 = vmatprep.subr.bf16.mxu0 0
        %4648 = vmatpush1.bf16.msra.mxu0 %v4575
        %4649 = vmatprep.subr.bf16.mxu0 0
        %4650 = vmatpush1.bf16.msra.mxu0 %v4576
        %4651 = vmatprep.subr.bf16.mxu0 0
        %4652 = vmatpush1.bf16.msra.mxu0 %v4577
        %4653 = vmatprep.subr.bf16.mxu0 0
        %4654 = vmatpush1.bf16.msra.mxu0 %v4578
        %4655 = vmatprep.subr.bf16.mxu0 0
        %4656 = vmatpush1.bf16.msra.mxu0 %v4579
        %4657 = vmatprep.subr.bf16.mxu0 0
        %4658 = vmatpush1.bf16.msra.mxu0 %v4580
        %4659 = vmatprep.subr.bf16.mxu0 0
        %4660 = vmatpush1.bf16.msra.mxu0 %v4581
        %4661 = vmatprep.subr.bf16.mxu0 0
        %4662 = vmatpush1.bf16.msra.mxu0 %v4582
        %4663 = vmatprep.mubr.bf16.mxu0 %v4337
        %4664 = vmatmul.mubr.bf16.gmra.mrb[0].mxu0 %v4336
        %v4665 = vpop.f32.mrb[0].mxu0
        %v4666 = vadd.f32 %v4437, %v4665
        %v4667 = vpop.f32.mrb[0].mxu0
        %v4668 = vpop.f32.mrb[0].mxu0
        %v4669 = vadd.f32 %v4437, %v4668
        %v4670 = vpop.f32.mrb[0].mxu0
        %4671 = vmatprep.mubr.bf16.mxu0 %v4341
        %4672 = vmatmul.mubr.bf16.gmra.mrb[0].mxu0 %v4340
        %v4673 = vpop.f32.mrb[0].mxu0
        %v4674 = vadd.f32 %v4437, %v4673
        %v4675 = vpop.f32.mrb[0].mxu0
        %v4676 = vpop.f32.mrb[0].mxu0
        %v4677 = vadd.f32 %v4437, %v4676
        %v4678 = vpop.f32.mrb[0].mxu0
        %4679 = vmatprep.mubr.bf16.mxu0 %v4345
        %4680 = vmatmul.mubr.bf16.gmra.mrb[0].mxu0 %v4344
        %v4681 = vpop.f32.mrb[0].mxu0
        %v4682 = vadd.f32 %v4437, %v4681
        %v4683 = vpop.f32.mrb[0].mxu0
        %v4684 = vpop.f32.mrb[0].mxu0
        %v4685 = vadd.f32 %v4437, %v4684
        %v4686 = vpop.f32.mrb[0].mxu0
        %4687 = vmatprep.mubr.bf16.mxu0 %v4349
        %4688 = vmatmul.mubr.bf16.gmra.mrb[0].mxu0 %v4348
        %v4689 = vpop.f32.mrb[0].mxu0
        %v4690 = vadd.f32 %v4437, %v4689
        %v4691 = vpop.f32.mrb[0].mxu0
        %v4692 = vpop.f32.mrb[0].mxu0
        %v4693 = vadd.f32 %v4437, %v4692
        %v4694 = vpop.f32.mrb[0].mxu0
        %4695 = vmatprep.mubr.bf16.mxu0 %v4353
        %4696 = vmatmul.mubr.bf16.gmra.mrb[0].mxu0 %v4352
        %v4697 = vpop.f32.mrb[0].mxu0
        %v4698 = vadd.f32 %v4437, %v4697
        %v4699 = vpop.f32.mrb[0].mxu0
        %v4700 = vpop.f32.mrb[0].mxu0
        %v4701 = vadd.f32 %v4437, %v4700
        %v4702 = vpop.f32.mrb[0].mxu0
        %4703 = vmatprep.mubr.bf16.mxu0 %v4357
        %4704 = vmatmul.mubr.bf16.gmra.mrb[0].mxu0 %v4356
        %v4705 = vpop.f32.mrb[0].mxu0
        %v4706 = vadd.f32 %v4437, %v4705
        %v4707 = vpop.f32.mrb[0].mxu0
        %v4708 = vpop.f32.mrb[0].mxu0
        %v4709 = vadd.f32 %v4437, %v4708
        %v4710 = vpop.f32.mrb[0].mxu0
        %4711 = vmatprep.mubr.bf16.mxu0 %v4361
        %4712 = vmatmul.mubr.bf16.gmra.mrb[0].mxu0 %v4360
        %v4713 = vpop.f32.mrb[0].mxu0
        %v4714 = vadd.f32 %v4437, %v4713
        %v4715 = vpop.f32.mrb[0].mxu0
        %v4716 = vpop.f32.mrb[0].mxu0
        %v4717 = vadd.f32 %v4437, %v4716
        %v4718 = vpop.f32.mrb[0].mxu0
        %4719 = vmatprep.mubr.bf16.mxu0 %v4365
        %4720 = vmatmul.mubr.bf16.gmra.mrb[0].mxu0 %v4364
        %v4721 = vpop.f32.mrb[0].mxu0
        %v4722 = vadd.f32 %v4437, %v4721
        %v4723 = vpop.f32.mrb[0].mxu0
        %v4724 = vpop.f32.mrb[0].mxu0
        %v4725 = vadd.f32 %v4437, %v4724
        %v4726 = vpop.f32.mrb[0].mxu0
        %4727 = vdwg.mxu0
        %4728 = vmatprep.subr.bf16.mxu0 0
        %4729 = vmatpush1.bf16.msra.mxu0 %v4583
        %4730 = vmatprep.subr.bf16.mxu0 0
        %4731 = vmatpush1.bf16.msra.mxu0 %v4584
        %4732 = vmatprep.subr.bf16.mxu0 0
        %4733 = vmatpush1.bf16.msra.mxu0 %v4585
        %4734 = vmatprep.subr.bf16.mxu0 0
        %4735 = vmatpush1.bf16.msra.mxu0 %v4586
        %4736 = vmatprep.subr.bf16.mxu0 0
        %4737 = vmatpush1.bf16.msra.mxu0 %v4587
        %4738 = vmatprep.subr.bf16.mxu0 0
        %4739 = vmatpush1.bf16.msra.mxu0 %v4588
        %4740 = vmatprep.subr.bf16.mxu0 0
        %4741 = vmatpush1.bf16.msra.mxu0 %v4589
        %4742 = vmatprep.subr.bf16.mxu0 0
        %4743 = vmatpush1.bf16.msra.mxu0 %v4590
        %4744 = vmatprep.subr.bf16.mxu0 0
        %4745 = vmatpush1.bf16.msra.mxu0 %v4591
        %4746 = vmatprep.subr.bf16.mxu0 0
        %4747 = vmatpush1.bf16.msra.mxu0 %v4592
        %4748 = vmatprep.subr.bf16.mxu0 0
        %4749 = vmatpush1.bf16.msra.mxu0 %v4593
        %4750 = vmatprep.subr.bf16.mxu0 0
        %4751 = vmatpush1.bf16.msra.mxu0 %v4594
        %4752 = vmatprep.subr.bf16.mxu0 0
        %4753 = vmatpush1.bf16.msra.mxu0 %v4595
        %4754 = vmatprep.subr.bf16.mxu0 0
        %4755 = vmatpush1.bf16.msra.mxu0 %v4596
        %4756 = vmatprep.subr.bf16.mxu0 0
        %4757 = vmatpush1.bf16.msra.mxu0 %v4597
        %4758 = vmatprep.subr.bf16.mxu0 0
        %4759 = vmatpush1.bf16.msra.mxu0 %v4598
        %4760 = vmatprep.mubr.bf16.mxu0 %v4339
        %4761 = vmatmul.mubr.bf16.gmra.mrb[0].mxu0 %v4338
        %v4762 = vpop.f32.mrb[0].mxu0
        %v4763 = vadd.f32 %v4666, %v4762
        %v4764 = vpop.f32.mrb[0].mxu0
        %v4765 = vpop.f32.mrb[0].mxu0
        %v4766 = vadd.f32 %v4669, %v4765
        %v4767 = vpop.f32.mrb[0].mxu0
        %4768 = vmatprep.mubr.bf16.mxu0 %v4343
        %4769 = vmatmul.mubr.bf16.gmra.mrb[0].mxu0 %v4342
        %v4770 = vpop.f32.mrb[0].mxu0
        %v4771 = vadd.f32 %v4674, %v4770
        %v4772 = vpop.f32.mrb[0].mxu0
        %v4773 = vpop.f32.mrb[0].mxu0
        %v4774 = vadd.f32 %v4677, %v4773
        %v4775 = vpop.f32.mrb[0].mxu0
        %4776 = vmatprep.mubr.bf16.mxu0 %v4347
        %4777 = vmatmul.mubr.bf16.gmra.mrb[0].mxu0 %v4346
        %v4778 = vpop.f32.mrb[0].mxu0
        %v4779 = vadd.f32 %v4682, %v4778
        %v4780 = vpop.f32.mrb[0].mxu0
        %v4781 = vpop.f32.mrb[0].mxu0
        %v4782 = vadd.f32 %v4685, %v4781
        %v4783 = vpop.f32.mrb[0].mxu0
        %4784 = vmatprep.mubr.bf16.mxu0 %v4351
        %4785 = vmatmul.mubr.bf16.gmra.mrb[0].mxu0 %v4350
        %v4786 = vpop.f32.mrb[0].mxu0
        %v4787 = vadd.f32 %v4690, %v4786
        %v4788 = vpop.f32.mrb[0].mxu0
        %v4789 = vpop.f32.mrb[0].mxu0
        %v4790 = vadd.f32 %v4693, %v4789
        %v4791 = vpop.f32.mrb[0].mxu0
        %4792 = vmatprep.mubr.bf16.mxu0 %v4355
        %4793 = vmatmul.mubr.bf16.gmra.mrb[0].mxu0 %v4354
        %v4794 = vpop.f32.mrb[0].mxu0
        %v4795 = vadd.f32 %v4698, %v4794
        %v4796 = vpop.f32.mrb[0].mxu0
        %v4797 = vpop.f32.mrb[0].mxu0
        %v4798 = vadd.f32 %v4701, %v4797
        %v4799 = vpop.f32.mrb[0].mxu0
        %4800 = vmatprep.mubr.bf16.mxu0 %v4359
        %4801 = vmatmul.mubr.bf16.gmra.mrb[0].mxu0 %v4358
        %v4802 = vpop.f32.mrb[0].mxu0
        %v4803 = vadd.f32 %v4706, %v4802
        %v4804 = vpop.f32.mrb[0].mxu0
        %v4805 = vpop.f32.mrb[0].mxu0
        %v4806 = vadd.f32 %v4709, %v4805
        %v4807 = vpop.f32.mrb[0].mxu0
        %4808 = vmatprep.mubr.bf16.mxu0 %v4363
        %4809 = vmatmul.mubr.bf16.gmra.mrb[0].mxu0 %v4362
        %v4810 = vpop.f32.mrb[0].mxu0
        %v4811 = vadd.f32 %v4714, %v4810
        %v4812 = vpop.f32.mrb[0].mxu0
        %v4813 = vpop.f32.mrb[0].mxu0
        %v4814 = vadd.f32 %v4717, %v4813
        %v4815 = vpop.f32.mrb[0].mxu0
        %4816 = vmatprep.mubr.bf16.mxu0 %v4367
        %4817 = vmatmul.mubr.bf16.gmra.mrb[0].mxu0 %v4366
        %v4818 = vpop.f32.mrb[0].mxu0
        %v4819 = vadd.f32 %v4722, %v4818
        %v4820 = vpop.f32.mrb[0].mxu0
        %v4821 = vpop.f32.mrb[0].mxu0
        %v4822 = vadd.f32 %v4725, %v4821
        %v4823 = vpop.f32.mrb[0].mxu0
        %4824 = vdwg.mxu0
        %v4825 = vadd.f32 %v3808, %v4763
        %v4826 = vadd.f32 %v3809, %v4766
        %v4827 = vadd.f32 %v3810, %v4771
        %v4828 = vadd.f32 %v3811, %v4774
        %v4829 = vadd.f32 %v3812, %v4779
        %v4830 = vadd.f32 %v3813, %v4782
        %v4831 = vadd.f32 %v3814, %v4787
        %v4832 = vadd.f32 %v3815, %v4790
        %v4833 = vadd.f32 %v3816, %v4795
        %v4834 = vadd.f32 %v3817, %v4798
        %v4835 = vadd.f32 %v3818, %v4803
        %v4836 = vadd.f32 %v3819, %v4806
        %v4837 = vadd.f32 %v3820, %v4811
        %v4838 = vadd.f32 %v3821, %v4814
        %v4839 = vadd.f32 %v3822, %v4819
        %v4840 = vadd.f32 %v3823, %v4822
        %4841 = vadd.xlane.f32.xlu0 %v4825
        %v4842 = vpop.xlane.xlu0 %4841
        %4843 = vadd.xlane.f32.xlu0 %v4826
        %v4844 = vpop.xlane.xlu0 %4843
        %4845 = vadd.xlane.f32.xlu0 %v4827
        %v4846 = vpop.xlane.xlu0 %4845
        %4847 = vadd.xlane.f32.xlu0 %v4828
        %v4848 = vpop.xlane.xlu0 %4847
        %4849 = vadd.xlane.f32.xlu0 %v4829
        %v4850 = vpop.xlane.xlu0 %4849
        %4851 = vadd.xlane.f32.xlu0 %v4830
        %v4852 = vpop.xlane.xlu0 %4851
        %4853 = vadd.xlane.f32.xlu0 %v4831
        %v4854 = vpop.xlane.xlu0 %4853
        %4855 = vadd.xlane.f32.xlu0 %v4832
        %v4856 = vpop.xlane.xlu0 %4855
        %4857 = vadd.xlane.f32.xlu0 %v4833
        %v4858 = vpop.xlane.xlu0 %4857
        %4859 = vadd.xlane.f32.xlu0 %v4834
        %v4860 = vpop.xlane.xlu0 %4859
        %4861 = vadd.xlane.f32.xlu0 %v4835
        %v4862 = vpop.xlane.xlu0 %4861
        %4863 = vadd.xlane.f32.xlu0 %v4836
        %v4864 = vpop.xlane.xlu0 %4863
        %4865 = vadd.xlane.f32.xlu0 %v4837
        %v4866 = vpop.xlane.xlu0 %4865
        %4867 = vadd.xlane.f32.xlu0 %v4838
        %v4868 = vpop.xlane.xlu0 %4867
        %4869 = vadd.xlane.f32.xlu0 %v4839
        %v4870 = vpop.xlane.xlu0 %4869
        %4871 = vadd.xlane.f32.xlu0 %v4840
        %v4872 = vpop.xlane.xlu0 %4871
        %v4873 = vmul.f32 %v4842, %v3679
        %v4874 = vmul.f32 %v4844, %v3679
        %v4875 = vmul.f32 %v4846, %v3679
        %v4876 = vmul.f32 %v4848, %v3679
        %v4877 = vmul.f32 %v4850, %v3679
        %v4878 = vmul.f32 %v4852, %v3679
        %v4879 = vmul.f32 %v4854, %v3679
        %v4880 = vmul.f32 %v4856, %v3679
        %v4881 = vmul.f32 %v4858, %v3679
        %v4882 = vmul.f32 %v4860, %v3679
        %v4883 = vmul.f32 %v4862, %v3679
        %v4884 = vmul.f32 %v4864, %v3679
        %v4885 = vmul.f32 %v4866, %v3679
        %v4886 = vmul.f32 %v4868, %v3679
        %v4887 = vmul.f32 %v4870, %v3679
        %v4888 = vmul.f32 %v4872, %v3679
        %v4889 = vsub.f32 %v4825, %v4873
        %v4890 = vsub.f32 %v4826, %v4874
        %v4891 = vsub.f32 %v4827, %v4875
        %v4892 = vsub.f32 %v4828, %v4876
        %v4893 = vsub.f32 %v4829, %v4877
        %v4894 = vsub.f32 %v4830, %v4878
        %v4895 = vsub.f32 %v4831, %v4879
        %v4896 = vsub.f32 %v4832, %v4880
        %v4897 = vsub.f32 %v4833, %v4881
        %v4898 = vsub.f32 %v4834, %v4882
        %v4899 = vsub.f32 %v4835, %v4883
        %v4900 = vsub.f32 %v4836, %v4884
        %v4901 = vsub.f32 %v4837, %v4885
        %v4902 = vsub.f32 %v4838, %v4886
        %v4903 = vsub.f32 %v4839, %v4887
        %v4904 = vsub.f32 %v4840, %v4888
        %v4905 = vmul.f32 %v4889, %v4889
        %v4906 = vmul.f32 %v4890, %v4890
        %v4907 = vmul.f32 %v4891, %v4891
        %v4908 = vmul.f32 %v4892, %v4892
        %v4909 = vmul.f32 %v4893, %v4893
        %v4910 = vmul.f32 %v4894, %v4894
        %v4911 = vmul.f32 %v4895, %v4895
        %v4912 = vmul.f32 %v4896, %v4896
        %v4913 = vmul.f32 %v4897, %v4897
        %v4914 = vmul.f32 %v4898, %v4898
        %v4915 = vmul.f32 %v4899, %v4899
        %v4916 = vmul.f32 %v4900, %v4900
        %v4917 = vmul.f32 %v4901, %v4901
        %v4918 = vmul.f32 %v4902, %v4902
        %v4919 = vmul.f32 %v4903, %v4903
        %v4920 = vmul.f32 %v4904, %v4904
        %4921 = vadd.xlane.f32.xlu0 %v4905
        %v4922 = vpop.xlane.xlu0 %4921
        %4923 = vadd.xlane.f32.xlu0 %v4906
        %v4924 = vpop.xlane.xlu0 %4923
        %4925 = vadd.xlane.f32.xlu0 %v4907
        %v4926 = vpop.xlane.xlu0 %4925
        %4927 = vadd.xlane.f32.xlu0 %v4908
        %v4928 = vpop.xlane.xlu0 %4927
        %4929 = vadd.xlane.f32.xlu0 %v4909
        %v4930 = vpop.xlane.xlu0 %4929
        %4931 = vadd.xlane.f32.xlu0 %v4910
        %v4932 = vpop.xlane.xlu0 %4931
        %4933 = vadd.xlane.f32.xlu0 %v4911
        %v4934 = vpop.xlane.xlu0 %4933
        %4935 = vadd.xlane.f32.xlu0 %v4912
        %v4936 = vpop.xlane.xlu0 %4935
        %4937 = vadd.xlane.f32.xlu0 %v4913
        %v4938 = vpop.xlane.xlu0 %4937
        %4939 = vadd.xlane.f32.xlu0 %v4914
        %v4940 = vpop.xlane.xlu0 %4939
        %4941 = vadd.xlane.f32.xlu0 %v4915
        %v4942 = vpop.xlane.xlu0 %4941
        %4943 = vadd.xlane.f32.xlu0 %v4916
        %v4944 = vpop.xlane.xlu0 %4943
        %4945 = vadd.xlane.f32.xlu0 %v4917
        %v4946 = vpop.xlane.xlu0 %4945
        %4947 = vadd.xlane.f32.xlu0 %v4918
        %v4948 = vpop.xlane.xlu0 %4947
        %4949 = vadd.xlane.f32.xlu0 %v4919
        %v4950 = vpop.xlane.xlu0 %4949
        %4951 = vadd.xlane.f32.xlu0 %v4920
        %v4952 = vpop.xlane.xlu0 %4951
        %v4953 = vmul.f32 %v4922, %v3679
        %v4954 = vmul.f32 %v4924, %v3679
        %v4955 = vmul.f32 %v4926, %v3679
        %v4956 = vmul.f32 %v4928, %v3679
        %v4957 = vmul.f32 %v4930, %v3679
        %v4958 = vmul.f32 %v4932, %v3679
        %v4959 = vmul.f32 %v4934, %v3679
        %v4960 = vmul.f32 %v4936, %v3679
        %v4961 = vmul.f32 %v4938, %v3679
        %v4962 = vmul.f32 %v4940, %v3679
        %v4963 = vmul.f32 %v4942, %v3679
        %v4964 = vmul.f32 %v4944, %v3679
        %v4965 = vmul.f32 %v4946, %v3679
        %v4966 = vmul.f32 %v4948, %v3679
        %v4967 = vmul.f32 %v4950, %v3679
        %v4968 = vmul.f32 %v4952, %v3679
        %v4969 = vadd.f32 %v4953, 1e-05
        %v4970 = vadd.f32 %v4954, 1e-05
        %v4971 = vadd.f32 %v4955, 1e-05
        %v4972 = vadd.f32 %v4956, 1e-05
        %v4973 = vadd.f32 %v4957, 1e-05
        %v4974 = vadd.f32 %v4958, 1e-05
        %v4975 = vadd.f32 %v4959, 1e-05
        %v4976 = vadd.f32 %v4960, 1e-05
        %v4977 = vadd.f32 %v4961, 1e-05
        %v4978 = vadd.f32 %v4962, 1e-05
        %v4979 = vadd.f32 %v4963, 1e-05
        %v4980 = vadd.f32 %v4964, 1e-05
        %v4981 = vadd.f32 %v4965, 1e-05
        %v4982 = vadd.f32 %v4966, 1e-05
        %v4983 = vadd.f32 %v4967, 1e-05
        %v4984 = vadd.f32 %v4968, 1e-05
        %v4985 = vrsqrt.pop %v4969
        %v4986 = vrsqrt.pop %v4970
        %v4987 = vrsqrt.pop %v4971
        %v4988 = vrsqrt.pop %v4972
        %v4989 = vrsqrt.pop %v4973
        %v4990 = vrsqrt.pop %v4974
        %v4991 = vrsqrt.pop %v4975
        %v4992 = vrsqrt.pop %v4976
        %v4993 = vrsqrt.pop %v4977
        %v4994 = vrsqrt.pop %v4978
        %v4995 = vrsqrt.pop %v4979
        %v4996 = vrsqrt.pop %v4980
        %v4997 = vrsqrt.pop %v4981
        %v4998 = vrsqrt.pop %v4982
        %v4999 = vrsqrt.pop %v4983
        %v5000 = vrsqrt.pop %v4984
        %v5001 = vmul.f32 %v4889, %v4985
        %v5002 = vmul.f32 %v4890, %v4986
        %v5003 = vmul.f32 %v4891, %v4987
        %v5004 = vmul.f32 %v4892, %v4988
        %v5005 = vmul.f32 %v4893, %v4989
        %v5006 = vmul.f32 %v4894, %v4990
        %v5007 = vmul.f32 %v4895, %v4991
        %v5008 = vmul.f32 %v4896, %v4992
        %v5009 = vmul.f32 %v4897, %v4993
        %v5010 = vmul.f32 %v4898, %v4994
        %v5011 = vmul.f32 %v4899, %v4995
        %v5012 = vmul.f32 %v4900, %v4996
        %v5013 = vmul.f32 %v4901, %v4997
        %v5014 = vmul.f32 %v4902, %v4998
        %v5015 = vmul.f32 %v4903, %v4999
        %v5016 = vmul.f32 %v4904, %v5000
        %5017 = vst [vmem:[%s412] sm:$0xff] %v5001
        %5018 = vst [vmem:[%s412 + $0x8] sm:$0xff] %v5002
        %5019 = vst [vmem:[%s412 + $0x10] sm:$0xff] %v5003
        %5020 = vst [vmem:[%s412 + $0x18] sm:$0xff] %v5004
        %5021 = vst [vmem:[%s412 + $0x20] sm:$0xff] %v5005
        %5022 = vst [vmem:[%s412 + $0x28] sm:$0xff] %v5006
        %5023 = vst [vmem:[%s412 + $0x30] sm:$0xff] %v5007
        %5024 = vst [vmem:[%s412 + $0x38] sm:$0xff] %v5008
        %5025 = vst [vmem:[%s412 + $0x40] sm:$0xff] %v5009
        %5026 = vst [vmem:[%s412 + $0x48] sm:$0xff] %v5010
        %5027 = vst [vmem:[%s412 + $0x50] sm:$0xff] %v5011
        %5028 = vst [vmem:[%s412 + $0x58] sm:$0xff] %v5012
        %5029 = vst [vmem:[%s412 + $0x60] sm:$0xff] %v5013
        %5030 = vst [vmem:[%s412 + $0x68] sm:$0xff] %v5014
        %5031 = vst [vmem:[%s412 + $0x70] sm:$0xff] %v5015
        %5032 = vst [vmem:[%s412 + $0x78] sm:$0xff] %v5016
        %s5033 = sand.u32 %s224, 1
        %s5034 = scalar_lea.sflag [#allocation5], %s5033
        %s5035 = sand.u32 %s224, 1
        %s5036 = smul.addr %s5035, 128
        %s5037 = scalar_lea.vmem [#allocation15], %s5036
        // Predicated region
        $region85: #{tpu_custom_call.1} parent=55 // pred_check
          %p5038 = pneg %p234
        $region86: #{tpu_custom_call.1} parent=55 // pred_check_branch
          %5040 = sbr.rel (%p5038) target = $region88
        $region87: #{tpu_custom_call.1} parent=55 // pred_region
          %s5041 = smul.u32 16, %s27
          %s5043 = ssub.s32 2048, 2048
          %5044 = vsyncadd %s5034, %s5043
          %s5045 = smul.addr %s5041, 128
          %s5046 = scalar_lea.hbm %s9, %s5045
          %s5047 = sshll.u32 %s5037, 4
          %s5048 = int_to_ptr.vmem [resolvable:$true] %s5047
          %5053 = dma.vmem_to_hbm [thread:$0]  %s5048, 2048, %s5046, %s5034, 128, 128, 8
        $region88: #{tpu_custom_call.1} parent=55 // pred_fallthru
          _
      $region56: #{tpu_custom_call.1} parent=5 // pred_fallthru
        _
      %p5054 = scmp.le.s32.totalorder 2, %s22
      // Predicated region
      $region89: #{tpu_custom_call.1} parent=5 // pred_check
        %p5055 = pneg %p5054
      $region90: #{tpu_custom_call.1} parent=5 // pred_check_branch
        %5057 = sbr.rel (%p5055) target = $region92
      $region91: #{tpu_custom_call.1} parent=5 // pred_region
        %s5058 = ssub.s32 %s22, 2
        // Predicated region
        $region93: #{tpu_custom_call.1} parent=91 // pred_check
          %p5059 = pneg %p240
        $region94: #{tpu_custom_call.1} parent=91 // pred_check_branch
          %5061 = sbr.rel (%p5059) target = $region96
        $region95: #{tpu_custom_call.1} parent=91 // pred_region
          %s5062 = sand.u32 %s225, 1
          %s5063 = scalar_lea.sflag [#allocation5], %s5062
          %s5064 = sand.u32 %s225, 1
          %s5065 = smul.addr %s5064, 128
          %s5066 = scalar_lea.vmem [#allocation15], %s5065
          %5067 = dma.done %s5063, 2048
        $region96: #{tpu_custom_call.1} parent=91 // pred_fallthru
          _
      $region92: #{tpu_custom_call.1} parent=5 // pred_fallthru
        _
    $region6: #{tpu_custom_call.1} parent=1 // loop_footer
      %s26 = sadd.s32 1, %s22
    $region7: #{tpu_custom_call.1} parent=1 // loop_footer_branch
      %21 = sbr.rel target = $region3
    $region8: #{tpu_custom_call.1} parent=1 // loop_exit
      _
    %5068 = vsyncpa [#allocation4], 1
    %s5069 = scalar_lea.sflag [#allocation4], 1
    %5070 = vsyncpa %s5069, 1
    %5071 = vsyncpa [#allocation7], 1
    %5072 = vsyncpa [#allocation10], 1
    %5073 = vsyncpa [#allocation13], 1
    %5074 = vsyncpa [#allocation5], 1
    %s5075 = scalar_lea.sflag [#allocation5], 1
    %5076 = vsyncpa %s5075, 1

</llo_original>
